<compile_context>
chip_gen: v7x
topology: tpu7x:2x2x1
jax: 0.10.0
libtpu: 0.0.40
codegen_flags: <defaults>
</compile_context>

<pallas_src>
import math
import jax
import jax.numpy as jnp
from jax import lax
from jax.experimental import pallas as pl
from jax.experimental.pallas import tpu as pltpu

d_k = 64
d_v = 64
d_model = 512
n_heads = 8
d_ff = 2048
LN_EPS = 1e-5

HSUB = 4                          # heads per attention grid step (4*64 = 256 lanes)
_ROW_TILE = 256                   # target rows per tile for the row-tiled FFN kernel
_VMEM_LIMIT = 48 * 1024 * 1024    # headroom on v7x (64 MiB physical VMEM)


def _row_tile(n_rows, target=_ROW_TILE):
    """Largest row tile <= target that divides n_rows (multiple of 8 sublanes)."""
    if n_rows <= target:
        return n_rows
    t = (target // 8) * 8
    while t >= 8:
        if n_rows % t == 0:
            return t
        t -= 8
    return n_rows  # fallback: single block


# ---------------------------------------------------------------------------
# Kernel 1: fused Q/K/V projection + scaled dot-product attention.
# Grid = (batch, head_group); HSUB heads per step.
#   q = x[b] @ W_Q[:, group cols]   (Q = K = V per the reference module)
#   scores = q @ q^T / sqrt(d_k); masked_fill; softmax; ctx = attn @ q
# Head split/merge is done via BlockSpec column offsets (no HBM transposes);
# ctx is written directly in (B, L, H*d_v) layout (lane-dense, 256-wide tiles).
# ---------------------------------------------------------------------------
def _attn_kernel(x_ref, wq_ref, m_ref, ctx_ref, *attn_ref):
    # x_ref:   (1, L, d_model)      f32
    # wq_ref:  (d_model, HSUB*d_k)  bf16   (column slice of W_Q for this group)
    # m_ref:   (1, L, L)            int32  (nonzero => masked)
    # ctx_ref: (1, L, HSUB*d_v)     f32
    # attn_ref (optional): (1, HSUB, L, L) f32
    q = jnp.dot(x_ref[0].astype(jnp.bfloat16), wq_ref[...],
                preferred_element_type=jnp.float32)              # (L, HSUB*d_k)
    mask = m_ref[0]                                              # (L, L)
    scale = 1.0 / math.sqrt(d_k)

    ctx_parts = []
    for h in range(HSUB):                                        # static unroll
        qh = q[:, h * d_k:(h + 1) * d_k].astype(jnp.bfloat16)    # (L, d_k)
        # scores = (q @ k^T) / sqrt(d_k); K = Q, contract on the d_k axis.
        scores = lax.dot_general(qh, qh, (((1,), (1,)), ((), ())),
                                 preferred_element_type=jnp.float32) * scale
        scores = jnp.where(mask != 0, jnp.float32(-1e9), scores)  # masked_fill_
        row_max = jnp.max(scores, axis=-1, keepdims=True)
        e = jnp.exp(scores - row_max)                              # f32 softmax
        attn = e * pl.reciprocal(jnp.sum(e, axis=-1, keepdims=True), approx=True)
        # context = attn @ V, with V = Q.
        ctx_parts.append(jnp.dot(attn.astype(jnp.bfloat16), qh,
                                 preferred_element_type=jnp.float32))
        if attn_ref:
            attn_ref[0][0, h] = attn
    ctx_ref[0] = jnp.concatenate(ctx_parts, axis=-1)


def attention(x3, wq_bf16, mask_i32, *, want_attn=True):
    B, L, D = x3.shape
    assert D == d_model and n_heads % HSUB == 0
    n_groups = n_heads // HSUB

    out_shape = [jax.ShapeDtypeStruct((B, L, n_heads * d_v), jnp.float32)]
    out_specs = [pl.BlockSpec((1, L, HSUB * d_v), lambda b, g: (b, 0, g))]
    if want_attn:
        out_shape.append(jax.ShapeDtypeStruct((B, n_heads, L, L), jnp.float32))
        out_specs.append(pl.BlockSpec((1, HSUB, L, L), lambda b, g: (b, g, 0, 0)))

    outs = pl.pallas_call(
        _attn_kernel,
        out_shape=tuple(out_shape),
        grid=(B, n_groups),
        in_specs=[
            pl.BlockSpec((1, L, D), lambda b, g: (b, 0, 0)),           # x[b]
            pl.BlockSpec((D, HSUB * d_k), lambda b, g: (0, g)),        # W_Q cols
            pl.BlockSpec((1, L, L), lambda b, g: (b, 0, 0)),           # mask
        ],
        out_specs=tuple(out_specs),
        compiler_params=pltpu.CompilerParams(
            dimension_semantics=("parallel", "parallel"),
            vmem_limit_bytes=_VMEM_LIMIT),
    )(x3, wq_bf16, mask_i32)
    if want_attn:
        return outs[0], outs[1]
    return outs[0], None


# ---------------------------------------------------------------------------
# Kernel 2 (fused, row-tiled):
#   y1 = LN1(ctx @ W_fc + residual)
#   y2 = LN2(relu(y1 @ W1) @ W2 + y1)
# All ops are row-local, so one (rows, d_model) tile flows through the whole
# chain with zero intermediate HBM traffic.
# ---------------------------------------------------------------------------
def _mha_out_ffn_kernel(ctx_ref, res_ref, wfc_ref, g1_ref, b1_ref,
                        w1_ref, w2_ref, g2_ref, b2_ref, o_ref):
    # Output projection + residual + LayerNorm 1 (LN math in f32).
    y = jnp.dot(ctx_ref[...].astype(jnp.bfloat16), wfc_ref[...],
                preferred_element_type=jnp.float32) + res_ref[...]
    mean = jnp.mean(y, axis=-1, keepdims=True)
    var = jnp.mean(jnp.square(y - mean), axis=-1, keepdims=True)
    y1 = (y - mean) * lax.rsqrt(var + LN_EPS) * g1_ref[...] + b1_ref[...]

    # Position-wise FFN + residual + LayerNorm 2.
    h = jnp.maximum(jnp.dot(y1.astype(jnp.bfloat16), w1_ref[...],
                            preferred_element_type=jnp.float32), 0.0)
    y2 = jnp.dot(h.astype(jnp.bfloat16), w2_ref[...],
                 preferred_element_type=jnp.float32) + y1
    mean2 = jnp.mean(y2, axis=-1, keepdims=True)
    var2 = jnp.mean(jnp.square(y2 - mean2), axis=-1, keepdims=True)
    o_ref[...] = (y2 - mean2) * lax.rsqrt(var2 + LN_EPS) * g2_ref[...] + b2_ref[...]


def mha_out_ffn(ctx2d, x2d, wfc, g1, b1, w1, w2, g2, b2):
    R, D = x2d.shape
    tm = _row_tile(R)

    def full(shape):
        return pl.BlockSpec(shape, lambda i, _s=shape: (0,) * len(_s))

    return pl.pallas_call(
        _mha_out_ffn_kernel,
        out_shape=jax.ShapeDtypeStruct((R, D), jnp.float32),
        grid=(R // tm,),
        in_specs=[pl.BlockSpec((tm, n_heads * d_v), lambda i: (i, 0)),   # ctx tile
                  pl.BlockSpec((tm, D), lambda i: (i, 0)),               # residual tile
                  full(wfc.shape), full(g1.shape), full(b1.shape),
                  full(w1.shape), full(w2.shape), full(g2.shape), full(b2.shape)],
        out_specs=pl.BlockSpec((tm, D), lambda i: (i, 0)),
        compiler_params=pltpu.CompilerParams(
            dimension_semantics=("parallel",),
            vmem_limit_bytes=_VMEM_LIMIT),
    )(ctx2d, x2d, wfc, g1, b1, w1, w2, g2, b2)


# ---------------------------------------------------------------------------
# EncoderLayer forward (glue in plain JAX: only reshapes, no transposes).
# ---------------------------------------------------------------------------
def encoder_layer(enc_inputs, enc_self_attn_mask, params, want_attn=True):
    B, L, D = enc_inputs.shape
    x2d = enc_inputs.reshape(B * L, D)

    mask_i32 = enc_self_attn_mask.astype(jnp.int32)                     # (B, L, L)
    # Q = K = V = x @ W_Q (the reference module uses W_Q for all three);
    # the projection is fused inside the attention kernel.
    ctx3, attn = attention(enc_inputs, params["W_Q"].astype(jnp.bfloat16),
                           mask_i32, want_attn=want_attn)               # (B,L,H*d_v)

    out2d = mha_out_ffn(ctx3.reshape(B * L, n_heads * d_v), x2d,
                        params["W_fc"].astype(jnp.bfloat16),
                        params["ln1_g"], params["ln1_b"],
                        params["W1"].astype(jnp.bfloat16),
                        params["W2"].astype(jnp.bfloat16),
                        params["ln2_g"], params["ln2_b"])               # (B*L, d_model)

    return out2d.reshape(B, L, D), attn


# ---------------------------------------------------------------------------
# Pure-JAX reference (uses the same bf16 matmul-operand rounding as the kernels
# so the comparison isolates kernel bugs rather than precision policy).
# ---------------------------------------------------------------------------
def _bf16_mm(a, b):
    return jnp.dot(a.astype(jnp.bfloat16), b.astype(jnp.bfloat16),
                   preferred_element_type=jnp.float32)


def _ln_ref(x, g, b):
    mean = jnp.mean(x, axis=-1, keepdims=True)
    var = jnp.mean(jnp.square(x - mean), axis=-1, keepdims=True)
    return (x - mean) * lax.rsqrt(var + LN_EPS) * g + b


def encoder_layer_ref(x, mask, p):
    B, L, D = x.shape
    x2d = x.reshape(B * L, D)
    q = _bf16_mm(x2d, p["W_Q"]).reshape(B, L, n_heads, d_k).transpose(0, 2, 1, 3)
    qb = q.astype(jnp.bfloat16)
    scores = jnp.einsum("bhqd,bhkd->bhqk", qb, qb,
                        preferred_element_type=jnp.float32) / math.sqrt(d_k)
    scores = jnp.where(mask[:, None, :, :], jnp.float32(-1e9), scores)
    attn = jax.nn.softmax(scores, axis=-1)
    ctx = jnp.einsum("bhqk,bhkd->bhqd", attn.astype(jnp.bfloat16), qb,
                     preferred_element_type=jnp.float32)
    ctx2d = ctx.transpose(0, 2, 1, 3).reshape(B * L, n_heads * d_v)
    out = _bf16_mm(ctx2d, p["W_fc"]) + x2d
    out = _ln_ref(out, p["ln1_g"], p["ln1_b"])
    h = jnp.maximum(_bf16_mm(out, p["W1"]), 0.0)
    y = _bf16_mm(h, p["W2"]) + out
    y = _ln_ref(y, p["ln2_g"], p["ln2_b"])
    return y.reshape(B, L, D), attn


if __name__ == "__main__":
    B, L = 2, 8  # batch_size, src_len (d_model/d_ff/heads fixed by the module)
    key = jax.random.PRNGKey(0)
    k1, k2, k3, k4, kx = jax.random.split(key, 5)

    params = {
        "W_Q":   jax.random.normal(k1, (d_model, n_heads * d_k), jnp.float32) * 0.02,
        "W_fc":  jax.random.normal(k2, (n_heads * d_v, d_model), jnp.float32) * 0.02,
        "W1":    jax.random.normal(k3, (d_model, d_ff), jnp.float32) * 0.02,
        "W2":    jax.random.normal(k4, (d_ff, d_model), jnp.float32) * 0.02,
        "ln1_g": jnp.ones((1, d_model), jnp.float32),
        "ln1_b": jnp.zeros((1, d_model), jnp.float32),
        "ln2_g": jnp.ones((1, d_model), jnp.float32),
        "ln2_b": jnp.zeros((1, d_model), jnp.float32),
    }

    x = jax.random.normal(kx, (B, L, d_model), jnp.float32)
    # Padding-style self-attention mask: last 2 key positions masked (True = masked).
    mask = jnp.zeros((B, L, L), dtype=bool).at[:, :, L - 2:].set(True)

    enc_out, attn = jax.jit(encoder_layer)(x, mask, params)
    enc_out = jax.block_until_ready(enc_out)
    attn = jax.block_until_ready(attn)

    ref_out, ref_attn = encoder_layer_ref(x, mask, params)
    assert enc_out.shape == (B, L, d_model)
    assert attn.shape == (B, n_heads, L, L)
    assert jnp.allclose(attn, ref_attn, atol=2e-2, rtol=2e-2), "attn mismatch"
    assert jnp.allclose(enc_out, ref_out, atol=2e-2, rtol=2e-2), "output mismatch"

    print("KERNEL_OK")
</pallas_src>

<mosaic_0001>
module attributes {stable_mosaic.version = 11 : i64} {
  func.func @_attn_kernel(%arg0: i32, %arg1: i32, %arg2: memref<1x8x512xf32, #tpu.memory_space<vmem>>, %arg3: memref<512x256xbf16, #tpu.memory_space<vmem>>, %arg4: memref<1x8x8xi32, #tpu.memory_space<vmem>>, %arg5: memref<1x8x256xf32, #tpu.memory_space<vmem>>, %arg6: memref<1x4x8x8xf32, #tpu.memory_space<vmem>>) attributes {dimension_semantics = [#tpu.dimension_semantics<parallel>, #tpu.dimension_semantics<parallel>], iteration_bounds = array<i64: 2, 2>, scalar_prefetch = 0 : i64, scratch_operands = 0 : i64, tpu.core_type = #tpu.core_type<tc>, window_params = [{transform_indices = @transform_0, window_bounds = array<i64: 1, 8, 512>}, {transform_indices = @transform_1, window_bounds = array<i64: 512, 256>}, {transform_indices = @transform_2, window_bounds = array<i64: 1, 8, 8>}, {transform_indices = @transform_3, window_bounds = array<i64: 1, 8, 256>}, {transform_indices = @transform_4, window_bounds = array<i64: 1, 4, 8, 8>}]} {
    %c0 = arith.constant 0 : index
    %c0_0 = arith.constant 0 : index
    %c0_1 = arith.constant 0 : index
    %0 = vector.load %arg2[%c0, %c0_0, %c0_1] : memref<1x8x512xf32, #tpu.memory_space<vmem>>, vector<1x8x512xf32>
    %1 = vector.shape_cast %0 : vector<1x8x512xf32> to vector<8x512xf32>
    %2 = arith.truncf %1 : vector<8x512xf32> to vector<8x512xbf16>
    %c0_2 = arith.constant 0 : index
    %c0_3 = arith.constant 0 : index
    %3 = vector.load %arg3[%c0_2, %c0_3] : memref<512x256xbf16, #tpu.memory_space<vmem>>, vector<512x256xbf16>
    %cst = arith.constant dense<0.000000e+00> : vector<8x256xf32>
    %4 = tpu.matmul %2, %3, %cst {dimension_numbers = #tpu.dot_dimension_numbers<[1], [0], [0], [1], [0, 0, 1, 1], [], []>} : vector<8x512xbf16>, vector<512x256xbf16>, vector<8x256xf32> -> vector<8x256xf32>
    %c0_4 = arith.constant 0 : index
    %c0_5 = arith.constant 0 : index
    %c0_6 = arith.constant 0 : index
    %5 = vector.load %arg4[%c0_4, %c0_5, %c0_6] : memref<1x8x8xi32, #tpu.memory_space<vmem>>, vector<1x8x8xi32>
    %6 = vector.shape_cast %5 : vector<1x8x8xi32> to vector<8x8xi32>
    %7 = vector.extract_strided_slice %4 {offsets = [0, 0], sizes = [8, 64], strides = [1, 1]} : vector<8x256xf32> to vector<8x64xf32>
    %8 = arith.truncf %7 : vector<8x64xf32> to vector<8x64xbf16>
    %cst_7 = arith.constant dense<0.000000e+00> : vector<8x8xf32>
    %9 = tpu.matmul %8, %8, %cst_7 {dimension_numbers = #tpu.dot_dimension_numbers<[1], [1], [0], [0], [0, 0, 1, 0], [], []>} : vector<8x64xbf16>, vector<8x64xbf16>, vector<8x8xf32> -> vector<8x8xf32>
    %cst_8 = arith.constant 1.250000e-01 : f32
    %10 = vector.broadcast %cst_8 : f32 to vector<8x8xf32>
    %11 = arith.mulf %9, %10 : vector<8x8xf32>
    %c0_i32 = arith.constant 0 : i32
    %12 = vector.broadcast %c0_i32 : i32 to vector<8x8xi32>
    %13 = arith.cmpi ne, %6, %12 : vector<8x8xi32>
    %cst_9 = arith.constant -1.000000e+09 : f32
    %14 = vector.broadcast %cst_9 : f32 to vector<8x8xf32>
    %15 = arith.select %13, %14, %11 : vector<8x8xi1>, vector<8x8xf32>
    %cst_10 = arith.constant dense<0xFF800000> : vector<8xf32>
    %16 = vector.multi_reduction <maximumf>, %15, %cst_10 [1] : vector<8x8xf32> to vector<8xf32>
    %17 = vector.shape_cast %16 : vector<8xf32> to vector<8x1xf32>
    %18 = vector.broadcast %17 : vector<8x1xf32> to vector<8x8xf32>
    %19 = arith.subf %15, %18 : vector<8x8xf32>
    %20 = math.exp %19 : vector<8x8xf32>
    %cst_11 = arith.constant dense<0.000000e+00> : vector<8xf32>
    %21 = vector.multi_reduction <add>, %20, %cst_11 [1] : vector<8x8xf32> to vector<8xf32>
    %22 = vector.shape_cast %21 : vector<8xf32> to vector<8x1xf32>
    %23 = tpu.reciprocal %22 {approx = true} : vector<8x1xf32> -> vector<8x1xf32>
    %24 = vector.broadcast %23 : vector<8x1xf32> to vector<8x8xf32>
    %25 = arith.mulf %20, %24 : vector<8x8xf32>
    %26 = arith.truncf %25 : vector<8x8xf32> to vector<8x8xbf16>
    %cst_12 = arith.constant dense<0.000000e+00> : vector<8x64xf32>
    %27 = tpu.matmul %26, %8, %cst_12 {dimension_numbers = #tpu.dot_dimension_numbers<[1], [0], [0], [1], [0, 0, 1, 1], [], []>} : vector<8x8xbf16>, vector<8x64xbf16>, vector<8x64xf32> -> vector<8x64xf32>
    %c0_13 = arith.constant 0 : index
    %c0_14 = arith.constant 0 : index
    %c0_15 = arith.constant 0 : index
    %c0_16 = arith.constant 0 : index
    %28 = vector.load %arg6[%c0_13, %c0_14, %c0_15, %c0_16] : memref<1x4x8x8xf32, #tpu.memory_space<vmem>>, vector<1x1x8x8xf32>
    %29 = vector.shape_cast %28 : vector<1x1x8x8xf32> to vector<8x8xf32>
    %30 = vector.shape_cast %25 : vector<8x8xf32> to vector<1x1x8x8xf32>
    tpu.vector_store %arg6[%c0_13, %c0_14, %c0_15, %c0_16], %30 {strides = array<i32>} : memref<1x4x8x8xf32, #tpu.memory_space<vmem>>, vector<1x1x8x8xf32>,
    %31 = vector.extract_strided_slice %4 {offsets = [0, 64], sizes = [8, 64], strides = [1, 1]} : vector<8x256xf32> to vector<8x64xf32>
    %32 = arith.truncf %31 : vector<8x64xf32> to vector<8x64xbf16>
    %cst_17 = arith.constant dense<0.000000e+00> : vector<8x8xf32>
    %33 = tpu.matmul %32, %32, %cst_17 {dimension_numbers = #tpu.dot_dimension_numbers<[1], [1], [0], [0], [0, 0, 1, 0], [], []>} : vector<8x64xbf16>, vector<8x64xbf16>, vector<8x8xf32> -> vector<8x8xf32>
    %cst_18 = arith.constant 1.250000e-01 : f32
    %34 = vector.broadcast %cst_18 : f32 to vector<8x8xf32>
    %35 = arith.mulf %33, %34 : vector<8x8xf32>
    %c0_i32_19 = arith.constant 0 : i32
    %36 = vector.broadcast %c0_i32_19 : i32 to vector<8x8xi32>
    %37 = arith.cmpi ne, %6, %36 : vector<8x8xi32>
    %cst_20 = arith.constant -1.000000e+09 : f32
    %38 = vector.broadcast %cst_20 : f32 to vector<8x8xf32>
    %39 = arith.select %37, %38, %35 : vector<8x8xi1>, vector<8x8xf32>
    %cst_21 = arith.constant dense<0xFF800000> : vector<8xf32>
    %40 = vector.multi_reduction <maximumf>, %39, %cst_21 [1] : vector<8x8xf32> to vector<8xf32>
    %41 = vector.shape_cast %40 : vector<8xf32> to vector<8x1xf32>
    %42 = vector.broadcast %41 : vector<8x1xf32> to vector<8x8xf32>
    %43 = arith.subf %39, %42 : vector<8x8xf32>
    %44 = math.exp %43 : vector<8x8xf32>
    %cst_22 = arith.constant dense<0.000000e+00> : vector<8xf32>
    %45 = vector.multi_reduction <add>, %44, %cst_22 [1] : vector<8x8xf32> to vector<8xf32>
    %46 = vector.shape_cast %45 : vector<8xf32> to vector<8x1xf32>
    %47 = tpu.reciprocal %46 {approx = true} : vector<8x1xf32> -> vector<8x1xf32>
    %48 = vector.broadcast %47 : vector<8x1xf32> to vector<8x8xf32>
    %49 = arith.mulf %44, %48 : vector<8x8xf32>
    %50 = arith.truncf %49 : vector<8x8xf32> to vector<8x8xbf16>
    %cst_23 = arith.constant dense<0.000000e+00> : vector<8x64xf32>
    %51 = tpu.matmul %50, %32, %cst_23 {dimension_numbers = #tpu.dot_dimension_numbers<[1], [0], [0], [1], [0, 0, 1, 1], [], []>} : vector<8x8xbf16>, vector<8x64xbf16>, vector<8x64xf32> -> vector<8x64xf32>
    %c0_24 = arith.constant 0 : index
    %c1 = arith.constant 1 : index
    %c0_25 = arith.constant 0 : index
    %c0_26 = arith.constant 0 : index
    %52 = vector.load %arg6[%c0_24, %c1, %c0_25, %c0_26] : memref<1x4x8x8xf32, #tpu.memory_space<vmem>>, vector<1x1x8x8xf32>
    %53 = vector.shape_cast %52 : vector<1x1x8x8xf32> to vector<8x8xf32>
    %54 = vector.shape_cast %49 : vector<8x8xf32> to vector<1x1x8x8xf32>
    tpu.vector_store %arg6[%c0_24, %c1, %c0_25, %c0_26], %54 {strides = array<i32>} : memref<1x4x8x8xf32, #tpu.memory_space<vmem>>, vector<1x1x8x8xf32>,
    %55 = vector.extract_strided_slice %4 {offsets = [0, 128], sizes = [8, 64], strides = [1, 1]} : vector<8x256xf32> to vector<8x64xf32>
    %56 = arith.truncf %55 : vector<8x64xf32> to vector<8x64xbf16>
    %cst_27 = arith.constant dense<0.000000e+00> : vector<8x8xf32>
    %57 = tpu.matmul %56, %56, %cst_27 {dimension_numbers = #tpu.dot_dimension_numbers<[1], [1], [0], [0], [0, 0, 1, 0], [], []>} : vector<8x64xbf16>, vector<8x64xbf16>, vector<8x8xf32> -> vector<8x8xf32>
    %cst_28 = arith.constant 1.250000e-01 : f32
    %58 = vector.broadcast %cst_28 : f32 to vector<8x8xf32>
    %59 = arith.mulf %57, %58 : vector<8x8xf32>
    %c0_i32_29 = arith.constant 0 : i32
    %60 = vector.broadcast %c0_i32_29 : i32 to vector<8x8xi32>
    %61 = arith.cmpi ne, %6, %60 : vector<8x8xi32>
    %cst_30 = arith.constant -1.000000e+09 : f32
    %62 = vector.broadcast %cst_30 : f32 to vector<8x8xf32>
    %63 = arith.select %61, %62, %59 : vector<8x8xi1>, vector<8x8xf32>
    %cst_31 = arith.constant dense<0xFF800000> : vector<8xf32>
    %64 = vector.multi_reduction <maximumf>, %63, %cst_31 [1] : vector<8x8xf32> to vector<8xf32>
    %65 = vector.shape_cast %64 : vector<8xf32> to vector<8x1xf32>
    %66 = vector.broadcast %65 : vector<8x1xf32> to vector<8x8xf32>
    %67 = arith.subf %63, %66 : vector<8x8xf32>
    %68 = math.exp %67 : vector<8x8xf32>
    %cst_32 = arith.constant dense<0.000000e+00> : vector<8xf32>
    %69 = vector.multi_reduction <add>, %68, %cst_32 [1] : vector<8x8xf32> to vector<8xf32>
    %70 = vector.shape_cast %69 : vector<8xf32> to vector<8x1xf32>
    %71 = tpu.reciprocal %70 {approx = true} : vector<8x1xf32> -> vector<8x1xf32>
    %72 = vector.broadcast %71 : vector<8x1xf32> to vector<8x8xf32>
    %73 = arith.mulf %68, %72 : vector<8x8xf32>
    %74 = arith.truncf %73 : vector<8x8xf32> to vector<8x8xbf16>
    %cst_33 = arith.constant dense<0.000000e+00> : vector<8x64xf32>
    %75 = tpu.matmul %74, %56, %cst_33 {dimension_numbers = #tpu.dot_dimension_numbers<[1], [0], [0], [1], [0, 0, 1, 1], [], []>} : vector<8x8xbf16>, vector<8x64xbf16>, vector<8x64xf32> -> vector<8x64xf32>
    %c0_34 = arith.constant 0 : index
    %c2 = arith.constant 2 : index
    %c0_35 = arith.constant 0 : index
    %c0_36 = arith.constant 0 : index
    %76 = vector.load %arg6[%c0_34, %c2, %c0_35, %c0_36] : memref<1x4x8x8xf32, #tpu.memory_space<vmem>>, vector<1x1x8x8xf32>
    %77 = vector.shape_cast %76 : vector<1x1x8x8xf32> to vector<8x8xf32>
    %78 = vector.shape_cast %73 : vector<8x8xf32> to vector<1x1x8x8xf32>
    tpu.vector_store %arg6[%c0_34, %c2, %c0_35, %c0_36], %78 {strides = array<i32>} : memref<1x4x8x8xf32, #tpu.memory_space<vmem>>, vector<1x1x8x8xf32>,
    %79 = vector.extract_strided_slice %4 {offsets = [0, 192], sizes = [8, 64], strides = [1, 1]} : vector<8x256xf32> to vector<8x64xf32>
    %80 = arith.truncf %79 : vector<8x64xf32> to vector<8x64xbf16>
    %cst_37 = arith.constant dense<0.000000e+00> : vector<8x8xf32>
    %81 = tpu.matmul %80, %80, %cst_37 {dimension_numbers = #tpu.dot_dimension_numbers<[1], [1], [0], [0], [0, 0, 1, 0], [], []>} : vector<8x64xbf16>, vector<8x64xbf16>, vector<8x8xf32> -> vector<8x8xf32>
    %cst_38 = arith.constant 1.250000e-01 : f32
    %82 = vector.broadcast %cst_38 : f32 to vector<8x8xf32>
    %83 = arith.mulf %81, %82 : vector<8x8xf32>
    %c0_i32_39 = arith.constant 0 : i32
    %84 = vector.broadcast %c0_i32_39 : i32 to vector<8x8xi32>
    %85 = arith.cmpi ne, %6, %84 : vector<8x8xi32>
    %cst_40 = arith.constant -1.000000e+09 : f32
    %86 = vector.broadcast %cst_40 : f32 to vector<8x8xf32>
    %87 = arith.select %85, %86, %83 : vector<8x8xi1>, vector<8x8xf32>
    %cst_41 = arith.constant dense<0xFF800000> : vector<8xf32>
    %88 = vector.multi_reduction <maximumf>, %87, %cst_41 [1] : vector<8x8xf32> to vector<8xf32>
    %89 = vector.shape_cast %88 : vector<8xf32> to vector<8x1xf32>
    %90 = vector.broadcast %89 : vector<8x1xf32> to vector<8x8xf32>
    %91 = arith.subf %87, %90 : vector<8x8xf32>
    %92 = math.exp %91 : vector<8x8xf32>
    %cst_42 = arith.constant dense<0.000000e+00> : vector<8xf32>
    %93 = vector.multi_reduction <add>, %92, %cst_42 [1] : vector<8x8xf32> to vector<8xf32>
    %94 = vector.shape_cast %93 : vector<8xf32> to vector<8x1xf32>
    %95 = tpu.reciprocal %94 {approx = true} : vector<8x1xf32> -> vector<8x1xf32>
    %96 = vector.broadcast %95 : vector<8x1xf32> to vector<8x8xf32>
    %97 = arith.mulf %92, %96 : vector<8x8xf32>
    %98 = arith.truncf %97 : vector<8x8xf32> to vector<8x8xbf16>
    %cst_43 = arith.constant dense<0.000000e+00> : vector<8x64xf32>
    %99 = tpu.matmul %98, %80, %cst_43 {dimension_numbers = #tpu.dot_dimension_numbers<[1], [0], [0], [1], [0, 0, 1, 1], [], []>} : vector<8x8xbf16>, vector<8x64xbf16>, vector<8x64xf32> -> vector<8x64xf32>
    %c0_44 = arith.constant 0 : index
    %c3 = arith.constant 3 : index
    %c0_45 = arith.constant 0 : index
    %c0_46 = arith.constant 0 : index
    %100 = vector.load %arg6[%c0_44, %c3, %c0_45, %c0_46] : memref<1x4x8x8xf32, #tpu.memory_space<vmem>>, vector<1x1x8x8xf32>
    %101 = vector.shape_cast %100 : vector<1x1x8x8xf32> to vector<8x8xf32>
    %102 = vector.shape_cast %97 : vector<8x8xf32> to vector<1x1x8x8xf32>
    tpu.vector_store %arg6[%c0_44, %c3, %c0_45, %c0_46], %102 {strides = array<i32>} : memref<1x4x8x8xf32, #tpu.memory_space<vmem>>, vector<1x1x8x8xf32>,
    %103 = tpu.concatenate %27, %51, %75, %99 in 1 : vector<8x64xf32>, vector<8x64xf32>, vector<8x64xf32>, vector<8x64xf32> -> vector<8x256xf32>
    %c0_47 = arith.constant 0 : index
    %c0_48 = arith.constant 0 : index
    %c0_49 = arith.constant 0 : index
    %104 = vector.load %arg5[%c0_47, %c0_48, %c0_49] : memref<1x8x256xf32, #tpu.memory_space<vmem>>, vector<1x8x256xf32>
    %105 = vector.shape_cast %104 : vector<1x8x256xf32> to vector<8x256xf32>
    %106 = vector.shape_cast %103 : vector<8x256xf32> to vector<1x8x256xf32>
    tpu.vector_store %arg5[%c0_47, %c0_48, %c0_49], %106 {strides = array<i32>} : memref<1x8x256xf32, #tpu.memory_space<vmem>>, vector<1x8x256xf32>,
    return
  }
  func.func @transform_0(%arg0: i32, %arg1: i32) -> (i32, i32, i32) {
    %c0_i32 = arith.constant 0 : i32
    %c0_i32_0 = arith.constant 0 : i32
    %c0_i32_1 = arith.constant 0 : i32
    return %arg0, %c0_i32, %c0_i32_0 : i32, i32, i32
  }
  func.func @transform_1(%arg0: i32, %arg1: i32) -> (i32, i32) {
    %c0_i32 = arith.constant 0 : i32
    %c0_i32_0 = arith.constant 0 : i32
    return %c0_i32, %arg1 : i32, i32
  }
  func.func @transform_2(%arg0: i32, %arg1: i32) -> (i32, i32, i32) {
    %c0_i32 = arith.constant 0 : i32
    %c0_i32_0 = arith.constant 0 : i32
    %c0_i32_1 = arith.constant 0 : i32
    return %arg0, %c0_i32, %c0_i32_0 : i32, i32, i32
  }
  func.func @transform_3(%arg0: i32, %arg1: i32) -> (i32, i32, i32) {
    %c0_i32 = arith.constant 0 : i32
    %c0_i32_0 = arith.constant 0 : i32
    return %arg0, %c0_i32, %arg1 : i32, i32, i32
  }
  func.func @transform_4(%arg0: i32, %arg1: i32) -> (i32, i32, i32, i32) {
    %c0_i32 = arith.constant 0 : i32
    %c0_i32_0 = arith.constant 0 : i32
    %c0_i32_1 = arith.constant 0 : i32
    return %arg0, %arg1, %c0_i32, %c0_i32_0 : i32, i32, i32, i32
  }
}

module attributes {stable_mosaic.version = 11 : i64} {
  func.func @_mha_out_ffn_kernel(%arg0: i32, %arg1: memref<16x512xf32, #tpu.memory_space<vmem>>, %arg2: memref<16x512xf32, #tpu.memory_space<vmem>>, %arg3: memref<512x512xbf16, #tpu.memory_space<vmem>>, %arg4: memref<1x512xf32, #tpu.memory_space<vmem>>, %arg5: memref<1x512xf32, #tpu.memory_space<vmem>>, %arg6: memref<512x2048xbf16, #tpu.memory_space<vmem>>, %arg7: memref<2048x512xbf16, #tpu.memory_space<vmem>>, %arg8: memref<1x512xf32, #tpu.memory_space<vmem>>, %arg9: memref<1x512xf32, #tpu.memory_space<vmem>>, %arg10: memref<16x512xf32, #tpu.memory_space<vmem>>) attributes {dimension_semantics = [#tpu.dimension_semantics<parallel>], iteration_bounds = array<i64: 1>, scalar_prefetch = 0 : i64, scratch_operands = 0 : i64, tpu.core_type = #tpu.core_type<tc>, window_params = [{transform_indices = @transform_0, window_bounds = array<i64: 16, 512>}, {transform_indices = @transform_1, window_bounds = array<i64: 16, 512>}, {pipeline_mode = #tpu.pipeline_mode<synchronous>, transform_indices = @transform_2, window_bounds = array<i64: 512, 512>}, {pipeline_mode = #tpu.pipeline_mode<synchronous>, transform_indices = @transform_3, window_bounds = array<i64: 1, 512>}, {pipeline_mode = #tpu.pipeline_mode<synchronous>, transform_indices = @transform_4, window_bounds = array<i64: 1, 512>}, {pipeline_mode = #tpu.pipeline_mode<synchronous>, transform_indices = @transform_5, window_bounds = array<i64: 512, 2048>}, {pipeline_mode = #tpu.pipeline_mode<synchronous>, transform_indices = @transform_6, window_bounds = array<i64: 2048, 512>}, {pipeline_mode = #tpu.pipeline_mode<synchronous>, transform_indices = @transform_7, window_bounds = array<i64: 1, 512>}, {pipeline_mode = #tpu.pipeline_mode<synchronous>, transform_indices = @transform_8, window_bounds = array<i64: 1, 512>}, {transform_indices = @transform_9, window_bounds = array<i64: 16, 512>}]} {
    %c0 = arith.constant 0 : index
    %c0_0 = arith.constant 0 : index
    %0 = vector.load %arg1[%c0, %c0_0] : memref<16x512xf32, #tpu.memory_space<vmem>>, vector<16x512xf32>
    %1 = arith.truncf %0 : vector<16x512xf32> to vector<16x512xbf16>
    %c0_1 = arith.constant 0 : index
    %c0_2 = arith.constant 0 : index
    %2 = vector.load %arg3[%c0_1, %c0_2] : memref<512x512xbf16, #tpu.memory_space<vmem>>, vector<512x512xbf16>
    %cst = arith.constant dense<0.000000e+00> : vector<16x512xf32>
    %3 = tpu.matmul %1, %2, %cst {dimension_numbers = #tpu.dot_dimension_numbers<[1], [0], [0], [1], [0, 0, 1, 1], [], []>} : vector<16x512xbf16>, vector<512x512xbf16>, vector<16x512xf32> -> vector<16x512xf32>
    %c0_3 = arith.constant 0 : index
    %c0_4 = arith.constant 0 : index
    %4 = vector.load %arg2[%c0_3, %c0_4] : memref<16x512xf32, #tpu.memory_space<vmem>>, vector<16x512xf32>
    %5 = arith.addf %3, %4 : vector<16x512xf32>
    %cst_5 = arith.constant dense<0.000000e+00> : vector<16xf32>
    %6 = vector.multi_reduction <add>, %5, %cst_5 [1] : vector<16x512xf32> to vector<16xf32>
    %7 = vector.shape_cast %6 : vector<16xf32> to vector<16x1xf32>
    %cst_6 = arith.constant 5.120000e+02 : f32
    %8 = vector.broadcast %cst_6 : f32 to vector<16x1xf32>
    %9 = arith.divf %7, %8 : vector<16x1xf32>
    %10 = vector.broadcast %9 : vector<16x1xf32> to vector<16x512xf32>
    %11 = arith.subf %5, %10 : vector<16x512xf32>
    %12 = arith.mulf %11, %11 : vector<16x512xf32>
    %cst_7 = arith.constant dense<0.000000e+00> : vector<16xf32>
    %13 = vector.multi_reduction <add>, %12, %cst_7 [1] : vector<16x512xf32> to vector<16xf32>
    %14 = vector.shape_cast %13 : vector<16xf32> to vector<16x1xf32>
    %cst_8 = arith.constant 5.120000e+02 : f32
    %15 = vector.broadcast %cst_8 : f32 to vector<16x1xf32>
    %16 = arith.divf %14, %15 : vector<16x1xf32>
    %17 = vector.broadcast %9 : vector<16x1xf32> to vector<16x512xf32>
    %18 = arith.subf %5, %17 : vector<16x512xf32>
    %cst_9 = arith.constant 9.99999974E-6 : f32
    %19 = vector.broadcast %cst_9 : f32 to vector<16x1xf32>
    %20 = arith.addf %16, %19 : vector<16x1xf32>
    %21 = math.rsqrt %20 : vector<16x1xf32>
    %22 = vector.broadcast %21 : vector<16x1xf32> to vector<16x512xf32>
    %23 = arith.mulf %18, %22 : vector<16x512xf32>
    %c0_10 = arith.constant 0 : index
    %c0_11 = arith.constant 0 : index
    %24 = vector.load %arg4[%c0_10, %c0_11] : memref<1x512xf32, #tpu.memory_space<vmem>>, vector<1x512xf32>
    %25 = vector.broadcast %24 : vector<1x512xf32> to vector<16x512xf32>
    %26 = arith.mulf %23, %25 : vector<16x512xf32>
    %c0_12 = arith.constant 0 : index
    %c0_13 = arith.constant 0 : index
    %27 = vector.load %arg5[%c0_12, %c0_13] : memref<1x512xf32, #tpu.memory_space<vmem>>, vector<1x512xf32>
    %28 = vector.broadcast %27 : vector<1x512xf32> to vector<16x512xf32>
    %29 = arith.addf %26, %28 : vector<16x512xf32>
    %30 = arith.truncf %29 : vector<16x512xf32> to vector<16x512xbf16>
    %c0_14 = arith.constant 0 : index
    %c0_15 = arith.constant 0 : index
    %31 = vector.load %arg6[%c0_14, %c0_15] : memref<512x2048xbf16, #tpu.memory_space<vmem>>, vector<512x2048xbf16>
    %cst_16 = arith.constant dense<0.000000e+00> : vector<16x2048xf32>
    %32 = tpu.matmul %30, %31, %cst_16 {dimension_numbers = #tpu.dot_dimension_numbers<[1], [0], [0], [1], [0, 0, 1, 1], [], []>} : vector<16x512xbf16>, vector<512x2048xbf16>, vector<16x2048xf32> -> vector<16x2048xf32>
    %cst_17 = arith.constant 0.000000e+00 : f32
    %33 = vector.broadcast %cst_17 : f32 to vector<16x2048xf32>
    %34 = arith.maximumf %32, %33 : vector<16x2048xf32>
    %35 = arith.truncf %34 : vector<16x2048xf32> to vector<16x2048xbf16>
    %c0_18 = arith.constant 0 : index
    %c0_19 = arith.constant 0 : index
    %36 = vector.load %arg7[%c0_18, %c0_19] : memref<2048x512xbf16, #tpu.memory_space<vmem>>, vector<2048x512xbf16>
    %cst_20 = arith.constant dense<0.000000e+00> : vector<16x512xf32>
    %37 = tpu.matmul %35, %36, %cst_20 {dimension_numbers = #tpu.dot_dimension_numbers<[1], [0], [0], [1], [0, 0, 1, 1], [], []>} : vector<16x2048xbf16>, vector<2048x512xbf16>, vector<16x512xf32> -> vector<16x512xf32>
    %38 = arith.addf %37, %29 : vector<16x512xf32>
    %cst_21 = arith.constant dense<0.000000e+00> : vector<16xf32>
    %39 = vector.multi_reduction <add>, %38, %cst_21 [1] : vector<16x512xf32> to vector<16xf32>
    %40 = vector.shape_cast %39 : vector<16xf32> to vector<16x1xf32>
    %cst_22 = arith.constant 5.120000e+02 : f32
    %41 = vector.broadcast %cst_22 : f32 to vector<16x1xf32>
    %42 = arith.divf %40, %41 : vector<16x1xf32>
    %43 = vector.broadcast %42 : vector<16x1xf32> to vector<16x512xf32>
    %44 = arith.subf %38, %43 : vector<16x512xf32>
    %45 = arith.mulf %44, %44 : vector<16x512xf32>
    %cst_23 = arith.constant dense<0.000000e+00> : vector<16xf32>
    %46 = vector.multi_reduction <add>, %45, %cst_23 [1] : vector<16x512xf32> to vector<16xf32>
    %47 = vector.shape_cast %46 : vector<16xf32> to vector<16x1xf32>
    %cst_24 = arith.constant 5.120000e+02 : f32
    %48 = vector.broadcast %cst_24 : f32 to vector<16x1xf32>
    %49 = arith.divf %47, %48 : vector<16x1xf32>
    %50 = vector.broadcast %42 : vector<16x1xf32> to vector<16x512xf32>
    %51 = arith.subf %38, %50 : vector<16x512xf32>
    %cst_25 = arith.constant 9.99999974E-6 : f32
    %52 = vector.broadcast %cst_25 : f32 to vector<16x1xf32>
    %53 = arith.addf %49, %52 : vector<16x1xf32>
    %54 = math.rsqrt %53 : vector<16x1xf32>
    %55 = vector.broadcast %54 : vector<16x1xf32> to vector<16x512xf32>
    %56 = arith.mulf %51, %55 : vector<16x512xf32>
    %c0_26 = arith.constant 0 : index
    %c0_27 = arith.constant 0 : index
    %57 = vector.load %arg8[%c0_26, %c0_27] : memref<1x512xf32, #tpu.memory_space<vmem>>, vector<1x512xf32>
    %58 = vector.broadcast %57 : vector<1x512xf32> to vector<16x512xf32>
    %59 = arith.mulf %56, %58 : vector<16x512xf32>
    %c0_28 = arith.constant 0 : index
    %c0_29 = arith.constant 0 : index
    %60 = vector.load %arg9[%c0_28, %c0_29] : memref<1x512xf32, #tpu.memory_space<vmem>>, vector<1x512xf32>
    %61 = vector.broadcast %60 : vector<1x512xf32> to vector<16x512xf32>
    %62 = arith.addf %59, %61 : vector<16x512xf32>
    %c0_30 = arith.constant 0 : index
    %c0_31 = arith.constant 0 : index
    %63 = vector.load %arg10[%c0_30, %c0_31] : memref<16x512xf32, #tpu.memory_space<vmem>>, vector<16x512xf32>
    tpu.vector_store %arg10[%c0_30, %c0_31], %62 {strides = array<i32>} : memref<16x512xf32, #tpu.memory_space<vmem>>, vector<16x512xf32>,
    return
  }
  func.func @transform_0(%arg0: i32) -> (i32, i32) {
    %c0_i32 = arith.constant 0 : i32
    %c0_i32_0 = arith.constant 0 : i32
    return %arg0, %c0_i32 : i32, i32
  }
  func.func @transform_1(%arg0: i32) -> (i32, i32) {
    %c0_i32 = arith.constant 0 : i32
    %c0_i32_0 = arith.constant 0 : i32
    return %arg0, %c0_i32 : i32, i32
  }
  func.func @transform_2(%arg0: i32) -> (i32, i32) {
    %c0_i32 = arith.constant 0 : i32
    %c0_i32_0 = arith.constant 0 : i32
    %c0_i32_1 = arith.constant 0 : i32
    return %c0_i32, %c0_i32_0 : i32, i32
  }
  func.func @transform_3(%arg0: i32) -> (i32, i32) {
    %c0_i32 = arith.constant 0 : i32
    %c0_i32_0 = arith.constant 0 : i32
    %c0_i32_1 = arith.constant 0 : i32
    return %c0_i32, %c0_i32_0 : i32, i32
  }
  func.func @transform_4(%arg0: i32) -> (i32, i32) {
    %c0_i32 = arith.constant 0 : i32
    %c0_i32_0 = arith.constant 0 : i32
    %c0_i32_1 = arith.constant 0 : i32
    return %c0_i32, %c0_i32_0 : i32, i32
  }
  func.func @transform_5(%arg0: i32) -> (i32, i32) {
    %c0_i32 = arith.constant 0 : i32
    %c0_i32_0 = arith.constant 0 : i32
    %c0_i32_1 = arith.constant 0 : i32
    return %c0_i32, %c0_i32_0 : i32, i32
  }
  func.func @transform_6(%arg0: i32) -> (i32, i32) {
    %c0_i32 = arith.constant 0 : i32
    %c0_i32_0 = arith.constant 0 : i32
    %c0_i32_1 = arith.constant 0 : i32
    return %c0_i32, %c0_i32_0 : i32, i32
  }
  func.func @transform_7(%arg0: i32) -> (i32, i32) {
    %c0_i32 = arith.constant 0 : i32
    %c0_i32_0 = arith.constant 0 : i32
    %c0_i32_1 = arith.constant 0 : i32
    return %c0_i32, %c0_i32_0 : i32, i32
  }
  func.func @transform_8(%arg0: i32) -> (i32, i32) {
    %c0_i32 = arith.constant 0 : i32
    %c0_i32_0 = arith.constant 0 : i32
    %c0_i32_1 = arith.constant 0 : i32
    return %c0_i32, %c0_i32_0 : i32, i32
  }
  func.func @transform_9(%arg0: i32) -> (i32, i32) {
    %c0_i32 = arith.constant 0 : i32
    %c0_i32_0 = arith.constant 0 : i32
    return %arg0, %c0_i32 : i32, i32
  }
}

</mosaic_0001>

<llo_original>
// kernel: encoder_layer.2
$region0: #{encoder_layer.2}
  #allocation0 [shape = 'u32[]', space=smem, size = 0x4, offset = 0x4, fixed_abs, tag = 'smem constant byte address 0x4 - core index']
  #allocation1 [shape = 'u32[144,128]{1,0:T(1,128)}', space=vmem, size = 0x12000, scoped, tag = 'internal scratch']
  %s0 = inlined_call_operand.hbm [shape: f32[2,8,512], index: 0, kind: input, shape index: {}]
  %s1 = inlined_call_operand.vmem [shape: bf16[512,512], index: 1, kind: input, shape index: {}]
  %s2 = inlined_call_operand.vmem [shape: s32[2,8,8], index: 2, kind: input, shape index: {}]
  %s3 = inlined_call_operand.vmem [shape: f32[2,8,512], index: 3, kind: output, shape index: {0}]
  %s4 = inlined_call_operand.hbm [shape: f32[2,8,8,8], index: 4, kind: output, shape index: {1}]
  %5 = xla_tuple %s3, %s4
  %s6 = sld [smem:[#allocation0]]
  $region95: #{encoder_layer.2} parent=0
    _
  %s8 = ssub.s32 1, %s6
  %s9 = scalar_select 0, %s8, %s6
  $region1: #{encoder_layer.2} parent=0
    #allocation2 [shape = 'u8[32768]{0}', space=vmem, size = 0x8000, scoped, tag = 'input window, operand 0']
    #allocation3 [shape = 's32[2]{0}', space=sflag, size = 0x8, scoped, tag = 'scoped memory for encoder_layer.2']
    #allocation4 [shape = 's32[2]{0}', space=sflag, size = 0x8, scoped, tag = 'scoped memory for encoder_layer.2']
    #allocation5 [shape = 'u8[524288]{0}', space=vmem, size = 0x80000, scoped, tag = 'input window, operand 1']
    #allocation6 [shape = 'u8[32768]{0}', space=vmem, size = 0x8000, scoped, tag = 'output window, operand 1']
    %10 = vsyncpa [#allocation3], 0
    %s11 = scalar_lea.sflag [#allocation3], 1
    %12 = vsyncpa %s11, 0
    %13 = vsyncpa [#allocation4], 0
    %s14 = scalar_lea.sflag [#allocation4], 1
    %15 = vsyncpa %s14, 0
    loop: start=0, step=1, limit=6
    $region2: #{encoder_layer.2} parent=1 // loop_pre_header
      _
    $region3: #{encoder_layer.2} parent=1 // loop_header
      %s17 = sphi 0, %s21
      %p18 = scmp.ge.s32.totalorder %s17, 6
      %s24 = sphi 0, %s36
      %s25 = sphi 0, %s32
      %s26 = sphi 0, %s24
      %s27 = sphi 0, %s25
      %s28 = sphi 0, %s26
      %s29 = sphi 0, %s27
      %s39 = sphi 0, %s41
      %s42 = sphi 0, %s39
      %s43 = sphi 0, %s42
      %s59 = sphi 0, %s43
      %s65 = sphi 0, %s67
      %s68 = sphi 0, %s65
      %s69 = sphi 0, %s68
      %s85 = sphi 0, %s69
      %s91 = sphi 0, %s93
      %s94 = sphi 0, %s91
      %s95 = sphi 0, %s94
      %s111 = sphi 0, %s95
      %s119 = sphi 0, %s121
      %s122 = sphi 0, %s119
      %s123 = sphi 0, %s122
      %s139 = sphi 0, %s123
      %s147 = sphi 0, %s149
      %s150 = sphi 0, %s147
      %s151 = sphi 0, %s150
      %s167 = sphi 0, %s151
    $region4: #{encoder_layer.2} parent=1 // loop_header_branch
      %20 = sbr.rel (%p18) target = $region8
    $region5: #{encoder_layer.2} parent=1 // loop_body
      %s22 = ssub.s32 %s17, 1
      %s23 = ssub.s32 %s17, 2
      %s30 = sadd.s32 1, %s25
      %p31 = scmp.ge.s32.totalorder %s30, 2
      %s32 = scalar_select %p31, 0, %s30
      %s33 = sadd.s32 1, %s24
      %s34 = scalar_select %p31, %s33, %s24
      %p35 = scmp.ge.s32.totalorder %s34, 2
      %s36 = scalar_select %p35, 0, %s34
      %s37 = ssub.s32 %s24, %s36
      %p38 = scmp.eq.s32.totalorder %s37, 0
      %s40 = sadd.s32 %s39, 1
      %s41 = scalar_select %p38, %s39, %s40
      %p44 = pneg %p38
      %p45 = scmp.eq.s32.totalorder %s17, 3
      %p46 = por %p44, %p45
      %p47 = scmp.ne.s32.totalorder %s39, %s42
      %p48 = scmp.eq.s32.totalorder %s17, 0
      %p49 = por %p47, %p48
      %p50 = scmp.ne.s32.totalorder %s39, %s42
      %p51 = scmp.eq.s32.totalorder %s22, 3
      %p52 = por %p50, %p51
      %p53 = scmp.ne.s32.totalorder %s42, %s43
      %p54 = scmp.eq.s32.totalorder %s22, 0
      %p55 = por %p53, %p54
      %p56 = scmp.ne.s32.totalorder %s42, %s43
      %p57 = scmp.eq.s32.totalorder %s23, 3
      %p58 = por %p56, %p57
      %p60 = scmp.ne.s32.totalorder %s43, %s59
      %p61 = scmp.eq.s32.totalorder %s23, 0
      %p62 = por %p60, %p61
      %s63 = ssub.s32 %s25, %s32
      %p64 = scmp.eq.s32.totalorder %s63, 0
      %s66 = sadd.s32 %s65, 1
      %s67 = scalar_select %p64, %s65, %s66
      %p70 = pneg %p64
      %p71 = scmp.eq.s32.totalorder %s17, 3
      %p72 = por %p70, %p71
      %p73 = scmp.ne.s32.totalorder %s65, %s68
      %p74 = scmp.eq.s32.totalorder %s17, 0
      %p75 = por %p73, %p74
      %p76 = scmp.ne.s32.totalorder %s65, %s68
      %p77 = scmp.eq.s32.totalorder %s22, 3
      %p78 = por %p76, %p77
      %p79 = scmp.ne.s32.totalorder %s68, %s69
      %p80 = scmp.eq.s32.totalorder %s22, 0
      %p81 = por %p79, %p80
      %p82 = scmp.ne.s32.totalorder %s68, %s69
      %p83 = scmp.eq.s32.totalorder %s23, 3
      %p84 = por %p82, %p83
      %p86 = scmp.ne.s32.totalorder %s69, %s85
      %p87 = scmp.eq.s32.totalorder %s23, 0
      %p88 = por %p86, %p87
      %s89 = ssub.s32 %s24, %s36
      %p90 = scmp.eq.s32.totalorder %s89, 0
      %s92 = sadd.s32 %s91, 1
      %s93 = scalar_select %p90, %s91, %s92
      %p96 = pneg %p90
      %p97 = scmp.eq.s32.totalorder %s17, 3
      %p98 = por %p96, %p97
      %p99 = scmp.ne.s32.totalorder %s91, %s94
      %p100 = scmp.eq.s32.totalorder %s17, 0
      %p101 = por %p99, %p100
      %p102 = scmp.ne.s32.totalorder %s91, %s94
      %p103 = scmp.eq.s32.totalorder %s22, 3
      %p104 = por %p102, %p103
      %p105 = scmp.ne.s32.totalorder %s94, %s95
      %p106 = scmp.eq.s32.totalorder %s22, 0
      %p107 = por %p105, %p106
      %p108 = scmp.ne.s32.totalorder %s94, %s95
      %p109 = scmp.eq.s32.totalorder %s23, 3
      %p110 = por %p108, %p109
      %p112 = scmp.ne.s32.totalorder %s95, %s111
      %p113 = scmp.eq.s32.totalorder %s23, 0
      %p114 = por %p112, %p113
      %s115 = ssub.s32 %s24, %s36
      %s116 = ssub.s32 %s25, %s32
      %s117 = sor.u32 %s115, %s116
      %p118 = scmp.eq.s32.totalorder %s117, 0
      %s120 = sadd.s32 %s119, 1
      %s121 = scalar_select %p118, %s119, %s120
      %p124 = pneg %p118
      %p125 = scmp.eq.s32.totalorder %s17, 3
      %p126 = por %p124, %p125
      %p127 = scmp.ne.s32.totalorder %s119, %s122
      %p128 = scmp.eq.s32.totalorder %s17, 0
      %p129 = por %p127, %p128
      %p130 = scmp.ne.s32.totalorder %s119, %s122
      %p131 = scmp.eq.s32.totalorder %s22, 3
      %p132 = por %p130, %p131
      %p133 = scmp.ne.s32.totalorder %s122, %s123
      %p134 = scmp.eq.s32.totalorder %s22, 0
      %p135 = por %p133, %p134
      %p136 = scmp.ne.s32.totalorder %s122, %s123
      %p137 = scmp.eq.s32.totalorder %s23, 3
      %p138 = por %p136, %p137
      %p140 = scmp.ne.s32.totalorder %s123, %s139
      %p141 = scmp.eq.s32.totalorder %s23, 0
      %p142 = por %p140, %p141
      %s143 = ssub.s32 %s24, %s36
      %s144 = ssub.s32 %s25, %s32
      %s145 = sor.u32 %s143, %s144
      %p146 = scmp.eq.s32.totalorder %s145, 0
      %s148 = sadd.s32 %s147, 1
      %s149 = scalar_select %p146, %s147, %s148
      %p152 = pneg %p146
      %p153 = scmp.eq.s32.totalorder %s17, 3
      %p154 = por %p152, %p153
      %p155 = scmp.ne.s32.totalorder %s147, %s150
      %p156 = scmp.eq.s32.totalorder %s17, 0
      %p157 = por %p155, %p156
      %p158 = scmp.ne.s32.totalorder %s147, %s150
      %p159 = scmp.eq.s32.totalorder %s22, 3
      %p160 = por %p158, %p159
      %p161 = scmp.ne.s32.totalorder %s150, %s151
      %p162 = scmp.eq.s32.totalorder %s22, 0
      %p163 = por %p161, %p162
      %p164 = scmp.ne.s32.totalorder %s150, %s151
      %p165 = scmp.eq.s32.totalorder %s23, 3
      %p166 = por %p164, %p165
      %p168 = scmp.ne.s32.totalorder %s151, %s167
      %p169 = scmp.eq.s32.totalorder %s23, 0
      %p170 = por %p168, %p169
      %p171 = scmp.le.s32.totalorder 1, %s17
      %p172 = scmp.lt.s32.totalorder %s17, 5
      %p173 = pnand %p171, %p172
      %p174 = pneg %p173
      // Predicated region
      $region9: #{encoder_layer.2} parent=5 // pred_check
        _
      $region10: #{encoder_layer.2} parent=5 // pred_check_branch
        %176 = sbr.rel (%p173) target = $region12
      $region11: #{encoder_layer.2} parent=5 // pred_region
        %s177 = ssub.s32 %s17, 1
      $region12: #{encoder_layer.2} parent=5 // pred_fallthru
        _
      %p178 = scmp.lt.s32.totalorder %s17, 4
      // Predicated region
      $region13: #{encoder_layer.2} parent=5 // pred_check
        %p179 = pneg %p178
      $region14: #{encoder_layer.2} parent=5 // pred_check_branch
        %181 = sbr.rel (%p179) target = $region16
      $region15: #{encoder_layer.2} parent=5 // pred_region
        // Predicated region
        $region17: #{encoder_layer.2} parent=15 // pred_check
          %p182 = pneg %p49
        $region18: #{encoder_layer.2} parent=15 // pred_check_branch
          %184 = sbr.rel (%p182) target = $region20
        $region19: #{encoder_layer.2} parent=15 // pred_region
          %s185 = sand.u32 %s39, 1
          %s186 = scalar_lea.sflag [#allocation3], %s185
          %s187 = sand.u32 %s39, 1
          %s188 = smul.addr %s187, 32
          %s189 = scalar_lea.vmem [#allocation2], %s188
          %s191 = ssub.s32 512, 512
          %192 = vsyncadd %s186, %s191
          %s193 = smul.addr %s24, 4
          %s194 = smul.addr %s193, 128
          %s195 = scalar_lea.hbm %s0, %s194
          %s197 = sshll.u32 %s189, 4
          %s198 = int_to_ptr.vmem [resolvable:$true] %s197
          %200 = dma.hbm_to_vmem [thread:$0]  %s195, 512, %s198, %s186
        $region20: #{encoder_layer.2} parent=15 // pred_fallthru
          _
        // Predicated region
        $region21: #{encoder_layer.2} parent=15 // pred_check
          %p201 = pneg %p75
        $region22: #{encoder_layer.2} parent=15 // pred_check_branch
          %203 = sbr.rel (%p201) target = $region24
        $region23: #{encoder_layer.2} parent=15 // pred_region
          %s204 = sand.u32 %s65, 1
          %s205 = sand.u32 %s65, 1
          %s206 = smul.addr %s205, 512
          %s207 = scalar_lea.vmem [#allocation5], %s206
          %s208 = smul.u32 2, %s25
          %s209 = smul.addr %s208, 4
          %s210 = scalar_lea.vmem %s1, %s209
          // Predicated region
          $region25: #{encoder_layer.2} parent=23 // pred_check
            _
          $region26: #{encoder_layer.2} parent=23 // pred_check_branch
            %212 = sbr.rel (0) target = $region28
          $region27: #{encoder_layer.2} parent=23 // pred_region
            // Predicated region
            $region29: #{encoder_layer.2} parent=27 // pred_check
              _
            $region30: #{encoder_layer.2} parent=27 // pred_check_branch
              %214 = sbr.rel (0) target = $region32
            $region31: #{encoder_layer.2} parent=27 // pred_region
              // Predicated region
              $region44: #{encoder_layer.2} parent=31 // pred_check
                _
              $region45: #{encoder_layer.2} parent=31 // pred_check_branch
                %355 = sbr.rel (0) target = $region47
              $region46: #{encoder_layer.2} parent=31 // pred_region
                loop: start=0, step=1, limit=1
                $region48: #{encoder_layer.2} parent=46 // loop_pre_header
                  _
                $region49: #{encoder_layer.2} parent=46 // loop_header
                  %s357 = sphi 0, %s361
                  %p358 = scmp.ge.s32.totalorder %s357, 1
                  %s362 = sphi %s210, %s210
                  %s363 = sphi %s207, %s207
                $region50: #{encoder_layer.2} parent=46 // loop_header_branch
                  %360 = sbr.rel (%p358) target = $region54
                $region51: #{encoder_layer.2} parent=46 // loop_body
                  %v364 = vld [vmem:[%s362] sm:$0xff]
                  %365 = vst [vmem:[%s363] sm:$0xff] %v364
                  %v366 = vld [vmem:[%s362 + $0x10] sm:$0xff]
                  %367 = vst [vmem:[%s363 + $0x8] sm:$0xff] %v366
                  %v368 = vld [vmem:[%s362 + $0x20] sm:$0xff]
                  %369 = vst [vmem:[%s363 + $0x10] sm:$0xff] %v368
                  %v370 = vld [vmem:[%s362 + $0x30] sm:$0xff]
                  %371 = vst [vmem:[%s363 + $0x18] sm:$0xff] %v370
                  %v372 = vld [vmem:[%s362 + $0x40] sm:$0xff]
                  %373 = vst [vmem:[%s363 + $0x20] sm:$0xff] %v372
                  %v374 = vld [vmem:[%s362 + $0x50] sm:$0xff]
                  %375 = vst [vmem:[%s363 + $0x28] sm:$0xff] %v374
                  %v376 = vld [vmem:[%s362 + $0x60] sm:$0xff]
                  %377 = vst [vmem:[%s363 + $0x30] sm:$0xff] %v376
                  %v378 = vld [vmem:[%s362 + $0x70] sm:$0xff]
                  %379 = vst [vmem:[%s363 + $0x38] sm:$0xff] %v378
                  %v380 = vld [vmem:[%s362 + $0x80] sm:$0xff]
                  %381 = vst [vmem:[%s363 + $0x40] sm:$0xff] %v380
                  %v382 = vld [vmem:[%s362 + $0x90] sm:$0xff]
                  %383 = vst [vmem:[%s363 + $0x48] sm:$0xff] %v382
                  %v384 = vld [vmem:[%s362 + $0xa0] sm:$0xff]
                  %385 = vst [vmem:[%s363 + $0x50] sm:$0xff] %v384
                  %v386 = vld [vmem:[%s362 + $0xb0] sm:$0xff]
                  %387 = vst [vmem:[%s363 + $0x58] sm:$0xff] %v386
                  %v388 = vld [vmem:[%s362 + $0xc0] sm:$0xff]
                  %389 = vst [vmem:[%s363 + $0x60] sm:$0xff] %v388
                  %v390 = vld [vmem:[%s362 + $0xd0] sm:$0xff]
                  %391 = vst [vmem:[%s363 + $0x68] sm:$0xff] %v390
                  %v392 = vld [vmem:[%s362 + $0xe0] sm:$0xff]
                  %393 = vst [vmem:[%s363 + $0x70] sm:$0xff] %v392
                  %v394 = vld [vmem:[%s362 + $0xf0] sm:$0xff]
                  %395 = vst [vmem:[%s363 + $0x78] sm:$0xff] %v394
                  %v396 = vld [vmem:[%s362 + $0x100] sm:$0xff]
                  %397 = vst [vmem:[%s363 + $0x80] sm:$0xff] %v396
                  %v398 = vld [vmem:[%s362 + $0x110] sm:$0xff]
                  %399 = vst [vmem:[%s363 + $0x88] sm:$0xff] %v398
                  %v400 = vld [vmem:[%s362 + $0x120] sm:$0xff]
                  %401 = vst [vmem:[%s363 + $0x90] sm:$0xff] %v400
                  %v402 = vld [vmem:[%s362 + $0x130] sm:$0xff]
                  %403 = vst [vmem:[%s363 + $0x98] sm:$0xff] %v402
                  %v404 = vld [vmem:[%s362 + $0x140] sm:$0xff]
                  %405 = vst [vmem:[%s363 + $0xa0] sm:$0xff] %v404
                  %v406 = vld [vmem:[%s362 + $0x150] sm:$0xff]
                  %407 = vst [vmem:[%s363 + $0xa8] sm:$0xff] %v406
                  %v408 = vld [vmem:[%s362 + $0x160] sm:$0xff]
                  %409 = vst [vmem:[%s363 + $0xb0] sm:$0xff] %v408
                  %v410 = vld [vmem:[%s362 + $0x170] sm:$0xff]
                  %411 = vst [vmem:[%s363 + $0xb8] sm:$0xff] %v410
                  %v412 = vld [vmem:[%s362 + $0x180] sm:$0xff]
                  %413 = vst [vmem:[%s363 + $0xc0] sm:$0xff] %v412
                  %v414 = vld [vmem:[%s362 + $0x190] sm:$0xff]
                  %415 = vst [vmem:[%s363 + $0xc8] sm:$0xff] %v414
                  %v416 = vld [vmem:[%s362 + $0x1a0] sm:$0xff]
                  %417 = vst [vmem:[%s363 + $0xd0] sm:$0xff] %v416
                  %v418 = vld [vmem:[%s362 + $0x1b0] sm:$0xff]
                  %419 = vst [vmem:[%s363 + $0xd8] sm:$0xff] %v418
                  %v420 = vld [vmem:[%s362 + $0x1c0] sm:$0xff]
                  %421 = vst [vmem:[%s363 + $0xe0] sm:$0xff] %v420
                  %v422 = vld [vmem:[%s362 + $0x1d0] sm:$0xff]
                  %423 = vst [vmem:[%s363 + $0xe8] sm:$0xff] %v422
                  %v424 = vld [vmem:[%s362 + $0x1e0] sm:$0xff]
                  %425 = vst [vmem:[%s363 + $0xf0] sm:$0xff] %v424
                  %v426 = vld [vmem:[%s362 + $0x1f0] sm:$0xff]
                  %427 = vst [vmem:[%s363 + $0xf8] sm:$0xff] %v426
                  %v428 = vld [vmem:[%s362 + $0x200] sm:$0xff]
                  %429 = vst [vmem:[%s363 + $0x100] sm:$0xff] %v428
                  %v430 = vld [vmem:[%s362 + $0x210] sm:$0xff]
                  %431 = vst [vmem:[%s363 + $0x108] sm:$0xff] %v430
                  %v432 = vld [vmem:[%s362 + $0x220] sm:$0xff]
                  %433 = vst [vmem:[%s363 + $0x110] sm:$0xff] %v432
                  %v434 = vld [vmem:[%s362 + $0x230] sm:$0xff]
                  %435 = vst [vmem:[%s363 + $0x118] sm:$0xff] %v434
                  %v436 = vld [vmem:[%s362 + $0x240] sm:$0xff]
                  %437 = vst [vmem:[%s363 + $0x120] sm:$0xff] %v436
                  %v438 = vld [vmem:[%s362 + $0x250] sm:$0xff]
                  %439 = vst [vmem:[%s363 + $0x128] sm:$0xff] %v438
                  %v440 = vld [vmem:[%s362 + $0x260] sm:$0xff]
                  %441 = vst [vmem:[%s363 + $0x130] sm:$0xff] %v440
                  %v442 = vld [vmem:[%s362 + $0x270] sm:$0xff]
                  %443 = vst [vmem:[%s363 + $0x138] sm:$0xff] %v442
                  %v444 = vld [vmem:[%s362 + $0x280] sm:$0xff]
                  %445 = vst [vmem:[%s363 + $0x140] sm:$0xff] %v444
                  %v446 = vld [vmem:[%s362 + $0x290] sm:$0xff]
                  %447 = vst [vmem:[%s363 + $0x148] sm:$0xff] %v446
                  %v448 = vld [vmem:[%s362 + $0x2a0] sm:$0xff]
                  %449 = vst [vmem:[%s363 + $0x150] sm:$0xff] %v448
                  %v450 = vld [vmem:[%s362 + $0x2b0] sm:$0xff]
                  %451 = vst [vmem:[%s363 + $0x158] sm:$0xff] %v450
                  %v452 = vld [vmem:[%s362 + $0x2c0] sm:$0xff]
                  %453 = vst [vmem:[%s363 + $0x160] sm:$0xff] %v452
                  %v454 = vld [vmem:[%s362 + $0x2d0] sm:$0xff]
                  %455 = vst [vmem:[%s363 + $0x168] sm:$0xff] %v454
                  %v456 = vld [vmem:[%s362 + $0x2e0] sm:$0xff]
                  %457 = vst [vmem:[%s363 + $0x170] sm:$0xff] %v456
                  %v458 = vld [vmem:[%s362 + $0x2f0] sm:$0xff]
                  %459 = vst [vmem:[%s363 + $0x178] sm:$0xff] %v458
                  %v460 = vld [vmem:[%s362 + $0x300] sm:$0xff]
                  %461 = vst [vmem:[%s363 + $0x180] sm:$0xff] %v460
                  %v462 = vld [vmem:[%s362 + $0x310] sm:$0xff]
                  %463 = vst [vmem:[%s363 + $0x188] sm:$0xff] %v462
                  %v464 = vld [vmem:[%s362 + $0x320] sm:$0xff]
                  %465 = vst [vmem:[%s363 + $0x190] sm:$0xff] %v464
                  %v466 = vld [vmem:[%s362 + $0x330] sm:$0xff]
                  %467 = vst [vmem:[%s363 + $0x198] sm:$0xff] %v466
                  %v468 = vld [vmem:[%s362 + $0x340] sm:$0xff]
                  %469 = vst [vmem:[%s363 + $0x1a0] sm:$0xff] %v468
                  %v470 = vld [vmem:[%s362 + $0x350] sm:$0xff]
                  %471 = vst [vmem:[%s363 + $0x1a8] sm:$0xff] %v470
                  %v472 = vld [vmem:[%s362 + $0x360] sm:$0xff]
                  %473 = vst [vmem:[%s363 + $0x1b0] sm:$0xff] %v472
                  %v474 = vld [vmem:[%s362 + $0x370] sm:$0xff]
                  %475 = vst [vmem:[%s363 + $0x1b8] sm:$0xff] %v474
                  %v476 = vld [vmem:[%s362 + $0x380] sm:$0xff]
                  %477 = vst [vmem:[%s363 + $0x1c0] sm:$0xff] %v476
                  %v478 = vld [vmem:[%s362 + $0x390] sm:$0xff]
                  %479 = vst [vmem:[%s363 + $0x1c8] sm:$0xff] %v478
                  %v480 = vld [vmem:[%s362 + $0x3a0] sm:$0xff]
                  %481 = vst [vmem:[%s363 + $0x1d0] sm:$0xff] %v480
                  %v482 = vld [vmem:[%s362 + $0x3b0] sm:$0xff]
                  %483 = vst [vmem:[%s363 + $0x1d8] sm:$0xff] %v482
                  %v484 = vld [vmem:[%s362 + $0x3c0] sm:$0xff]
                  %485 = vst [vmem:[%s363 + $0x1e0] sm:$0xff] %v484
                  %v486 = vld [vmem:[%s362 + $0x3d0] sm:$0xff]
                  %487 = vst [vmem:[%s363 + $0x1e8] sm:$0xff] %v486
                  %v488 = vld [vmem:[%s362 + $0x3e0] sm:$0xff]
                  %489 = vst [vmem:[%s363 + $0x1f0] sm:$0xff] %v488
                  %v490 = vld [vmem:[%s362 + $0x3f0] sm:$0xff]
                  %491 = vst [vmem:[%s363 + $0x1f8] sm:$0xff] %v490
                $region52: #{encoder_layer.2} parent=46 // loop_footer
                  %s361 = sadd.s32 1, %s357
                $region53: #{encoder_layer.2} parent=46 // loop_footer_branch
                  %356 = sbr.rel target = $region49
                $region54: #{encoder_layer.2} parent=46 // loop_exit
                  _
              $region47: #{encoder_layer.2} parent=31 // pred_fallthru
                _
              // Predicated region
              $region55: #{encoder_layer.2} parent=31 // pred_check
                _
              $region56: #{encoder_layer.2} parent=31 // pred_check_branch
                %493 = sbr.rel target = $region58
              $region57: #{encoder_layer.2} parent=31 // pred_region
                _
              $region58: #{encoder_layer.2} parent=31 // pred_fallthru
                _
            $region32: #{encoder_layer.2} parent=27 // pred_fallthru
              _
            // Predicated region
            $region33: #{encoder_layer.2} parent=27 // pred_check
              _
            $region34: #{encoder_layer.2} parent=27 // pred_check_branch
              %216 = sbr.rel target = $region36
            $region35: #{encoder_layer.2} parent=27 // pred_region
              loop: start=0, step=1, limit=1
              $region37: #{encoder_layer.2} parent=35 // loop_pre_header
                _
              $region38: #{encoder_layer.2} parent=35 // loop_header
                %s219 = sphi 0, %s223
                %p220 = scmp.ge.s32.totalorder %s219, 1
                %s224 = sphi %s210, %s210
                %s225 = sphi %s207, %s207
              $region39: #{encoder_layer.2} parent=35 // loop_header_branch
                %222 = sbr.rel (%p220) target = $region43
              $region40: #{encoder_layer.2} parent=35 // loop_body
                %v226 = vld [vmem:[%s224] sm:$0xff]
                %227 = vst [vmem:[%s225] sm:$0xff] %v226
                %v228 = vld [vmem:[%s224 + $0x10] sm:$0xff]
                %229 = vst [vmem:[%s225 + $0x8] sm:$0xff] %v228
                %v230 = vld [vmem:[%s224 + $0x20] sm:$0xff]
                %231 = vst [vmem:[%s225 + $0x10] sm:$0xff] %v230
                %v232 = vld [vmem:[%s224 + $0x30] sm:$0xff]
                %233 = vst [vmem:[%s225 + $0x18] sm:$0xff] %v232
                %v234 = vld [vmem:[%s224 + $0x40] sm:$0xff]
                %235 = vst [vmem:[%s225 + $0x20] sm:$0xff] %v234
                %v236 = vld [vmem:[%s224 + $0x50] sm:$0xff]
                %237 = vst [vmem:[%s225 + $0x28] sm:$0xff] %v236
                %v238 = vld [vmem:[%s224 + $0x60] sm:$0xff]
                %239 = vst [vmem:[%s225 + $0x30] sm:$0xff] %v238
                %v240 = vld [vmem:[%s224 + $0x70] sm:$0xff]
                %241 = vst [vmem:[%s225 + $0x38] sm:$0xff] %v240
                %v242 = vld [vmem:[%s224 + $0x80] sm:$0xff]
                %243 = vst [vmem:[%s225 + $0x40] sm:$0xff] %v242
                %v244 = vld [vmem:[%s224 + $0x90] sm:$0xff]
                %245 = vst [vmem:[%s225 + $0x48] sm:$0xff] %v244
                %v246 = vld [vmem:[%s224 + $0xa0] sm:$0xff]
                %247 = vst [vmem:[%s225 + $0x50] sm:$0xff] %v246
                %v248 = vld [vmem:[%s224 + $0xb0] sm:$0xff]
                %249 = vst [vmem:[%s225 + $0x58] sm:$0xff] %v248
                %v250 = vld [vmem:[%s224 + $0xc0] sm:$0xff]
                %251 = vst [vmem:[%s225 + $0x60] sm:$0xff] %v250
                %v252 = vld [vmem:[%s224 + $0xd0] sm:$0xff]
                %253 = vst [vmem:[%s225 + $0x68] sm:$0xff] %v252
                %v254 = vld [vmem:[%s224 + $0xe0] sm:$0xff]
                %255 = vst [vmem:[%s225 + $0x70] sm:$0xff] %v254
                %v256 = vld [vmem:[%s224 + $0xf0] sm:$0xff]
                %257 = vst [vmem:[%s225 + $0x78] sm:$0xff] %v256
                %v258 = vld [vmem:[%s224 + $0x100] sm:$0xff]
                %259 = vst [vmem:[%s225 + $0x80] sm:$0xff] %v258
                %v260 = vld [vmem:[%s224 + $0x110] sm:$0xff]
                %261 = vst [vmem:[%s225 + $0x88] sm:$0xff] %v260
                %v262 = vld [vmem:[%s224 + $0x120] sm:$0xff]
                %263 = vst [vmem:[%s225 + $0x90] sm:$0xff] %v262
                %v264 = vld [vmem:[%s224 + $0x130] sm:$0xff]
                %265 = vst [vmem:[%s225 + $0x98] sm:$0xff] %v264
                %v266 = vld [vmem:[%s224 + $0x140] sm:$0xff]
                %267 = vst [vmem:[%s225 + $0xa0] sm:$0xff] %v266
                %v268 = vld [vmem:[%s224 + $0x150] sm:$0xff]
                %269 = vst [vmem:[%s225 + $0xa8] sm:$0xff] %v268
                %v270 = vld [vmem:[%s224 + $0x160] sm:$0xff]
                %271 = vst [vmem:[%s225 + $0xb0] sm:$0xff] %v270
                %v272 = vld [vmem:[%s224 + $0x170] sm:$0xff]
                %273 = vst [vmem:[%s225 + $0xb8] sm:$0xff] %v272
                %v274 = vld [vmem:[%s224 + $0x180] sm:$0xff]
                %275 = vst [vmem:[%s225 + $0xc0] sm:$0xff] %v274
                %v276 = vld [vmem:[%s224 + $0x190] sm:$0xff]
                %277 = vst [vmem:[%s225 + $0xc8] sm:$0xff] %v276
                %v278 = vld [vmem:[%s224 + $0x1a0] sm:$0xff]
                %279 = vst [vmem:[%s225 + $0xd0] sm:$0xff] %v278
                %v280 = vld [vmem:[%s224 + $0x1b0] sm:$0xff]
                %281 = vst [vmem:[%s225 + $0xd8] sm:$0xff] %v280
                %v282 = vld [vmem:[%s224 + $0x1c0] sm:$0xff]
                %283 = vst [vmem:[%s225 + $0xe0] sm:$0xff] %v282
                %v284 = vld [vmem:[%s224 + $0x1d0] sm:$0xff]
                %285 = vst [vmem:[%s225 + $0xe8] sm:$0xff] %v284
                %v286 = vld [vmem:[%s224 + $0x1e0] sm:$0xff]
                %287 = vst [vmem:[%s225 + $0xf0] sm:$0xff] %v286
                %v288 = vld [vmem:[%s224 + $0x1f0] sm:$0xff]
                %289 = vst [vmem:[%s225 + $0xf8] sm:$0xff] %v288
                %v290 = vld [vmem:[%s224 + $0x200] sm:$0xff]
                %291 = vst [vmem:[%s225 + $0x100] sm:$0xff] %v290
                %v292 = vld [vmem:[%s224 + $0x210] sm:$0xff]
                %293 = vst [vmem:[%s225 + $0x108] sm:$0xff] %v292
                %v294 = vld [vmem:[%s224 + $0x220] sm:$0xff]
                %295 = vst [vmem:[%s225 + $0x110] sm:$0xff] %v294
                %v296 = vld [vmem:[%s224 + $0x230] sm:$0xff]
                %297 = vst [vmem:[%s225 + $0x118] sm:$0xff] %v296
                %v298 = vld [vmem:[%s224 + $0x240] sm:$0xff]
                %299 = vst [vmem:[%s225 + $0x120] sm:$0xff] %v298
                %v300 = vld [vmem:[%s224 + $0x250] sm:$0xff]
                %301 = vst [vmem:[%s225 + $0x128] sm:$0xff] %v300
                %v302 = vld [vmem:[%s224 + $0x260] sm:$0xff]
                %303 = vst [vmem:[%s225 + $0x130] sm:$0xff] %v302
                %v304 = vld [vmem:[%s224 + $0x270] sm:$0xff]
                %305 = vst [vmem:[%s225 + $0x138] sm:$0xff] %v304
                %v306 = vld [vmem:[%s224 + $0x280] sm:$0xff]
                %307 = vst [vmem:[%s225 + $0x140] sm:$0xff] %v306
                %v308 = vld [vmem:[%s224 + $0x290] sm:$0xff]
                %309 = vst [vmem:[%s225 + $0x148] sm:$0xff] %v308
                %v310 = vld [vmem:[%s224 + $0x2a0] sm:$0xff]
                %311 = vst [vmem:[%s225 + $0x150] sm:$0xff] %v310
                %v312 = vld [vmem:[%s224 + $0x2b0] sm:$0xff]
                %313 = vst [vmem:[%s225 + $0x158] sm:$0xff] %v312
                %v314 = vld [vmem:[%s224 + $0x2c0] sm:$0xff]
                %315 = vst [vmem:[%s225 + $0x160] sm:$0xff] %v314
                %v316 = vld [vmem:[%s224 + $0x2d0] sm:$0xff]
                %317 = vst [vmem:[%s225 + $0x168] sm:$0xff] %v316
                %v318 = vld [vmem:[%s224 + $0x2e0] sm:$0xff]
                %319 = vst [vmem:[%s225 + $0x170] sm:$0xff] %v318
                %v320 = vld [vmem:[%s224 + $0x2f0] sm:$0xff]
                %321 = vst [vmem:[%s225 + $0x178] sm:$0xff] %v320
                %v322 = vld [vmem:[%s224 + $0x300] sm:$0xff]
                %323 = vst [vmem:[%s225 + $0x180] sm:$0xff] %v322
                %v324 = vld [vmem:[%s224 + $0x310] sm:$0xff]
                %325 = vst [vmem:[%s225 + $0x188] sm:$0xff] %v324
                %v326 = vld [vmem:[%s224 + $0x320] sm:$0xff]
                %327 = vst [vmem:[%s225 + $0x190] sm:$0xff] %v326
                %v328 = vld [vmem:[%s224 + $0x330] sm:$0xff]
                %329 = vst [vmem:[%s225 + $0x198] sm:$0xff] %v328
                %v330 = vld [vmem:[%s224 + $0x340] sm:$0xff]
                %331 = vst [vmem:[%s225 + $0x1a0] sm:$0xff] %v330
                %v332 = vld [vmem:[%s224 + $0x350] sm:$0xff]
                %333 = vst [vmem:[%s225 + $0x1a8] sm:$0xff] %v332
                %v334 = vld [vmem:[%s224 + $0x360] sm:$0xff]
                %335 = vst [vmem:[%s225 + $0x1b0] sm:$0xff] %v334
                %v336 = vld [vmem:[%s224 + $0x370] sm:$0xff]
                %337 = vst [vmem:[%s225 + $0x1b8] sm:$0xff] %v336
                %v338 = vld [vmem:[%s224 + $0x380] sm:$0xff]
                %339 = vst [vmem:[%s225 + $0x1c0] sm:$0xff] %v338
                %v340 = vld [vmem:[%s224 + $0x390] sm:$0xff]
                %341 = vst [vmem:[%s225 + $0x1c8] sm:$0xff] %v340
                %v342 = vld [vmem:[%s224 + $0x3a0] sm:$0xff]
                %343 = vst [vmem:[%s225 + $0x1d0] sm:$0xff] %v342
                %v344 = vld [vmem:[%s224 + $0x3b0] sm:$0xff]
                %345 = vst [vmem:[%s225 + $0x1d8] sm:$0xff] %v344
                %v346 = vld [vmem:[%s224 + $0x3c0] sm:$0xff]
                %347 = vst [vmem:[%s225 + $0x1e0] sm:$0xff] %v346
                %v348 = vld [vmem:[%s224 + $0x3d0] sm:$0xff]
                %349 = vst [vmem:[%s225 + $0x1e8] sm:$0xff] %v348
                %v350 = vld [vmem:[%s224 + $0x3e0] sm:$0xff]
                %351 = vst [vmem:[%s225 + $0x1f0] sm:$0xff] %v350
                %v352 = vld [vmem:[%s224 + $0x3f0] sm:$0xff]
                %353 = vst [vmem:[%s225 + $0x1f8] sm:$0xff] %v352
              $region41: #{encoder_layer.2} parent=35 // loop_footer
                %s223 = sadd.s32 1, %s219
              $region42: #{encoder_layer.2} parent=35 // loop_footer_branch
                %218 = sbr.rel target = $region38
              $region43: #{encoder_layer.2} parent=35 // loop_exit
                _
            $region36: #{encoder_layer.2} parent=27 // pred_fallthru
              _
          $region28: #{encoder_layer.2} parent=23 // pred_fallthru
            _
          %494 = vnop
        $region24: #{encoder_layer.2} parent=15 // pred_fallthru
          _
        // Predicated region
        $region59: #{encoder_layer.2} parent=15 // pred_check
          %p495 = pneg %p101
        $region60: #{encoder_layer.2} parent=15 // pred_check_branch
          %497 = sbr.rel (%p495) target = $region62
        $region61: #{encoder_layer.2} parent=15 // pred_region
          %p498 = scmp.lt.s32.totalorder %s24, 1
          %s499 = scalar_select %p498, %s24, 1
          %s500 = smul.addr %s499, 8
          %s501 = scalar_lea.vmem %s2, %s500
        $region62: #{encoder_layer.2} parent=15 // pred_fallthru
          _
      $region16: #{encoder_layer.2} parent=5 // pred_fallthru
        _
      %p502 = scmp.le.s32.totalorder 1, %s17
      %p503 = scmp.lt.s32.totalorder %s17, 5
      %p504 = pnand %p502, %p503
      %p505 = pneg %p504
      // Predicated region
      $region63: #{encoder_layer.2} parent=5 // pred_check
        _
      $region64: #{encoder_layer.2} parent=5 // pred_check_branch
        %507 = sbr.rel (%p504) target = $region66
      $region65: #{encoder_layer.2} parent=5 // pred_region
        %s508 = ssub.s32 %s17, 1
        %s509 = sand.u32 %s42, 1
        %s510 = scalar_lea.sflag [#allocation3], %s509
        %s511 = sand.u32 %s42, 1
        %s512 = smul.addr %s511, 32
        %s513 = scalar_lea.vmem [#allocation2], %s512
        // Predicated region
        $region67: #{encoder_layer.2} parent=65 // pred_check
          %p514 = pneg %p55
        $region68: #{encoder_layer.2} parent=65 // pred_check_branch
          %516 = sbr.rel (%p514) target = $region70
        $region69: #{encoder_layer.2} parent=65 // pred_region
          %517 = dma.done %s510, 512
        $region70: #{encoder_layer.2} parent=65 // pred_fallthru
          _
        %s518 = sand.u32 %s68, 1
        %s519 = sand.u32 %s68, 1
        %s520 = smul.addr %s519, 512
        %s521 = scalar_lea.vmem [#allocation5], %s520
        // Predicated region
        $region71: #{encoder_layer.2} parent=65 // pred_check
          %p522 = pneg %p81
        $region72: #{encoder_layer.2} parent=65 // pred_check_branch
          %524 = sbr.rel (%p522) target = $region74
        $region73: #{encoder_layer.2} parent=65 // pred_region
          _
        $region74: #{encoder_layer.2} parent=65 // pred_fallthru
          _
        %s525 = sand.u32 %s42, 1
        %s526 = scalar_lea.sflag [#allocation3], %s525
        %s527 = sand.u32 %s42, 1
        %s528 = smul.addr %s527, 32
        %s529 = scalar_lea.vmem [#allocation2], %s528
        %p530 = pneg %p55
        %p531 = pneg %p52
        %s532 = sand.u32 %s68, 1
        %s533 = sand.u32 %s68, 1
        %s534 = smul.addr %s533, 512
        %s535 = scalar_lea.vmem [#allocation5], %s534
        %p536 = pneg %p81
        %p537 = pneg %p78
        %p538 = scmp.lt.s32.totalorder %s26, 1
        %s539 = scalar_select %p538, %s26, 1
        %s540 = smul.addr %s539, 8
        %s541 = scalar_lea.vmem %s2, %s540
        %p542 = pneg %p107
        %p543 = pneg %p104
        %p544 = pneg %p135
        %p545 = pneg %p132
        %s546 = smul.u32 2, %s27
        %p547 = scmp.lt.s32.totalorder %s26, 1
        %s548 = scalar_select %p547, %s26, 1
        %p549 = scmp.lt.s32.totalorder %s546, 3
        %s550 = scalar_select %p549, %s546, 3
        %s551 = smul.addr %s548, 4
        %s552 = sadd.s32 %s550, %s551
        %s553 = smul.addr %s552, 8
        %s554 = scalar_lea.vmem %s3, %s553
        %p555 = pneg %p163
        %p556 = pneg %p160
        %s557 = sand.u32 %s150, 1
        %s558 = scalar_lea.sflag [#allocation4], %s557
        %s559 = sand.u32 %s150, 1
        %s560 = smul.addr %s559, 32
        %s561 = scalar_lea.vmem [#allocation6], %s560
        %s562 = smul.u32 2, %s27
        %p563 = scmp.lt.s32.totalorder %s26, 1
        %s564 = scalar_select %p563, %s26, 1
        %s565 = smul.addr %s564, 8
        %s566 = scalar_lea.vmem %s2, %s565
        %s567 = smul.u32 2, %s27
        %p568 = scmp.lt.s32.totalorder %s26, 1
        %s569 = scalar_select %p568, %s26, 1
        %p570 = scmp.lt.s32.totalorder %s567, 3
        %s571 = scalar_select %p570, %s567, 3
        %s572 = smul.addr %s569, 4
        %s573 = sadd.s32 %s571, %s572
        %s574 = smul.addr %s573, 8
        %s575 = scalar_lea.vmem %s3, %s574
        %s576 = smul.u32 2, %s27
        %s577 = smul.u32 4, %s27
        %v579 = vld [vmem:[%s513] sm:$0xff]
        %v580 = vld [vmem:[%s513 + $0x8] sm:$0xff]
        %v581 = vld [vmem:[%s513 + $0x10] sm:$0xff]
        %v582 = vld [vmem:[%s513 + $0x18] sm:$0xff]
        %v583 = vpack.c.bf16 %v579, %v579
        %v584 = vpack.c.bf16 %v580, %v580
        %v585 = vpack.c.bf16 %v581, %v581
        %v586 = vpack.c.bf16 %v582, %v582
        %v587 = vld [vmem:[%s521] sm:$0xff]
        %v588 = vld [vmem:[%s521 + $0x8] sm:$0xff]
        %v589 = vld [vmem:[%s521 + $0x10] sm:$0xff]
        %v590 = vld [vmem:[%s521 + $0x18] sm:$0xff]
        %v591 = vld [vmem:[%s521 + $0x20] sm:$0xff]
        %v592 = vld [vmem:[%s521 + $0x28] sm:$0xff]
        %v593 = vld [vmem:[%s521 + $0x30] sm:$0xff]
        %v594 = vld [vmem:[%s521 + $0x38] sm:$0xff]
        %v595 = vld [vmem:[%s521 + $0x40] sm:$0xff]
        %v596 = vld [vmem:[%s521 + $0x48] sm:$0xff]
        %v597 = vld [vmem:[%s521 + $0x50] sm:$0xff]
        %v598 = vld [vmem:[%s521 + $0x58] sm:$0xff]
        %v599 = vld [vmem:[%s521 + $0x60] sm:$0xff]
        %v600 = vld [vmem:[%s521 + $0x68] sm:$0xff]
        %v601 = vld [vmem:[%s521 + $0x70] sm:$0xff]
        %v602 = vld [vmem:[%s521 + $0x78] sm:$0xff]
        %v603 = vld [vmem:[%s521 + $0x80] sm:$0xff]
        %v604 = vld [vmem:[%s521 + $0x88] sm:$0xff]
        %v605 = vld [vmem:[%s521 + $0x90] sm:$0xff]
        %v606 = vld [vmem:[%s521 + $0x98] sm:$0xff]
        %v607 = vld [vmem:[%s521 + $0xa0] sm:$0xff]
        %v608 = vld [vmem:[%s521 + $0xa8] sm:$0xff]
        %v609 = vld [vmem:[%s521 + $0xb0] sm:$0xff]
        %v610 = vld [vmem:[%s521 + $0xb8] sm:$0xff]
        %v611 = vld [vmem:[%s521 + $0xc0] sm:$0xff]
        %v612 = vld [vmem:[%s521 + $0xc8] sm:$0xff]
        %v613 = vld [vmem:[%s521 + $0xd0] sm:$0xff]
        %v614 = vld [vmem:[%s521 + $0xd8] sm:$0xff]
        %v615 = vld [vmem:[%s521 + $0xe0] sm:$0xff]
        %v616 = vld [vmem:[%s521 + $0xe8] sm:$0xff]
        %v617 = vld [vmem:[%s521 + $0xf0] sm:$0xff]
        %v618 = vld [vmem:[%s521 + $0xf8] sm:$0xff]
        %v619 = vld [vmem:[%s521 + $0x100] sm:$0xff]
        %v620 = vld [vmem:[%s521 + $0x108] sm:$0xff]
        %v621 = vld [vmem:[%s521 + $0x110] sm:$0xff]
        %v622 = vld [vmem:[%s521 + $0x118] sm:$0xff]
        %v623 = vld [vmem:[%s521 + $0x120] sm:$0xff]
        %v624 = vld [vmem:[%s521 + $0x128] sm:$0xff]
        %v625 = vld [vmem:[%s521 + $0x130] sm:$0xff]
        %v626 = vld [vmem:[%s521 + $0x138] sm:$0xff]
        %v627 = vld [vmem:[%s521 + $0x140] sm:$0xff]
        %v628 = vld [vmem:[%s521 + $0x148] sm:$0xff]
        %v629 = vld [vmem:[%s521 + $0x150] sm:$0xff]
        %v630 = vld [vmem:[%s521 + $0x158] sm:$0xff]
        %v631 = vld [vmem:[%s521 + $0x160] sm:$0xff]
        %v632 = vld [vmem:[%s521 + $0x168] sm:$0xff]
        %v633 = vld [vmem:[%s521 + $0x170] sm:$0xff]
        %v634 = vld [vmem:[%s521 + $0x178] sm:$0xff]
        %v635 = vld [vmem:[%s521 + $0x180] sm:$0xff]
        %v636 = vld [vmem:[%s521 + $0x188] sm:$0xff]
        %v637 = vld [vmem:[%s521 + $0x190] sm:$0xff]
        %v638 = vld [vmem:[%s521 + $0x198] sm:$0xff]
        %v639 = vld [vmem:[%s521 + $0x1a0] sm:$0xff]
        %v640 = vld [vmem:[%s521 + $0x1a8] sm:$0xff]
        %v641 = vld [vmem:[%s521 + $0x1b0] sm:$0xff]
        %v642 = vld [vmem:[%s521 + $0x1b8] sm:$0xff]
        %v643 = vld [vmem:[%s521 + $0x1c0] sm:$0xff]
        %v644 = vld [vmem:[%s521 + $0x1c8] sm:$0xff]
        %v645 = vld [vmem:[%s521 + $0x1d0] sm:$0xff]
        %v646 = vld [vmem:[%s521 + $0x1d8] sm:$0xff]
        %v647 = vld [vmem:[%s521 + $0x1e0] sm:$0xff]
        %v648 = vld [vmem:[%s521 + $0x1e8] sm:$0xff]
        %v649 = vld [vmem:[%s521 + $0x1f0] sm:$0xff]
        %v650 = vld [vmem:[%s521 + $0x1f8] sm:$0xff]
        %v715 = vunpack.c.l.b16 %v587
        %v716 = vunpack.c.h.b16 %v587
        %v717 = vunpack.c.l.b16 %v588
        %v718 = vunpack.c.h.b16 %v588
        %v719 = vunpack.c.l.b16 %v589
        %v720 = vunpack.c.h.b16 %v589
        %v721 = vunpack.c.l.b16 %v590
        %v722 = vunpack.c.h.b16 %v590
        %v723 = vunpack.c.l.b16 %v591
        %v724 = vunpack.c.h.b16 %v591
        %v725 = vunpack.c.l.b16 %v592
        %v726 = vunpack.c.h.b16 %v592
        %v727 = vunpack.c.l.b16 %v593
        %v728 = vunpack.c.h.b16 %v593
        %v729 = vunpack.c.l.b16 %v594
        %v730 = vunpack.c.h.b16 %v594
        %v731 = vunpack.c.l.b16 %v595
        %v732 = vunpack.c.h.b16 %v595
        %v733 = vunpack.c.l.b16 %v596
        %v734 = vunpack.c.h.b16 %v596
        %v735 = vunpack.c.l.b16 %v597
        %v736 = vunpack.c.h.b16 %v597
        %v737 = vunpack.c.l.b16 %v598
        %v738 = vunpack.c.h.b16 %v598
        %v739 = vunpack.c.l.b16 %v599
        %v740 = vunpack.c.h.b16 %v599
        %v741 = vunpack.c.l.b16 %v600
        %v742 = vunpack.c.h.b16 %v600
        %v743 = vunpack.c.l.b16 %v601
        %v744 = vunpack.c.h.b16 %v601
        %v745 = vunpack.c.l.b16 %v602
        %v746 = vunpack.c.h.b16 %v602
        %v747 = vunpack.c.l.b16 %v603
        %v748 = vunpack.c.h.b16 %v603
        %v749 = vunpack.c.l.b16 %v604
        %v750 = vunpack.c.h.b16 %v604
        %v751 = vunpack.c.l.b16 %v605
        %v752 = vunpack.c.h.b16 %v605
        %v753 = vunpack.c.l.b16 %v606
        %v754 = vunpack.c.h.b16 %v606
        %v755 = vunpack.c.l.b16 %v607
        %v756 = vunpack.c.h.b16 %v607
        %v757 = vunpack.c.l.b16 %v608
        %v758 = vunpack.c.h.b16 %v608
        %v759 = vunpack.c.l.b16 %v609
        %v760 = vunpack.c.h.b16 %v609
        %v761 = vunpack.c.l.b16 %v610
        %v762 = vunpack.c.h.b16 %v610
        %v763 = vunpack.c.l.b16 %v611
        %v764 = vunpack.c.h.b16 %v611
        %v765 = vunpack.c.l.b16 %v612
        %v766 = vunpack.c.h.b16 %v612
        %v767 = vunpack.c.l.b16 %v613
        %v768 = vunpack.c.h.b16 %v613
        %v769 = vunpack.c.l.b16 %v614
        %v770 = vunpack.c.h.b16 %v614
        %v771 = vunpack.c.l.b16 %v615
        %v772 = vunpack.c.h.b16 %v615
        %v773 = vunpack.c.l.b16 %v616
        %v774 = vunpack.c.h.b16 %v616
        %v775 = vunpack.c.l.b16 %v617
        %v776 = vunpack.c.h.b16 %v617
        %v777 = vunpack.c.l.b16 %v618
        %v778 = vunpack.c.h.b16 %v618
        %v779 = vunpack.c.l.b16 %v619
        %v780 = vunpack.c.h.b16 %v619
        %v781 = vunpack.c.l.b16 %v620
        %v782 = vunpack.c.h.b16 %v620
        %v783 = vunpack.c.l.b16 %v621
        %v784 = vunpack.c.h.b16 %v621
        %v785 = vunpack.c.l.b16 %v622
        %v786 = vunpack.c.h.b16 %v622
        %v787 = vunpack.c.l.b16 %v623
        %v788 = vunpack.c.h.b16 %v623
        %v789 = vunpack.c.l.b16 %v624
        %v790 = vunpack.c.h.b16 %v624
        %v791 = vunpack.c.l.b16 %v625
        %v792 = vunpack.c.h.b16 %v625
        %v793 = vunpack.c.l.b16 %v626
        %v794 = vunpack.c.h.b16 %v626
        %v795 = vunpack.c.l.b16 %v627
        %v796 = vunpack.c.h.b16 %v627
        %v797 = vunpack.c.l.b16 %v628
        %v798 = vunpack.c.h.b16 %v628
        %v799 = vunpack.c.l.b16 %v629
        %v800 = vunpack.c.h.b16 %v629
        %v801 = vunpack.c.l.b16 %v630
        %v802 = vunpack.c.h.b16 %v630
        %v803 = vunpack.c.l.b16 %v631
        %v804 = vunpack.c.h.b16 %v631
        %v805 = vunpack.c.l.b16 %v632
        %v806 = vunpack.c.h.b16 %v632
        %v807 = vunpack.c.l.b16 %v633
        %v808 = vunpack.c.h.b16 %v633
        %v809 = vunpack.c.l.b16 %v634
        %v810 = vunpack.c.h.b16 %v634
        %v811 = vunpack.c.l.b16 %v635
        %v812 = vunpack.c.h.b16 %v635
        %v813 = vunpack.c.l.b16 %v636
        %v814 = vunpack.c.h.b16 %v636
        %v815 = vunpack.c.l.b16 %v637
        %v816 = vunpack.c.h.b16 %v637
        %v817 = vunpack.c.l.b16 %v638
        %v818 = vunpack.c.h.b16 %v638
        %v819 = vunpack.c.l.b16 %v639
        %v820 = vunpack.c.h.b16 %v639
        %v821 = vunpack.c.l.b16 %v640
        %v822 = vunpack.c.h.b16 %v640
        %v823 = vunpack.c.l.b16 %v641
        %v824 = vunpack.c.h.b16 %v641
        %v825 = vunpack.c.l.b16 %v642
        %v826 = vunpack.c.h.b16 %v642
        %v827 = vunpack.c.l.b16 %v643
        %v828 = vunpack.c.h.b16 %v643
        %v829 = vunpack.c.l.b16 %v644
        %v830 = vunpack.c.h.b16 %v644
        %v831 = vunpack.c.l.b16 %v645
        %v832 = vunpack.c.h.b16 %v645
        %v833 = vunpack.c.l.b16 %v646
        %v834 = vunpack.c.h.b16 %v646
        %v835 = vunpack.c.l.b16 %v647
        %v836 = vunpack.c.h.b16 %v647
        %v837 = vunpack.c.l.b16 %v648
        %v838 = vunpack.c.h.b16 %v648
        %v839 = vunpack.c.l.b16 %v649
        %v840 = vunpack.c.h.b16 %v649
        %v841 = vunpack.c.l.b16 %v650
        %v842 = vunpack.c.h.b16 %v650
        %v843 = vpack.c.b16 %v717, %v715
        %v844 = vpack.c.b16 %v718, %v716
        %v845 = vpack.c.b16 %v721, %v719
        %v846 = vpack.c.b16 %v722, %v720
        %v847 = vpack.c.b16 %v725, %v723
        %v848 = vpack.c.b16 %v726, %v724
        %v849 = vpack.c.b16 %v729, %v727
        %v850 = vpack.c.b16 %v730, %v728
        %v851 = vpack.c.b16 %v733, %v731
        %v852 = vpack.c.b16 %v734, %v732
        %v853 = vpack.c.b16 %v737, %v735
        %v854 = vpack.c.b16 %v738, %v736
        %v855 = vpack.c.b16 %v741, %v739
        %v856 = vpack.c.b16 %v742, %v740
        %v857 = vpack.c.b16 %v745, %v743
        %v858 = vpack.c.b16 %v746, %v744
        %v859 = vpack.c.b16 %v749, %v747
        %v860 = vpack.c.b16 %v750, %v748
        %v861 = vpack.c.b16 %v753, %v751
        %v862 = vpack.c.b16 %v754, %v752
        %v863 = vpack.c.b16 %v757, %v755
        %v864 = vpack.c.b16 %v758, %v756
        %v865 = vpack.c.b16 %v761, %v759
        %v866 = vpack.c.b16 %v762, %v760
        %v867 = vpack.c.b16 %v765, %v763
        %v868 = vpack.c.b16 %v766, %v764
        %v869 = vpack.c.b16 %v769, %v767
        %v870 = vpack.c.b16 %v770, %v768
        %v871 = vpack.c.b16 %v773, %v771
        %v872 = vpack.c.b16 %v774, %v772
        %v873 = vpack.c.b16 %v777, %v775
        %v874 = vpack.c.b16 %v778, %v776
        %v875 = vpack.c.b16 %v781, %v779
        %v876 = vpack.c.b16 %v782, %v780
        %v877 = vpack.c.b16 %v785, %v783
        %v878 = vpack.c.b16 %v786, %v784
        %v879 = vpack.c.b16 %v789, %v787
        %v880 = vpack.c.b16 %v790, %v788
        %v881 = vpack.c.b16 %v793, %v791
        %v882 = vpack.c.b16 %v794, %v792
        %v883 = vpack.c.b16 %v797, %v795
        %v884 = vpack.c.b16 %v798, %v796
        %v885 = vpack.c.b16 %v801, %v799
        %v886 = vpack.c.b16 %v802, %v800
        %v887 = vpack.c.b16 %v805, %v803
        %v888 = vpack.c.b16 %v806, %v804
        %v889 = vpack.c.b16 %v809, %v807
        %v890 = vpack.c.b16 %v810, %v808
        %v891 = vpack.c.b16 %v813, %v811
        %v892 = vpack.c.b16 %v814, %v812
        %v893 = vpack.c.b16 %v817, %v815
        %v894 = vpack.c.b16 %v818, %v816
        %v895 = vpack.c.b16 %v821, %v819
        %v896 = vpack.c.b16 %v822, %v820
        %v897 = vpack.c.b16 %v825, %v823
        %v898 = vpack.c.b16 %v826, %v824
        %v899 = vpack.c.b16 %v829, %v827
        %v900 = vpack.c.b16 %v830, %v828
        %v901 = vpack.c.b16 %v833, %v831
        %v902 = vpack.c.b16 %v834, %v832
        %v903 = vpack.c.b16 %v837, %v835
        %v904 = vpack.c.b16 %v838, %v836
        %v905 = vpack.c.b16 %v841, %v839
        %v906 = vpack.c.b16 %v842, %v840
        %971 = vmatprep.subr.bf16.mxu0 %v844
        %972 = vmatpush1.bf16.msra.mxu0 %v843
        %973 = vmatprep.subr.bf16.mxu0 %v846
        %974 = vmatpush1.bf16.msra.mxu0 %v845
        %975 = vmatprep.subr.bf16.mxu0 %v848
        %976 = vmatpush1.bf16.msra.mxu0 %v847
        %977 = vmatprep.subr.bf16.mxu0 %v850
        %978 = vmatpush1.bf16.msra.mxu0 %v849
        %979 = vmatprep.subr.bf16.mxu0 %v852
        %980 = vmatpush1.bf16.msra.mxu0 %v851
        %981 = vmatprep.subr.bf16.mxu0 %v854
        %982 = vmatpush1.bf16.msra.mxu0 %v853
        %983 = vmatprep.subr.bf16.mxu0 %v856
        %984 = vmatpush1.bf16.msra.mxu0 %v855
        %985 = vmatprep.subr.bf16.mxu0 %v858
        %986 = vmatpush1.bf16.msra.mxu0 %v857
        %987 = vmatprep.subr.bf16.mxu0 %v860
        %988 = vmatpush1.bf16.msra.mxu0 %v859
        %989 = vmatprep.subr.bf16.mxu0 %v862
        %990 = vmatpush1.bf16.msra.mxu0 %v861
        %991 = vmatprep.subr.bf16.mxu0 %v864
        %992 = vmatpush1.bf16.msra.mxu0 %v863
        %993 = vmatprep.subr.bf16.mxu0 %v866
        %994 = vmatpush1.bf16.msra.mxu0 %v865
        %995 = vmatprep.subr.bf16.mxu0 %v868
        %996 = vmatpush1.bf16.msra.mxu0 %v867
        %997 = vmatprep.subr.bf16.mxu0 %v870
        %998 = vmatpush1.bf16.msra.mxu0 %v869
        %999 = vmatprep.subr.bf16.mxu0 %v872
        %1000 = vmatpush1.bf16.msra.mxu0 %v871
        %1001 = vmatprep.subr.bf16.mxu0 %v874
        %1002 = vmatpush1.bf16.msra.mxu0 %v873
        %1003 = vmatprep.mubr.bf16.mxu0 %v584
        %1004 = vmatmul.mubr.bf16.gmra.mrb[0].mxu0 %v583
        %v1005 = vpop.f32.mrb[0].mxu0
        %v1006 = vadd.f32 0.0, %v1005
        %v1007 = vpop.f32.mrb[0].mxu0
        %v1008 = vadd.f32 0.0, %v1007
        %v1009 = vpop.f32.mrb[0].mxu0
        %v1010 = vpop.f32.mrb[0].mxu0
        %1011 = vdwg.mxu0
        %1012 = vmatprep.subr.bf16.mxu0 %v876
        %1013 = vmatpush1.bf16.msra.mxu0 %v875
        %1014 = vmatprep.subr.bf16.mxu0 %v878
        %1015 = vmatpush1.bf16.msra.mxu0 %v877
        %1016 = vmatprep.subr.bf16.mxu0 %v880
        %1017 = vmatpush1.bf16.msra.mxu0 %v879
        %1018 = vmatprep.subr.bf16.mxu0 %v882
        %1019 = vmatpush1.bf16.msra.mxu0 %v881
        %1020 = vmatprep.subr.bf16.mxu0 %v884
        %1021 = vmatpush1.bf16.msra.mxu0 %v883
        %1022 = vmatprep.subr.bf16.mxu0 %v886
        %1023 = vmatpush1.bf16.msra.mxu0 %v885
        %1024 = vmatprep.subr.bf16.mxu0 %v888
        %1025 = vmatpush1.bf16.msra.mxu0 %v887
        %1026 = vmatprep.subr.bf16.mxu0 %v890
        %1027 = vmatpush1.bf16.msra.mxu0 %v889
        %1028 = vmatprep.subr.bf16.mxu0 %v892
        %1029 = vmatpush1.bf16.msra.mxu0 %v891
        %1030 = vmatprep.subr.bf16.mxu0 %v894
        %1031 = vmatpush1.bf16.msra.mxu0 %v893
        %1032 = vmatprep.subr.bf16.mxu0 %v896
        %1033 = vmatpush1.bf16.msra.mxu0 %v895
        %1034 = vmatprep.subr.bf16.mxu0 %v898
        %1035 = vmatpush1.bf16.msra.mxu0 %v897
        %1036 = vmatprep.subr.bf16.mxu0 %v900
        %1037 = vmatpush1.bf16.msra.mxu0 %v899
        %1038 = vmatprep.subr.bf16.mxu0 %v902
        %1039 = vmatpush1.bf16.msra.mxu0 %v901
        %1040 = vmatprep.subr.bf16.mxu0 %v904
        %1041 = vmatpush1.bf16.msra.mxu0 %v903
        %1042 = vmatprep.subr.bf16.mxu0 %v906
        %1043 = vmatpush1.bf16.msra.mxu0 %v905
        %1044 = vmatprep.mubr.bf16.mxu0 %v586
        %1045 = vmatmul.mubr.bf16.gmra.mrb[0].mxu0 %v585
        %v1046 = vpop.f32.mrb[0].mxu0
        %v1047 = vadd.f32 %v1006, %v1046
        %v1048 = vpop.f32.mrb[0].mxu0
        %v1049 = vadd.f32 %v1008, %v1048
        %v1050 = vpop.f32.mrb[0].mxu0
        %v1051 = vpop.f32.mrb[0].mxu0
        %1052 = vdwg.mxu0
        %v1053 = vld [vmem:[%s566] sm:$0xff]
        %v1054 = vpack.c.bf16 %v1047, %v1047
        %vm1055 = vcmask 523264
        %v1057 = vsel %vm1055, %v1054, 0
        %1059 = vmatprep.subr.bf16.mxu0 0
        %1060 = vmatpush1.bf16.xpose.msra.mxu0 %v1057
        %1061 = vmatprep.subr.bf16.mxu0 0
        %1062 = vmatpush1.bf16.xpose.msra.mxu0 0
        %1063 = vmatprep.subr.bf16.mxu0 0
        %1064 = vmatpush1.bf16.xpose.msra.mxu0 0
        %1065 = vmatprep.subr.bf16.mxu0 0
        %1066 = vmatpush1.bf16.xpose.msra.mxu0 0
        %1067 = vmatprep.subr.bf16.mxu0 0
        %1068 = vmatpush1.bf16.xpose.msra.mxu0 0
        %1069 = vmatprep.subr.bf16.mxu0 0
        %1070 = vmatpush1.bf16.xpose.msra.mxu0 0
        %1071 = vmatprep.subr.bf16.mxu0 0
        %1072 = vmatpush1.bf16.xpose.msra.mxu0 0
        %1073 = vmatprep.subr.bf16.mxu0 0
        %1074 = vmatpush1.bf16.xpose.msra.mxu0 0
        %1075 = vmatprep.subr.bf16.mxu0 0
        %1076 = vmatpush1.bf16.xpose.msra.mxu0 0
        %1077 = vmatprep.subr.bf16.mxu0 0
        %1078 = vmatpush1.bf16.xpose.msra.mxu0 0
        %1079 = vmatprep.subr.bf16.mxu0 0
        %1080 = vmatpush1.bf16.xpose.msra.mxu0 0
        %1081 = vmatprep.subr.bf16.mxu0 0
        %1082 = vmatpush1.bf16.xpose.msra.mxu0 0
        %1083 = vmatprep.subr.bf16.mxu0 0
        %1084 = vmatpush1.bf16.xpose.msra.mxu0 0
        %1085 = vmatprep.subr.bf16.mxu0 0
        %1086 = vmatpush1.bf16.xpose.msra.mxu0 0
        %1087 = vmatprep.subr.bf16.mxu0 0
        %1088 = vmatpush1.bf16.xpose.msra.mxu0 0
        %1089 = vmatprep.subr.bf16.mxu0 0
        %1090 = vmatpush1.bf16.xpose.msra.mxu0 0
        %1091 = vmatprep.mubr.bf16.mxu0 0
        %1092 = vmatmul.mubr.bf16.gmra.mrb[0].mxu0 %v1057
        %v1093 = vpop.f32.mrb[0].mxu0
        %v1094 = vadd.f32 0.0, %v1093
        %v1095 = vpop.f32.mrb[0].mxu0
        %v1096 = vpop.f32.mrb[0].mxu0
        %v1097 = vpop.f32.mrb[0].mxu0
        %1098 = vdwg.mxu0
        %v1099 = vmul.f32 %v1094, 0.125
        %vm1100 = vcmp.ne.s32.totalorder %v1053, 0
        %v1101 = vsel %vm1100, -1e+09, %v1099
        %vm1102 = vcmask 64512
        %v1103 = vsel %vm1102, %v1101, -inf
        %1104 = vmax.xlane.f32.xlu0 %v1103
        %v1105 = vpop.xlane.xlu0 %1104
        %v1106 = vsub.f32 %v1101, %v1105
        %v1107 = vmul.f32 %v1106, 1.442695
        %v1108 = vpow.pop %v1107
        %v1109 = vsel %vm1102, %v1108, 0.0
        %1110 = vadd.xlane.f32.xlu0 %v1109
        %v1111 = vpop.xlane.xlu0 %1110
        %v1112 = vrcp.pop %v1111
        %v1113 = vmul.f32 %v1108, %v1112
        %v1114 = vpack.c.bf16 %v1113, %v1113
        %v1116 = vsel %vm1102, %v1114, 0
        %vm1118 = vcmask 1043456
        %v1119 = vsel %vm1118, %v1054, 0
        %1121 = vmatprep.subr.bf16.mxu0 0
        %1122 = vmatpush1.bf16.msra.mxu0 %v1119
        %1123 = vmatprep.subr.bf16.mxu0 0
        %1124 = vmatpush1.bf16.msra.mxu0 0
        %1125 = vmatprep.subr.bf16.mxu0 0
        %1126 = vmatpush1.bf16.msra.mxu0 0
        %1127 = vmatprep.subr.bf16.mxu0 0
        %1128 = vmatpush1.bf16.msra.mxu0 0
        %1129 = vmatprep.subr.bf16.mxu0 0
        %1130 = vmatpush1.bf16.msra.mxu0 0
        %1131 = vmatprep.subr.bf16.mxu0 0
        %1132 = vmatpush1.bf16.msra.mxu0 0
        %1133 = vmatprep.subr.bf16.mxu0 0
        %1134 = vmatpush1.bf16.msra.mxu0 0
        %1135 = vmatprep.subr.bf16.mxu0 0
        %1136 = vmatpush1.bf16.msra.mxu0 0
        %1137 = vmatprep.subr.bf16.mxu0 0
        %1138 = vmatpush1.bf16.msra.mxu0 0
        %1139 = vmatprep.subr.bf16.mxu0 0
        %1140 = vmatpush1.bf16.msra.mxu0 0
        %1141 = vmatprep.subr.bf16.mxu0 0
        %1142 = vmatpush1.bf16.msra.mxu0 0
        %1143 = vmatprep.subr.bf16.mxu0 0
        %1144 = vmatpush1.bf16.msra.mxu0 0
        %1145 = vmatprep.subr.bf16.mxu0 0
        %1146 = vmatpush1.bf16.msra.mxu0 0
        %1147 = vmatprep.subr.bf16.mxu0 0
        %1148 = vmatpush1.bf16.msra.mxu0 0
        %1149 = vmatprep.subr.bf16.mxu0 0
        %1150 = vmatpush1.bf16.msra.mxu0 0
        %1151 = vmatprep.subr.bf16.mxu0 0
        %1152 = vmatpush1.bf16.msra.mxu0 0
        %1153 = vmatprep.mubr.bf16.mxu0 0
        %1154 = vmatmul.mubr.bf16.gmra.mrb[0].mxu0 %v1116
        %v1155 = vpop.f32.mrb[0].mxu0
        %v1156 = vadd.f32 0.0, %v1155
        %v1157 = vpop.f32.mrb[0].mxu0
        %v1158 = vpop.f32.mrb[0].mxu0
        %v1159 = vpop.f32.mrb[0].mxu0
        %1160 = vdwg.mxu0
        %1161 = vst.msk [vmem:[%s561] sm:$0xff] %vm1102, %v1113
        %1163 = vrot.lane.b32.xlu0 %v1054, 64
        %v1164 = vpop.permute.xlu0 %1163
        %v1166 = vsel %vm1055, %v1164, 0
        %1168 = vmatprep.subr.bf16.mxu0 0
        %1169 = vmatpush1.bf16.xpose.msra.mxu0 %v1166
        %1170 = vmatprep.subr.bf16.mxu0 0
        %1171 = vmatpush1.bf16.xpose.msra.mxu0 0
        %1172 = vmatprep.subr.bf16.mxu0 0
        %1173 = vmatpush1.bf16.xpose.msra.mxu0 0
        %1174 = vmatprep.subr.bf16.mxu0 0
        %1175 = vmatpush1.bf16.xpose.msra.mxu0 0
        %1176 = vmatprep.subr.bf16.mxu0 0
        %1177 = vmatpush1.bf16.xpose.msra.mxu0 0
        %1178 = vmatprep.subr.bf16.mxu0 0
        %1179 = vmatpush1.bf16.xpose.msra.mxu0 0
        %1180 = vmatprep.subr.bf16.mxu0 0
        %1181 = vmatpush1.bf16.xpose.msra.mxu0 0
        %1182 = vmatprep.subr.bf16.mxu0 0
        %1183 = vmatpush1.bf16.xpose.msra.mxu0 0
        %1184 = vmatprep.subr.bf16.mxu0 0
        %1185 = vmatpush1.bf16.xpose.msra.mxu0 0
        %1186 = vmatprep.subr.bf16.mxu0 0
        %1187 = vmatpush1.bf16.xpose.msra.mxu0 0
        %1188 = vmatprep.subr.bf16.mxu0 0
        %1189 = vmatpush1.bf16.xpose.msra.mxu0 0
        %1190 = vmatprep.subr.bf16.mxu0 0
        %1191 = vmatpush1.bf16.xpose.msra.mxu0 0
        %1192 = vmatprep.subr.bf16.mxu0 0
        %1193 = vmatpush1.bf16.xpose.msra.mxu0 0
        %1194 = vmatprep.subr.bf16.mxu0 0
        %1195 = vmatpush1.bf16.xpose.msra.mxu0 0
        %1196 = vmatprep.subr.bf16.mxu0 0
        %1197 = vmatpush1.bf16.xpose.msra.mxu0 0
        %1198 = vmatprep.subr.bf16.mxu0 0
        %1199 = vmatpush1.bf16.xpose.msra.mxu0 0
        %1200 = vmatprep.mubr.bf16.mxu0 0
        %1201 = vmatmul.mubr.bf16.gmra.mrb[0].mxu0 %v1166
        %v1202 = vpop.f32.mrb[0].mxu0
        %v1203 = vadd.f32 0.0, %v1202
        %v1204 = vpop.f32.mrb[0].mxu0
        %v1205 = vpop.f32.mrb[0].mxu0
        %v1206 = vpop.f32.mrb[0].mxu0
        %1207 = vdwg.mxu0
        %v1208 = vmul.f32 %v1203, 0.125
        %v1209 = vsel %vm1100, -1e+09, %v1208
        %v1210 = vsel %vm1102, %v1209, -inf
        %1211 = vmax.xlane.f32.xlu0 %v1210
        %v1212 = vpop.xlane.xlu0 %1211
        %v1213 = vsub.f32 %v1209, %v1212
        %v1214 = vmul.f32 %v1213, 1.442695
        %v1215 = vpow.pop %v1214
        %v1216 = vsel %vm1102, %v1215, 0.0
        %1217 = vadd.xlane.f32.xlu0 %v1216
        %v1218 = vpop.xlane.xlu0 %1217
        %v1219 = vrcp.pop %v1218
        %v1220 = vmul.f32 %v1215, %v1219
        %v1221 = vpack.c.bf16 %v1220, %v1220
        %v1223 = vsel %vm1102, %v1221, 0
        %v1225 = vsel %vm1118, %v1164, 0
        %1227 = vmatprep.subr.bf16.mxu0 0
        %1228 = vmatpush1.bf16.msra.mxu0 %v1225
        %1229 = vmatprep.subr.bf16.mxu0 0
        %1230 = vmatpush1.bf16.msra.mxu0 0
        %1231 = vmatprep.subr.bf16.mxu0 0
        %1232 = vmatpush1.bf16.msra.mxu0 0
        %1233 = vmatprep.subr.bf16.mxu0 0
        %1234 = vmatpush1.bf16.msra.mxu0 0
        %1235 = vmatprep.subr.bf16.mxu0 0
        %1236 = vmatpush1.bf16.msra.mxu0 0
        %1237 = vmatprep.subr.bf16.mxu0 0
        %1238 = vmatpush1.bf16.msra.mxu0 0
        %1239 = vmatprep.subr.bf16.mxu0 0
        %1240 = vmatpush1.bf16.msra.mxu0 0
        %1241 = vmatprep.subr.bf16.mxu0 0
        %1242 = vmatpush1.bf16.msra.mxu0 0
        %1243 = vmatprep.subr.bf16.mxu0 0
        %1244 = vmatpush1.bf16.msra.mxu0 0
        %1245 = vmatprep.subr.bf16.mxu0 0
        %1246 = vmatpush1.bf16.msra.mxu0 0
        %1247 = vmatprep.subr.bf16.mxu0 0
        %1248 = vmatpush1.bf16.msra.mxu0 0
        %1249 = vmatprep.subr.bf16.mxu0 0
        %1250 = vmatpush1.bf16.msra.mxu0 0
        %1251 = vmatprep.subr.bf16.mxu0 0
        %1252 = vmatpush1.bf16.msra.mxu0 0
        %1253 = vmatprep.subr.bf16.mxu0 0
        %1254 = vmatpush1.bf16.msra.mxu0 0
        %1255 = vmatprep.subr.bf16.mxu0 0
        %1256 = vmatpush1.bf16.msra.mxu0 0
        %1257 = vmatprep.subr.bf16.mxu0 0
        %1258 = vmatpush1.bf16.msra.mxu0 0
        %1259 = vmatprep.mubr.bf16.mxu0 0
        %1260 = vmatmul.mubr.bf16.gmra.mrb[0].mxu0 %v1223
        %v1261 = vpop.f32.mrb[0].mxu0
        %v1262 = vadd.f32 0.0, %v1261
        %v1263 = vpop.f32.mrb[0].mxu0
        %v1264 = vpop.f32.mrb[0].mxu0
        %v1265 = vpop.f32.mrb[0].mxu0
        %1266 = vdwg.mxu0
        %s1267 = scalar_lea.vmem %s561, 8 [#allocation6]
        %1268 = vst.msk [vmem:[%s1267] sm:$0xff] %vm1102, %v1220
        %v1269 = vpack.c.bf16 %v1049, %v1049
        %v1271 = vsel %vm1055, %v1269, 0
        %1273 = vmatprep.subr.bf16.mxu0 0
        %1274 = vmatpush1.bf16.xpose.msra.mxu0 %v1271
        %1275 = vmatprep.subr.bf16.mxu0 0
        %1276 = vmatpush1.bf16.xpose.msra.mxu0 0
        %1277 = vmatprep.subr.bf16.mxu0 0
        %1278 = vmatpush1.bf16.xpose.msra.mxu0 0
        %1279 = vmatprep.subr.bf16.mxu0 0
        %1280 = vmatpush1.bf16.xpose.msra.mxu0 0
        %1281 = vmatprep.subr.bf16.mxu0 0
        %1282 = vmatpush1.bf16.xpose.msra.mxu0 0
        %1283 = vmatprep.subr.bf16.mxu0 0
        %1284 = vmatpush1.bf16.xpose.msra.mxu0 0
        %1285 = vmatprep.subr.bf16.mxu0 0
        %1286 = vmatpush1.bf16.xpose.msra.mxu0 0
        %1287 = vmatprep.subr.bf16.mxu0 0
        %1288 = vmatpush1.bf16.xpose.msra.mxu0 0
        %1289 = vmatprep.subr.bf16.mxu0 0
        %1290 = vmatpush1.bf16.xpose.msra.mxu0 0
        %1291 = vmatprep.subr.bf16.mxu0 0
        %1292 = vmatpush1.bf16.xpose.msra.mxu0 0
        %1293 = vmatprep.subr.bf16.mxu0 0
        %1294 = vmatpush1.bf16.xpose.msra.mxu0 0
        %1295 = vmatprep.subr.bf16.mxu0 0
        %1296 = vmatpush1.bf16.xpose.msra.mxu0 0
        %1297 = vmatprep.subr.bf16.mxu0 0
        %1298 = vmatpush1.bf16.xpose.msra.mxu0 0
        %1299 = vmatprep.subr.bf16.mxu0 0
        %1300 = vmatpush1.bf16.xpose.msra.mxu0 0
        %1301 = vmatprep.subr.bf16.mxu0 0
        %1302 = vmatpush1.bf16.xpose.msra.mxu0 0
        %1303 = vmatprep.subr.bf16.mxu0 0
        %1304 = vmatpush1.bf16.xpose.msra.mxu0 0
        %1305 = vmatprep.mubr.bf16.mxu0 0
        %1306 = vmatmul.mubr.bf16.gmra.mrb[0].mxu0 %v1271
        %v1307 = vpop.f32.mrb[0].mxu0
        %v1308 = vadd.f32 0.0, %v1307
        %v1309 = vpop.f32.mrb[0].mxu0
        %v1310 = vpop.f32.mrb[0].mxu0
        %v1311 = vpop.f32.mrb[0].mxu0
        %1312 = vdwg.mxu0
        %v1313 = vmul.f32 %v1308, 0.125
        %v1314 = vsel %vm1100, -1e+09, %v1313
        %v1315 = vsel %vm1102, %v1314, -inf
        %1316 = vmax.xlane.f32.xlu0 %v1315
        %v1317 = vpop.xlane.xlu0 %1316
        %v1318 = vsub.f32 %v1314, %v1317
        %v1319 = vmul.f32 %v1318, 1.442695
        %v1320 = vpow.pop %v1319
        %v1321 = vsel %vm1102, %v1320, 0.0
        %1322 = vadd.xlane.f32.xlu0 %v1321
        %v1323 = vpop.xlane.xlu0 %1322
        %v1324 = vrcp.pop %v1323
        %v1325 = vmul.f32 %v1320, %v1324
        %v1326 = vpack.c.bf16 %v1325, %v1325
        %v1328 = vsel %vm1102, %v1326, 0
        %v1330 = vsel %vm1118, %v1269, 0
        %1332 = vmatprep.subr.bf16.mxu0 0
        %1333 = vmatpush1.bf16.msra.mxu0 %v1330
        %1334 = vmatprep.subr.bf16.mxu0 0
        %1335 = vmatpush1.bf16.msra.mxu0 0
        %1336 = vmatprep.subr.bf16.mxu0 0
        %1337 = vmatpush1.bf16.msra.mxu0 0
        %1338 = vmatprep.subr.bf16.mxu0 0
        %1339 = vmatpush1.bf16.msra.mxu0 0
        %1340 = vmatprep.subr.bf16.mxu0 0
        %1341 = vmatpush1.bf16.msra.mxu0 0
        %1342 = vmatprep.subr.bf16.mxu0 0
        %1343 = vmatpush1.bf16.msra.mxu0 0
        %1344 = vmatprep.subr.bf16.mxu0 0
        %1345 = vmatpush1.bf16.msra.mxu0 0
        %1346 = vmatprep.subr.bf16.mxu0 0
        %1347 = vmatpush1.bf16.msra.mxu0 0
        %1348 = vmatprep.subr.bf16.mxu0 0
        %1349 = vmatpush1.bf16.msra.mxu0 0
        %1350 = vmatprep.subr.bf16.mxu0 0
        %1351 = vmatpush1.bf16.msra.mxu0 0
        %1352 = vmatprep.subr.bf16.mxu0 0
        %1353 = vmatpush1.bf16.msra.mxu0 0
        %1354 = vmatprep.subr.bf16.mxu0 0
        %1355 = vmatpush1.bf16.msra.mxu0 0
        %1356 = vmatprep.subr.bf16.mxu0 0
        %1357 = vmatpush1.bf16.msra.mxu0 0
        %1358 = vmatprep.subr.bf16.mxu0 0
        %1359 = vmatpush1.bf16.msra.mxu0 0
        %1360 = vmatprep.subr.bf16.mxu0 0
        %1361 = vmatpush1.bf16.msra.mxu0 0
        %1362 = vmatprep.subr.bf16.mxu0 0
        %1363 = vmatpush1.bf16.msra.mxu0 0
        %1364 = vmatprep.mubr.bf16.mxu0 0
        %1365 = vmatmul.mubr.bf16.gmra.mrb[0].mxu0 %v1328
        %v1366 = vpop.f32.mrb[0].mxu0
        %v1367 = vadd.f32 0.0, %v1366
        %v1368 = vpop.f32.mrb[0].mxu0
        %v1369 = vpop.f32.mrb[0].mxu0
        %v1370 = vpop.f32.mrb[0].mxu0
        %1371 = vdwg.mxu0
        %s1372 = scalar_lea.vmem %s561, 16 [#allocation6]
        %1373 = vst.msk [vmem:[%s1372] sm:$0xff] %vm1102, %v1325
        %1375 = vrot.lane.b32.xlu0 %v1269, 64
        %v1376 = vpop.permute.xlu0 %1375
        %v1378 = vsel %vm1055, %v1376, 0
        %1380 = vmatprep.subr.bf16.mxu0 0
        %1381 = vmatpush1.bf16.xpose.msra.mxu0 %v1378
        %1382 = vmatprep.subr.bf16.mxu0 0
        %1383 = vmatpush1.bf16.xpose.msra.mxu0 0
        %1384 = vmatprep.subr.bf16.mxu0 0
        %1385 = vmatpush1.bf16.xpose.msra.mxu0 0
        %1386 = vmatprep.subr.bf16.mxu0 0
        %1387 = vmatpush1.bf16.xpose.msra.mxu0 0
        %1388 = vmatprep.subr.bf16.mxu0 0
        %1389 = vmatpush1.bf16.xpose.msra.mxu0 0
        %1390 = vmatprep.subr.bf16.mxu0 0
        %1391 = vmatpush1.bf16.xpose.msra.mxu0 0
        %1392 = vmatprep.subr.bf16.mxu0 0
        %1393 = vmatpush1.bf16.xpose.msra.mxu0 0
        %1394 = vmatprep.subr.bf16.mxu0 0
        %1395 = vmatpush1.bf16.xpose.msra.mxu0 0
        %1396 = vmatprep.subr.bf16.mxu0 0
        %1397 = vmatpush1.bf16.xpose.msra.mxu0 0
        %1398 = vmatprep.subr.bf16.mxu0 0
        %1399 = vmatpush1.bf16.xpose.msra.mxu0 0
        %1400 = vmatprep.subr.bf16.mxu0 0
        %1401 = vmatpush1.bf16.xpose.msra.mxu0 0
        %1402 = vmatprep.subr.bf16.mxu0 0
        %1403 = vmatpush1.bf16.xpose.msra.mxu0 0
        %1404 = vmatprep.subr.bf16.mxu0 0
        %1405 = vmatpush1.bf16.xpose.msra.mxu0 0
        %1406 = vmatprep.subr.bf16.mxu0 0
        %1407 = vmatpush1.bf16.xpose.msra.mxu0 0
        %1408 = vmatprep.subr.bf16.mxu0 0
        %1409 = vmatpush1.bf16.xpose.msra.mxu0 0
        %1410 = vmatprep.subr.bf16.mxu0 0
        %1411 = vmatpush1.bf16.xpose.msra.mxu0 0
        %1412 = vmatprep.mubr.bf16.mxu0 0
        %1413 = vmatmul.mubr.bf16.gmra.mrb[0].mxu0 %v1378
        %v1414 = vpop.f32.mrb[0].mxu0
        %v1415 = vadd.f32 0.0, %v1414
        %v1416 = vpop.f32.mrb[0].mxu0
        %v1417 = vpop.f32.mrb[0].mxu0
        %v1418 = vpop.f32.mrb[0].mxu0
        %1419 = vdwg.mxu0
        %v1420 = vmul.f32 %v1415, 0.125
        %v1421 = vsel %vm1100, -1e+09, %v1420
        %v1422 = vsel %vm1102, %v1421, -inf
        %1423 = vmax.xlane.f32.xlu0 %v1422
        %v1424 = vpop.xlane.xlu0 %1423
        %v1425 = vsub.f32 %v1421, %v1424
        %v1426 = vmul.f32 %v1425, 1.442695
        %v1427 = vpow.pop %v1426
        %v1428 = vsel %vm1102, %v1427, 0.0
        %1429 = vadd.xlane.f32.xlu0 %v1428
        %v1430 = vpop.xlane.xlu0 %1429
        %v1431 = vrcp.pop %v1430
        %v1432 = vmul.f32 %v1427, %v1431
        %v1433 = vpack.c.bf16 %v1432, %v1432
        %v1435 = vsel %vm1102, %v1433, 0
        %v1437 = vsel %vm1118, %v1376, 0
        %1439 = vmatprep.subr.bf16.mxu0 0
        %1440 = vmatpush1.bf16.msra.mxu0 %v1437
        %1441 = vmatprep.subr.bf16.mxu0 0
        %1442 = vmatpush1.bf16.msra.mxu0 0
        %1443 = vmatprep.subr.bf16.mxu0 0
        %1444 = vmatpush1.bf16.msra.mxu0 0
        %1445 = vmatprep.subr.bf16.mxu0 0
        %1446 = vmatpush1.bf16.msra.mxu0 0
        %1447 = vmatprep.subr.bf16.mxu0 0
        %1448 = vmatpush1.bf16.msra.mxu0 0
        %1449 = vmatprep.subr.bf16.mxu0 0
        %1450 = vmatpush1.bf16.msra.mxu0 0
        %1451 = vmatprep.subr.bf16.mxu0 0
        %1452 = vmatpush1.bf16.msra.mxu0 0
        %1453 = vmatprep.subr.bf16.mxu0 0
        %1454 = vmatpush1.bf16.msra.mxu0 0
        %1455 = vmatprep.subr.bf16.mxu0 0
        %1456 = vmatpush1.bf16.msra.mxu0 0
        %1457 = vmatprep.subr.bf16.mxu0 0
        %1458 = vmatpush1.bf16.msra.mxu0 0
        %1459 = vmatprep.subr.bf16.mxu0 0
        %1460 = vmatpush1.bf16.msra.mxu0 0
        %1461 = vmatprep.subr.bf16.mxu0 0
        %1462 = vmatpush1.bf16.msra.mxu0 0
        %1463 = vmatprep.subr.bf16.mxu0 0
        %1464 = vmatpush1.bf16.msra.mxu0 0
        %1465 = vmatprep.subr.bf16.mxu0 0
        %1466 = vmatpush1.bf16.msra.mxu0 0
        %1467 = vmatprep.subr.bf16.mxu0 0
        %1468 = vmatpush1.bf16.msra.mxu0 0
        %1469 = vmatprep.subr.bf16.mxu0 0
        %1470 = vmatpush1.bf16.msra.mxu0 0
        %1471 = vmatprep.mubr.bf16.mxu0 0
        %1472 = vmatmul.mubr.bf16.gmra.mrb[0].mxu0 %v1435
        %v1473 = vpop.f32.mrb[0].mxu0
        %v1474 = vadd.f32 0.0, %v1473
        %v1475 = vpop.f32.mrb[0].mxu0
        %v1476 = vpop.f32.mrb[0].mxu0
        %v1477 = vpop.f32.mrb[0].mxu0
        %1478 = vdwg.mxu0
        %s1479 = scalar_lea.vmem %s561, 24 [#allocation6]
        %1480 = vst.msk [vmem:[%s1479] sm:$0xff] %vm1102, %v1432
        %1482 = vrot.lane.b32.xlu0 %v1262, 64
        %v1483 = vpop.permute.xlu0 %1482
        %1486 = vrot.lane.b32.xlu0 %v1474, 64
        %v1487 = vpop.permute.xlu0 %1486
        %v1489 = vsel %vm1055, %v1156, %v1483
        %v1490 = vsel %vm1055, %v1367, %v1487
        %1491 = vst [vmem:[%s575] sm:$0xff] %v1489
        %1492 = vst [vmem:[%s575 + $0x8] sm:$0xff] %v1490
        %s1493 = smul.u32 2, %s27
        %p1494 = scmp.lt.s32.totalorder %s26, 1
        %s1495 = scalar_select %p1494, %s26, 1
        %p1496 = scmp.lt.s32.totalorder %s1493, 3
        %s1497 = scalar_select %p1496, %s1493, 3
        %s1498 = smul.addr %s1495, 4
        %s1499 = sadd.s32 %s1497, %s1498
        %s1500 = smul.addr %s1499, 8
        %s1501 = scalar_lea.vmem %s3, %s1500
        %s1502 = sand.u32 %s150, 1
        %s1503 = scalar_lea.sflag [#allocation4], %s1502
        %s1504 = sand.u32 %s150, 1
        %s1505 = smul.addr %s1504, 32
        %s1506 = scalar_lea.vmem [#allocation6], %s1505
        // Predicated region
        $region75: #{encoder_layer.2} parent=65 // pred_check
          %p1507 = pneg %p132
        $region76: #{encoder_layer.2} parent=65 // pred_check_branch
          %1509 = sbr.rel (%p1507) target = $region78
        $region77: #{encoder_layer.2} parent=65 // pred_region
          %s1510 = smul.u32 2, %s27
        $region78: #{encoder_layer.2} parent=65 // pred_fallthru
          _
        // Predicated region
        $region79: #{encoder_layer.2} parent=65 // pred_check
          %p1511 = pneg %p160
        $region80: #{encoder_layer.2} parent=65 // pred_check_branch
          %1513 = sbr.rel (%p1511) target = $region82
        $region81: #{encoder_layer.2} parent=65 // pred_region
          %s1514 = smul.u32 4, %s27
          %s1516 = ssub.s32 512, 512
          %1517 = vsyncadd %s1503, %s1516
          %s1518 = smul.addr %s26, 8
          %s1519 = sadd.s32 %s1514, %s1518
          %s1520 = smul.addr %s1519, 128
          %s1521 = scalar_lea.hbm %s4, %s1520
          %s1522 = sshll.u32 %s1506, 4
          %s1523 = int_to_ptr.vmem [resolvable:$true] %s1522
          %1528 = dma.vmem_to_hbm [thread:$0]  %s1523, 512, %s1521, %s1503, 128, 128, 8
        $region82: #{encoder_layer.2} parent=65 // pred_fallthru
          _
      $region66: #{encoder_layer.2} parent=5 // pred_fallthru
        _
      %p1529 = scmp.le.s32.totalorder 2, %s17
      // Predicated region
      $region83: #{encoder_layer.2} parent=5 // pred_check
        %p1530 = pneg %p1529
      $region84: #{encoder_layer.2} parent=5 // pred_check_branch
        %1532 = sbr.rel (%p1530) target = $region86
      $region85: #{encoder_layer.2} parent=5 // pred_region
        %s1533 = ssub.s32 %s17, 2
        // Predicated region
        $region87: #{encoder_layer.2} parent=85 // pred_check
          %p1534 = pneg %p138
        $region88: #{encoder_layer.2} parent=85 // pred_check_branch
          %1536 = sbr.rel (%p1534) target = $region90
        $region89: #{encoder_layer.2} parent=85 // pred_region
          %s1537 = smul.u32 2, %s29
          %p1538 = scmp.lt.s32.totalorder %s28, 1
          %s1539 = scalar_select %p1538, %s28, 1
          %p1540 = scmp.lt.s32.totalorder %s1537, 3
          %s1541 = scalar_select %p1540, %s1537, 3
          %s1542 = smul.addr %s1539, 4
          %s1543 = sadd.s32 %s1541, %s1542
          %s1544 = smul.addr %s1543, 8
          %s1545 = scalar_lea.vmem %s3, %s1544
        $region90: #{encoder_layer.2} parent=85 // pred_fallthru
          _
        // Predicated region
        $region91: #{encoder_layer.2} parent=85 // pred_check
          %p1546 = pneg %p166
        $region92: #{encoder_layer.2} parent=85 // pred_check_branch
          %1548 = sbr.rel (%p1546) target = $region94
        $region93: #{encoder_layer.2} parent=85 // pred_region
          %s1549 = sand.u32 %s151, 1
          %s1550 = scalar_lea.sflag [#allocation4], %s1549
          %s1551 = sand.u32 %s151, 1
          %s1552 = smul.addr %s1551, 32
          %s1553 = scalar_lea.vmem [#allocation6], %s1552
          %1554 = dma.done %s1550, 512
        $region94: #{encoder_layer.2} parent=85 // pred_fallthru
          _
      $region86: #{encoder_layer.2} parent=5 // pred_fallthru
        _
    $region6: #{encoder_layer.2} parent=1 // loop_footer
      %s21 = sadd.s32 1, %s17
    $region7: #{encoder_layer.2} parent=1 // loop_footer_branch
      %16 = sbr.rel target = $region3
    $region8: #{encoder_layer.2} parent=1 // loop_exit
      _
    %1555 = vsyncpa [#allocation3], 1
    %s1556 = scalar_lea.sflag [#allocation3], 1
    %1557 = vsyncpa %s1556, 1
    %1558 = vsyncpa [#allocation4], 1
    %s1559 = scalar_lea.sflag [#allocation4], 1
    %1560 = vsyncpa %s1559, 1

// kernel: encoder_layer.3
$region0: #{encoder_layer.3}
  #allocation0 [shape = 'u32[]', space=smem, size = 0x4, offset = 0x4, fixed_abs, tag = 'smem constant byte address 0x4 - core index']
  #allocation1 [shape = 'u32[144,128]{1,0:T(1,128)}', space=vmem, size = 0x12000, scoped, tag = 'internal scratch']
  %s0 = inlined_call_operand.vmem [shape: f32[16,512], index: 0, kind: input, shape index: {}]
  %s1 = inlined_call_operand.vmem [shape: f32[16,512], index: 1, kind: input, shape index: {}]
  %s2 = inlined_call_operand.vmem [shape: bf16[512,512], index: 2, kind: input, shape index: {}]
  %s3 = inlined_call_operand.vmem [shape: f32[1,512], index: 3, kind: input, shape index: {}]
  %s4 = inlined_call_operand.vmem [shape: f32[1,512], index: 4, kind: input, shape index: {}]
  %s5 = inlined_call_operand.vmem [shape: bf16[512,2048], index: 5, kind: input, shape index: {}]
  %s6 = inlined_call_operand.vmem [shape: bf16[2048,512], index: 6, kind: input, shape index: {}]
  %s7 = inlined_call_operand.vmem [shape: f32[1,512], index: 7, kind: input, shape index: {}]
  %s8 = inlined_call_operand.vmem [shape: f32[1,512], index: 8, kind: input, shape index: {}]
  %s9 = inlined_call_operand.hbm [shape: f32[16,512], index: 9, kind: output, shape index: {}]
  %s10 = sld [smem:[#allocation0]]
  $region46: #{encoder_layer.3} parent=0
    _
  %s12 = ssub.s32 1, %s10
  %s13 = scalar_select 0, %s12, %s10
  $region1: #{encoder_layer.3} parent=0
    #allocation2 [shape = 'u8[32768]{0}', space=vmem, size = 0x8000, scoped, tag = 'output window, operand 0, single buffered']
    #allocation3 [shape = 's32[1]{0}', space=sflag, size = 0x4, scoped, tag = 'scoped memory for encoder_layer.3']
    %14 = vsyncpa [#allocation3], 0
    // Predicated region
    $region2: #{encoder_layer.3} parent=1 // pred_check
      _
    $region3: #{encoder_layer.3} parent=1 // pred_check_branch
      %16 = sbr.rel (0) target = $region5
    $region4: #{encoder_layer.3} parent=1 // pred_region
      _
    $region5: #{encoder_layer.3} parent=1 // pred_fallthru
      _
    // Predicated region
    $region6: #{encoder_layer.3} parent=1 // pred_check
      _
    $region7: #{encoder_layer.3} parent=1 // pred_check_branch
      %18 = sbr.rel (0) target = $region9
    $region8: #{encoder_layer.3} parent=1 // pred_region
      _
    $region9: #{encoder_layer.3} parent=1 // pred_fallthru
      _
    // Predicated region
    $region10: #{encoder_layer.3} parent=1 // pred_check
      _
    $region11: #{encoder_layer.3} parent=1 // pred_check_branch
      %20 = sbr.rel (0) target = $region13
    $region12: #{encoder_layer.3} parent=1 // pred_region
      _
    $region13: #{encoder_layer.3} parent=1 // pred_fallthru
      _
    // Predicated region
    $region14: #{encoder_layer.3} parent=1 // pred_check
      _
    $region15: #{encoder_layer.3} parent=1 // pred_check_branch
      %22 = sbr.rel (0) target = $region17
    $region16: #{encoder_layer.3} parent=1 // pred_region
      _
    $region17: #{encoder_layer.3} parent=1 // pred_fallthru
      _
    // Predicated region
    $region18: #{encoder_layer.3} parent=1 // pred_check
      _
    $region19: #{encoder_layer.3} parent=1 // pred_check_branch
      %24 = sbr.rel (0) target = $region21
    $region20: #{encoder_layer.3} parent=1 // pred_region
      _
    $region21: #{encoder_layer.3} parent=1 // pred_fallthru
      _
    // Predicated region
    $region22: #{encoder_layer.3} parent=1 // pred_check
      _
    $region23: #{encoder_layer.3} parent=1 // pred_check_branch
      %26 = sbr.rel (0) target = $region25
    $region24: #{encoder_layer.3} parent=1 // pred_region
      _
    $region25: #{encoder_layer.3} parent=1 // pred_fallthru
      _
    // Predicated region
    $region26: #{encoder_layer.3} parent=1 // pred_check
      _
    $region27: #{encoder_layer.3} parent=1 // pred_check_branch
      %28 = sbr.rel (0) target = $region29
    $region28: #{encoder_layer.3} parent=1 // pred_region
      _
    $region29: #{encoder_layer.3} parent=1 // pred_fallthru
      _
    // Predicated region
    $region30: #{encoder_layer.3} parent=1 // pred_check
      _
    $region31: #{encoder_layer.3} parent=1 // pred_check_branch
      %30 = sbr.rel (0) target = $region33
    $region32: #{encoder_layer.3} parent=1 // pred_region
      _
    $region33: #{encoder_layer.3} parent=1 // pred_fallthru
      _
    // Predicated region
    $region34: #{encoder_layer.3} parent=1 // pred_check
      _
    $region35: #{encoder_layer.3} parent=1 // pred_check_branch
      %32 = sbr.rel (0) target = $region37
    $region36: #{encoder_layer.3} parent=1 // pred_region
      _
    $region37: #{encoder_layer.3} parent=1 // pred_fallthru
      _
    %v33 = vld [vmem:[%s0] sm:$0xff]
    %v34 = vld [vmem:[%s0 + $0x8] sm:$0xff]
    %v35 = vld [vmem:[%s0 + $0x10] sm:$0xff]
    %v36 = vld [vmem:[%s0 + $0x18] sm:$0xff]
    %v37 = vld [vmem:[%s0 + $0x20] sm:$0xff]
    %v38 = vld [vmem:[%s0 + $0x28] sm:$0xff]
    %v39 = vld [vmem:[%s0 + $0x30] sm:$0xff]
    %v40 = vld [vmem:[%s0 + $0x38] sm:$0xff]
    %v41 = vpack.c.bf16 %v37, %v33
    %v42 = vpack.c.bf16 %v38, %v34
    %v43 = vpack.c.bf16 %v39, %v35
    %v44 = vpack.c.bf16 %v40, %v36
    %v45 = vld [vmem:[%s2] sm:$0xff]
    %v46 = vld [vmem:[%s2 + $0x8] sm:$0xff]
    %v47 = vld [vmem:[%s2 + $0x10] sm:$0xff]
    %v48 = vld [vmem:[%s2 + $0x18] sm:$0xff]
    %v49 = vld [vmem:[%s2 + $0x20] sm:$0xff]
    %v50 = vld [vmem:[%s2 + $0x28] sm:$0xff]
    %v51 = vld [vmem:[%s2 + $0x30] sm:$0xff]
    %v52 = vld [vmem:[%s2 + $0x38] sm:$0xff]
    %v53 = vld [vmem:[%s2 + $0x40] sm:$0xff]
    %v54 = vld [vmem:[%s2 + $0x48] sm:$0xff]
    %v55 = vld [vmem:[%s2 + $0x50] sm:$0xff]
    %v56 = vld [vmem:[%s2 + $0x58] sm:$0xff]
    %v57 = vld [vmem:[%s2 + $0x60] sm:$0xff]
    %v58 = vld [vmem:[%s2 + $0x68] sm:$0xff]
    %v59 = vld [vmem:[%s2 + $0x70] sm:$0xff]
    %v60 = vld [vmem:[%s2 + $0x78] sm:$0xff]
    %v61 = vld [vmem:[%s2 + $0x80] sm:$0xff]
    %v62 = vld [vmem:[%s2 + $0x88] sm:$0xff]
    %v63 = vld [vmem:[%s2 + $0x90] sm:$0xff]
    %v64 = vld [vmem:[%s2 + $0x98] sm:$0xff]
    %v65 = vld [vmem:[%s2 + $0xa0] sm:$0xff]
    %v66 = vld [vmem:[%s2 + $0xa8] sm:$0xff]
    %v67 = vld [vmem:[%s2 + $0xb0] sm:$0xff]
    %v68 = vld [vmem:[%s2 + $0xb8] sm:$0xff]
    %v69 = vld [vmem:[%s2 + $0xc0] sm:$0xff]
    %v70 = vld [vmem:[%s2 + $0xc8] sm:$0xff]
    %v71 = vld [vmem:[%s2 + $0xd0] sm:$0xff]
    %v72 = vld [vmem:[%s2 + $0xd8] sm:$0xff]
    %v73 = vld [vmem:[%s2 + $0xe0] sm:$0xff]
    %v74 = vld [vmem:[%s2 + $0xe8] sm:$0xff]
    %v75 = vld [vmem:[%s2 + $0xf0] sm:$0xff]
    %v76 = vld [vmem:[%s2 + $0xf8] sm:$0xff]
    %v77 = vld [vmem:[%s2 + $0x100] sm:$0xff]
    %v78 = vld [vmem:[%s2 + $0x108] sm:$0xff]
    %v79 = vld [vmem:[%s2 + $0x110] sm:$0xff]
    %v80 = vld [vmem:[%s2 + $0x118] sm:$0xff]
    %v81 = vld [vmem:[%s2 + $0x120] sm:$0xff]
    %v82 = vld [vmem:[%s2 + $0x128] sm:$0xff]
    %v83 = vld [vmem:[%s2 + $0x130] sm:$0xff]
    %v84 = vld [vmem:[%s2 + $0x138] sm:$0xff]
    %v85 = vld [vmem:[%s2 + $0x140] sm:$0xff]
    %v86 = vld [vmem:[%s2 + $0x148] sm:$0xff]
    %v87 = vld [vmem:[%s2 + $0x150] sm:$0xff]
    %v88 = vld [vmem:[%s2 + $0x158] sm:$0xff]
    %v89 = vld [vmem:[%s2 + $0x160] sm:$0xff]
    %v90 = vld [vmem:[%s2 + $0x168] sm:$0xff]
    %v91 = vld [vmem:[%s2 + $0x170] sm:$0xff]
    %v92 = vld [vmem:[%s2 + $0x178] sm:$0xff]
    %v93 = vld [vmem:[%s2 + $0x180] sm:$0xff]
    %v94 = vld [vmem:[%s2 + $0x188] sm:$0xff]
    %v95 = vld [vmem:[%s2 + $0x190] sm:$0xff]
    %v96 = vld [vmem:[%s2 + $0x198] sm:$0xff]
    %v97 = vld [vmem:[%s2 + $0x1a0] sm:$0xff]
    %v98 = vld [vmem:[%s2 + $0x1a8] sm:$0xff]
    %v99 = vld [vmem:[%s2 + $0x1b0] sm:$0xff]
    %v100 = vld [vmem:[%s2 + $0x1b8] sm:$0xff]
    %v101 = vld [vmem:[%s2 + $0x1c0] sm:$0xff]
    %v102 = vld [vmem:[%s2 + $0x1c8] sm:$0xff]
    %v103 = vld [vmem:[%s2 + $0x1d0] sm:$0xff]
    %v104 = vld [vmem:[%s2 + $0x1d8] sm:$0xff]
    %v105 = vld [vmem:[%s2 + $0x1e0] sm:$0xff]
    %v106 = vld [vmem:[%s2 + $0x1e8] sm:$0xff]
    %v107 = vld [vmem:[%s2 + $0x1f0] sm:$0xff]
    %v108 = vld [vmem:[%s2 + $0x1f8] sm:$0xff]
    %v109 = vld [vmem:[%s2 + $0x200] sm:$0xff]
    %v110 = vld [vmem:[%s2 + $0x208] sm:$0xff]
    %v111 = vld [vmem:[%s2 + $0x210] sm:$0xff]
    %v112 = vld [vmem:[%s2 + $0x218] sm:$0xff]
    %v113 = vld [vmem:[%s2 + $0x220] sm:$0xff]
    %v114 = vld [vmem:[%s2 + $0x228] sm:$0xff]
    %v115 = vld [vmem:[%s2 + $0x230] sm:$0xff]
    %v116 = vld [vmem:[%s2 + $0x238] sm:$0xff]
    %v117 = vld [vmem:[%s2 + $0x240] sm:$0xff]
    %v118 = vld [vmem:[%s2 + $0x248] sm:$0xff]
    %v119 = vld [vmem:[%s2 + $0x250] sm:$0xff]
    %v120 = vld [vmem:[%s2 + $0x258] sm:$0xff]
    %v121 = vld [vmem:[%s2 + $0x260] sm:$0xff]
    %v122 = vld [vmem:[%s2 + $0x268] sm:$0xff]
    %v123 = vld [vmem:[%s2 + $0x270] sm:$0xff]
    %v124 = vld [vmem:[%s2 + $0x278] sm:$0xff]
    %v125 = vld [vmem:[%s2 + $0x280] sm:$0xff]
    %v126 = vld [vmem:[%s2 + $0x288] sm:$0xff]
    %v127 = vld [vmem:[%s2 + $0x290] sm:$0xff]
    %v128 = vld [vmem:[%s2 + $0x298] sm:$0xff]
    %v129 = vld [vmem:[%s2 + $0x2a0] sm:$0xff]
    %v130 = vld [vmem:[%s2 + $0x2a8] sm:$0xff]
    %v131 = vld [vmem:[%s2 + $0x2b0] sm:$0xff]
    %v132 = vld [vmem:[%s2 + $0x2b8] sm:$0xff]
    %v133 = vld [vmem:[%s2 + $0x2c0] sm:$0xff]
    %v134 = vld [vmem:[%s2 + $0x2c8] sm:$0xff]
    %v135 = vld [vmem:[%s2 + $0x2d0] sm:$0xff]
    %v136 = vld [vmem:[%s2 + $0x2d8] sm:$0xff]
    %v137 = vld [vmem:[%s2 + $0x2e0] sm:$0xff]
    %v138 = vld [vmem:[%s2 + $0x2e8] sm:$0xff]
    %v139 = vld [vmem:[%s2 + $0x2f0] sm:$0xff]
    %v140 = vld [vmem:[%s2 + $0x2f8] sm:$0xff]
    %v141 = vld [vmem:[%s2 + $0x300] sm:$0xff]
    %v142 = vld [vmem:[%s2 + $0x308] sm:$0xff]
    %v143 = vld [vmem:[%s2 + $0x310] sm:$0xff]
    %v144 = vld [vmem:[%s2 + $0x318] sm:$0xff]
    %v145 = vld [vmem:[%s2 + $0x320] sm:$0xff]
    %v146 = vld [vmem:[%s2 + $0x328] sm:$0xff]
    %v147 = vld [vmem:[%s2 + $0x330] sm:$0xff]
    %v148 = vld [vmem:[%s2 + $0x338] sm:$0xff]
    %v149 = vld [vmem:[%s2 + $0x340] sm:$0xff]
    %v150 = vld [vmem:[%s2 + $0x348] sm:$0xff]
    %v151 = vld [vmem:[%s2 + $0x350] sm:$0xff]
    %v152 = vld [vmem:[%s2 + $0x358] sm:$0xff]
    %v153 = vld [vmem:[%s2 + $0x360] sm:$0xff]
    %v154 = vld [vmem:[%s2 + $0x368] sm:$0xff]
    %v155 = vld [vmem:[%s2 + $0x370] sm:$0xff]
    %v156 = vld [vmem:[%s2 + $0x378] sm:$0xff]
    %v157 = vld [vmem:[%s2 + $0x380] sm:$0xff]
    %v158 = vld [vmem:[%s2 + $0x388] sm:$0xff]
    %v159 = vld [vmem:[%s2 + $0x390] sm:$0xff]
    %v160 = vld [vmem:[%s2 + $0x398] sm:$0xff]
    %v161 = vld [vmem:[%s2 + $0x3a0] sm:$0xff]
    %v162 = vld [vmem:[%s2 + $0x3a8] sm:$0xff]
    %v163 = vld [vmem:[%s2 + $0x3b0] sm:$0xff]
    %v164 = vld [vmem:[%s2 + $0x3b8] sm:$0xff]
    %v165 = vld [vmem:[%s2 + $0x3c0] sm:$0xff]
    %v166 = vld [vmem:[%s2 + $0x3c8] sm:$0xff]
    %v167 = vld [vmem:[%s2 + $0x3d0] sm:$0xff]
    %v168 = vld [vmem:[%s2 + $0x3d8] sm:$0xff]
    %v169 = vld [vmem:[%s2 + $0x3e0] sm:$0xff]
    %v170 = vld [vmem:[%s2 + $0x3e8] sm:$0xff]
    %v171 = vld [vmem:[%s2 + $0x3f0] sm:$0xff]
    %v172 = vld [vmem:[%s2 + $0x3f8] sm:$0xff]
    %v173 = vld [vmem:[%s1] sm:$0xff]
    %v174 = vld [vmem:[%s1 + $0x8] sm:$0xff]
    %v175 = vld [vmem:[%s1 + $0x10] sm:$0xff]
    %v176 = vld [vmem:[%s1 + $0x18] sm:$0xff]
    %v177 = vld [vmem:[%s1 + $0x20] sm:$0xff]
    %v178 = vld [vmem:[%s1 + $0x28] sm:$0xff]
    %v179 = vld [vmem:[%s1 + $0x30] sm:$0xff]
    %v180 = vld [vmem:[%s1 + $0x38] sm:$0xff]
    %v309 = vunpack.c.l.b16 %v45
    %v310 = vunpack.c.h.b16 %v45
    %v311 = vunpack.c.l.b16 %v46
    %v312 = vunpack.c.h.b16 %v46
    %v313 = vunpack.c.l.b16 %v47
    %v314 = vunpack.c.h.b16 %v47
    %v315 = vunpack.c.l.b16 %v48
    %v316 = vunpack.c.h.b16 %v48
    %v317 = vunpack.c.l.b16 %v49
    %v318 = vunpack.c.h.b16 %v49
    %v319 = vunpack.c.l.b16 %v50
    %v320 = vunpack.c.h.b16 %v50
    %v321 = vunpack.c.l.b16 %v51
    %v322 = vunpack.c.h.b16 %v51
    %v323 = vunpack.c.l.b16 %v52
    %v324 = vunpack.c.h.b16 %v52
    %v325 = vunpack.c.l.b16 %v53
    %v326 = vunpack.c.h.b16 %v53
    %v327 = vunpack.c.l.b16 %v54
    %v328 = vunpack.c.h.b16 %v54
    %v329 = vunpack.c.l.b16 %v55
    %v330 = vunpack.c.h.b16 %v55
    %v331 = vunpack.c.l.b16 %v56
    %v332 = vunpack.c.h.b16 %v56
    %v333 = vunpack.c.l.b16 %v57
    %v334 = vunpack.c.h.b16 %v57
    %v335 = vunpack.c.l.b16 %v58
    %v336 = vunpack.c.h.b16 %v58
    %v337 = vunpack.c.l.b16 %v59
    %v338 = vunpack.c.h.b16 %v59
    %v339 = vunpack.c.l.b16 %v60
    %v340 = vunpack.c.h.b16 %v60
    %v341 = vunpack.c.l.b16 %v61
    %v342 = vunpack.c.h.b16 %v61
    %v343 = vunpack.c.l.b16 %v62
    %v344 = vunpack.c.h.b16 %v62
    %v345 = vunpack.c.l.b16 %v63
    %v346 = vunpack.c.h.b16 %v63
    %v347 = vunpack.c.l.b16 %v64
    %v348 = vunpack.c.h.b16 %v64
    %v349 = vunpack.c.l.b16 %v65
    %v350 = vunpack.c.h.b16 %v65
    %v351 = vunpack.c.l.b16 %v66
    %v352 = vunpack.c.h.b16 %v66
    %v353 = vunpack.c.l.b16 %v67
    %v354 = vunpack.c.h.b16 %v67
    %v355 = vunpack.c.l.b16 %v68
    %v356 = vunpack.c.h.b16 %v68
    %v357 = vunpack.c.l.b16 %v69
    %v358 = vunpack.c.h.b16 %v69
    %v359 = vunpack.c.l.b16 %v70
    %v360 = vunpack.c.h.b16 %v70
    %v361 = vunpack.c.l.b16 %v71
    %v362 = vunpack.c.h.b16 %v71
    %v363 = vunpack.c.l.b16 %v72
    %v364 = vunpack.c.h.b16 %v72
    %v365 = vunpack.c.l.b16 %v73
    %v366 = vunpack.c.h.b16 %v73
    %v367 = vunpack.c.l.b16 %v74
    %v368 = vunpack.c.h.b16 %v74
    %v369 = vunpack.c.l.b16 %v75
    %v370 = vunpack.c.h.b16 %v75
    %v371 = vunpack.c.l.b16 %v76
    %v372 = vunpack.c.h.b16 %v76
    %v373 = vunpack.c.l.b16 %v77
    %v374 = vunpack.c.h.b16 %v77
    %v375 = vunpack.c.l.b16 %v78
    %v376 = vunpack.c.h.b16 %v78
    %v377 = vunpack.c.l.b16 %v79
    %v378 = vunpack.c.h.b16 %v79
    %v379 = vunpack.c.l.b16 %v80
    %v380 = vunpack.c.h.b16 %v80
    %v381 = vunpack.c.l.b16 %v81
    %v382 = vunpack.c.h.b16 %v81
    %v383 = vunpack.c.l.b16 %v82
    %v384 = vunpack.c.h.b16 %v82
    %v385 = vunpack.c.l.b16 %v83
    %v386 = vunpack.c.h.b16 %v83
    %v387 = vunpack.c.l.b16 %v84
    %v388 = vunpack.c.h.b16 %v84
    %v389 = vunpack.c.l.b16 %v85
    %v390 = vunpack.c.h.b16 %v85
    %v391 = vunpack.c.l.b16 %v86
    %v392 = vunpack.c.h.b16 %v86
    %v393 = vunpack.c.l.b16 %v87
    %v394 = vunpack.c.h.b16 %v87
    %v395 = vunpack.c.l.b16 %v88
    %v396 = vunpack.c.h.b16 %v88
    %v397 = vunpack.c.l.b16 %v89
    %v398 = vunpack.c.h.b16 %v89
    %v399 = vunpack.c.l.b16 %v90
    %v400 = vunpack.c.h.b16 %v90
    %v401 = vunpack.c.l.b16 %v91
    %v402 = vunpack.c.h.b16 %v91
    %v403 = vunpack.c.l.b16 %v92
    %v404 = vunpack.c.h.b16 %v92
    %v405 = vunpack.c.l.b16 %v93
    %v406 = vunpack.c.h.b16 %v93
    %v407 = vunpack.c.l.b16 %v94
    %v408 = vunpack.c.h.b16 %v94
    %v409 = vunpack.c.l.b16 %v95
    %v410 = vunpack.c.h.b16 %v95
    %v411 = vunpack.c.l.b16 %v96
    %v412 = vunpack.c.h.b16 %v96
    %v413 = vunpack.c.l.b16 %v97
    %v414 = vunpack.c.h.b16 %v97
    %v415 = vunpack.c.l.b16 %v98
    %v416 = vunpack.c.h.b16 %v98
    %v417 = vunpack.c.l.b16 %v99
    %v418 = vunpack.c.h.b16 %v99
    %v419 = vunpack.c.l.b16 %v100
    %v420 = vunpack.c.h.b16 %v100
    %v421 = vunpack.c.l.b16 %v101
    %v422 = vunpack.c.h.b16 %v101
    %v423 = vunpack.c.l.b16 %v102
    %v424 = vunpack.c.h.b16 %v102
    %v425 = vunpack.c.l.b16 %v103
    %v426 = vunpack.c.h.b16 %v103
    %v427 = vunpack.c.l.b16 %v104
    %v428 = vunpack.c.h.b16 %v104
    %v429 = vunpack.c.l.b16 %v105
    %v430 = vunpack.c.h.b16 %v105
    %v431 = vunpack.c.l.b16 %v106
    %v432 = vunpack.c.h.b16 %v106
    %v433 = vunpack.c.l.b16 %v107
    %v434 = vunpack.c.h.b16 %v107
    %v435 = vunpack.c.l.b16 %v108
    %v436 = vunpack.c.h.b16 %v108
    %v437 = vunpack.c.l.b16 %v109
    %v438 = vunpack.c.h.b16 %v109
    %v439 = vunpack.c.l.b16 %v110
    %v440 = vunpack.c.h.b16 %v110
    %v441 = vunpack.c.l.b16 %v111
    %v442 = vunpack.c.h.b16 %v111
    %v443 = vunpack.c.l.b16 %v112
    %v444 = vunpack.c.h.b16 %v112
    %v445 = vunpack.c.l.b16 %v113
    %v446 = vunpack.c.h.b16 %v113
    %v447 = vunpack.c.l.b16 %v114
    %v448 = vunpack.c.h.b16 %v114
    %v449 = vunpack.c.l.b16 %v115
    %v450 = vunpack.c.h.b16 %v115
    %v451 = vunpack.c.l.b16 %v116
    %v452 = vunpack.c.h.b16 %v116
    %v453 = vunpack.c.l.b16 %v117
    %v454 = vunpack.c.h.b16 %v117
    %v455 = vunpack.c.l.b16 %v118
    %v456 = vunpack.c.h.b16 %v118
    %v457 = vunpack.c.l.b16 %v119
    %v458 = vunpack.c.h.b16 %v119
    %v459 = vunpack.c.l.b16 %v120
    %v460 = vunpack.c.h.b16 %v120
    %v461 = vunpack.c.l.b16 %v121
    %v462 = vunpack.c.h.b16 %v121
    %v463 = vunpack.c.l.b16 %v122
    %v464 = vunpack.c.h.b16 %v122
    %v465 = vunpack.c.l.b16 %v123
    %v466 = vunpack.c.h.b16 %v123
    %v467 = vunpack.c.l.b16 %v124
    %v468 = vunpack.c.h.b16 %v124
    %v469 = vunpack.c.l.b16 %v125
    %v470 = vunpack.c.h.b16 %v125
    %v471 = vunpack.c.l.b16 %v126
    %v472 = vunpack.c.h.b16 %v126
    %v473 = vunpack.c.l.b16 %v127
    %v474 = vunpack.c.h.b16 %v127
    %v475 = vunpack.c.l.b16 %v128
    %v476 = vunpack.c.h.b16 %v128
    %v477 = vunpack.c.l.b16 %v129
    %v478 = vunpack.c.h.b16 %v129
    %v479 = vunpack.c.l.b16 %v130
    %v480 = vunpack.c.h.b16 %v130
    %v481 = vunpack.c.l.b16 %v131
    %v482 = vunpack.c.h.b16 %v131
    %v483 = vunpack.c.l.b16 %v132
    %v484 = vunpack.c.h.b16 %v132
    %v485 = vunpack.c.l.b16 %v133
    %v486 = vunpack.c.h.b16 %v133
    %v487 = vunpack.c.l.b16 %v134
    %v488 = vunpack.c.h.b16 %v134
    %v489 = vunpack.c.l.b16 %v135
    %v490 = vunpack.c.h.b16 %v135
    %v491 = vunpack.c.l.b16 %v136
    %v492 = vunpack.c.h.b16 %v136
    %v493 = vunpack.c.l.b16 %v137
    %v494 = vunpack.c.h.b16 %v137
    %v495 = vunpack.c.l.b16 %v138
    %v496 = vunpack.c.h.b16 %v138
    %v497 = vunpack.c.l.b16 %v139
    %v498 = vunpack.c.h.b16 %v139
    %v499 = vunpack.c.l.b16 %v140
    %v500 = vunpack.c.h.b16 %v140
    %v501 = vunpack.c.l.b16 %v141
    %v502 = vunpack.c.h.b16 %v141
    %v503 = vunpack.c.l.b16 %v142
    %v504 = vunpack.c.h.b16 %v142
    %v505 = vunpack.c.l.b16 %v143
    %v506 = vunpack.c.h.b16 %v143
    %v507 = vunpack.c.l.b16 %v144
    %v508 = vunpack.c.h.b16 %v144
    %v509 = vunpack.c.l.b16 %v145
    %v510 = vunpack.c.h.b16 %v145
    %v511 = vunpack.c.l.b16 %v146
    %v512 = vunpack.c.h.b16 %v146
    %v513 = vunpack.c.l.b16 %v147
    %v514 = vunpack.c.h.b16 %v147
    %v515 = vunpack.c.l.b16 %v148
    %v516 = vunpack.c.h.b16 %v148
    %v517 = vunpack.c.l.b16 %v149
    %v518 = vunpack.c.h.b16 %v149
    %v519 = vunpack.c.l.b16 %v150
    %v520 = vunpack.c.h.b16 %v150
    %v521 = vunpack.c.l.b16 %v151
    %v522 = vunpack.c.h.b16 %v151
    %v523 = vunpack.c.l.b16 %v152
    %v524 = vunpack.c.h.b16 %v152
    %v525 = vunpack.c.l.b16 %v153
    %v526 = vunpack.c.h.b16 %v153
    %v527 = vunpack.c.l.b16 %v154
    %v528 = vunpack.c.h.b16 %v154
    %v529 = vunpack.c.l.b16 %v155
    %v530 = vunpack.c.h.b16 %v155
    %v531 = vunpack.c.l.b16 %v156
    %v532 = vunpack.c.h.b16 %v156
    %v533 = vunpack.c.l.b16 %v157
    %v534 = vunpack.c.h.b16 %v157
    %v535 = vunpack.c.l.b16 %v158
    %v536 = vunpack.c.h.b16 %v158
    %v537 = vunpack.c.l.b16 %v159
    %v538 = vunpack.c.h.b16 %v159
    %v539 = vunpack.c.l.b16 %v160
    %v540 = vunpack.c.h.b16 %v160
    %v541 = vunpack.c.l.b16 %v161
    %v542 = vunpack.c.h.b16 %v161
    %v543 = vunpack.c.l.b16 %v162
    %v544 = vunpack.c.h.b16 %v162
    %v545 = vunpack.c.l.b16 %v163
    %v546 = vunpack.c.h.b16 %v163
    %v547 = vunpack.c.l.b16 %v164
    %v548 = vunpack.c.h.b16 %v164
    %v549 = vunpack.c.l.b16 %v165
    %v550 = vunpack.c.h.b16 %v165
    %v551 = vunpack.c.l.b16 %v166
    %v552 = vunpack.c.h.b16 %v166
    %v553 = vunpack.c.l.b16 %v167
    %v554 = vunpack.c.h.b16 %v167
    %v555 = vunpack.c.l.b16 %v168
    %v556 = vunpack.c.h.b16 %v168
    %v557 = vunpack.c.l.b16 %v169
    %v558 = vunpack.c.h.b16 %v169
    %v559 = vunpack.c.l.b16 %v170
    %v560 = vunpack.c.h.b16 %v170
    %v561 = vunpack.c.l.b16 %v171
    %v562 = vunpack.c.h.b16 %v171
    %v563 = vunpack.c.l.b16 %v172
    %v564 = vunpack.c.h.b16 %v172
    %v565 = vpack.c.b16 %v313, %v309
    %v566 = vpack.c.b16 %v314, %v310
    %v567 = vpack.c.b16 %v315, %v311
    %v568 = vpack.c.b16 %v316, %v312
    %v569 = vpack.c.b16 %v321, %v317
    %v570 = vpack.c.b16 %v322, %v318
    %v571 = vpack.c.b16 %v323, %v319
    %v572 = vpack.c.b16 %v324, %v320
    %v573 = vpack.c.b16 %v329, %v325
    %v574 = vpack.c.b16 %v330, %v326
    %v575 = vpack.c.b16 %v331, %v327
    %v576 = vpack.c.b16 %v332, %v328
    %v577 = vpack.c.b16 %v337, %v333
    %v578 = vpack.c.b16 %v338, %v334
    %v579 = vpack.c.b16 %v339, %v335
    %v580 = vpack.c.b16 %v340, %v336
    %v581 = vpack.c.b16 %v345, %v341
    %v582 = vpack.c.b16 %v346, %v342
    %v583 = vpack.c.b16 %v347, %v343
    %v584 = vpack.c.b16 %v348, %v344
    %v585 = vpack.c.b16 %v353, %v349
    %v586 = vpack.c.b16 %v354, %v350
    %v587 = vpack.c.b16 %v355, %v351
    %v588 = vpack.c.b16 %v356, %v352
    %v589 = vpack.c.b16 %v361, %v357
    %v590 = vpack.c.b16 %v362, %v358
    %v591 = vpack.c.b16 %v363, %v359
    %v592 = vpack.c.b16 %v364, %v360
    %v593 = vpack.c.b16 %v369, %v365
    %v594 = vpack.c.b16 %v370, %v366
    %v595 = vpack.c.b16 %v371, %v367
    %v596 = vpack.c.b16 %v372, %v368
    %v597 = vpack.c.b16 %v377, %v373
    %v598 = vpack.c.b16 %v378, %v374
    %v599 = vpack.c.b16 %v379, %v375
    %v600 = vpack.c.b16 %v380, %v376
    %v601 = vpack.c.b16 %v385, %v381
    %v602 = vpack.c.b16 %v386, %v382
    %v603 = vpack.c.b16 %v387, %v383
    %v604 = vpack.c.b16 %v388, %v384
    %v605 = vpack.c.b16 %v393, %v389
    %v606 = vpack.c.b16 %v394, %v390
    %v607 = vpack.c.b16 %v395, %v391
    %v608 = vpack.c.b16 %v396, %v392
    %v609 = vpack.c.b16 %v401, %v397
    %v610 = vpack.c.b16 %v402, %v398
    %v611 = vpack.c.b16 %v403, %v399
    %v612 = vpack.c.b16 %v404, %v400
    %v613 = vpack.c.b16 %v409, %v405
    %v614 = vpack.c.b16 %v410, %v406
    %v615 = vpack.c.b16 %v411, %v407
    %v616 = vpack.c.b16 %v412, %v408
    %v617 = vpack.c.b16 %v417, %v413
    %v618 = vpack.c.b16 %v418, %v414
    %v619 = vpack.c.b16 %v419, %v415
    %v620 = vpack.c.b16 %v420, %v416
    %v621 = vpack.c.b16 %v425, %v421
    %v622 = vpack.c.b16 %v426, %v422
    %v623 = vpack.c.b16 %v427, %v423
    %v624 = vpack.c.b16 %v428, %v424
    %v625 = vpack.c.b16 %v433, %v429
    %v626 = vpack.c.b16 %v434, %v430
    %v627 = vpack.c.b16 %v435, %v431
    %v628 = vpack.c.b16 %v436, %v432
    %v629 = vpack.c.b16 %v441, %v437
    %v630 = vpack.c.b16 %v442, %v438
    %v631 = vpack.c.b16 %v443, %v439
    %v632 = vpack.c.b16 %v444, %v440
    %v633 = vpack.c.b16 %v449, %v445
    %v634 = vpack.c.b16 %v450, %v446
    %v635 = vpack.c.b16 %v451, %v447
    %v636 = vpack.c.b16 %v452, %v448
    %v637 = vpack.c.b16 %v457, %v453
    %v638 = vpack.c.b16 %v458, %v454
    %v639 = vpack.c.b16 %v459, %v455
    %v640 = vpack.c.b16 %v460, %v456
    %v641 = vpack.c.b16 %v465, %v461
    %v642 = vpack.c.b16 %v466, %v462
    %v643 = vpack.c.b16 %v467, %v463
    %v644 = vpack.c.b16 %v468, %v464
    %v645 = vpack.c.b16 %v473, %v469
    %v646 = vpack.c.b16 %v474, %v470
    %v647 = vpack.c.b16 %v475, %v471
    %v648 = vpack.c.b16 %v476, %v472
    %v649 = vpack.c.b16 %v481, %v477
    %v650 = vpack.c.b16 %v482, %v478
    %v651 = vpack.c.b16 %v483, %v479
    %v652 = vpack.c.b16 %v484, %v480
    %v653 = vpack.c.b16 %v489, %v485
    %v654 = vpack.c.b16 %v490, %v486
    %v655 = vpack.c.b16 %v491, %v487
    %v656 = vpack.c.b16 %v492, %v488
    %v657 = vpack.c.b16 %v497, %v493
    %v658 = vpack.c.b16 %v498, %v494
    %v659 = vpack.c.b16 %v499, %v495
    %v660 = vpack.c.b16 %v500, %v496
    %v661 = vpack.c.b16 %v505, %v501
    %v662 = vpack.c.b16 %v506, %v502
    %v663 = vpack.c.b16 %v507, %v503
    %v664 = vpack.c.b16 %v508, %v504
    %v665 = vpack.c.b16 %v513, %v509
    %v666 = vpack.c.b16 %v514, %v510
    %v667 = vpack.c.b16 %v515, %v511
    %v668 = vpack.c.b16 %v516, %v512
    %v669 = vpack.c.b16 %v521, %v517
    %v670 = vpack.c.b16 %v522, %v518
    %v671 = vpack.c.b16 %v523, %v519
    %v672 = vpack.c.b16 %v524, %v520
    %v673 = vpack.c.b16 %v529, %v525
    %v674 = vpack.c.b16 %v530, %v526
    %v675 = vpack.c.b16 %v531, %v527
    %v676 = vpack.c.b16 %v532, %v528
    %v677 = vpack.c.b16 %v537, %v533
    %v678 = vpack.c.b16 %v538, %v534
    %v679 = vpack.c.b16 %v539, %v535
    %v680 = vpack.c.b16 %v540, %v536
    %v681 = vpack.c.b16 %v545, %v541
    %v682 = vpack.c.b16 %v546, %v542
    %v683 = vpack.c.b16 %v547, %v543
    %v684 = vpack.c.b16 %v548, %v544
    %v685 = vpack.c.b16 %v553, %v549
    %v686 = vpack.c.b16 %v554, %v550
    %v687 = vpack.c.b16 %v555, %v551
    %v688 = vpack.c.b16 %v556, %v552
    %v689 = vpack.c.b16 %v561, %v557
    %v690 = vpack.c.b16 %v562, %v558
    %v691 = vpack.c.b16 %v563, %v559
    %v692 = vpack.c.b16 %v564, %v560
    %821 = vmatprep.subr.bf16.mxu0 %v566
    %822 = vmatpush1.bf16.msra.mxu0 %v565
    %823 = vmatprep.subr.bf16.mxu0 %v570
    %824 = vmatpush1.bf16.msra.mxu0 %v569
    %825 = vmatprep.subr.bf16.mxu0 %v574
    %826 = vmatpush1.bf16.msra.mxu0 %v573
    %827 = vmatprep.subr.bf16.mxu0 %v578
    %828 = vmatpush1.bf16.msra.mxu0 %v577
    %829 = vmatprep.subr.bf16.mxu0 %v582
    %830 = vmatpush1.bf16.msra.mxu0 %v581
    %831 = vmatprep.subr.bf16.mxu0 %v586
    %832 = vmatpush1.bf16.msra.mxu0 %v585
    %833 = vmatprep.subr.bf16.mxu0 %v590
    %834 = vmatpush1.bf16.msra.mxu0 %v589
    %835 = vmatprep.subr.bf16.mxu0 %v594
    %836 = vmatpush1.bf16.msra.mxu0 %v593
    %837 = vmatprep.subr.bf16.mxu0 %v598
    %838 = vmatpush1.bf16.msra.mxu0 %v597
    %839 = vmatprep.subr.bf16.mxu0 %v602
    %840 = vmatpush1.bf16.msra.mxu0 %v601
    %841 = vmatprep.subr.bf16.mxu0 %v606
    %842 = vmatpush1.bf16.msra.mxu0 %v605
    %843 = vmatprep.subr.bf16.mxu0 %v610
    %844 = vmatpush1.bf16.msra.mxu0 %v609
    %845 = vmatprep.subr.bf16.mxu0 %v614
    %846 = vmatpush1.bf16.msra.mxu0 %v613
    %847 = vmatprep.subr.bf16.mxu0 %v618
    %848 = vmatpush1.bf16.msra.mxu0 %v617
    %849 = vmatprep.subr.bf16.mxu0 %v622
    %850 = vmatpush1.bf16.msra.mxu0 %v621
    %851 = vmatprep.subr.bf16.mxu0 %v626
    %852 = vmatpush1.bf16.msra.mxu0 %v625
    %853 = vmatprep.mubr.bf16.mxu0 %v42
    %854 = vmatmul.mubr.bf16.gmra.mrb[0].mxu0 %v41
    %v855 = vpop.f32.mrb[0].mxu0
    %v856 = vadd.f32 %v173, %v855
    %v857 = vpop.f32.mrb[0].mxu0
    %v858 = vadd.f32 %v174, %v857
    %v859 = vpop.f32.mrb[0].mxu0
    %v860 = vadd.f32 %v177, %v859
    %v861 = vpop.f32.mrb[0].mxu0
    %v862 = vadd.f32 %v178, %v861
    %863 = vdwg.mxu0
    %864 = vmatprep.subr.bf16.mxu0 %v630
    %865 = vmatpush1.bf16.msra.mxu0 %v629
    %866 = vmatprep.subr.bf16.mxu0 %v634
    %867 = vmatpush1.bf16.msra.mxu0 %v633
    %868 = vmatprep.subr.bf16.mxu0 %v638
    %869 = vmatpush1.bf16.msra.mxu0 %v637
    %870 = vmatprep.subr.bf16.mxu0 %v642
    %871 = vmatpush1.bf16.msra.mxu0 %v641
    %872 = vmatprep.subr.bf16.mxu0 %v646
    %873 = vmatpush1.bf16.msra.mxu0 %v645
    %874 = vmatprep.subr.bf16.mxu0 %v650
    %875 = vmatpush1.bf16.msra.mxu0 %v649
    %876 = vmatprep.subr.bf16.mxu0 %v654
    %877 = vmatpush1.bf16.msra.mxu0 %v653
    %878 = vmatprep.subr.bf16.mxu0 %v658
    %879 = vmatpush1.bf16.msra.mxu0 %v657
    %880 = vmatprep.subr.bf16.mxu0 %v662
    %881 = vmatpush1.bf16.msra.mxu0 %v661
    %882 = vmatprep.subr.bf16.mxu0 %v666
    %883 = vmatpush1.bf16.msra.mxu0 %v665
    %884 = vmatprep.subr.bf16.mxu0 %v670
    %885 = vmatpush1.bf16.msra.mxu0 %v669
    %886 = vmatprep.subr.bf16.mxu0 %v674
    %887 = vmatpush1.bf16.msra.mxu0 %v673
    %888 = vmatprep.subr.bf16.mxu0 %v678
    %889 = vmatpush1.bf16.msra.mxu0 %v677
    %890 = vmatprep.subr.bf16.mxu0 %v682
    %891 = vmatpush1.bf16.msra.mxu0 %v681
    %892 = vmatprep.subr.bf16.mxu0 %v686
    %893 = vmatpush1.bf16.msra.mxu0 %v685
    %894 = vmatprep.subr.bf16.mxu0 %v690
    %895 = vmatpush1.bf16.msra.mxu0 %v689
    %896 = vmatprep.mubr.bf16.mxu0 %v44
    %897 = vmatmul.mubr.bf16.gmra.mrb[0].mxu0 %v43
    %v898 = vpop.f32.mrb[0].mxu0
    %v899 = vadd.f32 %v856, %v898
    %v900 = vpop.f32.mrb[0].mxu0
    %v901 = vadd.f32 %v858, %v900
    %v902 = vpop.f32.mrb[0].mxu0
    %v903 = vadd.f32 %v860, %v902
    %v904 = vpop.f32.mrb[0].mxu0
    %v905 = vadd.f32 %v862, %v904
    %906 = vdwg.mxu0
    %907 = vmatprep.subr.bf16.mxu0 %v568
    %908 = vmatpush1.bf16.msra.mxu0 %v567
    %909 = vmatprep.subr.bf16.mxu0 %v572
    %910 = vmatpush1.bf16.msra.mxu0 %v571
    %911 = vmatprep.subr.bf16.mxu0 %v576
    %912 = vmatpush1.bf16.msra.mxu0 %v575
    %913 = vmatprep.subr.bf16.mxu0 %v580
    %914 = vmatpush1.bf16.msra.mxu0 %v579
    %915 = vmatprep.subr.bf16.mxu0 %v584
    %916 = vmatpush1.bf16.msra.mxu0 %v583
    %917 = vmatprep.subr.bf16.mxu0 %v588
    %918 = vmatpush1.bf16.msra.mxu0 %v587
    %919 = vmatprep.subr.bf16.mxu0 %v592
    %920 = vmatpush1.bf16.msra.mxu0 %v591
    %921 = vmatprep.subr.bf16.mxu0 %v596
    %922 = vmatpush1.bf16.msra.mxu0 %v595
    %923 = vmatprep.subr.bf16.mxu0 %v600
    %924 = vmatpush1.bf16.msra.mxu0 %v599
    %925 = vmatprep.subr.bf16.mxu0 %v604
    %926 = vmatpush1.bf16.msra.mxu0 %v603
    %927 = vmatprep.subr.bf16.mxu0 %v608
    %928 = vmatpush1.bf16.msra.mxu0 %v607
    %929 = vmatprep.subr.bf16.mxu0 %v612
    %930 = vmatpush1.bf16.msra.mxu0 %v611
    %931 = vmatprep.subr.bf16.mxu0 %v616
    %932 = vmatpush1.bf16.msra.mxu0 %v615
    %933 = vmatprep.subr.bf16.mxu0 %v620
    %934 = vmatpush1.bf16.msra.mxu0 %v619
    %935 = vmatprep.subr.bf16.mxu0 %v624
    %936 = vmatpush1.bf16.msra.mxu0 %v623
    %937 = vmatprep.subr.bf16.mxu0 %v628
    %938 = vmatpush1.bf16.msra.mxu0 %v627
    %939 = vmatprep.mubr.bf16.mxu0 %v42
    %940 = vmatmul.mubr.bf16.gmra.mrb[0].mxu0 %v41
    %v941 = vpop.f32.mrb[0].mxu0
    %v942 = vadd.f32 %v175, %v941
    %v943 = vpop.f32.mrb[0].mxu0
    %v944 = vadd.f32 %v176, %v943
    %v945 = vpop.f32.mrb[0].mxu0
    %v946 = vadd.f32 %v179, %v945
    %v947 = vpop.f32.mrb[0].mxu0
    %v948 = vadd.f32 %v180, %v947
    %949 = vdwg.mxu0
    %950 = vmatprep.subr.bf16.mxu0 %v632
    %951 = vmatpush1.bf16.msra.mxu0 %v631
    %952 = vmatprep.subr.bf16.mxu0 %v636
    %953 = vmatpush1.bf16.msra.mxu0 %v635
    %954 = vmatprep.subr.bf16.mxu0 %v640
    %955 = vmatpush1.bf16.msra.mxu0 %v639
    %956 = vmatprep.subr.bf16.mxu0 %v644
    %957 = vmatpush1.bf16.msra.mxu0 %v643
    %958 = vmatprep.subr.bf16.mxu0 %v648
    %959 = vmatpush1.bf16.msra.mxu0 %v647
    %960 = vmatprep.subr.bf16.mxu0 %v652
    %961 = vmatpush1.bf16.msra.mxu0 %v651
    %962 = vmatprep.subr.bf16.mxu0 %v656
    %963 = vmatpush1.bf16.msra.mxu0 %v655
    %964 = vmatprep.subr.bf16.mxu0 %v660
    %965 = vmatpush1.bf16.msra.mxu0 %v659
    %966 = vmatprep.subr.bf16.mxu0 %v664
    %967 = vmatpush1.bf16.msra.mxu0 %v663
    %968 = vmatprep.subr.bf16.mxu0 %v668
    %969 = vmatpush1.bf16.msra.mxu0 %v667
    %970 = vmatprep.subr.bf16.mxu0 %v672
    %971 = vmatpush1.bf16.msra.mxu0 %v671
    %972 = vmatprep.subr.bf16.mxu0 %v676
    %973 = vmatpush1.bf16.msra.mxu0 %v675
    %974 = vmatprep.subr.bf16.mxu0 %v680
    %975 = vmatpush1.bf16.msra.mxu0 %v679
    %976 = vmatprep.subr.bf16.mxu0 %v684
    %977 = vmatpush1.bf16.msra.mxu0 %v683
    %978 = vmatprep.subr.bf16.mxu0 %v688
    %979 = vmatpush1.bf16.msra.mxu0 %v687
    %980 = vmatprep.subr.bf16.mxu0 %v692
    %981 = vmatpush1.bf16.msra.mxu0 %v691
    %982 = vmatprep.mubr.bf16.mxu0 %v44
    %983 = vmatmul.mubr.bf16.gmra.mrb[0].mxu0 %v43
    %v984 = vpop.f32.mrb[0].mxu0
    %v985 = vadd.f32 %v942, %v984
    %v986 = vpop.f32.mrb[0].mxu0
    %v987 = vadd.f32 %v944, %v986
    %v988 = vpop.f32.mrb[0].mxu0
    %v989 = vadd.f32 %v946, %v988
    %v990 = vpop.f32.mrb[0].mxu0
    %v991 = vadd.f32 %v948, %v990
    %992 = vdwg.mxu0
    %v993 = vadd.f32 %v899, %v901
    %v994 = vadd.f32 %v993, %v985
    %v995 = vadd.f32 %v994, %v987
    %996 = vadd.xlane.f32.xlu0 %v995
    %v997 = vpop.xlane.xlu0 %996
    %v998 = vadd.f32 %v903, %v905
    %v999 = vadd.f32 %v998, %v989
    %v1000 = vadd.f32 %v999, %v991
    %1001 = vadd.xlane.f32.xlu0 %v1000
    %v1002 = vpop.xlane.xlu0 %1001
    %v1003 = vrcp.pop 512.0
    %v1004 = vmul.f32 %v997, %v1003
    %v1005 = vmul.f32 %v1002, %v1003
    %v1006 = vsub.f32 %v899, %v1004
    %v1007 = vsub.f32 %v901, %v1004
    %v1008 = vsub.f32 %v985, %v1004
    %v1009 = vsub.f32 %v987, %v1004
    %v1010 = vsub.f32 %v903, %v1005
    %v1011 = vsub.f32 %v905, %v1005
    %v1012 = vsub.f32 %v989, %v1005
    %v1013 = vsub.f32 %v991, %v1005
    %v1014 = vmul.f32 %v1006, %v1006
    %v1015 = vmul.f32 %v1007, %v1007
    %v1016 = vmul.f32 %v1008, %v1008
    %v1017 = vmul.f32 %v1009, %v1009
    %v1018 = vmul.f32 %v1010, %v1010
    %v1019 = vmul.f32 %v1011, %v1011
    %v1020 = vmul.f32 %v1012, %v1012
    %v1021 = vmul.f32 %v1013, %v1013
    %v1022 = vadd.f32 %v1014, %v1015
    %v1023 = vadd.f32 %v1022, %v1016
    %v1024 = vadd.f32 %v1023, %v1017
    %1025 = vadd.xlane.f32.xlu0 %v1024
    %v1026 = vpop.xlane.xlu0 %1025
    %v1027 = vadd.f32 %v1018, %v1019
    %v1028 = vadd.f32 %v1027, %v1020
    %v1029 = vadd.f32 %v1028, %v1021
    %1030 = vadd.xlane.f32.xlu0 %v1029
    %v1031 = vpop.xlane.xlu0 %1030
    %v1032 = vmul.f32 %v1026, %v1003
    %v1033 = vmul.f32 %v1031, %v1003
    %v1034 = vadd.f32 %v1032, 1e-05
    %v1035 = vadd.f32 %v1033, 1e-05
    %v1036 = vrsqrt.pop %v1034
    %v1037 = vrsqrt.pop %v1035
    %v1038 = vmul.f32 %v1006, %v1036
    %v1039 = vmul.f32 %v1007, %v1036
    %v1040 = vmul.f32 %v1008, %v1036
    %v1041 = vmul.f32 %v1009, %v1036
    %v1042 = vmul.f32 %v1010, %v1037
    %v1043 = vmul.f32 %v1011, %v1037
    %v1044 = vmul.f32 %v1012, %v1037
    %v1045 = vmul.f32 %v1013, %v1037
    %v1046 = vld [vmem:[%s3] sm:$0xf]
    %v1048 = vlaneseq
    %v1049 = vshrl.u32 %v1048, 7
    %v1050 = vsub.s32 0, %v1049
    %v1051 = vrot.slane %v1046, %v1050
    %v1052 = vlaneseq
    %v1053 = vshrl.u32 %v1052, 7
    %v1054 = vsub.s32 1, %v1053
    %v1055 = vrot.slane %v1046, %v1054
    %v1056 = vlaneseq
    %v1057 = vshrl.u32 %v1056, 7
    %v1058 = vsub.s32 2, %v1057
    %v1059 = vrot.slane %v1046, %v1058
    %v1060 = vlaneseq
    %v1061 = vshrl.u32 %v1060, 7
    %v1062 = vsub.s32 3, %v1061
    %v1063 = vrot.slane %v1046, %v1062
    %v1068 = vmul.f32 %v1038, %v1051
    %v1069 = vmul.f32 %v1039, %v1055
    %v1070 = vmul.f32 %v1040, %v1059
    %v1071 = vmul.f32 %v1041, %v1063
    %v1072 = vmul.f32 %v1042, %v1051
    %v1073 = vmul.f32 %v1043, %v1055
    %v1074 = vmul.f32 %v1044, %v1059
    %v1075 = vmul.f32 %v1045, %v1063
    %v1076 = vld [vmem:[%s4] sm:$0xf]
    %v1078 = vlaneseq
    %v1079 = vshrl.u32 %v1078, 7
    %v1080 = vsub.s32 0, %v1079
    %v1081 = vrot.slane %v1076, %v1080
    %v1082 = vlaneseq
    %v1083 = vshrl.u32 %v1082, 7
    %v1084 = vsub.s32 1, %v1083
    %v1085 = vrot.slane %v1076, %v1084
    %v1086 = vlaneseq
    %v1087 = vshrl.u32 %v1086, 7
    %v1088 = vsub.s32 2, %v1087
    %v1089 = vrot.slane %v1076, %v1088
    %v1090 = vlaneseq
    %v1091 = vshrl.u32 %v1090, 7
    %v1092 = vsub.s32 3, %v1091
    %v1093 = vrot.slane %v1076, %v1092
    %v1098 = vadd.f32 %v1068, %v1081
    %v1099 = vadd.f32 %v1069, %v1085
    %v1100 = vadd.f32 %v1070, %v1089
    %v1101 = vadd.f32 %v1071, %v1093
    %v1102 = vadd.f32 %v1072, %v1081
    %v1103 = vadd.f32 %v1073, %v1085
    %v1104 = vadd.f32 %v1074, %v1089
    %v1105 = vadd.f32 %v1075, %v1093
    %v1106 = vpack.c.bf16 %v1102, %v1098
    %v1107 = vpack.c.bf16 %v1103, %v1099
    %v1108 = vpack.c.bf16 %v1104, %v1100
    %v1109 = vpack.c.bf16 %v1105, %v1101
    %v1110 = vld [vmem:[%s5] sm:$0xff]
    %v1111 = vld [vmem:[%s5 + $0x8] sm:$0xff]
    %v1112 = vld [vmem:[%s5 + $0x10] sm:$0xff]
    %v1113 = vld [vmem:[%s5 + $0x18] sm:$0xff]
    %v1114 = vld [vmem:[%s5 + $0x20] sm:$0xff]
    %v1115 = vld [vmem:[%s5 + $0x28] sm:$0xff]
    %v1116 = vld [vmem:[%s5 + $0x30] sm:$0xff]
    %v1117 = vld [vmem:[%s5 + $0x38] sm:$0xff]
    %v1118 = vld [vmem:[%s5 + $0x40] sm:$0xff]
    %v1119 = vld [vmem:[%s5 + $0x48] sm:$0xff]
    %v1120 = vld [vmem:[%s5 + $0x50] sm:$0xff]
    %v1121 = vld [vmem:[%s5 + $0x58] sm:$0xff]
    %v1122 = vld [vmem:[%s5 + $0x60] sm:$0xff]
    %v1123 = vld [vmem:[%s5 + $0x68] sm:$0xff]
    %v1124 = vld [vmem:[%s5 + $0x70] sm:$0xff]
    %v1125 = vld [vmem:[%s5 + $0x78] sm:$0xff]
    %v1126 = vld [vmem:[%s5 + $0x80] sm:$0xff]
    %v1127 = vld [vmem:[%s5 + $0x88] sm:$0xff]
    %v1128 = vld [vmem:[%s5 + $0x90] sm:$0xff]
    %v1129 = vld [vmem:[%s5 + $0x98] sm:$0xff]
    %v1130 = vld [vmem:[%s5 + $0xa0] sm:$0xff]
    %v1131 = vld [vmem:[%s5 + $0xa8] sm:$0xff]
    %v1132 = vld [vmem:[%s5 + $0xb0] sm:$0xff]
    %v1133 = vld [vmem:[%s5 + $0xb8] sm:$0xff]
    %v1134 = vld [vmem:[%s5 + $0xc0] sm:$0xff]
    %v1135 = vld [vmem:[%s5 + $0xc8] sm:$0xff]
    %v1136 = vld [vmem:[%s5 + $0xd0] sm:$0xff]
    %v1137 = vld [vmem:[%s5 + $0xd8] sm:$0xff]
    %v1138 = vld [vmem:[%s5 + $0xe0] sm:$0xff]
    %v1139 = vld [vmem:[%s5 + $0xe8] sm:$0xff]
    %v1140 = vld [vmem:[%s5 + $0xf0] sm:$0xff]
    %v1141 = vld [vmem:[%s5 + $0xf8] sm:$0xff]
    %v1142 = vld [vmem:[%s5 + $0x100] sm:$0xff]
    %v1143 = vld [vmem:[%s5 + $0x108] sm:$0xff]
    %v1144 = vld [vmem:[%s5 + $0x110] sm:$0xff]
    %v1145 = vld [vmem:[%s5 + $0x118] sm:$0xff]
    %v1146 = vld [vmem:[%s5 + $0x120] sm:$0xff]
    %v1147 = vld [vmem:[%s5 + $0x128] sm:$0xff]
    %v1148 = vld [vmem:[%s5 + $0x130] sm:$0xff]
    %v1149 = vld [vmem:[%s5 + $0x138] sm:$0xff]
    %v1150 = vld [vmem:[%s5 + $0x140] sm:$0xff]
    %v1151 = vld [vmem:[%s5 + $0x148] sm:$0xff]
    %v1152 = vld [vmem:[%s5 + $0x150] sm:$0xff]
    %v1153 = vld [vmem:[%s5 + $0x158] sm:$0xff]
    %v1154 = vld [vmem:[%s5 + $0x160] sm:$0xff]
    %v1155 = vld [vmem:[%s5 + $0x168] sm:$0xff]
    %v1156 = vld [vmem:[%s5 + $0x170] sm:$0xff]
    %v1157 = vld [vmem:[%s5 + $0x178] sm:$0xff]
    %v1158 = vld [vmem:[%s5 + $0x180] sm:$0xff]
    %v1159 = vld [vmem:[%s5 + $0x188] sm:$0xff]
    %v1160 = vld [vmem:[%s5 + $0x190] sm:$0xff]
    %v1161 = vld [vmem:[%s5 + $0x198] sm:$0xff]
    %v1162 = vld [vmem:[%s5 + $0x1a0] sm:$0xff]
    %v1163 = vld [vmem:[%s5 + $0x1a8] sm:$0xff]
    %v1164 = vld [vmem:[%s5 + $0x1b0] sm:$0xff]
    %v1165 = vld [vmem:[%s5 + $0x1b8] sm:$0xff]
    %v1166 = vld [vmem:[%s5 + $0x1c0] sm:$0xff]
    %v1167 = vld [vmem:[%s5 + $0x1c8] sm:$0xff]
    %v1168 = vld [vmem:[%s5 + $0x1d0] sm:$0xff]
    %v1169 = vld [vmem:[%s5 + $0x1d8] sm:$0xff]
    %v1170 = vld [vmem:[%s5 + $0x1e0] sm:$0xff]
    %v1171 = vld [vmem:[%s5 + $0x1e8] sm:$0xff]
    %v1172 = vld [vmem:[%s5 + $0x1f0] sm:$0xff]
    %v1173 = vld [vmem:[%s5 + $0x1f8] sm:$0xff]
    %v1174 = vld [vmem:[%s5 + $0x200] sm:$0xff]
    %v1175 = vld [vmem:[%s5 + $0x208] sm:$0xff]
    %v1176 = vld [vmem:[%s5 + $0x210] sm:$0xff]
    %v1177 = vld [vmem:[%s5 + $0x218] sm:$0xff]
    %v1178 = vld [vmem:[%s5 + $0x220] sm:$0xff]
    %v1179 = vld [vmem:[%s5 + $0x228] sm:$0xff]
    %v1180 = vld [vmem:[%s5 + $0x230] sm:$0xff]
    %v1181 = vld [vmem:[%s5 + $0x238] sm:$0xff]
    %v1182 = vld [vmem:[%s5 + $0x240] sm:$0xff]
    %v1183 = vld [vmem:[%s5 + $0x248] sm:$0xff]
    %v1184 = vld [vmem:[%s5 + $0x250] sm:$0xff]
    %v1185 = vld [vmem:[%s5 + $0x258] sm:$0xff]
    %v1186 = vld [vmem:[%s5 + $0x260] sm:$0xff]
    %v1187 = vld [vmem:[%s5 + $0x268] sm:$0xff]
    %v1188 = vld [vmem:[%s5 + $0x270] sm:$0xff]
    %v1189 = vld [vmem:[%s5 + $0x278] sm:$0xff]
    %v1190 = vld [vmem:[%s5 + $0x280] sm:$0xff]
    %v1191 = vld [vmem:[%s5 + $0x288] sm:$0xff]
    %v1192 = vld [vmem:[%s5 + $0x290] sm:$0xff]
    %v1193 = vld [vmem:[%s5 + $0x298] sm:$0xff]
    %v1194 = vld [vmem:[%s5 + $0x2a0] sm:$0xff]
    %v1195 = vld [vmem:[%s5 + $0x2a8] sm:$0xff]
    %v1196 = vld [vmem:[%s5 + $0x2b0] sm:$0xff]
    %v1197 = vld [vmem:[%s5 + $0x2b8] sm:$0xff]
    %v1198 = vld [vmem:[%s5 + $0x2c0] sm:$0xff]
    %v1199 = vld [vmem:[%s5 + $0x2c8] sm:$0xff]
    %v1200 = vld [vmem:[%s5 + $0x2d0] sm:$0xff]
    %v1201 = vld [vmem:[%s5 + $0x2d8] sm:$0xff]
    %v1202 = vld [vmem:[%s5 + $0x2e0] sm:$0xff]
    %v1203 = vld [vmem:[%s5 + $0x2e8] sm:$0xff]
    %v1204 = vld [vmem:[%s5 + $0x2f0] sm:$0xff]
    %v1205 = vld [vmem:[%s5 + $0x2f8] sm:$0xff]
    %v1206 = vld [vmem:[%s5 + $0x300] sm:$0xff]
    %v1207 = vld [vmem:[%s5 + $0x308] sm:$0xff]
    %v1208 = vld [vmem:[%s5 + $0x310] sm:$0xff]
    %v1209 = vld [vmem:[%s5 + $0x318] sm:$0xff]
    %v1210 = vld [vmem:[%s5 + $0x320] sm:$0xff]
    %v1211 = vld [vmem:[%s5 + $0x328] sm:$0xff]
    %v1212 = vld [vmem:[%s5 + $0x330] sm:$0xff]
    %v1213 = vld [vmem:[%s5 + $0x338] sm:$0xff]
    %v1214 = vld [vmem:[%s5 + $0x340] sm:$0xff]
    %v1215 = vld [vmem:[%s5 + $0x348] sm:$0xff]
    %v1216 = vld [vmem:[%s5 + $0x350] sm:$0xff]
    %v1217 = vld [vmem:[%s5 + $0x358] sm:$0xff]
    %v1218 = vld [vmem:[%s5 + $0x360] sm:$0xff]
    %v1219 = vld [vmem:[%s5 + $0x368] sm:$0xff]
    %v1220 = vld [vmem:[%s5 + $0x370] sm:$0xff]
    %v1221 = vld [vmem:[%s5 + $0x378] sm:$0xff]
    %v1222 = vld [vmem:[%s5 + $0x380] sm:$0xff]
    %v1223 = vld [vmem:[%s5 + $0x388] sm:$0xff]
    %v1224 = vld [vmem:[%s5 + $0x390] sm:$0xff]
    %v1225 = vld [vmem:[%s5 + $0x398] sm:$0xff]
    %v1226 = vld [vmem:[%s5 + $0x3a0] sm:$0xff]
    %v1227 = vld [vmem:[%s5 + $0x3a8] sm:$0xff]
    %v1228 = vld [vmem:[%s5 + $0x3b0] sm:$0xff]
    %v1229 = vld [vmem:[%s5 + $0x3b8] sm:$0xff]
    %v1230 = vld [vmem:[%s5 + $0x3c0] sm:$0xff]
    %v1231 = vld [vmem:[%s5 + $0x3c8] sm:$0xff]
    %v1232 = vld [vmem:[%s5 + $0x3d0] sm:$0xff]
    %v1233 = vld [vmem:[%s5 + $0x3d8] sm:$0xff]
    %v1234 = vld [vmem:[%s5 + $0x3e0] sm:$0xff]
    %v1235 = vld [vmem:[%s5 + $0x3e8] sm:$0xff]
    %v1236 = vld [vmem:[%s5 + $0x3f0] sm:$0xff]
    %v1237 = vld [vmem:[%s5 + $0x3f8] sm:$0xff]
    %v1238 = vld [vmem:[%s5 + $0x400] sm:$0xff]
    %v1239 = vld [vmem:[%s5 + $0x408] sm:$0xff]
    %v1240 = vld [vmem:[%s5 + $0x410] sm:$0xff]
    %v1241 = vld [vmem:[%s5 + $0x418] sm:$0xff]
    %v1242 = vld [vmem:[%s5 + $0x420] sm:$0xff]
    %v1243 = vld [vmem:[%s5 + $0x428] sm:$0xff]
    %v1244 = vld [vmem:[%s5 + $0x430] sm:$0xff]
    %v1245 = vld [vmem:[%s5 + $0x438] sm:$0xff]
    %v1246 = vld [vmem:[%s5 + $0x440] sm:$0xff]
    %v1247 = vld [vmem:[%s5 + $0x448] sm:$0xff]
    %v1248 = vld [vmem:[%s5 + $0x450] sm:$0xff]
    %v1249 = vld [vmem:[%s5 + $0x458] sm:$0xff]
    %v1250 = vld [vmem:[%s5 + $0x460] sm:$0xff]
    %v1251 = vld [vmem:[%s5 + $0x468] sm:$0xff]
    %v1252 = vld [vmem:[%s5 + $0x470] sm:$0xff]
    %v1253 = vld [vmem:[%s5 + $0x478] sm:$0xff]
    %v1254 = vld [vmem:[%s5 + $0x480] sm:$0xff]
    %v1255 = vld [vmem:[%s5 + $0x488] sm:$0xff]
    %v1256 = vld [vmem:[%s5 + $0x490] sm:$0xff]
    %v1257 = vld [vmem:[%s5 + $0x498] sm:$0xff]
    %v1258 = vld [vmem:[%s5 + $0x4a0] sm:$0xff]
    %v1259 = vld [vmem:[%s5 + $0x4a8] sm:$0xff]
    %v1260 = vld [vmem:[%s5 + $0x4b0] sm:$0xff]
    %v1261 = vld [vmem:[%s5 + $0x4b8] sm:$0xff]
    %v1262 = vld [vmem:[%s5 + $0x4c0] sm:$0xff]
    %v1263 = vld [vmem:[%s5 + $0x4c8] sm:$0xff]
    %v1264 = vld [vmem:[%s5 + $0x4d0] sm:$0xff]
    %v1265 = vld [vmem:[%s5 + $0x4d8] sm:$0xff]
    %v1266 = vld [vmem:[%s5 + $0x4e0] sm:$0xff]
    %v1267 = vld [vmem:[%s5 + $0x4e8] sm:$0xff]
    %v1268 = vld [vmem:[%s5 + $0x4f0] sm:$0xff]
    %v1269 = vld [vmem:[%s5 + $0x4f8] sm:$0xff]
    %v1270 = vld [vmem:[%s5 + $0x500] sm:$0xff]
    %v1271 = vld [vmem:[%s5 + $0x508] sm:$0xff]
    %v1272 = vld [vmem:[%s5 + $0x510] sm:$0xff]
    %v1273 = vld [vmem:[%s5 + $0x518] sm:$0xff]
    %v1274 = vld [vmem:[%s5 + $0x520] sm:$0xff]
    %v1275 = vld [vmem:[%s5 + $0x528] sm:$0xff]
    %v1276 = vld [vmem:[%s5 + $0x530] sm:$0xff]
    %v1277 = vld [vmem:[%s5 + $0x538] sm:$0xff]
    %v1278 = vld [vmem:[%s5 + $0x540] sm:$0xff]
    %v1279 = vld [vmem:[%s5 + $0x548] sm:$0xff]
    %v1280 = vld [vmem:[%s5 + $0x550] sm:$0xff]
    %v1281 = vld [vmem:[%s5 + $0x558] sm:$0xff]
    %v1282 = vld [vmem:[%s5 + $0x560] sm:$0xff]
    %v1283 = vld [vmem:[%s5 + $0x568] sm:$0xff]
    %v1284 = vld [vmem:[%s5 + $0x570] sm:$0xff]
    %v1285 = vld [vmem:[%s5 + $0x578] sm:$0xff]
    %v1286 = vld [vmem:[%s5 + $0x580] sm:$0xff]
    %v1287 = vld [vmem:[%s5 + $0x588] sm:$0xff]
    %v1288 = vld [vmem:[%s5 + $0x590] sm:$0xff]
    %v1289 = vld [vmem:[%s5 + $0x598] sm:$0xff]
    %v1290 = vld [vmem:[%s5 + $0x5a0] sm:$0xff]
    %v1291 = vld [vmem:[%s5 + $0x5a8] sm:$0xff]
    %v1292 = vld [vmem:[%s5 + $0x5b0] sm:$0xff]
    %v1293 = vld [vmem:[%s5 + $0x5b8] sm:$0xff]
    %v1294 = vld [vmem:[%s5 + $0x5c0] sm:$0xff]
    %v1295 = vld [vmem:[%s5 + $0x5c8] sm:$0xff]
    %v1296 = vld [vmem:[%s5 + $0x5d0] sm:$0xff]
    %v1297 = vld [vmem:[%s5 + $0x5d8] sm:$0xff]
    %v1298 = vld [vmem:[%s5 + $0x5e0] sm:$0xff]
    %v1299 = vld [vmem:[%s5 + $0x5e8] sm:$0xff]
    %v1300 = vld [vmem:[%s5 + $0x5f0] sm:$0xff]
    %v1301 = vld [vmem:[%s5 + $0x5f8] sm:$0xff]
    %v1302 = vld [vmem:[%s5 + $0x600] sm:$0xff]
    %v1303 = vld [vmem:[%s5 + $0x608] sm:$0xff]
    %v1304 = vld [vmem:[%s5 + $0x610] sm:$0xff]
    %v1305 = vld [vmem:[%s5 + $0x618] sm:$0xff]
    %v1306 = vld [vmem:[%s5 + $0x620] sm:$0xff]
    %v1307 = vld [vmem:[%s5 + $0x628] sm:$0xff]
    %v1308 = vld [vmem:[%s5 + $0x630] sm:$0xff]
    %v1309 = vld [vmem:[%s5 + $0x638] sm:$0xff]
    %v1310 = vld [vmem:[%s5 + $0x640] sm:$0xff]
    %v1311 = vld [vmem:[%s5 + $0x648] sm:$0xff]
    %v1312 = vld [vmem:[%s5 + $0x650] sm:$0xff]
    %v1313 = vld [vmem:[%s5 + $0x658] sm:$0xff]
    %v1314 = vld [vmem:[%s5 + $0x660] sm:$0xff]
    %v1315 = vld [vmem:[%s5 + $0x668] sm:$0xff]
    %v1316 = vld [vmem:[%s5 + $0x670] sm:$0xff]
    %v1317 = vld [vmem:[%s5 + $0x678] sm:$0xff]
    %v1318 = vld [vmem:[%s5 + $0x680] sm:$0xff]
    %v1319 = vld [vmem:[%s5 + $0x688] sm:$0xff]
    %v1320 = vld [vmem:[%s5 + $0x690] sm:$0xff]
    %v1321 = vld [vmem:[%s5 + $0x698] sm:$0xff]
    %v1322 = vld [vmem:[%s5 + $0x6a0] sm:$0xff]
    %v1323 = vld [vmem:[%s5 + $0x6a8] sm:$0xff]
    %v1324 = vld [vmem:[%s5 + $0x6b0] sm:$0xff]
    %v1325 = vld [vmem:[%s5 + $0x6b8] sm:$0xff]
    %v1326 = vld [vmem:[%s5 + $0x6c0] sm:$0xff]
    %v1327 = vld [vmem:[%s5 + $0x6c8] sm:$0xff]
    %v1328 = vld [vmem:[%s5 + $0x6d0] sm:$0xff]
    %v1329 = vld [vmem:[%s5 + $0x6d8] sm:$0xff]
    %v1330 = vld [vmem:[%s5 + $0x6e0] sm:$0xff]
    %v1331 = vld [vmem:[%s5 + $0x6e8] sm:$0xff]
    %v1332 = vld [vmem:[%s5 + $0x6f0] sm:$0xff]
    %v1333 = vld [vmem:[%s5 + $0x6f8] sm:$0xff]
    %v1334 = vld [vmem:[%s5 + $0x700] sm:$0xff]
    %v1335 = vld [vmem:[%s5 + $0x708] sm:$0xff]
    %v1336 = vld [vmem:[%s5 + $0x710] sm:$0xff]
    %v1337 = vld [vmem:[%s5 + $0x718] sm:$0xff]
    %v1338 = vld [vmem:[%s5 + $0x720] sm:$0xff]
    %v1339 = vld [vmem:[%s5 + $0x728] sm:$0xff]
    %v1340 = vld [vmem:[%s5 + $0x730] sm:$0xff]
    %v1341 = vld [vmem:[%s5 + $0x738] sm:$0xff]
    %v1342 = vld [vmem:[%s5 + $0x740] sm:$0xff]
    %v1343 = vld [vmem:[%s5 + $0x748] sm:$0xff]
    %v1344 = vld [vmem:[%s5 + $0x750] sm:$0xff]
    %v1345 = vld [vmem:[%s5 + $0x758] sm:$0xff]
    %v1346 = vld [vmem:[%s5 + $0x760] sm:$0xff]
    %v1347 = vld [vmem:[%s5 + $0x768] sm:$0xff]
    %v1348 = vld [vmem:[%s5 + $0x770] sm:$0xff]
    %v1349 = vld [vmem:[%s5 + $0x778] sm:$0xff]
    %v1350 = vld [vmem:[%s5 + $0x780] sm:$0xff]
    %v1351 = vld [vmem:[%s5 + $0x788] sm:$0xff]
    %v1352 = vld [vmem:[%s5 + $0x790] sm:$0xff]
    %v1353 = vld [vmem:[%s5 + $0x798] sm:$0xff]
    %v1354 = vld [vmem:[%s5 + $0x7a0] sm:$0xff]
    %v1355 = vld [vmem:[%s5 + $0x7a8] sm:$0xff]
    %v1356 = vld [vmem:[%s5 + $0x7b0] sm:$0xff]
    %v1357 = vld [vmem:[%s5 + $0x7b8] sm:$0xff]
    %v1358 = vld [vmem:[%s5 + $0x7c0] sm:$0xff]
    %v1359 = vld [vmem:[%s5 + $0x7c8] sm:$0xff]
    %v1360 = vld [vmem:[%s5 + $0x7d0] sm:$0xff]
    %v1361 = vld [vmem:[%s5 + $0x7d8] sm:$0xff]
    %v1362 = vld [vmem:[%s5 + $0x7e0] sm:$0xff]
    %v1363 = vld [vmem:[%s5 + $0x7e8] sm:$0xff]
    %v1364 = vld [vmem:[%s5 + $0x7f0] sm:$0xff]
    %v1365 = vld [vmem:[%s5 + $0x7f8] sm:$0xff]
    %v1366 = vld [vmem:[%s5 + $0x800] sm:$0xff]
    %v1367 = vld [vmem:[%s5 + $0x808] sm:$0xff]
    %v1368 = vld [vmem:[%s5 + $0x810] sm:$0xff]
    %v1369 = vld [vmem:[%s5 + $0x818] sm:$0xff]
    %v1370 = vld [vmem:[%s5 + $0x820] sm:$0xff]
    %v1371 = vld [vmem:[%s5 + $0x828] sm:$0xff]
    %v1372 = vld [vmem:[%s5 + $0x830] sm:$0xff]
    %v1373 = vld [vmem:[%s5 + $0x838] sm:$0xff]
    %v1374 = vld [vmem:[%s5 + $0x840] sm:$0xff]
    %v1375 = vld [vmem:[%s5 + $0x848] sm:$0xff]
    %v1376 = vld [vmem:[%s5 + $0x850] sm:$0xff]
    %v1377 = vld [vmem:[%s5 + $0x858] sm:$0xff]
    %v1378 = vld [vmem:[%s5 + $0x860] sm:$0xff]
    %v1379 = vld [vmem:[%s5 + $0x868] sm:$0xff]
    %v1380 = vld [vmem:[%s5 + $0x870] sm:$0xff]
    %v1381 = vld [vmem:[%s5 + $0x878] sm:$0xff]
    %v1382 = vld [vmem:[%s5 + $0x880] sm:$0xff]
    %v1383 = vld [vmem:[%s5 + $0x888] sm:$0xff]
    %v1384 = vld [vmem:[%s5 + $0x890] sm:$0xff]
    %v1385 = vld [vmem:[%s5 + $0x898] sm:$0xff]
    %v1386 = vld [vmem:[%s5 + $0x8a0] sm:$0xff]
    %v1387 = vld [vmem:[%s5 + $0x8a8] sm:$0xff]
    %v1388 = vld [vmem:[%s5 + $0x8b0] sm:$0xff]
    %v1389 = vld [vmem:[%s5 + $0x8b8] sm:$0xff]
    %v1390 = vld [vmem:[%s5 + $0x8c0] sm:$0xff]
    %v1391 = vld [vmem:[%s5 + $0x8c8] sm:$0xff]
    %v1392 = vld [vmem:[%s5 + $0x8d0] sm:$0xff]
    %v1393 = vld [vmem:[%s5 + $0x8d8] sm:$0xff]
    %v1394 = vld [vmem:[%s5 + $0x8e0] sm:$0xff]
    %v1395 = vld [vmem:[%s5 + $0x8e8] sm:$0xff]
    %v1396 = vld [vmem:[%s5 + $0x8f0] sm:$0xff]
    %v1397 = vld [vmem:[%s5 + $0x8f8] sm:$0xff]
    %v1398 = vld [vmem:[%s5 + $0x900] sm:$0xff]
    %v1399 = vld [vmem:[%s5 + $0x908] sm:$0xff]
    %v1400 = vld [vmem:[%s5 + $0x910] sm:$0xff]
    %v1401 = vld [vmem:[%s5 + $0x918] sm:$0xff]
    %v1402 = vld [vmem:[%s5 + $0x920] sm:$0xff]
    %v1403 = vld [vmem:[%s5 + $0x928] sm:$0xff]
    %v1404 = vld [vmem:[%s5 + $0x930] sm:$0xff]
    %v1405 = vld [vmem:[%s5 + $0x938] sm:$0xff]
    %v1406 = vld [vmem:[%s5 + $0x940] sm:$0xff]
    %v1407 = vld [vmem:[%s5 + $0x948] sm:$0xff]
    %v1408 = vld [vmem:[%s5 + $0x950] sm:$0xff]
    %v1409 = vld [vmem:[%s5 + $0x958] sm:$0xff]
    %v1410 = vld [vmem:[%s5 + $0x960] sm:$0xff]
    %v1411 = vld [vmem:[%s5 + $0x968] sm:$0xff]
    %v1412 = vld [vmem:[%s5 + $0x970] sm:$0xff]
    %v1413 = vld [vmem:[%s5 + $0x978] sm:$0xff]
    %v1414 = vld [vmem:[%s5 + $0x980] sm:$0xff]
    %v1415 = vld [vmem:[%s5 + $0x988] sm:$0xff]
    %v1416 = vld [vmem:[%s5 + $0x990] sm:$0xff]
    %v1417 = vld [vmem:[%s5 + $0x998] sm:$0xff]
    %v1418 = vld [vmem:[%s5 + $0x9a0] sm:$0xff]
    %v1419 = vld [vmem:[%s5 + $0x9a8] sm:$0xff]
    %v1420 = vld [vmem:[%s5 + $0x9b0] sm:$0xff]
    %v1421 = vld [vmem:[%s5 + $0x9b8] sm:$0xff]
    %v1422 = vld [vmem:[%s5 + $0x9c0] sm:$0xff]
    %v1423 = vld [vmem:[%s5 + $0x9c8] sm:$0xff]
    %v1424 = vld [vmem:[%s5 + $0x9d0] sm:$0xff]
    %v1425 = vld [vmem:[%s5 + $0x9d8] sm:$0xff]
    %v1426 = vld [vmem:[%s5 + $0x9e0] sm:$0xff]
    %v1427 = vld [vmem:[%s5 + $0x9e8] sm:$0xff]
    %v1428 = vld [vmem:[%s5 + $0x9f0] sm:$0xff]
    %v1429 = vld [vmem:[%s5 + $0x9f8] sm:$0xff]
    %v1430 = vld [vmem:[%s5 + $0xa00] sm:$0xff]
    %v1431 = vld [vmem:[%s5 + $0xa08] sm:$0xff]
    %v1432 = vld [vmem:[%s5 + $0xa10] sm:$0xff]
    %v1433 = vld [vmem:[%s5 + $0xa18] sm:$0xff]
    %v1434 = vld [vmem:[%s5 + $0xa20] sm:$0xff]
    %v1435 = vld [vmem:[%s5 + $0xa28] sm:$0xff]
    %v1436 = vld [vmem:[%s5 + $0xa30] sm:$0xff]
    %v1437 = vld [vmem:[%s5 + $0xa38] sm:$0xff]
    %v1438 = vld [vmem:[%s5 + $0xa40] sm:$0xff]
    %v1439 = vld [vmem:[%s5 + $0xa48] sm:$0xff]
    %v1440 = vld [vmem:[%s5 + $0xa50] sm:$0xff]
    %v1441 = vld [vmem:[%s5 + $0xa58] sm:$0xff]
    %v1442 = vld [vmem:[%s5 + $0xa60] sm:$0xff]
    %v1443 = vld [vmem:[%s5 + $0xa68] sm:$0xff]
    %v1444 = vld [vmem:[%s5 + $0xa70] sm:$0xff]
    %v1445 = vld [vmem:[%s5 + $0xa78] sm:$0xff]
    %v1446 = vld [vmem:[%s5 + $0xa80] sm:$0xff]
    %v1447 = vld [vmem:[%s5 + $0xa88] sm:$0xff]
    %v1448 = vld [vmem:[%s5 + $0xa90] sm:$0xff]
    %v1449 = vld [vmem:[%s5 + $0xa98] sm:$0xff]
    %v1450 = vld [vmem:[%s5 + $0xaa0] sm:$0xff]
    %v1451 = vld [vmem:[%s5 + $0xaa8] sm:$0xff]
    %v1452 = vld [vmem:[%s5 + $0xab0] sm:$0xff]
    %v1453 = vld [vmem:[%s5 + $0xab8] sm:$0xff]
    %v1454 = vld [vmem:[%s5 + $0xac0] sm:$0xff]
    %v1455 = vld [vmem:[%s5 + $0xac8] sm:$0xff]
    %v1456 = vld [vmem:[%s5 + $0xad0] sm:$0xff]
    %v1457 = vld [vmem:[%s5 + $0xad8] sm:$0xff]
    %v1458 = vld [vmem:[%s5 + $0xae0] sm:$0xff]
    %v1459 = vld [vmem:[%s5 + $0xae8] sm:$0xff]
    %v1460 = vld [vmem:[%s5 + $0xaf0] sm:$0xff]
    %v1461 = vld [vmem:[%s5 + $0xaf8] sm:$0xff]
    %v1462 = vld [vmem:[%s5 + $0xb00] sm:$0xff]
    %v1463 = vld [vmem:[%s5 + $0xb08] sm:$0xff]
    %v1464 = vld [vmem:[%s5 + $0xb10] sm:$0xff]
    %v1465 = vld [vmem:[%s5 + $0xb18] sm:$0xff]
    %v1466 = vld [vmem:[%s5 + $0xb20] sm:$0xff]
    %v1467 = vld [vmem:[%s5 + $0xb28] sm:$0xff]
    %v1468 = vld [vmem:[%s5 + $0xb30] sm:$0xff]
    %v1469 = vld [vmem:[%s5 + $0xb38] sm:$0xff]
    %v1470 = vld [vmem:[%s5 + $0xb40] sm:$0xff]
    %v1471 = vld [vmem:[%s5 + $0xb48] sm:$0xff]
    %v1472 = vld [vmem:[%s5 + $0xb50] sm:$0xff]
    %v1473 = vld [vmem:[%s5 + $0xb58] sm:$0xff]
    %v1474 = vld [vmem:[%s5 + $0xb60] sm:$0xff]
    %v1475 = vld [vmem:[%s5 + $0xb68] sm:$0xff]
    %v1476 = vld [vmem:[%s5 + $0xb70] sm:$0xff]
    %v1477 = vld [vmem:[%s5 + $0xb78] sm:$0xff]
    %v1478 = vld [vmem:[%s5 + $0xb80] sm:$0xff]
    %v1479 = vld [vmem:[%s5 + $0xb88] sm:$0xff]
    %v1480 = vld [vmem:[%s5 + $0xb90] sm:$0xff]
    %v1481 = vld [vmem:[%s5 + $0xb98] sm:$0xff]
    %v1482 = vld [vmem:[%s5 + $0xba0] sm:$0xff]
    %v1483 = vld [vmem:[%s5 + $0xba8] sm:$0xff]
    %v1484 = vld [vmem:[%s5 + $0xbb0] sm:$0xff]
    %v1485 = vld [vmem:[%s5 + $0xbb8] sm:$0xff]
    %v1486 = vld [vmem:[%s5 + $0xbc0] sm:$0xff]
    %v1487 = vld [vmem:[%s5 + $0xbc8] sm:$0xff]
    %v1488 = vld [vmem:[%s5 + $0xbd0] sm:$0xff]
    %v1489 = vld [vmem:[%s5 + $0xbd8] sm:$0xff]
    %v1490 = vld [vmem:[%s5 + $0xbe0] sm:$0xff]
    %v1491 = vld [vmem:[%s5 + $0xbe8] sm:$0xff]
    %v1492 = vld [vmem:[%s5 + $0xbf0] sm:$0xff]
    %v1493 = vld [vmem:[%s5 + $0xbf8] sm:$0xff]
    %v1494 = vld [vmem:[%s5 + $0xc00] sm:$0xff]
    %v1495 = vld [vmem:[%s5 + $0xc08] sm:$0xff]
    %v1496 = vld [vmem:[%s5 + $0xc10] sm:$0xff]
    %v1497 = vld [vmem:[%s5 + $0xc18] sm:$0xff]
    %v1498 = vld [vmem:[%s5 + $0xc20] sm:$0xff]
    %v1499 = vld [vmem:[%s5 + $0xc28] sm:$0xff]
    %v1500 = vld [vmem:[%s5 + $0xc30] sm:$0xff]
    %v1501 = vld [vmem:[%s5 + $0xc38] sm:$0xff]
    %v1502 = vld [vmem:[%s5 + $0xc40] sm:$0xff]
    %v1503 = vld [vmem:[%s5 + $0xc48] sm:$0xff]
    %v1504 = vld [vmem:[%s5 + $0xc50] sm:$0xff]
    %v1505 = vld [vmem:[%s5 + $0xc58] sm:$0xff]
    %v1506 = vld [vmem:[%s5 + $0xc60] sm:$0xff]
    %v1507 = vld [vmem:[%s5 + $0xc68] sm:$0xff]
    %v1508 = vld [vmem:[%s5 + $0xc70] sm:$0xff]
    %v1509 = vld [vmem:[%s5 + $0xc78] sm:$0xff]
    %v1510 = vld [vmem:[%s5 + $0xc80] sm:$0xff]
    %v1511 = vld [vmem:[%s5 + $0xc88] sm:$0xff]
    %v1512 = vld [vmem:[%s5 + $0xc90] sm:$0xff]
    %v1513 = vld [vmem:[%s5 + $0xc98] sm:$0xff]
    %v1514 = vld [vmem:[%s5 + $0xca0] sm:$0xff]
    %v1515 = vld [vmem:[%s5 + $0xca8] sm:$0xff]
    %v1516 = vld [vmem:[%s5 + $0xcb0] sm:$0xff]
    %v1517 = vld [vmem:[%s5 + $0xcb8] sm:$0xff]
    %v1518 = vld [vmem:[%s5 + $0xcc0] sm:$0xff]
    %v1519 = vld [vmem:[%s5 + $0xcc8] sm:$0xff]
    %v1520 = vld [vmem:[%s5 + $0xcd0] sm:$0xff]
    %v1521 = vld [vmem:[%s5 + $0xcd8] sm:$0xff]
    %v1522 = vld [vmem:[%s5 + $0xce0] sm:$0xff]
    %v1523 = vld [vmem:[%s5 + $0xce8] sm:$0xff]
    %v1524 = vld [vmem:[%s5 + $0xcf0] sm:$0xff]
    %v1525 = vld [vmem:[%s5 + $0xcf8] sm:$0xff]
    %v1526 = vld [vmem:[%s5 + $0xd00] sm:$0xff]
    %v1527 = vld [vmem:[%s5 + $0xd08] sm:$0xff]
    %v1528 = vld [vmem:[%s5 + $0xd10] sm:$0xff]
    %v1529 = vld [vmem:[%s5 + $0xd18] sm:$0xff]
    %v1530 = vld [vmem:[%s5 + $0xd20] sm:$0xff]
    %v1531 = vld [vmem:[%s5 + $0xd28] sm:$0xff]
    %v1532 = vld [vmem:[%s5 + $0xd30] sm:$0xff]
    %v1533 = vld [vmem:[%s5 + $0xd38] sm:$0xff]
    %v1534 = vld [vmem:[%s5 + $0xd40] sm:$0xff]
    %v1535 = vld [vmem:[%s5 + $0xd48] sm:$0xff]
    %v1536 = vld [vmem:[%s5 + $0xd50] sm:$0xff]
    %v1537 = vld [vmem:[%s5 + $0xd58] sm:$0xff]
    %v1538 = vld [vmem:[%s5 + $0xd60] sm:$0xff]
    %v1539 = vld [vmem:[%s5 + $0xd68] sm:$0xff]
    %v1540 = vld [vmem:[%s5 + $0xd70] sm:$0xff]
    %v1541 = vld [vmem:[%s5 + $0xd78] sm:$0xff]
    %v1542 = vld [vmem:[%s5 + $0xd80] sm:$0xff]
    %v1543 = vld [vmem:[%s5 + $0xd88] sm:$0xff]
    %v1544 = vld [vmem:[%s5 + $0xd90] sm:$0xff]
    %v1545 = vld [vmem:[%s5 + $0xd98] sm:$0xff]
    %v1546 = vld [vmem:[%s5 + $0xda0] sm:$0xff]
    %v1547 = vld [vmem:[%s5 + $0xda8] sm:$0xff]
    %v1548 = vld [vmem:[%s5 + $0xdb0] sm:$0xff]
    %v1549 = vld [vmem:[%s5 + $0xdb8] sm:$0xff]
    %v1550 = vld [vmem:[%s5 + $0xdc0] sm:$0xff]
    %v1551 = vld [vmem:[%s5 + $0xdc8] sm:$0xff]
    %v1552 = vld [vmem:[%s5 + $0xdd0] sm:$0xff]
    %v1553 = vld [vmem:[%s5 + $0xdd8] sm:$0xff]
    %v1554 = vld [vmem:[%s5 + $0xde0] sm:$0xff]
    %v1555 = vld [vmem:[%s5 + $0xde8] sm:$0xff]
    %v1556 = vld [vmem:[%s5 + $0xdf0] sm:$0xff]
    %v1557 = vld [vmem:[%s5 + $0xdf8] sm:$0xff]
    %v1558 = vld [vmem:[%s5 + $0xe00] sm:$0xff]
    %v1559 = vld [vmem:[%s5 + $0xe08] sm:$0xff]
    %v1560 = vld [vmem:[%s5 + $0xe10] sm:$0xff]
    %v1561 = vld [vmem:[%s5 + $0xe18] sm:$0xff]
    %v1562 = vld [vmem:[%s5 + $0xe20] sm:$0xff]
    %v1563 = vld [vmem:[%s5 + $0xe28] sm:$0xff]
    %v1564 = vld [vmem:[%s5 + $0xe30] sm:$0xff]
    %v1565 = vld [vmem:[%s5 + $0xe38] sm:$0xff]
    %v1566 = vld [vmem:[%s5 + $0xe40] sm:$0xff]
    %v1567 = vld [vmem:[%s5 + $0xe48] sm:$0xff]
    %v1568 = vld [vmem:[%s5 + $0xe50] sm:$0xff]
    %v1569 = vld [vmem:[%s5 + $0xe58] sm:$0xff]
    %v1570 = vld [vmem:[%s5 + $0xe60] sm:$0xff]
    %v1571 = vld [vmem:[%s5 + $0xe68] sm:$0xff]
    %v1572 = vld [vmem:[%s5 + $0xe70] sm:$0xff]
    %v1573 = vld [vmem:[%s5 + $0xe78] sm:$0xff]
    %v1574 = vld [vmem:[%s5 + $0xe80] sm:$0xff]
    %v1575 = vld [vmem:[%s5 + $0xe88] sm:$0xff]
    %v1576 = vld [vmem:[%s5 + $0xe90] sm:$0xff]
    %v1577 = vld [vmem:[%s5 + $0xe98] sm:$0xff]
    %v1578 = vld [vmem:[%s5 + $0xea0] sm:$0xff]
    %v1579 = vld [vmem:[%s5 + $0xea8] sm:$0xff]
    %v1580 = vld [vmem:[%s5 + $0xeb0] sm:$0xff]
    %v1581 = vld [vmem:[%s5 + $0xeb8] sm:$0xff]
    %v1582 = vld [vmem:[%s5 + $0xec0] sm:$0xff]
    %v1583 = vld [vmem:[%s5 + $0xec8] sm:$0xff]
    %v1584 = vld [vmem:[%s5 + $0xed0] sm:$0xff]
    %v1585 = vld [vmem:[%s5 + $0xed8] sm:$0xff]
    %v1586 = vld [vmem:[%s5 + $0xee0] sm:$0xff]
    %v1587 = vld [vmem:[%s5 + $0xee8] sm:$0xff]
    %v1588 = vld [vmem:[%s5 + $0xef0] sm:$0xff]
    %v1589 = vld [vmem:[%s5 + $0xef8] sm:$0xff]
    %v1590 = vld [vmem:[%s5 + $0xf00] sm:$0xff]
    %v1591 = vld [vmem:[%s5 + $0xf08] sm:$0xff]
    %v1592 = vld [vmem:[%s5 + $0xf10] sm:$0xff]
    %v1593 = vld [vmem:[%s5 + $0xf18] sm:$0xff]
    %v1594 = vld [vmem:[%s5 + $0xf20] sm:$0xff]
    %v1595 = vld [vmem:[%s5 + $0xf28] sm:$0xff]
    %v1596 = vld [vmem:[%s5 + $0xf30] sm:$0xff]
    %v1597 = vld [vmem:[%s5 + $0xf38] sm:$0xff]
    %v1598 = vld [vmem:[%s5 + $0xf40] sm:$0xff]
    %v1599 = vld [vmem:[%s5 + $0xf48] sm:$0xff]
    %v1600 = vld [vmem:[%s5 + $0xf50] sm:$0xff]
    %v1601 = vld [vmem:[%s5 + $0xf58] sm:$0xff]
    %v1602 = vld [vmem:[%s5 + $0xf60] sm:$0xff]
    %v1603 = vld [vmem:[%s5 + $0xf68] sm:$0xff]
    %v1604 = vld [vmem:[%s5 + $0xf70] sm:$0xff]
    %v1605 = vld [vmem:[%s5 + $0xf78] sm:$0xff]
    %v1606 = vld [vmem:[%s5 + $0xf80] sm:$0xff]
    %v1607 = vld [vmem:[%s5 + $0xf88] sm:$0xff]
    %v1608 = vld [vmem:[%s5 + $0xf90] sm:$0xff]
    %v1609 = vld [vmem:[%s5 + $0xf98] sm:$0xff]
    %v1610 = vld [vmem:[%s5 + $0xfa0] sm:$0xff]
    %v1611 = vld [vmem:[%s5 + $0xfa8] sm:$0xff]
    %v1612 = vld [vmem:[%s5 + $0xfb0] sm:$0xff]
    %v1613 = vld [vmem:[%s5 + $0xfb8] sm:$0xff]
    %v1614 = vld [vmem:[%s5 + $0xfc0] sm:$0xff]
    %v1615 = vld [vmem:[%s5 + $0xfc8] sm:$0xff]
    %v1616 = vld [vmem:[%s5 + $0xfd0] sm:$0xff]
    %v1617 = vld [vmem:[%s5 + $0xfd8] sm:$0xff]
    %v1618 = vld [vmem:[%s5 + $0xfe0] sm:$0xff]
    %v1619 = vld [vmem:[%s5 + $0xfe8] sm:$0xff]
    %v1620 = vld [vmem:[%s5 + $0xff0] sm:$0xff]
    %v1621 = vld [vmem:[%s5 + $0xff8] sm:$0xff]
    %v2134 = vunpack.c.l.b16 %v1110
    %v2135 = vunpack.c.h.b16 %v1110
    %v2136 = vunpack.c.l.b16 %v1111
    %v2137 = vunpack.c.h.b16 %v1111
    %v2138 = vunpack.c.l.b16 %v1112
    %v2139 = vunpack.c.h.b16 %v1112
    %v2140 = vunpack.c.l.b16 %v1113
    %v2141 = vunpack.c.h.b16 %v1113
    %v2142 = vunpack.c.l.b16 %v1114
    %v2143 = vunpack.c.h.b16 %v1114
    %v2144 = vunpack.c.l.b16 %v1115
    %v2145 = vunpack.c.h.b16 %v1115
    %v2146 = vunpack.c.l.b16 %v1116
    %v2147 = vunpack.c.h.b16 %v1116
    %v2148 = vunpack.c.l.b16 %v1117
    %v2149 = vunpack.c.h.b16 %v1117
    %v2150 = vunpack.c.l.b16 %v1118
    %v2151 = vunpack.c.h.b16 %v1118
    %v2152 = vunpack.c.l.b16 %v1119
    %v2153 = vunpack.c.h.b16 %v1119
    %v2154 = vunpack.c.l.b16 %v1120
    %v2155 = vunpack.c.h.b16 %v1120
    %v2156 = vunpack.c.l.b16 %v1121
    %v2157 = vunpack.c.h.b16 %v1121
    %v2158 = vunpack.c.l.b16 %v1122
    %v2159 = vunpack.c.h.b16 %v1122
    %v2160 = vunpack.c.l.b16 %v1123
    %v2161 = vunpack.c.h.b16 %v1123
    %v2162 = vunpack.c.l.b16 %v1124
    %v2163 = vunpack.c.h.b16 %v1124
    %v2164 = vunpack.c.l.b16 %v1125
    %v2165 = vunpack.c.h.b16 %v1125
    %v2166 = vunpack.c.l.b16 %v1126
    %v2167 = vunpack.c.h.b16 %v1126
    %v2168 = vunpack.c.l.b16 %v1127
    %v2169 = vunpack.c.h.b16 %v1127
    %v2170 = vunpack.c.l.b16 %v1128
    %v2171 = vunpack.c.h.b16 %v1128
    %v2172 = vunpack.c.l.b16 %v1129
    %v2173 = vunpack.c.h.b16 %v1129
    %v2174 = vunpack.c.l.b16 %v1130
    %v2175 = vunpack.c.h.b16 %v1130
    %v2176 = vunpack.c.l.b16 %v1131
    %v2177 = vunpack.c.h.b16 %v1131
    %v2178 = vunpack.c.l.b16 %v1132
    %v2179 = vunpack.c.h.b16 %v1132
    %v2180 = vunpack.c.l.b16 %v1133
    %v2181 = vunpack.c.h.b16 %v1133
    %v2182 = vunpack.c.l.b16 %v1134
    %v2183 = vunpack.c.h.b16 %v1134
    %v2184 = vunpack.c.l.b16 %v1135
    %v2185 = vunpack.c.h.b16 %v1135
    %v2186 = vunpack.c.l.b16 %v1136
    %v2187 = vunpack.c.h.b16 %v1136
    %v2188 = vunpack.c.l.b16 %v1137
    %v2189 = vunpack.c.h.b16 %v1137
    %v2190 = vunpack.c.l.b16 %v1138
    %v2191 = vunpack.c.h.b16 %v1138
    %v2192 = vunpack.c.l.b16 %v1139
    %v2193 = vunpack.c.h.b16 %v1139
    %v2194 = vunpack.c.l.b16 %v1140
    %v2195 = vunpack.c.h.b16 %v1140
    %v2196 = vunpack.c.l.b16 %v1141
    %v2197 = vunpack.c.h.b16 %v1141
    %v2198 = vunpack.c.l.b16 %v1142
    %v2199 = vunpack.c.h.b16 %v1142
    %v2200 = vunpack.c.l.b16 %v1143
    %v2201 = vunpack.c.h.b16 %v1143
    %v2202 = vunpack.c.l.b16 %v1144
    %v2203 = vunpack.c.h.b16 %v1144
    %v2204 = vunpack.c.l.b16 %v1145
    %v2205 = vunpack.c.h.b16 %v1145
    %v2206 = vunpack.c.l.b16 %v1146
    %v2207 = vunpack.c.h.b16 %v1146
    %v2208 = vunpack.c.l.b16 %v1147
    %v2209 = vunpack.c.h.b16 %v1147
    %v2210 = vunpack.c.l.b16 %v1148
    %v2211 = vunpack.c.h.b16 %v1148
    %v2212 = vunpack.c.l.b16 %v1149
    %v2213 = vunpack.c.h.b16 %v1149
    %v2214 = vunpack.c.l.b16 %v1150
    %v2215 = vunpack.c.h.b16 %v1150
    %v2216 = vunpack.c.l.b16 %v1151
    %v2217 = vunpack.c.h.b16 %v1151
    %v2218 = vunpack.c.l.b16 %v1152
    %v2219 = vunpack.c.h.b16 %v1152
    %v2220 = vunpack.c.l.b16 %v1153
    %v2221 = vunpack.c.h.b16 %v1153
    %v2222 = vunpack.c.l.b16 %v1154
    %v2223 = vunpack.c.h.b16 %v1154
    %v2224 = vunpack.c.l.b16 %v1155
    %v2225 = vunpack.c.h.b16 %v1155
    %v2226 = vunpack.c.l.b16 %v1156
    %v2227 = vunpack.c.h.b16 %v1156
    %v2228 = vunpack.c.l.b16 %v1157
    %v2229 = vunpack.c.h.b16 %v1157
    %v2230 = vunpack.c.l.b16 %v1158
    %v2231 = vunpack.c.h.b16 %v1158
    %v2232 = vunpack.c.l.b16 %v1159
    %v2233 = vunpack.c.h.b16 %v1159
    %v2234 = vunpack.c.l.b16 %v1160
    %v2235 = vunpack.c.h.b16 %v1160
    %v2236 = vunpack.c.l.b16 %v1161
    %v2237 = vunpack.c.h.b16 %v1161
    %v2238 = vunpack.c.l.b16 %v1162
    %v2239 = vunpack.c.h.b16 %v1162
    %v2240 = vunpack.c.l.b16 %v1163
    %v2241 = vunpack.c.h.b16 %v1163
    %v2242 = vunpack.c.l.b16 %v1164
    %v2243 = vunpack.c.h.b16 %v1164
    %v2244 = vunpack.c.l.b16 %v1165
    %v2245 = vunpack.c.h.b16 %v1165
    %v2246 = vunpack.c.l.b16 %v1166
    %v2247 = vunpack.c.h.b16 %v1166
    %v2248 = vunpack.c.l.b16 %v1167
    %v2249 = vunpack.c.h.b16 %v1167
    %v2250 = vunpack.c.l.b16 %v1168
    %v2251 = vunpack.c.h.b16 %v1168
    %v2252 = vunpack.c.l.b16 %v1169
    %v2253 = vunpack.c.h.b16 %v1169
    %v2254 = vunpack.c.l.b16 %v1170
    %v2255 = vunpack.c.h.b16 %v1170
    %v2256 = vunpack.c.l.b16 %v1171
    %v2257 = vunpack.c.h.b16 %v1171
    %v2258 = vunpack.c.l.b16 %v1172
    %v2259 = vunpack.c.h.b16 %v1172
    %v2260 = vunpack.c.l.b16 %v1173
    %v2261 = vunpack.c.h.b16 %v1173
    %v2262 = vunpack.c.l.b16 %v1174
    %v2263 = vunpack.c.h.b16 %v1174
    %v2264 = vunpack.c.l.b16 %v1175
    %v2265 = vunpack.c.h.b16 %v1175
    %v2266 = vunpack.c.l.b16 %v1176
    %v2267 = vunpack.c.h.b16 %v1176
    %v2268 = vunpack.c.l.b16 %v1177
    %v2269 = vunpack.c.h.b16 %v1177
    %v2270 = vunpack.c.l.b16 %v1178
    %v2271 = vunpack.c.h.b16 %v1178
    %v2272 = vunpack.c.l.b16 %v1179
    %v2273 = vunpack.c.h.b16 %v1179
    %v2274 = vunpack.c.l.b16 %v1180
    %v2275 = vunpack.c.h.b16 %v1180
    %v2276 = vunpack.c.l.b16 %v1181
    %v2277 = vunpack.c.h.b16 %v1181
    %v2278 = vunpack.c.l.b16 %v1182
    %v2279 = vunpack.c.h.b16 %v1182
    %v2280 = vunpack.c.l.b16 %v1183
    %v2281 = vunpack.c.h.b16 %v1183
    %v2282 = vunpack.c.l.b16 %v1184
    %v2283 = vunpack.c.h.b16 %v1184
    %v2284 = vunpack.c.l.b16 %v1185
    %v2285 = vunpack.c.h.b16 %v1185
    %v2286 = vunpack.c.l.b16 %v1186
    %v2287 = vunpack.c.h.b16 %v1186
    %v2288 = vunpack.c.l.b16 %v1187
    %v2289 = vunpack.c.h.b16 %v1187
    %v2290 = vunpack.c.l.b16 %v1188
    %v2291 = vunpack.c.h.b16 %v1188
    %v2292 = vunpack.c.l.b16 %v1189
    %v2293 = vunpack.c.h.b16 %v1189
    %v2294 = vunpack.c.l.b16 %v1190
    %v2295 = vunpack.c.h.b16 %v1190
    %v2296 = vunpack.c.l.b16 %v1191
    %v2297 = vunpack.c.h.b16 %v1191
    %v2298 = vunpack.c.l.b16 %v1192
    %v2299 = vunpack.c.h.b16 %v1192
    %v2300 = vunpack.c.l.b16 %v1193
    %v2301 = vunpack.c.h.b16 %v1193
    %v2302 = vunpack.c.l.b16 %v1194
    %v2303 = vunpack.c.h.b16 %v1194
    %v2304 = vunpack.c.l.b16 %v1195
    %v2305 = vunpack.c.h.b16 %v1195
    %v2306 = vunpack.c.l.b16 %v1196
    %v2307 = vunpack.c.h.b16 %v1196
    %v2308 = vunpack.c.l.b16 %v1197
    %v2309 = vunpack.c.h.b16 %v1197
    %v2310 = vunpack.c.l.b16 %v1198
    %v2311 = vunpack.c.h.b16 %v1198
    %v2312 = vunpack.c.l.b16 %v1199
    %v2313 = vunpack.c.h.b16 %v1199
    %v2314 = vunpack.c.l.b16 %v1200
    %v2315 = vunpack.c.h.b16 %v1200
    %v2316 = vunpack.c.l.b16 %v1201
    %v2317 = vunpack.c.h.b16 %v1201
    %v2318 = vunpack.c.l.b16 %v1202
    %v2319 = vunpack.c.h.b16 %v1202
    %v2320 = vunpack.c.l.b16 %v1203
    %v2321 = vunpack.c.h.b16 %v1203
    %v2322 = vunpack.c.l.b16 %v1204
    %v2323 = vunpack.c.h.b16 %v1204
    %v2324 = vunpack.c.l.b16 %v1205
    %v2325 = vunpack.c.h.b16 %v1205
    %v2326 = vunpack.c.l.b16 %v1206
    %v2327 = vunpack.c.h.b16 %v1206
    %v2328 = vunpack.c.l.b16 %v1207
    %v2329 = vunpack.c.h.b16 %v1207
    %v2330 = vunpack.c.l.b16 %v1208
    %v2331 = vunpack.c.h.b16 %v1208
    %v2332 = vunpack.c.l.b16 %v1209
    %v2333 = vunpack.c.h.b16 %v1209
    %v2334 = vunpack.c.l.b16 %v1210
    %v2335 = vunpack.c.h.b16 %v1210
    %v2336 = vunpack.c.l.b16 %v1211
    %v2337 = vunpack.c.h.b16 %v1211
    %v2338 = vunpack.c.l.b16 %v1212
    %v2339 = vunpack.c.h.b16 %v1212
    %v2340 = vunpack.c.l.b16 %v1213
    %v2341 = vunpack.c.h.b16 %v1213
    %v2342 = vunpack.c.l.b16 %v1214
    %v2343 = vunpack.c.h.b16 %v1214
    %v2344 = vunpack.c.l.b16 %v1215
    %v2345 = vunpack.c.h.b16 %v1215
    %v2346 = vunpack.c.l.b16 %v1216
    %v2347 = vunpack.c.h.b16 %v1216
    %v2348 = vunpack.c.l.b16 %v1217
    %v2349 = vunpack.c.h.b16 %v1217
    %v2350 = vunpack.c.l.b16 %v1218
    %v2351 = vunpack.c.h.b16 %v1218
    %v2352 = vunpack.c.l.b16 %v1219
    %v2353 = vunpack.c.h.b16 %v1219
    %v2354 = vunpack.c.l.b16 %v1220
    %v2355 = vunpack.c.h.b16 %v1220
    %v2356 = vunpack.c.l.b16 %v1221
    %v2357 = vunpack.c.h.b16 %v1221
    %v2358 = vunpack.c.l.b16 %v1222
    %v2359 = vunpack.c.h.b16 %v1222
    %v2360 = vunpack.c.l.b16 %v1223
    %v2361 = vunpack.c.h.b16 %v1223
    %v2362 = vunpack.c.l.b16 %v1224
    %v2363 = vunpack.c.h.b16 %v1224
    %v2364 = vunpack.c.l.b16 %v1225
    %v2365 = vunpack.c.h.b16 %v1225
    %v2366 = vunpack.c.l.b16 %v1226
    %v2367 = vunpack.c.h.b16 %v1226
    %v2368 = vunpack.c.l.b16 %v1227
    %v2369 = vunpack.c.h.b16 %v1227
    %v2370 = vunpack.c.l.b16 %v1228
    %v2371 = vunpack.c.h.b16 %v1228
    %v2372 = vunpack.c.l.b16 %v1229
    %v2373 = vunpack.c.h.b16 %v1229
    %v2374 = vunpack.c.l.b16 %v1230
    %v2375 = vunpack.c.h.b16 %v1230
    %v2376 = vunpack.c.l.b16 %v1231
    %v2377 = vunpack.c.h.b16 %v1231
    %v2378 = vunpack.c.l.b16 %v1232
    %v2379 = vunpack.c.h.b16 %v1232
    %v2380 = vunpack.c.l.b16 %v1233
    %v2381 = vunpack.c.h.b16 %v1233
    %v2382 = vunpack.c.l.b16 %v1234
    %v2383 = vunpack.c.h.b16 %v1234
    %v2384 = vunpack.c.l.b16 %v1235
    %v2385 = vunpack.c.h.b16 %v1235
    %v2386 = vunpack.c.l.b16 %v1236
    %v2387 = vunpack.c.h.b16 %v1236
    %v2388 = vunpack.c.l.b16 %v1237
    %v2389 = vunpack.c.h.b16 %v1237
    %v2390 = vunpack.c.l.b16 %v1238
    %v2391 = vunpack.c.h.b16 %v1238
    %v2392 = vunpack.c.l.b16 %v1239
    %v2393 = vunpack.c.h.b16 %v1239
    %v2394 = vunpack.c.l.b16 %v1240
    %v2395 = vunpack.c.h.b16 %v1240
    %v2396 = vunpack.c.l.b16 %v1241
    %v2397 = vunpack.c.h.b16 %v1241
    %v2398 = vunpack.c.l.b16 %v1242
    %v2399 = vunpack.c.h.b16 %v1242
    %v2400 = vunpack.c.l.b16 %v1243
    %v2401 = vunpack.c.h.b16 %v1243
    %v2402 = vunpack.c.l.b16 %v1244
    %v2403 = vunpack.c.h.b16 %v1244
    %v2404 = vunpack.c.l.b16 %v1245
    %v2405 = vunpack.c.h.b16 %v1245
    %v2406 = vunpack.c.l.b16 %v1246
    %v2407 = vunpack.c.h.b16 %v1246
    %v2408 = vunpack.c.l.b16 %v1247
    %v2409 = vunpack.c.h.b16 %v1247
    %v2410 = vunpack.c.l.b16 %v1248
    %v2411 = vunpack.c.h.b16 %v1248
    %v2412 = vunpack.c.l.b16 %v1249
    %v2413 = vunpack.c.h.b16 %v1249
    %v2414 = vunpack.c.l.b16 %v1250
    %v2415 = vunpack.c.h.b16 %v1250
    %v2416 = vunpack.c.l.b16 %v1251
    %v2417 = vunpack.c.h.b16 %v1251
    %v2418 = vunpack.c.l.b16 %v1252
    %v2419 = vunpack.c.h.b16 %v1252
    %v2420 = vunpack.c.l.b16 %v1253
    %v2421 = vunpack.c.h.b16 %v1253
    %v2422 = vunpack.c.l.b16 %v1254
    %v2423 = vunpack.c.h.b16 %v1254
    %v2424 = vunpack.c.l.b16 %v1255
    %v2425 = vunpack.c.h.b16 %v1255
    %v2426 = vunpack.c.l.b16 %v1256
    %v2427 = vunpack.c.h.b16 %v1256
    %v2428 = vunpack.c.l.b16 %v1257
    %v2429 = vunpack.c.h.b16 %v1257
    %v2430 = vunpack.c.l.b16 %v1258
    %v2431 = vunpack.c.h.b16 %v1258
    %v2432 = vunpack.c.l.b16 %v1259
    %v2433 = vunpack.c.h.b16 %v1259
    %v2434 = vunpack.c.l.b16 %v1260
    %v2435 = vunpack.c.h.b16 %v1260
    %v2436 = vunpack.c.l.b16 %v1261
    %v2437 = vunpack.c.h.b16 %v1261
    %v2438 = vunpack.c.l.b16 %v1262
    %v2439 = vunpack.c.h.b16 %v1262
    %v2440 = vunpack.c.l.b16 %v1263
    %v2441 = vunpack.c.h.b16 %v1263
    %v2442 = vunpack.c.l.b16 %v1264
    %v2443 = vunpack.c.h.b16 %v1264
    %v2444 = vunpack.c.l.b16 %v1265
    %v2445 = vunpack.c.h.b16 %v1265
    %v2446 = vunpack.c.l.b16 %v1266
    %v2447 = vunpack.c.h.b16 %v1266
    %v2448 = vunpack.c.l.b16 %v1267
    %v2449 = vunpack.c.h.b16 %v1267
    %v2450 = vunpack.c.l.b16 %v1268
    %v2451 = vunpack.c.h.b16 %v1268
    %v2452 = vunpack.c.l.b16 %v1269
    %v2453 = vunpack.c.h.b16 %v1269
    %v2454 = vunpack.c.l.b16 %v1270
    %v2455 = vunpack.c.h.b16 %v1270
    %v2456 = vunpack.c.l.b16 %v1271
    %v2457 = vunpack.c.h.b16 %v1271
    %v2458 = vunpack.c.l.b16 %v1272
    %v2459 = vunpack.c.h.b16 %v1272
    %v2460 = vunpack.c.l.b16 %v1273
    %v2461 = vunpack.c.h.b16 %v1273
    %v2462 = vunpack.c.l.b16 %v1274
    %v2463 = vunpack.c.h.b16 %v1274
    %v2464 = vunpack.c.l.b16 %v1275
    %v2465 = vunpack.c.h.b16 %v1275
    %v2466 = vunpack.c.l.b16 %v1276
    %v2467 = vunpack.c.h.b16 %v1276
    %v2468 = vunpack.c.l.b16 %v1277
    %v2469 = vunpack.c.h.b16 %v1277
    %v2470 = vunpack.c.l.b16 %v1278
    %v2471 = vunpack.c.h.b16 %v1278
    %v2472 = vunpack.c.l.b16 %v1279
    %v2473 = vunpack.c.h.b16 %v1279
    %v2474 = vunpack.c.l.b16 %v1280
    %v2475 = vunpack.c.h.b16 %v1280
    %v2476 = vunpack.c.l.b16 %v1281
    %v2477 = vunpack.c.h.b16 %v1281
    %v2478 = vunpack.c.l.b16 %v1282
    %v2479 = vunpack.c.h.b16 %v1282
    %v2480 = vunpack.c.l.b16 %v1283
    %v2481 = vunpack.c.h.b16 %v1283
    %v2482 = vunpack.c.l.b16 %v1284
    %v2483 = vunpack.c.h.b16 %v1284
    %v2484 = vunpack.c.l.b16 %v1285
    %v2485 = vunpack.c.h.b16 %v1285
    %v2486 = vunpack.c.l.b16 %v1286
    %v2487 = vunpack.c.h.b16 %v1286
    %v2488 = vunpack.c.l.b16 %v1287
    %v2489 = vunpack.c.h.b16 %v1287
    %v2490 = vunpack.c.l.b16 %v1288
    %v2491 = vunpack.c.h.b16 %v1288
    %v2492 = vunpack.c.l.b16 %v1289
    %v2493 = vunpack.c.h.b16 %v1289
    %v2494 = vunpack.c.l.b16 %v1290
    %v2495 = vunpack.c.h.b16 %v1290
    %v2496 = vunpack.c.l.b16 %v1291
    %v2497 = vunpack.c.h.b16 %v1291
    %v2498 = vunpack.c.l.b16 %v1292
    %v2499 = vunpack.c.h.b16 %v1292
    %v2500 = vunpack.c.l.b16 %v1293
    %v2501 = vunpack.c.h.b16 %v1293
    %v2502 = vunpack.c.l.b16 %v1294
    %v2503 = vunpack.c.h.b16 %v1294
    %v2504 = vunpack.c.l.b16 %v1295
    %v2505 = vunpack.c.h.b16 %v1295
    %v2506 = vunpack.c.l.b16 %v1296
    %v2507 = vunpack.c.h.b16 %v1296
    %v2508 = vunpack.c.l.b16 %v1297
    %v2509 = vunpack.c.h.b16 %v1297
    %v2510 = vunpack.c.l.b16 %v1298
    %v2511 = vunpack.c.h.b16 %v1298
    %v2512 = vunpack.c.l.b16 %v1299
    %v2513 = vunpack.c.h.b16 %v1299
    %v2514 = vunpack.c.l.b16 %v1300
    %v2515 = vunpack.c.h.b16 %v1300
    %v2516 = vunpack.c.l.b16 %v1301
    %v2517 = vunpack.c.h.b16 %v1301
    %v2518 = vunpack.c.l.b16 %v1302
    %v2519 = vunpack.c.h.b16 %v1302
    %v2520 = vunpack.c.l.b16 %v1303
    %v2521 = vunpack.c.h.b16 %v1303
    %v2522 = vunpack.c.l.b16 %v1304
    %v2523 = vunpack.c.h.b16 %v1304
    %v2524 = vunpack.c.l.b16 %v1305
    %v2525 = vunpack.c.h.b16 %v1305
    %v2526 = vunpack.c.l.b16 %v1306
    %v2527 = vunpack.c.h.b16 %v1306
    %v2528 = vunpack.c.l.b16 %v1307
    %v2529 = vunpack.c.h.b16 %v1307
    %v2530 = vunpack.c.l.b16 %v1308
    %v2531 = vunpack.c.h.b16 %v1308
    %v2532 = vunpack.c.l.b16 %v1309
    %v2533 = vunpack.c.h.b16 %v1309
    %v2534 = vunpack.c.l.b16 %v1310
    %v2535 = vunpack.c.h.b16 %v1310
    %v2536 = vunpack.c.l.b16 %v1311
    %v2537 = vunpack.c.h.b16 %v1311
    %v2538 = vunpack.c.l.b16 %v1312
    %v2539 = vunpack.c.h.b16 %v1312
    %v2540 = vunpack.c.l.b16 %v1313
    %v2541 = vunpack.c.h.b16 %v1313
    %v2542 = vunpack.c.l.b16 %v1314
    %v2543 = vunpack.c.h.b16 %v1314
    %v2544 = vunpack.c.l.b16 %v1315
    %v2545 = vunpack.c.h.b16 %v1315
    %v2546 = vunpack.c.l.b16 %v1316
    %v2547 = vunpack.c.h.b16 %v1316
    %v2548 = vunpack.c.l.b16 %v1317
    %v2549 = vunpack.c.h.b16 %v1317
    %v2550 = vunpack.c.l.b16 %v1318
    %v2551 = vunpack.c.h.b16 %v1318
    %v2552 = vunpack.c.l.b16 %v1319
    %v2553 = vunpack.c.h.b16 %v1319
    %v2554 = vunpack.c.l.b16 %v1320
    %v2555 = vunpack.c.h.b16 %v1320
    %v2556 = vunpack.c.l.b16 %v1321
    %v2557 = vunpack.c.h.b16 %v1321
    %v2558 = vunpack.c.l.b16 %v1322
    %v2559 = vunpack.c.h.b16 %v1322
    %v2560 = vunpack.c.l.b16 %v1323
    %v2561 = vunpack.c.h.b16 %v1323
    %v2562 = vunpack.c.l.b16 %v1324
    %v2563 = vunpack.c.h.b16 %v1324
    %v2564 = vunpack.c.l.b16 %v1325
    %v2565 = vunpack.c.h.b16 %v1325
    %v2566 = vunpack.c.l.b16 %v1326
    %v2567 = vunpack.c.h.b16 %v1326
    %v2568 = vunpack.c.l.b16 %v1327
    %v2569 = vunpack.c.h.b16 %v1327
    %v2570 = vunpack.c.l.b16 %v1328
    %v2571 = vunpack.c.h.b16 %v1328
    %v2572 = vunpack.c.l.b16 %v1329
    %v2573 = vunpack.c.h.b16 %v1329
    %v2574 = vunpack.c.l.b16 %v1330
    %v2575 = vunpack.c.h.b16 %v1330
    %v2576 = vunpack.c.l.b16 %v1331
    %v2577 = vunpack.c.h.b16 %v1331
    %v2578 = vunpack.c.l.b16 %v1332
    %v2579 = vunpack.c.h.b16 %v1332
    %v2580 = vunpack.c.l.b16 %v1333
    %v2581 = vunpack.c.h.b16 %v1333
    %v2582 = vunpack.c.l.b16 %v1334
    %v2583 = vunpack.c.h.b16 %v1334
    %v2584 = vunpack.c.l.b16 %v1335
    %v2585 = vunpack.c.h.b16 %v1335
    %v2586 = vunpack.c.l.b16 %v1336
    %v2587 = vunpack.c.h.b16 %v1336
    %v2588 = vunpack.c.l.b16 %v1337
    %v2589 = vunpack.c.h.b16 %v1337
    %v2590 = vunpack.c.l.b16 %v1338
    %v2591 = vunpack.c.h.b16 %v1338
    %v2592 = vunpack.c.l.b16 %v1339
    %v2593 = vunpack.c.h.b16 %v1339
    %v2594 = vunpack.c.l.b16 %v1340
    %v2595 = vunpack.c.h.b16 %v1340
    %v2596 = vunpack.c.l.b16 %v1341
    %v2597 = vunpack.c.h.b16 %v1341
    %v2598 = vunpack.c.l.b16 %v1342
    %v2599 = vunpack.c.h.b16 %v1342
    %v2600 = vunpack.c.l.b16 %v1343
    %v2601 = vunpack.c.h.b16 %v1343
    %v2602 = vunpack.c.l.b16 %v1344
    %v2603 = vunpack.c.h.b16 %v1344
    %v2604 = vunpack.c.l.b16 %v1345
    %v2605 = vunpack.c.h.b16 %v1345
    %v2606 = vunpack.c.l.b16 %v1346
    %v2607 = vunpack.c.h.b16 %v1346
    %v2608 = vunpack.c.l.b16 %v1347
    %v2609 = vunpack.c.h.b16 %v1347
    %v2610 = vunpack.c.l.b16 %v1348
    %v2611 = vunpack.c.h.b16 %v1348
    %v2612 = vunpack.c.l.b16 %v1349
    %v2613 = vunpack.c.h.b16 %v1349
    %v2614 = vunpack.c.l.b16 %v1350
    %v2615 = vunpack.c.h.b16 %v1350
    %v2616 = vunpack.c.l.b16 %v1351
    %v2617 = vunpack.c.h.b16 %v1351
    %v2618 = vunpack.c.l.b16 %v1352
    %v2619 = vunpack.c.h.b16 %v1352
    %v2620 = vunpack.c.l.b16 %v1353
    %v2621 = vunpack.c.h.b16 %v1353
    %v2622 = vunpack.c.l.b16 %v1354
    %v2623 = vunpack.c.h.b16 %v1354
    %v2624 = vunpack.c.l.b16 %v1355
    %v2625 = vunpack.c.h.b16 %v1355
    %v2626 = vunpack.c.l.b16 %v1356
    %v2627 = vunpack.c.h.b16 %v1356
    %v2628 = vunpack.c.l.b16 %v1357
    %v2629 = vunpack.c.h.b16 %v1357
    %v2630 = vunpack.c.l.b16 %v1358
    %v2631 = vunpack.c.h.b16 %v1358
    %v2632 = vunpack.c.l.b16 %v1359
    %v2633 = vunpack.c.h.b16 %v1359
    %v2634 = vunpack.c.l.b16 %v1360
    %v2635 = vunpack.c.h.b16 %v1360
    %v2636 = vunpack.c.l.b16 %v1361
    %v2637 = vunpack.c.h.b16 %v1361
    %v2638 = vunpack.c.l.b16 %v1362
    %v2639 = vunpack.c.h.b16 %v1362
    %v2640 = vunpack.c.l.b16 %v1363
    %v2641 = vunpack.c.h.b16 %v1363
    %v2642 = vunpack.c.l.b16 %v1364
    %v2643 = vunpack.c.h.b16 %v1364
    %v2644 = vunpack.c.l.b16 %v1365
    %v2645 = vunpack.c.h.b16 %v1365
    %v2646 = vunpack.c.l.b16 %v1366
    %v2647 = vunpack.c.h.b16 %v1366
    %v2648 = vunpack.c.l.b16 %v1367
    %v2649 = vunpack.c.h.b16 %v1367
    %v2650 = vunpack.c.l.b16 %v1368
    %v2651 = vunpack.c.h.b16 %v1368
    %v2652 = vunpack.c.l.b16 %v1369
    %v2653 = vunpack.c.h.b16 %v1369
    %v2654 = vunpack.c.l.b16 %v1370
    %v2655 = vunpack.c.h.b16 %v1370
    %v2656 = vunpack.c.l.b16 %v1371
    %v2657 = vunpack.c.h.b16 %v1371
    %v2658 = vunpack.c.l.b16 %v1372
    %v2659 = vunpack.c.h.b16 %v1372
    %v2660 = vunpack.c.l.b16 %v1373
    %v2661 = vunpack.c.h.b16 %v1373
    %v2662 = vunpack.c.l.b16 %v1374
    %v2663 = vunpack.c.h.b16 %v1374
    %v2664 = vunpack.c.l.b16 %v1375
    %v2665 = vunpack.c.h.b16 %v1375
    %v2666 = vunpack.c.l.b16 %v1376
    %v2667 = vunpack.c.h.b16 %v1376
    %v2668 = vunpack.c.l.b16 %v1377
    %v2669 = vunpack.c.h.b16 %v1377
    %v2670 = vunpack.c.l.b16 %v1378
    %v2671 = vunpack.c.h.b16 %v1378
    %v2672 = vunpack.c.l.b16 %v1379
    %v2673 = vunpack.c.h.b16 %v1379
    %v2674 = vunpack.c.l.b16 %v1380
    %v2675 = vunpack.c.h.b16 %v1380
    %v2676 = vunpack.c.l.b16 %v1381
    %v2677 = vunpack.c.h.b16 %v1381
    %v2678 = vunpack.c.l.b16 %v1382
    %v2679 = vunpack.c.h.b16 %v1382
    %v2680 = vunpack.c.l.b16 %v1383
    %v2681 = vunpack.c.h.b16 %v1383
    %v2682 = vunpack.c.l.b16 %v1384
    %v2683 = vunpack.c.h.b16 %v1384
    %v2684 = vunpack.c.l.b16 %v1385
    %v2685 = vunpack.c.h.b16 %v1385
    %v2686 = vunpack.c.l.b16 %v1386
    %v2687 = vunpack.c.h.b16 %v1386
    %v2688 = vunpack.c.l.b16 %v1387
    %v2689 = vunpack.c.h.b16 %v1387
    %v2690 = vunpack.c.l.b16 %v1388
    %v2691 = vunpack.c.h.b16 %v1388
    %v2692 = vunpack.c.l.b16 %v1389
    %v2693 = vunpack.c.h.b16 %v1389
    %v2694 = vunpack.c.l.b16 %v1390
    %v2695 = vunpack.c.h.b16 %v1390
    %v2696 = vunpack.c.l.b16 %v1391
    %v2697 = vunpack.c.h.b16 %v1391
    %v2698 = vunpack.c.l.b16 %v1392
    %v2699 = vunpack.c.h.b16 %v1392
    %v2700 = vunpack.c.l.b16 %v1393
    %v2701 = vunpack.c.h.b16 %v1393
    %v2702 = vunpack.c.l.b16 %v1394
    %v2703 = vunpack.c.h.b16 %v1394
    %v2704 = vunpack.c.l.b16 %v1395
    %v2705 = vunpack.c.h.b16 %v1395
    %v2706 = vunpack.c.l.b16 %v1396
    %v2707 = vunpack.c.h.b16 %v1396
    %v2708 = vunpack.c.l.b16 %v1397
    %v2709 = vunpack.c.h.b16 %v1397
    %v2710 = vunpack.c.l.b16 %v1398
    %v2711 = vunpack.c.h.b16 %v1398
    %v2712 = vunpack.c.l.b16 %v1399
    %v2713 = vunpack.c.h.b16 %v1399
    %v2714 = vunpack.c.l.b16 %v1400
    %v2715 = vunpack.c.h.b16 %v1400
    %v2716 = vunpack.c.l.b16 %v1401
    %v2717 = vunpack.c.h.b16 %v1401
    %v2718 = vunpack.c.l.b16 %v1402
    %v2719 = vunpack.c.h.b16 %v1402
    %v2720 = vunpack.c.l.b16 %v1403
    %v2721 = vunpack.c.h.b16 %v1403
    %v2722 = vunpack.c.l.b16 %v1404
    %v2723 = vunpack.c.h.b16 %v1404
    %v2724 = vunpack.c.l.b16 %v1405
    %v2725 = vunpack.c.h.b16 %v1405
    %v2726 = vunpack.c.l.b16 %v1406
    %v2727 = vunpack.c.h.b16 %v1406
    %v2728 = vunpack.c.l.b16 %v1407
    %v2729 = vunpack.c.h.b16 %v1407
    %v2730 = vunpack.c.l.b16 %v1408
    %v2731 = vunpack.c.h.b16 %v1408
    %v2732 = vunpack.c.l.b16 %v1409
    %v2733 = vunpack.c.h.b16 %v1409
    %v2734 = vunpack.c.l.b16 %v1410
    %v2735 = vunpack.c.h.b16 %v1410
    %v2736 = vunpack.c.l.b16 %v1411
    %v2737 = vunpack.c.h.b16 %v1411
    %v2738 = vunpack.c.l.b16 %v1412
    %v2739 = vunpack.c.h.b16 %v1412
    %v2740 = vunpack.c.l.b16 %v1413
    %v2741 = vunpack.c.h.b16 %v1413
    %v2742 = vunpack.c.l.b16 %v1414
    %v2743 = vunpack.c.h.b16 %v1414
    %v2744 = vunpack.c.l.b16 %v1415
    %v2745 = vunpack.c.h.b16 %v1415
    %v2746 = vunpack.c.l.b16 %v1416
    %v2747 = vunpack.c.h.b16 %v1416
    %v2748 = vunpack.c.l.b16 %v1417
    %v2749 = vunpack.c.h.b16 %v1417
    %v2750 = vunpack.c.l.b16 %v1418
    %v2751 = vunpack.c.h.b16 %v1418
    %v2752 = vunpack.c.l.b16 %v1419
    %v2753 = vunpack.c.h.b16 %v1419
    %v2754 = vunpack.c.l.b16 %v1420
    %v2755 = vunpack.c.h.b16 %v1420
    %v2756 = vunpack.c.l.b16 %v1421
    %v2757 = vunpack.c.h.b16 %v1421
    %v2758 = vunpack.c.l.b16 %v1422
    %v2759 = vunpack.c.h.b16 %v1422
    %v2760 = vunpack.c.l.b16 %v1423
    %v2761 = vunpack.c.h.b16 %v1423
    %v2762 = vunpack.c.l.b16 %v1424
    %v2763 = vunpack.c.h.b16 %v1424
    %v2764 = vunpack.c.l.b16 %v1425
    %v2765 = vunpack.c.h.b16 %v1425
    %v2766 = vunpack.c.l.b16 %v1426
    %v2767 = vunpack.c.h.b16 %v1426
    %v2768 = vunpack.c.l.b16 %v1427
    %v2769 = vunpack.c.h.b16 %v1427
    %v2770 = vunpack.c.l.b16 %v1428
    %v2771 = vunpack.c.h.b16 %v1428
    %v2772 = vunpack.c.l.b16 %v1429
    %v2773 = vunpack.c.h.b16 %v1429
    %v2774 = vunpack.c.l.b16 %v1430
    %v2775 = vunpack.c.h.b16 %v1430
    %v2776 = vunpack.c.l.b16 %v1431
    %v2777 = vunpack.c.h.b16 %v1431
    %v2778 = vunpack.c.l.b16 %v1432
    %v2779 = vunpack.c.h.b16 %v1432
    %v2780 = vunpack.c.l.b16 %v1433
    %v2781 = vunpack.c.h.b16 %v1433
    %v2782 = vunpack.c.l.b16 %v1434
    %v2783 = vunpack.c.h.b16 %v1434
    %v2784 = vunpack.c.l.b16 %v1435
    %v2785 = vunpack.c.h.b16 %v1435
    %v2786 = vunpack.c.l.b16 %v1436
    %v2787 = vunpack.c.h.b16 %v1436
    %v2788 = vunpack.c.l.b16 %v1437
    %v2789 = vunpack.c.h.b16 %v1437
    %v2790 = vunpack.c.l.b16 %v1438
    %v2791 = vunpack.c.h.b16 %v1438
    %v2792 = vunpack.c.l.b16 %v1439
    %v2793 = vunpack.c.h.b16 %v1439
    %v2794 = vunpack.c.l.b16 %v1440
    %v2795 = vunpack.c.h.b16 %v1440
    %v2796 = vunpack.c.l.b16 %v1441
    %v2797 = vunpack.c.h.b16 %v1441
    %v2798 = vunpack.c.l.b16 %v1442
    %v2799 = vunpack.c.h.b16 %v1442
    %v2800 = vunpack.c.l.b16 %v1443
    %v2801 = vunpack.c.h.b16 %v1443
    %v2802 = vunpack.c.l.b16 %v1444
    %v2803 = vunpack.c.h.b16 %v1444
    %v2804 = vunpack.c.l.b16 %v1445
    %v2805 = vunpack.c.h.b16 %v1445
    %v2806 = vunpack.c.l.b16 %v1446
    %v2807 = vunpack.c.h.b16 %v1446
    %v2808 = vunpack.c.l.b16 %v1447
    %v2809 = vunpack.c.h.b16 %v1447
    %v2810 = vunpack.c.l.b16 %v1448
    %v2811 = vunpack.c.h.b16 %v1448
    %v2812 = vunpack.c.l.b16 %v1449
    %v2813 = vunpack.c.h.b16 %v1449
    %v2814 = vunpack.c.l.b16 %v1450
    %v2815 = vunpack.c.h.b16 %v1450
    %v2816 = vunpack.c.l.b16 %v1451
    %v2817 = vunpack.c.h.b16 %v1451
    %v2818 = vunpack.c.l.b16 %v1452
    %v2819 = vunpack.c.h.b16 %v1452
    %v2820 = vunpack.c.l.b16 %v1453
    %v2821 = vunpack.c.h.b16 %v1453
    %v2822 = vunpack.c.l.b16 %v1454
    %v2823 = vunpack.c.h.b16 %v1454
    %v2824 = vunpack.c.l.b16 %v1455
    %v2825 = vunpack.c.h.b16 %v1455
    %v2826 = vunpack.c.l.b16 %v1456
    %v2827 = vunpack.c.h.b16 %v1456
    %v2828 = vunpack.c.l.b16 %v1457
    %v2829 = vunpack.c.h.b16 %v1457
    %v2830 = vunpack.c.l.b16 %v1458
    %v2831 = vunpack.c.h.b16 %v1458
    %v2832 = vunpack.c.l.b16 %v1459
    %v2833 = vunpack.c.h.b16 %v1459
    %v2834 = vunpack.c.l.b16 %v1460
    %v2835 = vunpack.c.h.b16 %v1460
    %v2836 = vunpack.c.l.b16 %v1461
    %v2837 = vunpack.c.h.b16 %v1461
    %v2838 = vunpack.c.l.b16 %v1462
    %v2839 = vunpack.c.h.b16 %v1462
    %v2840 = vunpack.c.l.b16 %v1463
    %v2841 = vunpack.c.h.b16 %v1463
    %v2842 = vunpack.c.l.b16 %v1464
    %v2843 = vunpack.c.h.b16 %v1464
    %v2844 = vunpack.c.l.b16 %v1465
    %v2845 = vunpack.c.h.b16 %v1465
    %v2846 = vunpack.c.l.b16 %v1466
    %v2847 = vunpack.c.h.b16 %v1466
    %v2848 = vunpack.c.l.b16 %v1467
    %v2849 = vunpack.c.h.b16 %v1467
    %v2850 = vunpack.c.l.b16 %v1468
    %v2851 = vunpack.c.h.b16 %v1468
    %v2852 = vunpack.c.l.b16 %v1469
    %v2853 = vunpack.c.h.b16 %v1469
    %v2854 = vunpack.c.l.b16 %v1470
    %v2855 = vunpack.c.h.b16 %v1470
    %v2856 = vunpack.c.l.b16 %v1471
    %v2857 = vunpack.c.h.b16 %v1471
    %v2858 = vunpack.c.l.b16 %v1472
    %v2859 = vunpack.c.h.b16 %v1472
    %v2860 = vunpack.c.l.b16 %v1473
    %v2861 = vunpack.c.h.b16 %v1473
    %v2862 = vunpack.c.l.b16 %v1474
    %v2863 = vunpack.c.h.b16 %v1474
    %v2864 = vunpack.c.l.b16 %v1475
    %v2865 = vunpack.c.h.b16 %v1475
    %v2866 = vunpack.c.l.b16 %v1476
    %v2867 = vunpack.c.h.b16 %v1476
    %v2868 = vunpack.c.l.b16 %v1477
    %v2869 = vunpack.c.h.b16 %v1477
    %v2870 = vunpack.c.l.b16 %v1478
    %v2871 = vunpack.c.h.b16 %v1478
    %v2872 = vunpack.c.l.b16 %v1479
    %v2873 = vunpack.c.h.b16 %v1479
    %v2874 = vunpack.c.l.b16 %v1480
    %v2875 = vunpack.c.h.b16 %v1480
    %v2876 = vunpack.c.l.b16 %v1481
    %v2877 = vunpack.c.h.b16 %v1481
    %v2878 = vunpack.c.l.b16 %v1482
    %v2879 = vunpack.c.h.b16 %v1482
    %v2880 = vunpack.c.l.b16 %v1483
    %v2881 = vunpack.c.h.b16 %v1483
    %v2882 = vunpack.c.l.b16 %v1484
    %v2883 = vunpack.c.h.b16 %v1484
    %v2884 = vunpack.c.l.b16 %v1485
    %v2885 = vunpack.c.h.b16 %v1485
    %v2886 = vunpack.c.l.b16 %v1486
    %v2887 = vunpack.c.h.b16 %v1486
    %v2888 = vunpack.c.l.b16 %v1487
    %v2889 = vunpack.c.h.b16 %v1487
    %v2890 = vunpack.c.l.b16 %v1488
    %v2891 = vunpack.c.h.b16 %v1488
    %v2892 = vunpack.c.l.b16 %v1489
    %v2893 = vunpack.c.h.b16 %v1489
    %v2894 = vunpack.c.l.b16 %v1490
    %v2895 = vunpack.c.h.b16 %v1490
    %v2896 = vunpack.c.l.b16 %v1491
    %v2897 = vunpack.c.h.b16 %v1491
    %v2898 = vunpack.c.l.b16 %v1492
    %v2899 = vunpack.c.h.b16 %v1492
    %v2900 = vunpack.c.l.b16 %v1493
    %v2901 = vunpack.c.h.b16 %v1493
    %v2902 = vunpack.c.l.b16 %v1494
    %v2903 = vunpack.c.h.b16 %v1494
    %v2904 = vunpack.c.l.b16 %v1495
    %v2905 = vunpack.c.h.b16 %v1495
    %v2906 = vunpack.c.l.b16 %v1496
    %v2907 = vunpack.c.h.b16 %v1496
    %v2908 = vunpack.c.l.b16 %v1497
    %v2909 = vunpack.c.h.b16 %v1497
    %v2910 = vunpack.c.l.b16 %v1498
    %v2911 = vunpack.c.h.b16 %v1498
    %v2912 = vunpack.c.l.b16 %v1499
    %v2913 = vunpack.c.h.b16 %v1499
    %v2914 = vunpack.c.l.b16 %v1500
    %v2915 = vunpack.c.h.b16 %v1500
    %v2916 = vunpack.c.l.b16 %v1501
    %v2917 = vunpack.c.h.b16 %v1501
    %v2918 = vunpack.c.l.b16 %v1502
    %v2919 = vunpack.c.h.b16 %v1502
    %v2920 = vunpack.c.l.b16 %v1503
    %v2921 = vunpack.c.h.b16 %v1503
    %v2922 = vunpack.c.l.b16 %v1504
    %v2923 = vunpack.c.h.b16 %v1504
    %v2924 = vunpack.c.l.b16 %v1505
    %v2925 = vunpack.c.h.b16 %v1505
    %v2926 = vunpack.c.l.b16 %v1506
    %v2927 = vunpack.c.h.b16 %v1506
    %v2928 = vunpack.c.l.b16 %v1507
    %v2929 = vunpack.c.h.b16 %v1507
    %v2930 = vunpack.c.l.b16 %v1508
    %v2931 = vunpack.c.h.b16 %v1508
    %v2932 = vunpack.c.l.b16 %v1509
    %v2933 = vunpack.c.h.b16 %v1509
    %v2934 = vunpack.c.l.b16 %v1510
    %v2935 = vunpack.c.h.b16 %v1510
    %v2936 = vunpack.c.l.b16 %v1511
    %v2937 = vunpack.c.h.b16 %v1511
    %v2938 = vunpack.c.l.b16 %v1512
    %v2939 = vunpack.c.h.b16 %v1512
    %v2940 = vunpack.c.l.b16 %v1513
    %v2941 = vunpack.c.h.b16 %v1513
    %v2942 = vunpack.c.l.b16 %v1514
    %v2943 = vunpack.c.h.b16 %v1514
    %v2944 = vunpack.c.l.b16 %v1515
    %v2945 = vunpack.c.h.b16 %v1515
    %v2946 = vunpack.c.l.b16 %v1516
    %v2947 = vunpack.c.h.b16 %v1516
    %v2948 = vunpack.c.l.b16 %v1517
    %v2949 = vunpack.c.h.b16 %v1517
    %v2950 = vunpack.c.l.b16 %v1518
    %v2951 = vunpack.c.h.b16 %v1518
    %v2952 = vunpack.c.l.b16 %v1519
    %v2953 = vunpack.c.h.b16 %v1519
    %v2954 = vunpack.c.l.b16 %v1520
    %v2955 = vunpack.c.h.b16 %v1520
    %v2956 = vunpack.c.l.b16 %v1521
    %v2957 = vunpack.c.h.b16 %v1521
    %v2958 = vunpack.c.l.b16 %v1522
    %v2959 = vunpack.c.h.b16 %v1522
    %v2960 = vunpack.c.l.b16 %v1523
    %v2961 = vunpack.c.h.b16 %v1523
    %v2962 = vunpack.c.l.b16 %v1524
    %v2963 = vunpack.c.h.b16 %v1524
    %v2964 = vunpack.c.l.b16 %v1525
    %v2965 = vunpack.c.h.b16 %v1525
    %v2966 = vunpack.c.l.b16 %v1526
    %v2967 = vunpack.c.h.b16 %v1526
    %v2968 = vunpack.c.l.b16 %v1527
    %v2969 = vunpack.c.h.b16 %v1527
    %v2970 = vunpack.c.l.b16 %v1528
    %v2971 = vunpack.c.h.b16 %v1528
    %v2972 = vunpack.c.l.b16 %v1529
    %v2973 = vunpack.c.h.b16 %v1529
    %v2974 = vunpack.c.l.b16 %v1530
    %v2975 = vunpack.c.h.b16 %v1530
    %v2976 = vunpack.c.l.b16 %v1531
    %v2977 = vunpack.c.h.b16 %v1531
    %v2978 = vunpack.c.l.b16 %v1532
    %v2979 = vunpack.c.h.b16 %v1532
    %v2980 = vunpack.c.l.b16 %v1533
    %v2981 = vunpack.c.h.b16 %v1533
    %v2982 = vunpack.c.l.b16 %v1534
    %v2983 = vunpack.c.h.b16 %v1534
    %v2984 = vunpack.c.l.b16 %v1535
    %v2985 = vunpack.c.h.b16 %v1535
    %v2986 = vunpack.c.l.b16 %v1536
    %v2987 = vunpack.c.h.b16 %v1536
    %v2988 = vunpack.c.l.b16 %v1537
    %v2989 = vunpack.c.h.b16 %v1537
    %v2990 = vunpack.c.l.b16 %v1538
    %v2991 = vunpack.c.h.b16 %v1538
    %v2992 = vunpack.c.l.b16 %v1539
    %v2993 = vunpack.c.h.b16 %v1539
    %v2994 = vunpack.c.l.b16 %v1540
    %v2995 = vunpack.c.h.b16 %v1540
    %v2996 = vunpack.c.l.b16 %v1541
    %v2997 = vunpack.c.h.b16 %v1541
    %v2998 = vunpack.c.l.b16 %v1542
    %v2999 = vunpack.c.h.b16 %v1542
    %v3000 = vunpack.c.l.b16 %v1543
    %v3001 = vunpack.c.h.b16 %v1543
    %v3002 = vunpack.c.l.b16 %v1544
    %v3003 = vunpack.c.h.b16 %v1544
    %v3004 = vunpack.c.l.b16 %v1545
    %v3005 = vunpack.c.h.b16 %v1545
    %v3006 = vunpack.c.l.b16 %v1546
    %v3007 = vunpack.c.h.b16 %v1546
    %v3008 = vunpack.c.l.b16 %v1547
    %v3009 = vunpack.c.h.b16 %v1547
    %v3010 = vunpack.c.l.b16 %v1548
    %v3011 = vunpack.c.h.b16 %v1548
    %v3012 = vunpack.c.l.b16 %v1549
    %v3013 = vunpack.c.h.b16 %v1549
    %v3014 = vunpack.c.l.b16 %v1550
    %v3015 = vunpack.c.h.b16 %v1550
    %v3016 = vunpack.c.l.b16 %v1551
    %v3017 = vunpack.c.h.b16 %v1551
    %v3018 = vunpack.c.l.b16 %v1552
    %v3019 = vunpack.c.h.b16 %v1552
    %v3020 = vunpack.c.l.b16 %v1553
    %v3021 = vunpack.c.h.b16 %v1553
    %v3022 = vunpack.c.l.b16 %v1554
    %v3023 = vunpack.c.h.b16 %v1554
    %v3024 = vunpack.c.l.b16 %v1555
    %v3025 = vunpack.c.h.b16 %v1555
    %v3026 = vunpack.c.l.b16 %v1556
    %v3027 = vunpack.c.h.b16 %v1556
    %v3028 = vunpack.c.l.b16 %v1557
    %v3029 = vunpack.c.h.b16 %v1557
    %v3030 = vunpack.c.l.b16 %v1558
    %v3031 = vunpack.c.h.b16 %v1558
    %v3032 = vunpack.c.l.b16 %v1559
    %v3033 = vunpack.c.h.b16 %v1559
    %v3034 = vunpack.c.l.b16 %v1560
    %v3035 = vunpack.c.h.b16 %v1560
    %v3036 = vunpack.c.l.b16 %v1561
    %v3037 = vunpack.c.h.b16 %v1561
    %v3038 = vunpack.c.l.b16 %v1562
    %v3039 = vunpack.c.h.b16 %v1562
    %v3040 = vunpack.c.l.b16 %v1563
    %v3041 = vunpack.c.h.b16 %v1563
    %v3042 = vunpack.c.l.b16 %v1564
    %v3043 = vunpack.c.h.b16 %v1564
    %v3044 = vunpack.c.l.b16 %v1565
    %v3045 = vunpack.c.h.b16 %v1565
    %v3046 = vunpack.c.l.b16 %v1566
    %v3047 = vunpack.c.h.b16 %v1566
    %v3048 = vunpack.c.l.b16 %v1567
    %v3049 = vunpack.c.h.b16 %v1567
    %v3050 = vunpack.c.l.b16 %v1568
    %v3051 = vunpack.c.h.b16 %v1568
    %v3052 = vunpack.c.l.b16 %v1569
    %v3053 = vunpack.c.h.b16 %v1569
    %v3054 = vunpack.c.l.b16 %v1570
    %v3055 = vunpack.c.h.b16 %v1570
    %v3056 = vunpack.c.l.b16 %v1571
    %v3057 = vunpack.c.h.b16 %v1571
    %v3058 = vunpack.c.l.b16 %v1572
    %v3059 = vunpack.c.h.b16 %v1572
    %v3060 = vunpack.c.l.b16 %v1573
    %v3061 = vunpack.c.h.b16 %v1573
    %v3062 = vunpack.c.l.b16 %v1574
    %v3063 = vunpack.c.h.b16 %v1574
    %v3064 = vunpack.c.l.b16 %v1575
    %v3065 = vunpack.c.h.b16 %v1575
    %v3066 = vunpack.c.l.b16 %v1576
    %v3067 = vunpack.c.h.b16 %v1576
    %v3068 = vunpack.c.l.b16 %v1577
    %v3069 = vunpack.c.h.b16 %v1577
    %v3070 = vunpack.c.l.b16 %v1578
    %v3071 = vunpack.c.h.b16 %v1578
    %v3072 = vunpack.c.l.b16 %v1579
    %v3073 = vunpack.c.h.b16 %v1579
    %v3074 = vunpack.c.l.b16 %v1580
    %v3075 = vunpack.c.h.b16 %v1580
    %v3076 = vunpack.c.l.b16 %v1581
    %v3077 = vunpack.c.h.b16 %v1581
    %v3078 = vunpack.c.l.b16 %v1582
    %v3079 = vunpack.c.h.b16 %v1582
    %v3080 = vunpack.c.l.b16 %v1583
    %v3081 = vunpack.c.h.b16 %v1583
    %v3082 = vunpack.c.l.b16 %v1584
    %v3083 = vunpack.c.h.b16 %v1584
    %v3084 = vunpack.c.l.b16 %v1585
    %v3085 = vunpack.c.h.b16 %v1585
    %v3086 = vunpack.c.l.b16 %v1586
    %v3087 = vunpack.c.h.b16 %v1586
    %v3088 = vunpack.c.l.b16 %v1587
    %v3089 = vunpack.c.h.b16 %v1587
    %v3090 = vunpack.c.l.b16 %v1588
    %v3091 = vunpack.c.h.b16 %v1588
    %v3092 = vunpack.c.l.b16 %v1589
    %v3093 = vunpack.c.h.b16 %v1589
    %v3094 = vunpack.c.l.b16 %v1590
    %v3095 = vunpack.c.h.b16 %v1590
    %v3096 = vunpack.c.l.b16 %v1591
    %v3097 = vunpack.c.h.b16 %v1591
    %v3098 = vunpack.c.l.b16 %v1592
    %v3099 = vunpack.c.h.b16 %v1592
    %v3100 = vunpack.c.l.b16 %v1593
    %v3101 = vunpack.c.h.b16 %v1593
    %v3102 = vunpack.c.l.b16 %v1594
    %v3103 = vunpack.c.h.b16 %v1594
    %v3104 = vunpack.c.l.b16 %v1595
    %v3105 = vunpack.c.h.b16 %v1595
    %v3106 = vunpack.c.l.b16 %v1596
    %v3107 = vunpack.c.h.b16 %v1596
    %v3108 = vunpack.c.l.b16 %v1597
    %v3109 = vunpack.c.h.b16 %v1597
    %v3110 = vunpack.c.l.b16 %v1598
    %v3111 = vunpack.c.h.b16 %v1598
    %v3112 = vunpack.c.l.b16 %v1599
    %v3113 = vunpack.c.h.b16 %v1599
    %v3114 = vunpack.c.l.b16 %v1600
    %v3115 = vunpack.c.h.b16 %v1600
    %v3116 = vunpack.c.l.b16 %v1601
    %v3117 = vunpack.c.h.b16 %v1601
    %v3118 = vunpack.c.l.b16 %v1602
    %v3119 = vunpack.c.h.b16 %v1602
    %v3120 = vunpack.c.l.b16 %v1603
    %v3121 = vunpack.c.h.b16 %v1603
    %v3122 = vunpack.c.l.b16 %v1604
    %v3123 = vunpack.c.h.b16 %v1604
    %v3124 = vunpack.c.l.b16 %v1605
    %v3125 = vunpack.c.h.b16 %v1605
    %v3126 = vunpack.c.l.b16 %v1606
    %v3127 = vunpack.c.h.b16 %v1606
    %v3128 = vunpack.c.l.b16 %v1607
    %v3129 = vunpack.c.h.b16 %v1607
    %v3130 = vunpack.c.l.b16 %v1608
    %v3131 = vunpack.c.h.b16 %v1608
    %v3132 = vunpack.c.l.b16 %v1609
    %v3133 = vunpack.c.h.b16 %v1609
    %v3134 = vunpack.c.l.b16 %v1610
    %v3135 = vunpack.c.h.b16 %v1610
    %v3136 = vunpack.c.l.b16 %v1611
    %v3137 = vunpack.c.h.b16 %v1611
    %v3138 = vunpack.c.l.b16 %v1612
    %v3139 = vunpack.c.h.b16 %v1612
    %v3140 = vunpack.c.l.b16 %v1613
    %v3141 = vunpack.c.h.b16 %v1613
    %v3142 = vunpack.c.l.b16 %v1614
    %v3143 = vunpack.c.h.b16 %v1614
    %v3144 = vunpack.c.l.b16 %v1615
    %v3145 = vunpack.c.h.b16 %v1615
    %v3146 = vunpack.c.l.b16 %v1616
    %v3147 = vunpack.c.h.b16 %v1616
    %v3148 = vunpack.c.l.b16 %v1617
    %v3149 = vunpack.c.h.b16 %v1617
    %v3150 = vunpack.c.l.b16 %v1618
    %v3151 = vunpack.c.h.b16 %v1618
    %v3152 = vunpack.c.l.b16 %v1619
    %v3153 = vunpack.c.h.b16 %v1619
    %v3154 = vunpack.c.l.b16 %v1620
    %v3155 = vunpack.c.h.b16 %v1620
    %v3156 = vunpack.c.l.b16 %v1621
    %v3157 = vunpack.c.h.b16 %v1621
    %v3158 = vpack.c.b16 %v2150, %v2134
    %v3159 = vpack.c.b16 %v2151, %v2135
    %v3160 = vpack.c.b16 %v2152, %v2136
    %v3161 = vpack.c.b16 %v2153, %v2137
    %v3162 = vpack.c.b16 %v2154, %v2138
    %v3163 = vpack.c.b16 %v2155, %v2139
    %v3164 = vpack.c.b16 %v2156, %v2140
    %v3165 = vpack.c.b16 %v2157, %v2141
    %v3166 = vpack.c.b16 %v2158, %v2142
    %v3167 = vpack.c.b16 %v2159, %v2143
    %v3168 = vpack.c.b16 %v2160, %v2144
    %v3169 = vpack.c.b16 %v2161, %v2145
    %v3170 = vpack.c.b16 %v2162, %v2146
    %v3171 = vpack.c.b16 %v2163, %v2147
    %v3172 = vpack.c.b16 %v2164, %v2148
    %v3173 = vpack.c.b16 %v2165, %v2149
    %v3174 = vpack.c.b16 %v2182, %v2166
    %v3175 = vpack.c.b16 %v2183, %v2167
    %v3176 = vpack.c.b16 %v2184, %v2168
    %v3177 = vpack.c.b16 %v2185, %v2169
    %v3178 = vpack.c.b16 %v2186, %v2170
    %v3179 = vpack.c.b16 %v2187, %v2171
    %v3180 = vpack.c.b16 %v2188, %v2172
    %v3181 = vpack.c.b16 %v2189, %v2173
    %v3182 = vpack.c.b16 %v2190, %v2174
    %v3183 = vpack.c.b16 %v2191, %v2175
    %v3184 = vpack.c.b16 %v2192, %v2176
    %v3185 = vpack.c.b16 %v2193, %v2177
    %v3186 = vpack.c.b16 %v2194, %v2178
    %v3187 = vpack.c.b16 %v2195, %v2179
    %v3188 = vpack.c.b16 %v2196, %v2180
    %v3189 = vpack.c.b16 %v2197, %v2181
    %v3190 = vpack.c.b16 %v2214, %v2198
    %v3191 = vpack.c.b16 %v2215, %v2199
    %v3192 = vpack.c.b16 %v2216, %v2200
    %v3193 = vpack.c.b16 %v2217, %v2201
    %v3194 = vpack.c.b16 %v2218, %v2202
    %v3195 = vpack.c.b16 %v2219, %v2203
    %v3196 = vpack.c.b16 %v2220, %v2204
    %v3197 = vpack.c.b16 %v2221, %v2205
    %v3198 = vpack.c.b16 %v2222, %v2206
    %v3199 = vpack.c.b16 %v2223, %v2207
    %v3200 = vpack.c.b16 %v2224, %v2208
    %v3201 = vpack.c.b16 %v2225, %v2209
    %v3202 = vpack.c.b16 %v2226, %v2210
    %v3203 = vpack.c.b16 %v2227, %v2211
    %v3204 = vpack.c.b16 %v2228, %v2212
    %v3205 = vpack.c.b16 %v2229, %v2213
    %v3206 = vpack.c.b16 %v2246, %v2230
    %v3207 = vpack.c.b16 %v2247, %v2231
    %v3208 = vpack.c.b16 %v2248, %v2232
    %v3209 = vpack.c.b16 %v2249, %v2233
    %v3210 = vpack.c.b16 %v2250, %v2234
    %v3211 = vpack.c.b16 %v2251, %v2235
    %v3212 = vpack.c.b16 %v2252, %v2236
    %v3213 = vpack.c.b16 %v2253, %v2237
    %v3214 = vpack.c.b16 %v2254, %v2238
    %v3215 = vpack.c.b16 %v2255, %v2239
    %v3216 = vpack.c.b16 %v2256, %v2240
    %v3217 = vpack.c.b16 %v2257, %v2241
    %v3218 = vpack.c.b16 %v2258, %v2242
    %v3219 = vpack.c.b16 %v2259, %v2243
    %v3220 = vpack.c.b16 %v2260, %v2244
    %v3221 = vpack.c.b16 %v2261, %v2245
    %v3222 = vpack.c.b16 %v2278, %v2262
    %v3223 = vpack.c.b16 %v2279, %v2263
    %v3224 = vpack.c.b16 %v2280, %v2264
    %v3225 = vpack.c.b16 %v2281, %v2265
    %v3226 = vpack.c.b16 %v2282, %v2266
    %v3227 = vpack.c.b16 %v2283, %v2267
    %v3228 = vpack.c.b16 %v2284, %v2268
    %v3229 = vpack.c.b16 %v2285, %v2269
    %v3230 = vpack.c.b16 %v2286, %v2270
    %v3231 = vpack.c.b16 %v2287, %v2271
    %v3232 = vpack.c.b16 %v2288, %v2272
    %v3233 = vpack.c.b16 %v2289, %v2273
    %v3234 = vpack.c.b16 %v2290, %v2274
    %v3235 = vpack.c.b16 %v2291, %v2275
    %v3236 = vpack.c.b16 %v2292, %v2276
    %v3237 = vpack.c.b16 %v2293, %v2277
    %v3238 = vpack.c.b16 %v2310, %v2294
    %v3239 = vpack.c.b16 %v2311, %v2295
    %v3240 = vpack.c.b16 %v2312, %v2296
    %v3241 = vpack.c.b16 %v2313, %v2297
    %v3242 = vpack.c.b16 %v2314, %v2298
    %v3243 = vpack.c.b16 %v2315, %v2299
    %v3244 = vpack.c.b16 %v2316, %v2300
    %v3245 = vpack.c.b16 %v2317, %v2301
    %v3246 = vpack.c.b16 %v2318, %v2302
    %v3247 = vpack.c.b16 %v2319, %v2303
    %v3248 = vpack.c.b16 %v2320, %v2304
    %v3249 = vpack.c.b16 %v2321, %v2305
    %v3250 = vpack.c.b16 %v2322, %v2306
    %v3251 = vpack.c.b16 %v2323, %v2307
    %v3252 = vpack.c.b16 %v2324, %v2308
    %v3253 = vpack.c.b16 %v2325, %v2309
    %v3254 = vpack.c.b16 %v2342, %v2326
    %v3255 = vpack.c.b16 %v2343, %v2327
    %v3256 = vpack.c.b16 %v2344, %v2328
    %v3257 = vpack.c.b16 %v2345, %v2329
    %v3258 = vpack.c.b16 %v2346, %v2330
    %v3259 = vpack.c.b16 %v2347, %v2331
    %v3260 = vpack.c.b16 %v2348, %v2332
    %v3261 = vpack.c.b16 %v2349, %v2333
    %v3262 = vpack.c.b16 %v2350, %v2334
    %v3263 = vpack.c.b16 %v2351, %v2335
    %v3264 = vpack.c.b16 %v2352, %v2336
    %v3265 = vpack.c.b16 %v2353, %v2337
    %v3266 = vpack.c.b16 %v2354, %v2338
    %v3267 = vpack.c.b16 %v2355, %v2339
    %v3268 = vpack.c.b16 %v2356, %v2340
    %v3269 = vpack.c.b16 %v2357, %v2341
    %v3270 = vpack.c.b16 %v2374, %v2358
    %v3271 = vpack.c.b16 %v2375, %v2359
    %v3272 = vpack.c.b16 %v2376, %v2360
    %v3273 = vpack.c.b16 %v2377, %v2361
    %v3274 = vpack.c.b16 %v2378, %v2362
    %v3275 = vpack.c.b16 %v2379, %v2363
    %v3276 = vpack.c.b16 %v2380, %v2364
    %v3277 = vpack.c.b16 %v2381, %v2365
    %v3278 = vpack.c.b16 %v2382, %v2366
    %v3279 = vpack.c.b16 %v2383, %v2367
    %v3280 = vpack.c.b16 %v2384, %v2368
    %v3281 = vpack.c.b16 %v2385, %v2369
    %v3282 = vpack.c.b16 %v2386, %v2370
    %v3283 = vpack.c.b16 %v2387, %v2371
    %v3284 = vpack.c.b16 %v2388, %v2372
    %v3285 = vpack.c.b16 %v2389, %v2373
    %v3286 = vpack.c.b16 %v2406, %v2390
    %v3287 = vpack.c.b16 %v2407, %v2391
    %v3288 = vpack.c.b16 %v2408, %v2392
    %v3289 = vpack.c.b16 %v2409, %v2393
    %v3290 = vpack.c.b16 %v2410, %v2394
    %v3291 = vpack.c.b16 %v2411, %v2395
    %v3292 = vpack.c.b16 %v2412, %v2396
    %v3293 = vpack.c.b16 %v2413, %v2397
    %v3294 = vpack.c.b16 %v2414, %v2398
    %v3295 = vpack.c.b16 %v2415, %v2399
    %v3296 = vpack.c.b16 %v2416, %v2400
    %v3297 = vpack.c.b16 %v2417, %v2401
    %v3298 = vpack.c.b16 %v2418, %v2402
    %v3299 = vpack.c.b16 %v2419, %v2403
    %v3300 = vpack.c.b16 %v2420, %v2404
    %v3301 = vpack.c.b16 %v2421, %v2405
    %v3302 = vpack.c.b16 %v2438, %v2422
    %v3303 = vpack.c.b16 %v2439, %v2423
    %v3304 = vpack.c.b16 %v2440, %v2424
    %v3305 = vpack.c.b16 %v2441, %v2425
    %v3306 = vpack.c.b16 %v2442, %v2426
    %v3307 = vpack.c.b16 %v2443, %v2427
    %v3308 = vpack.c.b16 %v2444, %v2428
    %v3309 = vpack.c.b16 %v2445, %v2429
    %v3310 = vpack.c.b16 %v2446, %v2430
    %v3311 = vpack.c.b16 %v2447, %v2431
    %v3312 = vpack.c.b16 %v2448, %v2432
    %v3313 = vpack.c.b16 %v2449, %v2433
    %v3314 = vpack.c.b16 %v2450, %v2434
    %v3315 = vpack.c.b16 %v2451, %v2435
    %v3316 = vpack.c.b16 %v2452, %v2436
    %v3317 = vpack.c.b16 %v2453, %v2437
    %v3318 = vpack.c.b16 %v2470, %v2454
    %v3319 = vpack.c.b16 %v2471, %v2455
    %v3320 = vpack.c.b16 %v2472, %v2456
    %v3321 = vpack.c.b16 %v2473, %v2457
    %v3322 = vpack.c.b16 %v2474, %v2458
    %v3323 = vpack.c.b16 %v2475, %v2459
    %v3324 = vpack.c.b16 %v2476, %v2460
    %v3325 = vpack.c.b16 %v2477, %v2461
    %v3326 = vpack.c.b16 %v2478, %v2462
    %v3327 = vpack.c.b16 %v2479, %v2463
    %v3328 = vpack.c.b16 %v2480, %v2464
    %v3329 = vpack.c.b16 %v2481, %v2465
    %v3330 = vpack.c.b16 %v2482, %v2466
    %v3331 = vpack.c.b16 %v2483, %v2467
    %v3332 = vpack.c.b16 %v2484, %v2468
    %v3333 = vpack.c.b16 %v2485, %v2469
    %v3334 = vpack.c.b16 %v2502, %v2486
    %v3335 = vpack.c.b16 %v2503, %v2487
    %v3336 = vpack.c.b16 %v2504, %v2488
    %v3337 = vpack.c.b16 %v2505, %v2489
    %v3338 = vpack.c.b16 %v2506, %v2490
    %v3339 = vpack.c.b16 %v2507, %v2491
    %v3340 = vpack.c.b16 %v2508, %v2492
    %v3341 = vpack.c.b16 %v2509, %v2493
    %v3342 = vpack.c.b16 %v2510, %v2494
    %v3343 = vpack.c.b16 %v2511, %v2495
    %v3344 = vpack.c.b16 %v2512, %v2496
    %v3345 = vpack.c.b16 %v2513, %v2497
    %v3346 = vpack.c.b16 %v2514, %v2498
    %v3347 = vpack.c.b16 %v2515, %v2499
    %v3348 = vpack.c.b16 %v2516, %v2500
    %v3349 = vpack.c.b16 %v2517, %v2501
    %v3350 = vpack.c.b16 %v2534, %v2518
    %v3351 = vpack.c.b16 %v2535, %v2519
    %v3352 = vpack.c.b16 %v2536, %v2520
    %v3353 = vpack.c.b16 %v2537, %v2521
    %v3354 = vpack.c.b16 %v2538, %v2522
    %v3355 = vpack.c.b16 %v2539, %v2523
    %v3356 = vpack.c.b16 %v2540, %v2524
    %v3357 = vpack.c.b16 %v2541, %v2525
    %v3358 = vpack.c.b16 %v2542, %v2526
    %v3359 = vpack.c.b16 %v2543, %v2527
    %v3360 = vpack.c.b16 %v2544, %v2528
    %v3361 = vpack.c.b16 %v2545, %v2529
    %v3362 = vpack.c.b16 %v2546, %v2530
    %v3363 = vpack.c.b16 %v2547, %v2531
    %v3364 = vpack.c.b16 %v2548, %v2532
    %v3365 = vpack.c.b16 %v2549, %v2533
    %v3366 = vpack.c.b16 %v2566, %v2550
    %v3367 = vpack.c.b16 %v2567, %v2551
    %v3368 = vpack.c.b16 %v2568, %v2552
    %v3369 = vpack.c.b16 %v2569, %v2553
    %v3370 = vpack.c.b16 %v2570, %v2554
    %v3371 = vpack.c.b16 %v2571, %v2555
    %v3372 = vpack.c.b16 %v2572, %v2556
    %v3373 = vpack.c.b16 %v2573, %v2557
    %v3374 = vpack.c.b16 %v2574, %v2558
    %v3375 = vpack.c.b16 %v2575, %v2559
    %v3376 = vpack.c.b16 %v2576, %v2560
    %v3377 = vpack.c.b16 %v2577, %v2561
    %v3378 = vpack.c.b16 %v2578, %v2562
    %v3379 = vpack.c.b16 %v2579, %v2563
    %v3380 = vpack.c.b16 %v2580, %v2564
    %v3381 = vpack.c.b16 %v2581, %v2565
    %v3382 = vpack.c.b16 %v2598, %v2582
    %v3383 = vpack.c.b16 %v2599, %v2583
    %v3384 = vpack.c.b16 %v2600, %v2584
    %v3385 = vpack.c.b16 %v2601, %v2585
    %v3386 = vpack.c.b16 %v2602, %v2586
    %v3387 = vpack.c.b16 %v2603, %v2587
    %v3388 = vpack.c.b16 %v2604, %v2588
    %v3389 = vpack.c.b16 %v2605, %v2589
    %v3390 = vpack.c.b16 %v2606, %v2590
    %v3391 = vpack.c.b16 %v2607, %v2591
    %v3392 = vpack.c.b16 %v2608, %v2592
    %v3393 = vpack.c.b16 %v2609, %v2593
    %v3394 = vpack.c.b16 %v2610, %v2594
    %v3395 = vpack.c.b16 %v2611, %v2595
    %v3396 = vpack.c.b16 %v2612, %v2596
    %v3397 = vpack.c.b16 %v2613, %v2597
    %v3398 = vpack.c.b16 %v2630, %v2614
    %v3399 = vpack.c.b16 %v2631, %v2615
    %v3400 = vpack.c.b16 %v2632, %v2616
    %v3401 = vpack.c.b16 %v2633, %v2617
    %v3402 = vpack.c.b16 %v2634, %v2618
    %v3403 = vpack.c.b16 %v2635, %v2619
    %v3404 = vpack.c.b16 %v2636, %v2620
    %v3405 = vpack.c.b16 %v2637, %v2621
    %v3406 = vpack.c.b16 %v2638, %v2622
    %v3407 = vpack.c.b16 %v2639, %v2623
    %v3408 = vpack.c.b16 %v2640, %v2624
    %v3409 = vpack.c.b16 %v2641, %v2625
    %v3410 = vpack.c.b16 %v2642, %v2626
    %v3411 = vpack.c.b16 %v2643, %v2627
    %v3412 = vpack.c.b16 %v2644, %v2628
    %v3413 = vpack.c.b16 %v2645, %v2629
    %v3414 = vpack.c.b16 %v2662, %v2646
    %v3415 = vpack.c.b16 %v2663, %v2647
    %v3416 = vpack.c.b16 %v2664, %v2648
    %v3417 = vpack.c.b16 %v2665, %v2649
    %v3418 = vpack.c.b16 %v2666, %v2650
    %v3419 = vpack.c.b16 %v2667, %v2651
    %v3420 = vpack.c.b16 %v2668, %v2652
    %v3421 = vpack.c.b16 %v2669, %v2653
    %v3422 = vpack.c.b16 %v2670, %v2654
    %v3423 = vpack.c.b16 %v2671, %v2655
    %v3424 = vpack.c.b16 %v2672, %v2656
    %v3425 = vpack.c.b16 %v2673, %v2657
    %v3426 = vpack.c.b16 %v2674, %v2658
    %v3427 = vpack.c.b16 %v2675, %v2659
    %v3428 = vpack.c.b16 %v2676, %v2660
    %v3429 = vpack.c.b16 %v2677, %v2661
    %v3430 = vpack.c.b16 %v2694, %v2678
    %v3431 = vpack.c.b16 %v2695, %v2679
    %v3432 = vpack.c.b16 %v2696, %v2680
    %v3433 = vpack.c.b16 %v2697, %v2681
    %v3434 = vpack.c.b16 %v2698, %v2682
    %v3435 = vpack.c.b16 %v2699, %v2683
    %v3436 = vpack.c.b16 %v2700, %v2684
    %v3437 = vpack.c.b16 %v2701, %v2685
    %v3438 = vpack.c.b16 %v2702, %v2686
    %v3439 = vpack.c.b16 %v2703, %v2687
    %v3440 = vpack.c.b16 %v2704, %v2688
    %v3441 = vpack.c.b16 %v2705, %v2689
    %v3442 = vpack.c.b16 %v2706, %v2690
    %v3443 = vpack.c.b16 %v2707, %v2691
    %v3444 = vpack.c.b16 %v2708, %v2692
    %v3445 = vpack.c.b16 %v2709, %v2693
    %v3446 = vpack.c.b16 %v2726, %v2710
    %v3447 = vpack.c.b16 %v2727, %v2711
    %v3448 = vpack.c.b16 %v2728, %v2712
    %v3449 = vpack.c.b16 %v2729, %v2713
    %v3450 = vpack.c.b16 %v2730, %v2714
    %v3451 = vpack.c.b16 %v2731, %v2715
    %v3452 = vpack.c.b16 %v2732, %v2716
    %v3453 = vpack.c.b16 %v2733, %v2717
    %v3454 = vpack.c.b16 %v2734, %v2718
    %v3455 = vpack.c.b16 %v2735, %v2719
    %v3456 = vpack.c.b16 %v2736, %v2720
    %v3457 = vpack.c.b16 %v2737, %v2721
    %v3458 = vpack.c.b16 %v2738, %v2722
    %v3459 = vpack.c.b16 %v2739, %v2723
    %v3460 = vpack.c.b16 %v2740, %v2724
    %v3461 = vpack.c.b16 %v2741, %v2725
    %v3462 = vpack.c.b16 %v2758, %v2742
    %v3463 = vpack.c.b16 %v2759, %v2743
    %v3464 = vpack.c.b16 %v2760, %v2744
    %v3465 = vpack.c.b16 %v2761, %v2745
    %v3466 = vpack.c.b16 %v2762, %v2746
    %v3467 = vpack.c.b16 %v2763, %v2747
    %v3468 = vpack.c.b16 %v2764, %v2748
    %v3469 = vpack.c.b16 %v2765, %v2749
    %v3470 = vpack.c.b16 %v2766, %v2750
    %v3471 = vpack.c.b16 %v2767, %v2751
    %v3472 = vpack.c.b16 %v2768, %v2752
    %v3473 = vpack.c.b16 %v2769, %v2753
    %v3474 = vpack.c.b16 %v2770, %v2754
    %v3475 = vpack.c.b16 %v2771, %v2755
    %v3476 = vpack.c.b16 %v2772, %v2756
    %v3477 = vpack.c.b16 %v2773, %v2757
    %v3478 = vpack.c.b16 %v2790, %v2774
    %v3479 = vpack.c.b16 %v2791, %v2775
    %v3480 = vpack.c.b16 %v2792, %v2776
    %v3481 = vpack.c.b16 %v2793, %v2777
    %v3482 = vpack.c.b16 %v2794, %v2778
    %v3483 = vpack.c.b16 %v2795, %v2779
    %v3484 = vpack.c.b16 %v2796, %v2780
    %v3485 = vpack.c.b16 %v2797, %v2781
    %v3486 = vpack.c.b16 %v2798, %v2782
    %v3487 = vpack.c.b16 %v2799, %v2783
    %v3488 = vpack.c.b16 %v2800, %v2784
    %v3489 = vpack.c.b16 %v2801, %v2785
    %v3490 = vpack.c.b16 %v2802, %v2786
    %v3491 = vpack.c.b16 %v2803, %v2787
    %v3492 = vpack.c.b16 %v2804, %v2788
    %v3493 = vpack.c.b16 %v2805, %v2789
    %v3494 = vpack.c.b16 %v2822, %v2806
    %v3495 = vpack.c.b16 %v2823, %v2807
    %v3496 = vpack.c.b16 %v2824, %v2808
    %v3497 = vpack.c.b16 %v2825, %v2809
    %v3498 = vpack.c.b16 %v2826, %v2810
    %v3499 = vpack.c.b16 %v2827, %v2811
    %v3500 = vpack.c.b16 %v2828, %v2812
    %v3501 = vpack.c.b16 %v2829, %v2813
    %v3502 = vpack.c.b16 %v2830, %v2814
    %v3503 = vpack.c.b16 %v2831, %v2815
    %v3504 = vpack.c.b16 %v2832, %v2816
    %v3505 = vpack.c.b16 %v2833, %v2817
    %v3506 = vpack.c.b16 %v2834, %v2818
    %v3507 = vpack.c.b16 %v2835, %v2819
    %v3508 = vpack.c.b16 %v2836, %v2820
    %v3509 = vpack.c.b16 %v2837, %v2821
    %v3510 = vpack.c.b16 %v2854, %v2838
    %v3511 = vpack.c.b16 %v2855, %v2839
    %v3512 = vpack.c.b16 %v2856, %v2840
    %v3513 = vpack.c.b16 %v2857, %v2841
    %v3514 = vpack.c.b16 %v2858, %v2842
    %v3515 = vpack.c.b16 %v2859, %v2843
    %v3516 = vpack.c.b16 %v2860, %v2844
    %v3517 = vpack.c.b16 %v2861, %v2845
    %v3518 = vpack.c.b16 %v2862, %v2846
    %v3519 = vpack.c.b16 %v2863, %v2847
    %v3520 = vpack.c.b16 %v2864, %v2848
    %v3521 = vpack.c.b16 %v2865, %v2849
    %v3522 = vpack.c.b16 %v2866, %v2850
    %v3523 = vpack.c.b16 %v2867, %v2851
    %v3524 = vpack.c.b16 %v2868, %v2852
    %v3525 = vpack.c.b16 %v2869, %v2853
    %v3526 = vpack.c.b16 %v2886, %v2870
    %v3527 = vpack.c.b16 %v2887, %v2871
    %v3528 = vpack.c.b16 %v2888, %v2872
    %v3529 = vpack.c.b16 %v2889, %v2873
    %v3530 = vpack.c.b16 %v2890, %v2874
    %v3531 = vpack.c.b16 %v2891, %v2875
    %v3532 = vpack.c.b16 %v2892, %v2876
    %v3533 = vpack.c.b16 %v2893, %v2877
    %v3534 = vpack.c.b16 %v2894, %v2878
    %v3535 = vpack.c.b16 %v2895, %v2879
    %v3536 = vpack.c.b16 %v2896, %v2880
    %v3537 = vpack.c.b16 %v2897, %v2881
    %v3538 = vpack.c.b16 %v2898, %v2882
    %v3539 = vpack.c.b16 %v2899, %v2883
    %v3540 = vpack.c.b16 %v2900, %v2884
    %v3541 = vpack.c.b16 %v2901, %v2885
    %v3542 = vpack.c.b16 %v2918, %v2902
    %v3543 = vpack.c.b16 %v2919, %v2903
    %v3544 = vpack.c.b16 %v2920, %v2904
    %v3545 = vpack.c.b16 %v2921, %v2905
    %v3546 = vpack.c.b16 %v2922, %v2906
    %v3547 = vpack.c.b16 %v2923, %v2907
    %v3548 = vpack.c.b16 %v2924, %v2908
    %v3549 = vpack.c.b16 %v2925, %v2909
    %v3550 = vpack.c.b16 %v2926, %v2910
    %v3551 = vpack.c.b16 %v2927, %v2911
    %v3552 = vpack.c.b16 %v2928, %v2912
    %v3553 = vpack.c.b16 %v2929, %v2913
    %v3554 = vpack.c.b16 %v2930, %v2914
    %v3555 = vpack.c.b16 %v2931, %v2915
    %v3556 = vpack.c.b16 %v2932, %v2916
    %v3557 = vpack.c.b16 %v2933, %v2917
    %v3558 = vpack.c.b16 %v2950, %v2934
    %v3559 = vpack.c.b16 %v2951, %v2935
    %v3560 = vpack.c.b16 %v2952, %v2936
    %v3561 = vpack.c.b16 %v2953, %v2937
    %v3562 = vpack.c.b16 %v2954, %v2938
    %v3563 = vpack.c.b16 %v2955, %v2939
    %v3564 = vpack.c.b16 %v2956, %v2940
    %v3565 = vpack.c.b16 %v2957, %v2941
    %v3566 = vpack.c.b16 %v2958, %v2942
    %v3567 = vpack.c.b16 %v2959, %v2943
    %v3568 = vpack.c.b16 %v2960, %v2944
    %v3569 = vpack.c.b16 %v2961, %v2945
    %v3570 = vpack.c.b16 %v2962, %v2946
    %v3571 = vpack.c.b16 %v2963, %v2947
    %v3572 = vpack.c.b16 %v2964, %v2948
    %v3573 = vpack.c.b16 %v2965, %v2949
    %v3574 = vpack.c.b16 %v2982, %v2966
    %v3575 = vpack.c.b16 %v2983, %v2967
    %v3576 = vpack.c.b16 %v2984, %v2968
    %v3577 = vpack.c.b16 %v2985, %v2969
    %v3578 = vpack.c.b16 %v2986, %v2970
    %v3579 = vpack.c.b16 %v2987, %v2971
    %v3580 = vpack.c.b16 %v2988, %v2972
    %v3581 = vpack.c.b16 %v2989, %v2973
    %v3582 = vpack.c.b16 %v2990, %v2974
    %v3583 = vpack.c.b16 %v2991, %v2975
    %v3584 = vpack.c.b16 %v2992, %v2976
    %v3585 = vpack.c.b16 %v2993, %v2977
    %v3586 = vpack.c.b16 %v2994, %v2978
    %v3587 = vpack.c.b16 %v2995, %v2979
    %v3588 = vpack.c.b16 %v2996, %v2980
    %v3589 = vpack.c.b16 %v2997, %v2981
    %v3590 = vpack.c.b16 %v3014, %v2998
    %v3591 = vpack.c.b16 %v3015, %v2999
    %v3592 = vpack.c.b16 %v3016, %v3000
    %v3593 = vpack.c.b16 %v3017, %v3001
    %v3594 = vpack.c.b16 %v3018, %v3002
    %v3595 = vpack.c.b16 %v3019, %v3003
    %v3596 = vpack.c.b16 %v3020, %v3004
    %v3597 = vpack.c.b16 %v3021, %v3005
    %v3598 = vpack.c.b16 %v3022, %v3006
    %v3599 = vpack.c.b16 %v3023, %v3007
    %v3600 = vpack.c.b16 %v3024, %v3008
    %v3601 = vpack.c.b16 %v3025, %v3009
    %v3602 = vpack.c.b16 %v3026, %v3010
    %v3603 = vpack.c.b16 %v3027, %v3011
    %v3604 = vpack.c.b16 %v3028, %v3012
    %v3605 = vpack.c.b16 %v3029, %v3013
    %v3606 = vpack.c.b16 %v3046, %v3030
    %v3607 = vpack.c.b16 %v3047, %v3031
    %v3608 = vpack.c.b16 %v3048, %v3032
    %v3609 = vpack.c.b16 %v3049, %v3033
    %v3610 = vpack.c.b16 %v3050, %v3034
    %v3611 = vpack.c.b16 %v3051, %v3035
    %v3612 = vpack.c.b16 %v3052, %v3036
    %v3613 = vpack.c.b16 %v3053, %v3037
    %v3614 = vpack.c.b16 %v3054, %v3038
    %v3615 = vpack.c.b16 %v3055, %v3039
    %v3616 = vpack.c.b16 %v3056, %v3040
    %v3617 = vpack.c.b16 %v3057, %v3041
    %v3618 = vpack.c.b16 %v3058, %v3042
    %v3619 = vpack.c.b16 %v3059, %v3043
    %v3620 = vpack.c.b16 %v3060, %v3044
    %v3621 = vpack.c.b16 %v3061, %v3045
    %v3622 = vpack.c.b16 %v3078, %v3062
    %v3623 = vpack.c.b16 %v3079, %v3063
    %v3624 = vpack.c.b16 %v3080, %v3064
    %v3625 = vpack.c.b16 %v3081, %v3065
    %v3626 = vpack.c.b16 %v3082, %v3066
    %v3627 = vpack.c.b16 %v3083, %v3067
    %v3628 = vpack.c.b16 %v3084, %v3068
    %v3629 = vpack.c.b16 %v3085, %v3069
    %v3630 = vpack.c.b16 %v3086, %v3070
    %v3631 = vpack.c.b16 %v3087, %v3071
    %v3632 = vpack.c.b16 %v3088, %v3072
    %v3633 = vpack.c.b16 %v3089, %v3073
    %v3634 = vpack.c.b16 %v3090, %v3074
    %v3635 = vpack.c.b16 %v3091, %v3075
    %v3636 = vpack.c.b16 %v3092, %v3076
    %v3637 = vpack.c.b16 %v3093, %v3077
    %v3638 = vpack.c.b16 %v3110, %v3094
    %v3639 = vpack.c.b16 %v3111, %v3095
    %v3640 = vpack.c.b16 %v3112, %v3096
    %v3641 = vpack.c.b16 %v3113, %v3097
    %v3642 = vpack.c.b16 %v3114, %v3098
    %v3643 = vpack.c.b16 %v3115, %v3099
    %v3644 = vpack.c.b16 %v3116, %v3100
    %v3645 = vpack.c.b16 %v3117, %v3101
    %v3646 = vpack.c.b16 %v3118, %v3102
    %v3647 = vpack.c.b16 %v3119, %v3103
    %v3648 = vpack.c.b16 %v3120, %v3104
    %v3649 = vpack.c.b16 %v3121, %v3105
    %v3650 = vpack.c.b16 %v3122, %v3106
    %v3651 = vpack.c.b16 %v3123, %v3107
    %v3652 = vpack.c.b16 %v3124, %v3108
    %v3653 = vpack.c.b16 %v3125, %v3109
    %v3654 = vpack.c.b16 %v3142, %v3126
    %v3655 = vpack.c.b16 %v3143, %v3127
    %v3656 = vpack.c.b16 %v3144, %v3128
    %v3657 = vpack.c.b16 %v3145, %v3129
    %v3658 = vpack.c.b16 %v3146, %v3130
    %v3659 = vpack.c.b16 %v3147, %v3131
    %v3660 = vpack.c.b16 %v3148, %v3132
    %v3661 = vpack.c.b16 %v3149, %v3133
    %v3662 = vpack.c.b16 %v3150, %v3134
    %v3663 = vpack.c.b16 %v3151, %v3135
    %v3664 = vpack.c.b16 %v3152, %v3136
    %v3665 = vpack.c.b16 %v3153, %v3137
    %v3666 = vpack.c.b16 %v3154, %v3138
    %v3667 = vpack.c.b16 %v3155, %v3139
    %v3668 = vpack.c.b16 %v3156, %v3140
    %v3669 = vpack.c.b16 %v3157, %v3141
    %4182 = vmatprep.subr.bf16.mxu0 %v3159
    %4183 = vmatpush1.bf16.msra.mxu0 %v3158
    %4184 = vmatprep.subr.bf16.mxu0 %v3175
    %4185 = vmatpush1.bf16.msra.mxu0 %v3174
    %4186 = vmatprep.subr.bf16.mxu0 %v3191
    %4187 = vmatpush1.bf16.msra.mxu0 %v3190
    %4188 = vmatprep.subr.bf16.mxu0 %v3207
    %4189 = vmatpush1.bf16.msra.mxu0 %v3206
    %4190 = vmatprep.subr.bf16.mxu0 %v3223
    %4191 = vmatpush1.bf16.msra.mxu0 %v3222
    %4192 = vmatprep.subr.bf16.mxu0 %v3239
    %4193 = vmatpush1.bf16.msra.mxu0 %v3238
    %4194 = vmatprep.subr.bf16.mxu0 %v3255
    %4195 = vmatpush1.bf16.msra.mxu0 %v3254
    %4196 = vmatprep.subr.bf16.mxu0 %v3271
    %4197 = vmatpush1.bf16.msra.mxu0 %v3270
    %4198 = vmatprep.subr.bf16.mxu0 %v3287
    %4199 = vmatpush1.bf16.msra.mxu0 %v3286
    %4200 = vmatprep.subr.bf16.mxu0 %v3303
    %4201 = vmatpush1.bf16.msra.mxu0 %v3302
    %4202 = vmatprep.subr.bf16.mxu0 %v3319
    %4203 = vmatpush1.bf16.msra.mxu0 %v3318
    %4204 = vmatprep.subr.bf16.mxu0 %v3335
    %4205 = vmatpush1.bf16.msra.mxu0 %v3334
    %4206 = vmatprep.subr.bf16.mxu0 %v3351
    %4207 = vmatpush1.bf16.msra.mxu0 %v3350
    %4208 = vmatprep.subr.bf16.mxu0 %v3367
    %4209 = vmatpush1.bf16.msra.mxu0 %v3366
    %4210 = vmatprep.subr.bf16.mxu0 %v3383
    %4211 = vmatpush1.bf16.msra.mxu0 %v3382
    %4212 = vmatprep.subr.bf16.mxu0 %v3399
    %4213 = vmatpush1.bf16.msra.mxu0 %v3398
    %4214 = vmatprep.mubr.bf16.mxu0 %v1107
    %4215 = vmatmul.mubr.bf16.gmra.mrb[0].mxu0 %v1106
    %v4216 = vpop.f32.mrb[0].mxu0
    %v4217 = vadd.f32 0.0, %v4216
    %v4218 = vpop.f32.mrb[0].mxu0
    %v4219 = vadd.f32 0.0, %v4218
    %v4220 = vpop.f32.mrb[0].mxu0
    %v4221 = vadd.f32 0.0, %v4220
    %v4222 = vpop.f32.mrb[0].mxu0
    %v4223 = vadd.f32 0.0, %v4222
    %4224 = vdwg.mxu0
    %4225 = vmatprep.subr.bf16.mxu0 %v3415
    %4226 = vmatpush1.bf16.msra.mxu0 %v3414
    %4227 = vmatprep.subr.bf16.mxu0 %v3431
    %4228 = vmatpush1.bf16.msra.mxu0 %v3430
    %4229 = vmatprep.subr.bf16.mxu0 %v3447
    %4230 = vmatpush1.bf16.msra.mxu0 %v3446
    %4231 = vmatprep.subr.bf16.mxu0 %v3463
    %4232 = vmatpush1.bf16.msra.mxu0 %v3462
    %4233 = vmatprep.subr.bf16.mxu0 %v3479
    %4234 = vmatpush1.bf16.msra.mxu0 %v3478
    %4235 = vmatprep.subr.bf16.mxu0 %v3495
    %4236 = vmatpush1.bf16.msra.mxu0 %v3494
    %4237 = vmatprep.subr.bf16.mxu0 %v3511
    %4238 = vmatpush1.bf16.msra.mxu0 %v3510
    %4239 = vmatprep.subr.bf16.mxu0 %v3527
    %4240 = vmatpush1.bf16.msra.mxu0 %v3526
    %4241 = vmatprep.subr.bf16.mxu0 %v3543
    %4242 = vmatpush1.bf16.msra.mxu0 %v3542
    %4243 = vmatprep.subr.bf16.mxu0 %v3559
    %4244 = vmatpush1.bf16.msra.mxu0 %v3558
    %4245 = vmatprep.subr.bf16.mxu0 %v3575
    %4246 = vmatpush1.bf16.msra.mxu0 %v3574
    %4247 = vmatprep.subr.bf16.mxu0 %v3591
    %4248 = vmatpush1.bf16.msra.mxu0 %v3590
    %4249 = vmatprep.subr.bf16.mxu0 %v3607
    %4250 = vmatpush1.bf16.msra.mxu0 %v3606
    %4251 = vmatprep.subr.bf16.mxu0 %v3623
    %4252 = vmatpush1.bf16.msra.mxu0 %v3622
    %4253 = vmatprep.subr.bf16.mxu0 %v3639
    %4254 = vmatpush1.bf16.msra.mxu0 %v3638
    %4255 = vmatprep.subr.bf16.mxu0 %v3655
    %4256 = vmatpush1.bf16.msra.mxu0 %v3654
    %4257 = vmatprep.mubr.bf16.mxu0 %v1109
    %4258 = vmatmul.mubr.bf16.gmra.mrb[0].mxu0 %v1108
    %v4259 = vpop.f32.mrb[0].mxu0
    %v4260 = vadd.f32 %v4217, %v4259
    %v4261 = vpop.f32.mrb[0].mxu0
    %v4262 = vadd.f32 %v4219, %v4261
    %v4263 = vpop.f32.mrb[0].mxu0
    %v4264 = vadd.f32 %v4221, %v4263
    %v4265 = vpop.f32.mrb[0].mxu0
    %v4266 = vadd.f32 %v4223, %v4265
    %4267 = vdwg.mxu0
    %4268 = vmatprep.subr.bf16.mxu0 %v3161
    %4269 = vmatpush1.bf16.msra.mxu0 %v3160
    %4270 = vmatprep.subr.bf16.mxu0 %v3177
    %4271 = vmatpush1.bf16.msra.mxu0 %v3176
    %4272 = vmatprep.subr.bf16.mxu0 %v3193
    %4273 = vmatpush1.bf16.msra.mxu0 %v3192
    %4274 = vmatprep.subr.bf16.mxu0 %v3209
    %4275 = vmatpush1.bf16.msra.mxu0 %v3208
    %4276 = vmatprep.subr.bf16.mxu0 %v3225
    %4277 = vmatpush1.bf16.msra.mxu0 %v3224
    %4278 = vmatprep.subr.bf16.mxu0 %v3241
    %4279 = vmatpush1.bf16.msra.mxu0 %v3240
    %4280 = vmatprep.subr.bf16.mxu0 %v3257
    %4281 = vmatpush1.bf16.msra.mxu0 %v3256
    %4282 = vmatprep.subr.bf16.mxu0 %v3273
    %4283 = vmatpush1.bf16.msra.mxu0 %v3272
    %4284 = vmatprep.subr.bf16.mxu0 %v3289
    %4285 = vmatpush1.bf16.msra.mxu0 %v3288
    %4286 = vmatprep.subr.bf16.mxu0 %v3305
    %4287 = vmatpush1.bf16.msra.mxu0 %v3304
    %4288 = vmatprep.subr.bf16.mxu0 %v3321
    %4289 = vmatpush1.bf16.msra.mxu0 %v3320
    %4290 = vmatprep.subr.bf16.mxu0 %v3337
    %4291 = vmatpush1.bf16.msra.mxu0 %v3336
    %4292 = vmatprep.subr.bf16.mxu0 %v3353
    %4293 = vmatpush1.bf16.msra.mxu0 %v3352
    %4294 = vmatprep.subr.bf16.mxu0 %v3369
    %4295 = vmatpush1.bf16.msra.mxu0 %v3368
    %4296 = vmatprep.subr.bf16.mxu0 %v3385
    %4297 = vmatpush1.bf16.msra.mxu0 %v3384
    %4298 = vmatprep.subr.bf16.mxu0 %v3401
    %4299 = vmatpush1.bf16.msra.mxu0 %v3400
    %4300 = vmatprep.mubr.bf16.mxu0 %v1107
    %4301 = vmatmul.mubr.bf16.gmra.mrb[0].mxu0 %v1106
    %v4302 = vpop.f32.mrb[0].mxu0
    %v4303 = vadd.f32 0.0, %v4302
    %v4304 = vpop.f32.mrb[0].mxu0
    %v4305 = vadd.f32 0.0, %v4304
    %v4306 = vpop.f32.mrb[0].mxu0
    %v4307 = vadd.f32 0.0, %v4306
    %v4308 = vpop.f32.mrb[0].mxu0
    %v4309 = vadd.f32 0.0, %v4308
    %4310 = vdwg.mxu0
    %4311 = vmatprep.subr.bf16.mxu0 %v3417
    %4312 = vmatpush1.bf16.msra.mxu0 %v3416
    %4313 = vmatprep.subr.bf16.mxu0 %v3433
    %4314 = vmatpush1.bf16.msra.mxu0 %v3432
    %4315 = vmatprep.subr.bf16.mxu0 %v3449
    %4316 = vmatpush1.bf16.msra.mxu0 %v3448
    %4317 = vmatprep.subr.bf16.mxu0 %v3465
    %4318 = vmatpush1.bf16.msra.mxu0 %v3464
    %4319 = vmatprep.subr.bf16.mxu0 %v3481
    %4320 = vmatpush1.bf16.msra.mxu0 %v3480
    %4321 = vmatprep.subr.bf16.mxu0 %v3497
    %4322 = vmatpush1.bf16.msra.mxu0 %v3496
    %4323 = vmatprep.subr.bf16.mxu0 %v3513
    %4324 = vmatpush1.bf16.msra.mxu0 %v3512
    %4325 = vmatprep.subr.bf16.mxu0 %v3529
    %4326 = vmatpush1.bf16.msra.mxu0 %v3528
    %4327 = vmatprep.subr.bf16.mxu0 %v3545
    %4328 = vmatpush1.bf16.msra.mxu0 %v3544
    %4329 = vmatprep.subr.bf16.mxu0 %v3561
    %4330 = vmatpush1.bf16.msra.mxu0 %v3560
    %4331 = vmatprep.subr.bf16.mxu0 %v3577
    %4332 = vmatpush1.bf16.msra.mxu0 %v3576
    %4333 = vmatprep.subr.bf16.mxu0 %v3593
    %4334 = vmatpush1.bf16.msra.mxu0 %v3592
    %4335 = vmatprep.subr.bf16.mxu0 %v3609
    %4336 = vmatpush1.bf16.msra.mxu0 %v3608
    %4337 = vmatprep.subr.bf16.mxu0 %v3625
    %4338 = vmatpush1.bf16.msra.mxu0 %v3624
    %4339 = vmatprep.subr.bf16.mxu0 %v3641
    %4340 = vmatpush1.bf16.msra.mxu0 %v3640
    %4341 = vmatprep.subr.bf16.mxu0 %v3657
    %4342 = vmatpush1.bf16.msra.mxu0 %v3656
    %4343 = vmatprep.mubr.bf16.mxu0 %v1109
    %4344 = vmatmul.mubr.bf16.gmra.mrb[0].mxu0 %v1108
    %v4345 = vpop.f32.mrb[0].mxu0
    %v4346 = vadd.f32 %v4303, %v4345
    %v4347 = vpop.f32.mrb[0].mxu0
    %v4348 = vadd.f32 %v4305, %v4347
    %v4349 = vpop.f32.mrb[0].mxu0
    %v4350 = vadd.f32 %v4307, %v4349
    %v4351 = vpop.f32.mrb[0].mxu0
    %v4352 = vadd.f32 %v4309, %v4351
    %4353 = vdwg.mxu0
    %4354 = vmatprep.subr.bf16.mxu0 %v3163
    %4355 = vmatpush1.bf16.msra.mxu0 %v3162
    %4356 = vmatprep.subr.bf16.mxu0 %v3179
    %4357 = vmatpush1.bf16.msra.mxu0 %v3178
    %4358 = vmatprep.subr.bf16.mxu0 %v3195
    %4359 = vmatpush1.bf16.msra.mxu0 %v3194
    %4360 = vmatprep.subr.bf16.mxu0 %v3211
    %4361 = vmatpush1.bf16.msra.mxu0 %v3210
    %4362 = vmatprep.subr.bf16.mxu0 %v3227
    %4363 = vmatpush1.bf16.msra.mxu0 %v3226
    %4364 = vmatprep.subr.bf16.mxu0 %v3243
    %4365 = vmatpush1.bf16.msra.mxu0 %v3242
    %4366 = vmatprep.subr.bf16.mxu0 %v3259
    %4367 = vmatpush1.bf16.msra.mxu0 %v3258
    %4368 = vmatprep.subr.bf16.mxu0 %v3275
    %4369 = vmatpush1.bf16.msra.mxu0 %v3274
    %4370 = vmatprep.subr.bf16.mxu0 %v3291
    %4371 = vmatpush1.bf16.msra.mxu0 %v3290
    %4372 = vmatprep.subr.bf16.mxu0 %v3307
    %4373 = vmatpush1.bf16.msra.mxu0 %v3306
    %4374 = vmatprep.subr.bf16.mxu0 %v3323
    %4375 = vmatpush1.bf16.msra.mxu0 %v3322
    %4376 = vmatprep.subr.bf16.mxu0 %v3339
    %4377 = vmatpush1.bf16.msra.mxu0 %v3338
    %4378 = vmatprep.subr.bf16.mxu0 %v3355
    %4379 = vmatpush1.bf16.msra.mxu0 %v3354
    %4380 = vmatprep.subr.bf16.mxu0 %v3371
    %4381 = vmatpush1.bf16.msra.mxu0 %v3370
    %4382 = vmatprep.subr.bf16.mxu0 %v3387
    %4383 = vmatpush1.bf16.msra.mxu0 %v3386
    %4384 = vmatprep.subr.bf16.mxu0 %v3403
    %4385 = vmatpush1.bf16.msra.mxu0 %v3402
    %4386 = vmatprep.mubr.bf16.mxu0 %v1107
    %4387 = vmatmul.mubr.bf16.gmra.mrb[0].mxu0 %v1106
    %v4388 = vpop.f32.mrb[0].mxu0
    %v4389 = vadd.f32 0.0, %v4388
    %v4390 = vpop.f32.mrb[0].mxu0
    %v4391 = vadd.f32 0.0, %v4390
    %v4392 = vpop.f32.mrb[0].mxu0
    %v4393 = vadd.f32 0.0, %v4392
    %v4394 = vpop.f32.mrb[0].mxu0
    %v4395 = vadd.f32 0.0, %v4394
    %4396 = vdwg.mxu0
    %4397 = vmatprep.subr.bf16.mxu0 %v3419
    %4398 = vmatpush1.bf16.msra.mxu0 %v3418
    %4399 = vmatprep.subr.bf16.mxu0 %v3435
    %4400 = vmatpush1.bf16.msra.mxu0 %v3434
    %4401 = vmatprep.subr.bf16.mxu0 %v3451
    %4402 = vmatpush1.bf16.msra.mxu0 %v3450
    %4403 = vmatprep.subr.bf16.mxu0 %v3467
    %4404 = vmatpush1.bf16.msra.mxu0 %v3466
    %4405 = vmatprep.subr.bf16.mxu0 %v3483
    %4406 = vmatpush1.bf16.msra.mxu0 %v3482
    %4407 = vmatprep.subr.bf16.mxu0 %v3499
    %4408 = vmatpush1.bf16.msra.mxu0 %v3498
    %4409 = vmatprep.subr.bf16.mxu0 %v3515
    %4410 = vmatpush1.bf16.msra.mxu0 %v3514
    %4411 = vmatprep.subr.bf16.mxu0 %v3531
    %4412 = vmatpush1.bf16.msra.mxu0 %v3530
    %4413 = vmatprep.subr.bf16.mxu0 %v3547
    %4414 = vmatpush1.bf16.msra.mxu0 %v3546
    %4415 = vmatprep.subr.bf16.mxu0 %v3563
    %4416 = vmatpush1.bf16.msra.mxu0 %v3562
    %4417 = vmatprep.subr.bf16.mxu0 %v3579
    %4418 = vmatpush1.bf16.msra.mxu0 %v3578
    %4419 = vmatprep.subr.bf16.mxu0 %v3595
    %4420 = vmatpush1.bf16.msra.mxu0 %v3594
    %4421 = vmatprep.subr.bf16.mxu0 %v3611
    %4422 = vmatpush1.bf16.msra.mxu0 %v3610
    %4423 = vmatprep.subr.bf16.mxu0 %v3627
    %4424 = vmatpush1.bf16.msra.mxu0 %v3626
    %4425 = vmatprep.subr.bf16.mxu0 %v3643
    %4426 = vmatpush1.bf16.msra.mxu0 %v3642
    %4427 = vmatprep.subr.bf16.mxu0 %v3659
    %4428 = vmatpush1.bf16.msra.mxu0 %v3658
    %4429 = vmatprep.mubr.bf16.mxu0 %v1109
    %4430 = vmatmul.mubr.bf16.gmra.mrb[0].mxu0 %v1108
    %v4431 = vpop.f32.mrb[0].mxu0
    %v4432 = vadd.f32 %v4389, %v4431
    %v4433 = vpop.f32.mrb[0].mxu0
    %v4434 = vadd.f32 %v4391, %v4433
    %v4435 = vpop.f32.mrb[0].mxu0
    %v4436 = vadd.f32 %v4393, %v4435
    %v4437 = vpop.f32.mrb[0].mxu0
    %v4438 = vadd.f32 %v4395, %v4437
    %4439 = vdwg.mxu0
    %4440 = vmatprep.subr.bf16.mxu0 %v3165
    %4441 = vmatpush1.bf16.msra.mxu0 %v3164
    %4442 = vmatprep.subr.bf16.mxu0 %v3181
    %4443 = vmatpush1.bf16.msra.mxu0 %v3180
    %4444 = vmatprep.subr.bf16.mxu0 %v3197
    %4445 = vmatpush1.bf16.msra.mxu0 %v3196
    %4446 = vmatprep.subr.bf16.mxu0 %v3213
    %4447 = vmatpush1.bf16.msra.mxu0 %v3212
    %4448 = vmatprep.subr.bf16.mxu0 %v3229
    %4449 = vmatpush1.bf16.msra.mxu0 %v3228
    %4450 = vmatprep.subr.bf16.mxu0 %v3245
    %4451 = vmatpush1.bf16.msra.mxu0 %v3244
    %4452 = vmatprep.subr.bf16.mxu0 %v3261
    %4453 = vmatpush1.bf16.msra.mxu0 %v3260
    %4454 = vmatprep.subr.bf16.mxu0 %v3277
    %4455 = vmatpush1.bf16.msra.mxu0 %v3276
    %4456 = vmatprep.subr.bf16.mxu0 %v3293
    %4457 = vmatpush1.bf16.msra.mxu0 %v3292
    %4458 = vmatprep.subr.bf16.mxu0 %v3309
    %4459 = vmatpush1.bf16.msra.mxu0 %v3308
    %4460 = vmatprep.subr.bf16.mxu0 %v3325
    %4461 = vmatpush1.bf16.msra.mxu0 %v3324
    %4462 = vmatprep.subr.bf16.mxu0 %v3341
    %4463 = vmatpush1.bf16.msra.mxu0 %v3340
    %4464 = vmatprep.subr.bf16.mxu0 %v3357
    %4465 = vmatpush1.bf16.msra.mxu0 %v3356
    %4466 = vmatprep.subr.bf16.mxu0 %v3373
    %4467 = vmatpush1.bf16.msra.mxu0 %v3372
    %4468 = vmatprep.subr.bf16.mxu0 %v3389
    %4469 = vmatpush1.bf16.msra.mxu0 %v3388
    %4470 = vmatprep.subr.bf16.mxu0 %v3405
    %4471 = vmatpush1.bf16.msra.mxu0 %v3404
    %4472 = vmatprep.mubr.bf16.mxu0 %v1107
    %4473 = vmatmul.mubr.bf16.gmra.mrb[0].mxu0 %v1106
    %v4474 = vpop.f32.mrb[0].mxu0
    %v4475 = vadd.f32 0.0, %v4474
    %v4476 = vpop.f32.mrb[0].mxu0
    %v4477 = vadd.f32 0.0, %v4476
    %v4478 = vpop.f32.mrb[0].mxu0
    %v4479 = vadd.f32 0.0, %v4478
    %v4480 = vpop.f32.mrb[0].mxu0
    %v4481 = vadd.f32 0.0, %v4480
    %4482 = vdwg.mxu0
    %4483 = vmatprep.subr.bf16.mxu0 %v3421
    %4484 = vmatpush1.bf16.msra.mxu0 %v3420
    %4485 = vmatprep.subr.bf16.mxu0 %v3437
    %4486 = vmatpush1.bf16.msra.mxu0 %v3436
    %4487 = vmatprep.subr.bf16.mxu0 %v3453
    %4488 = vmatpush1.bf16.msra.mxu0 %v3452
    %4489 = vmatprep.subr.bf16.mxu0 %v3469
    %4490 = vmatpush1.bf16.msra.mxu0 %v3468
    %4491 = vmatprep.subr.bf16.mxu0 %v3485
    %4492 = vmatpush1.bf16.msra.mxu0 %v3484
    %4493 = vmatprep.subr.bf16.mxu0 %v3501
    %4494 = vmatpush1.bf16.msra.mxu0 %v3500
    %4495 = vmatprep.subr.bf16.mxu0 %v3517
    %4496 = vmatpush1.bf16.msra.mxu0 %v3516
    %4497 = vmatprep.subr.bf16.mxu0 %v3533
    %4498 = vmatpush1.bf16.msra.mxu0 %v3532
    %4499 = vmatprep.subr.bf16.mxu0 %v3549
    %4500 = vmatpush1.bf16.msra.mxu0 %v3548
    %4501 = vmatprep.subr.bf16.mxu0 %v3565
    %4502 = vmatpush1.bf16.msra.mxu0 %v3564
    %4503 = vmatprep.subr.bf16.mxu0 %v3581
    %4504 = vmatpush1.bf16.msra.mxu0 %v3580
    %4505 = vmatprep.subr.bf16.mxu0 %v3597
    %4506 = vmatpush1.bf16.msra.mxu0 %v3596
    %4507 = vmatprep.subr.bf16.mxu0 %v3613
    %4508 = vmatpush1.bf16.msra.mxu0 %v3612
    %4509 = vmatprep.subr.bf16.mxu0 %v3629
    %4510 = vmatpush1.bf16.msra.mxu0 %v3628
    %4511 = vmatprep.subr.bf16.mxu0 %v3645
    %4512 = vmatpush1.bf16.msra.mxu0 %v3644
    %4513 = vmatprep.subr.bf16.mxu0 %v3661
    %4514 = vmatpush1.bf16.msra.mxu0 %v3660
    %4515 = vmatprep.mubr.bf16.mxu0 %v1109
    %4516 = vmatmul.mubr.bf16.gmra.mrb[0].mxu0 %v1108
    %v4517 = vpop.f32.mrb[0].mxu0
    %v4518 = vadd.f32 %v4475, %v4517
    %v4519 = vpop.f32.mrb[0].mxu0
    %v4520 = vadd.f32 %v4477, %v4519
    %v4521 = vpop.f32.mrb[0].mxu0
    %v4522 = vadd.f32 %v4479, %v4521
    %v4523 = vpop.f32.mrb[0].mxu0
    %v4524 = vadd.f32 %v4481, %v4523
    %4525 = vdwg.mxu0
    %4526 = vmatprep.subr.bf16.mxu0 %v3167
    %4527 = vmatpush1.bf16.msra.mxu0 %v3166
    %4528 = vmatprep.subr.bf16.mxu0 %v3183
    %4529 = vmatpush1.bf16.msra.mxu0 %v3182
    %4530 = vmatprep.subr.bf16.mxu0 %v3199
    %4531 = vmatpush1.bf16.msra.mxu0 %v3198
    %4532 = vmatprep.subr.bf16.mxu0 %v3215
    %4533 = vmatpush1.bf16.msra.mxu0 %v3214
    %4534 = vmatprep.subr.bf16.mxu0 %v3231
    %4535 = vmatpush1.bf16.msra.mxu0 %v3230
    %4536 = vmatprep.subr.bf16.mxu0 %v3247
    %4537 = vmatpush1.bf16.msra.mxu0 %v3246
    %4538 = vmatprep.subr.bf16.mxu0 %v3263
    %4539 = vmatpush1.bf16.msra.mxu0 %v3262
    %4540 = vmatprep.subr.bf16.mxu0 %v3279
    %4541 = vmatpush1.bf16.msra.mxu0 %v3278
    %4542 = vmatprep.subr.bf16.mxu0 %v3295
    %4543 = vmatpush1.bf16.msra.mxu0 %v3294
    %4544 = vmatprep.subr.bf16.mxu0 %v3311
    %4545 = vmatpush1.bf16.msra.mxu0 %v3310
    %4546 = vmatprep.subr.bf16.mxu0 %v3327
    %4547 = vmatpush1.bf16.msra.mxu0 %v3326
    %4548 = vmatprep.subr.bf16.mxu0 %v3343
    %4549 = vmatpush1.bf16.msra.mxu0 %v3342
    %4550 = vmatprep.subr.bf16.mxu0 %v3359
    %4551 = vmatpush1.bf16.msra.mxu0 %v3358
    %4552 = vmatprep.subr.bf16.mxu0 %v3375
    %4553 = vmatpush1.bf16.msra.mxu0 %v3374
    %4554 = vmatprep.subr.bf16.mxu0 %v3391
    %4555 = vmatpush1.bf16.msra.mxu0 %v3390
    %4556 = vmatprep.subr.bf16.mxu0 %v3407
    %4557 = vmatpush1.bf16.msra.mxu0 %v3406
    %4558 = vmatprep.mubr.bf16.mxu0 %v1107
    %4559 = vmatmul.mubr.bf16.gmra.mrb[0].mxu0 %v1106
    %v4560 = vpop.f32.mrb[0].mxu0
    %v4561 = vadd.f32 0.0, %v4560
    %v4562 = vpop.f32.mrb[0].mxu0
    %v4563 = vadd.f32 0.0, %v4562
    %v4564 = vpop.f32.mrb[0].mxu0
    %v4565 = vadd.f32 0.0, %v4564
    %v4566 = vpop.f32.mrb[0].mxu0
    %v4567 = vadd.f32 0.0, %v4566
    %4568 = vdwg.mxu0
    %4569 = vmatprep.subr.bf16.mxu0 %v3423
    %4570 = vmatpush1.bf16.msra.mxu0 %v3422
    %4571 = vmatprep.subr.bf16.mxu0 %v3439
    %4572 = vmatpush1.bf16.msra.mxu0 %v3438
    %4573 = vmatprep.subr.bf16.mxu0 %v3455
    %4574 = vmatpush1.bf16.msra.mxu0 %v3454
    %4575 = vmatprep.subr.bf16.mxu0 %v3471
    %4576 = vmatpush1.bf16.msra.mxu0 %v3470
    %4577 = vmatprep.subr.bf16.mxu0 %v3487
    %4578 = vmatpush1.bf16.msra.mxu0 %v3486
    %4579 = vmatprep.subr.bf16.mxu0 %v3503
    %4580 = vmatpush1.bf16.msra.mxu0 %v3502
    %4581 = vmatprep.subr.bf16.mxu0 %v3519
    %4582 = vmatpush1.bf16.msra.mxu0 %v3518
    %4583 = vmatprep.subr.bf16.mxu0 %v3535
    %4584 = vmatpush1.bf16.msra.mxu0 %v3534
    %4585 = vmatprep.subr.bf16.mxu0 %v3551
    %4586 = vmatpush1.bf16.msra.mxu0 %v3550
    %4587 = vmatprep.subr.bf16.mxu0 %v3567
    %4588 = vmatpush1.bf16.msra.mxu0 %v3566
    %4589 = vmatprep.subr.bf16.mxu0 %v3583
    %4590 = vmatpush1.bf16.msra.mxu0 %v3582
    %4591 = vmatprep.subr.bf16.mxu0 %v3599
    %4592 = vmatpush1.bf16.msra.mxu0 %v3598
    %4593 = vmatprep.subr.bf16.mxu0 %v3615
    %4594 = vmatpush1.bf16.msra.mxu0 %v3614
    %4595 = vmatprep.subr.bf16.mxu0 %v3631
    %4596 = vmatpush1.bf16.msra.mxu0 %v3630
    %4597 = vmatprep.subr.bf16.mxu0 %v3647
    %4598 = vmatpush1.bf16.msra.mxu0 %v3646
    %4599 = vmatprep.subr.bf16.mxu0 %v3663
    %4600 = vmatpush1.bf16.msra.mxu0 %v3662
    %4601 = vmatprep.mubr.bf16.mxu0 %v1109
    %4602 = vmatmul.mubr.bf16.gmra.mrb[0].mxu0 %v1108
    %v4603 = vpop.f32.mrb[0].mxu0
    %v4604 = vadd.f32 %v4561, %v4603
    %v4605 = vpop.f32.mrb[0].mxu0
    %v4606 = vadd.f32 %v4563, %v4605
    %v4607 = vpop.f32.mrb[0].mxu0
    %v4608 = vadd.f32 %v4565, %v4607
    %v4609 = vpop.f32.mrb[0].mxu0
    %v4610 = vadd.f32 %v4567, %v4609
    %4611 = vdwg.mxu0
    %4612 = vmatprep.subr.bf16.mxu0 %v3169
    %4613 = vmatpush1.bf16.msra.mxu0 %v3168
    %4614 = vmatprep.subr.bf16.mxu0 %v3185
    %4615 = vmatpush1.bf16.msra.mxu0 %v3184
    %4616 = vmatprep.subr.bf16.mxu0 %v3201
    %4617 = vmatpush1.bf16.msra.mxu0 %v3200
    %4618 = vmatprep.subr.bf16.mxu0 %v3217
    %4619 = vmatpush1.bf16.msra.mxu0 %v3216
    %4620 = vmatprep.subr.bf16.mxu0 %v3233
    %4621 = vmatpush1.bf16.msra.mxu0 %v3232
    %4622 = vmatprep.subr.bf16.mxu0 %v3249
    %4623 = vmatpush1.bf16.msra.mxu0 %v3248
    %4624 = vmatprep.subr.bf16.mxu0 %v3265
    %4625 = vmatpush1.bf16.msra.mxu0 %v3264
    %4626 = vmatprep.subr.bf16.mxu0 %v3281
    %4627 = vmatpush1.bf16.msra.mxu0 %v3280
    %4628 = vmatprep.subr.bf16.mxu0 %v3297
    %4629 = vmatpush1.bf16.msra.mxu0 %v3296
    %4630 = vmatprep.subr.bf16.mxu0 %v3313
    %4631 = vmatpush1.bf16.msra.mxu0 %v3312
    %4632 = vmatprep.subr.bf16.mxu0 %v3329
    %4633 = vmatpush1.bf16.msra.mxu0 %v3328
    %4634 = vmatprep.subr.bf16.mxu0 %v3345
    %4635 = vmatpush1.bf16.msra.mxu0 %v3344
    %4636 = vmatprep.subr.bf16.mxu0 %v3361
    %4637 = vmatpush1.bf16.msra.mxu0 %v3360
    %4638 = vmatprep.subr.bf16.mxu0 %v3377
    %4639 = vmatpush1.bf16.msra.mxu0 %v3376
    %4640 = vmatprep.subr.bf16.mxu0 %v3393
    %4641 = vmatpush1.bf16.msra.mxu0 %v3392
    %4642 = vmatprep.subr.bf16.mxu0 %v3409
    %4643 = vmatpush1.bf16.msra.mxu0 %v3408
    %4644 = vmatprep.mubr.bf16.mxu0 %v1107
    %4645 = vmatmul.mubr.bf16.gmra.mrb[0].mxu0 %v1106
    %v4646 = vpop.f32.mrb[0].mxu0
    %v4647 = vadd.f32 0.0, %v4646
    %v4648 = vpop.f32.mrb[0].mxu0
    %v4649 = vadd.f32 0.0, %v4648
    %v4650 = vpop.f32.mrb[0].mxu0
    %v4651 = vadd.f32 0.0, %v4650
    %v4652 = vpop.f32.mrb[0].mxu0
    %v4653 = vadd.f32 0.0, %v4652
    %4654 = vdwg.mxu0
    %4655 = vmatprep.subr.bf16.mxu0 %v3425
    %4656 = vmatpush1.bf16.msra.mxu0 %v3424
    %4657 = vmatprep.subr.bf16.mxu0 %v3441
    %4658 = vmatpush1.bf16.msra.mxu0 %v3440
    %4659 = vmatprep.subr.bf16.mxu0 %v3457
    %4660 = vmatpush1.bf16.msra.mxu0 %v3456
    %4661 = vmatprep.subr.bf16.mxu0 %v3473
    %4662 = vmatpush1.bf16.msra.mxu0 %v3472
    %4663 = vmatprep.subr.bf16.mxu0 %v3489
    %4664 = vmatpush1.bf16.msra.mxu0 %v3488
    %4665 = vmatprep.subr.bf16.mxu0 %v3505
    %4666 = vmatpush1.bf16.msra.mxu0 %v3504
    %4667 = vmatprep.subr.bf16.mxu0 %v3521
    %4668 = vmatpush1.bf16.msra.mxu0 %v3520
    %4669 = vmatprep.subr.bf16.mxu0 %v3537
    %4670 = vmatpush1.bf16.msra.mxu0 %v3536
    %4671 = vmatprep.subr.bf16.mxu0 %v3553
    %4672 = vmatpush1.bf16.msra.mxu0 %v3552
    %4673 = vmatprep.subr.bf16.mxu0 %v3569
    %4674 = vmatpush1.bf16.msra.mxu0 %v3568
    %4675 = vmatprep.subr.bf16.mxu0 %v3585
    %4676 = vmatpush1.bf16.msra.mxu0 %v3584
    %4677 = vmatprep.subr.bf16.mxu0 %v3601
    %4678 = vmatpush1.bf16.msra.mxu0 %v3600
    %4679 = vmatprep.subr.bf16.mxu0 %v3617
    %4680 = vmatpush1.bf16.msra.mxu0 %v3616
    %4681 = vmatprep.subr.bf16.mxu0 %v3633
    %4682 = vmatpush1.bf16.msra.mxu0 %v3632
    %4683 = vmatprep.subr.bf16.mxu0 %v3649
    %4684 = vmatpush1.bf16.msra.mxu0 %v3648
    %4685 = vmatprep.subr.bf16.mxu0 %v3665
    %4686 = vmatpush1.bf16.msra.mxu0 %v3664
    %4687 = vmatprep.mubr.bf16.mxu0 %v1109
    %4688 = vmatmul.mubr.bf16.gmra.mrb[0].mxu0 %v1108
    %v4689 = vpop.f32.mrb[0].mxu0
    %v4690 = vadd.f32 %v4647, %v4689
    %v4691 = vpop.f32.mrb[0].mxu0
    %v4692 = vadd.f32 %v4649, %v4691
    %v4693 = vpop.f32.mrb[0].mxu0
    %v4694 = vadd.f32 %v4651, %v4693
    %v4695 = vpop.f32.mrb[0].mxu0
    %v4696 = vadd.f32 %v4653, %v4695
    %4697 = vdwg.mxu0
    %4698 = vmatprep.subr.bf16.mxu0 %v3171
    %4699 = vmatpush1.bf16.msra.mxu0 %v3170
    %4700 = vmatprep.subr.bf16.mxu0 %v3187
    %4701 = vmatpush1.bf16.msra.mxu0 %v3186
    %4702 = vmatprep.subr.bf16.mxu0 %v3203
    %4703 = vmatpush1.bf16.msra.mxu0 %v3202
    %4704 = vmatprep.subr.bf16.mxu0 %v3219
    %4705 = vmatpush1.bf16.msra.mxu0 %v3218
    %4706 = vmatprep.subr.bf16.mxu0 %v3235
    %4707 = vmatpush1.bf16.msra.mxu0 %v3234
    %4708 = vmatprep.subr.bf16.mxu0 %v3251
    %4709 = vmatpush1.bf16.msra.mxu0 %v3250
    %4710 = vmatprep.subr.bf16.mxu0 %v3267
    %4711 = vmatpush1.bf16.msra.mxu0 %v3266
    %4712 = vmatprep.subr.bf16.mxu0 %v3283
    %4713 = vmatpush1.bf16.msra.mxu0 %v3282
    %4714 = vmatprep.subr.bf16.mxu0 %v3299
    %4715 = vmatpush1.bf16.msra.mxu0 %v3298
    %4716 = vmatprep.subr.bf16.mxu0 %v3315
    %4717 = vmatpush1.bf16.msra.mxu0 %v3314
    %4718 = vmatprep.subr.bf16.mxu0 %v3331
    %4719 = vmatpush1.bf16.msra.mxu0 %v3330
    %4720 = vmatprep.subr.bf16.mxu0 %v3347
    %4721 = vmatpush1.bf16.msra.mxu0 %v3346
    %4722 = vmatprep.subr.bf16.mxu0 %v3363
    %4723 = vmatpush1.bf16.msra.mxu0 %v3362
    %4724 = vmatprep.subr.bf16.mxu0 %v3379
    %4725 = vmatpush1.bf16.msra.mxu0 %v3378
    %4726 = vmatprep.subr.bf16.mxu0 %v3395
    %4727 = vmatpush1.bf16.msra.mxu0 %v3394
    %4728 = vmatprep.subr.bf16.mxu0 %v3411
    %4729 = vmatpush1.bf16.msra.mxu0 %v3410
    %4730 = vmatprep.mubr.bf16.mxu0 %v1107
    %4731 = vmatmul.mubr.bf16.gmra.mrb[0].mxu0 %v1106
    %v4732 = vpop.f32.mrb[0].mxu0
    %v4733 = vadd.f32 0.0, %v4732
    %v4734 = vpop.f32.mrb[0].mxu0
    %v4735 = vadd.f32 0.0, %v4734
    %v4736 = vpop.f32.mrb[0].mxu0
    %v4737 = vadd.f32 0.0, %v4736
    %v4738 = vpop.f32.mrb[0].mxu0
    %v4739 = vadd.f32 0.0, %v4738
    %4740 = vdwg.mxu0
    %4741 = vmatprep.subr.bf16.mxu0 %v3427
    %4742 = vmatpush1.bf16.msra.mxu0 %v3426
    %4743 = vmatprep.subr.bf16.mxu0 %v3443
    %4744 = vmatpush1.bf16.msra.mxu0 %v3442
    %4745 = vmatprep.subr.bf16.mxu0 %v3459
    %4746 = vmatpush1.bf16.msra.mxu0 %v3458
    %4747 = vmatprep.subr.bf16.mxu0 %v3475
    %4748 = vmatpush1.bf16.msra.mxu0 %v3474
    %4749 = vmatprep.subr.bf16.mxu0 %v3491
    %4750 = vmatpush1.bf16.msra.mxu0 %v3490
    %4751 = vmatprep.subr.bf16.mxu0 %v3507
    %4752 = vmatpush1.bf16.msra.mxu0 %v3506
    %4753 = vmatprep.subr.bf16.mxu0 %v3523
    %4754 = vmatpush1.bf16.msra.mxu0 %v3522
    %4755 = vmatprep.subr.bf16.mxu0 %v3539
    %4756 = vmatpush1.bf16.msra.mxu0 %v3538
    %4757 = vmatprep.subr.bf16.mxu0 %v3555
    %4758 = vmatpush1.bf16.msra.mxu0 %v3554
    %4759 = vmatprep.subr.bf16.mxu0 %v3571
    %4760 = vmatpush1.bf16.msra.mxu0 %v3570
    %4761 = vmatprep.subr.bf16.mxu0 %v3587
    %4762 = vmatpush1.bf16.msra.mxu0 %v3586
    %4763 = vmatprep.subr.bf16.mxu0 %v3603
    %4764 = vmatpush1.bf16.msra.mxu0 %v3602
    %4765 = vmatprep.subr.bf16.mxu0 %v3619
    %4766 = vmatpush1.bf16.msra.mxu0 %v3618
    %4767 = vmatprep.subr.bf16.mxu0 %v3635
    %4768 = vmatpush1.bf16.msra.mxu0 %v3634
    %4769 = vmatprep.subr.bf16.mxu0 %v3651
    %4770 = vmatpush1.bf16.msra.mxu0 %v3650
    %4771 = vmatprep.subr.bf16.mxu0 %v3667
    %4772 = vmatpush1.bf16.msra.mxu0 %v3666
    %4773 = vmatprep.mubr.bf16.mxu0 %v1109
    %4774 = vmatmul.mubr.bf16.gmra.mrb[0].mxu0 %v1108
    %v4775 = vpop.f32.mrb[0].mxu0
    %v4776 = vadd.f32 %v4733, %v4775
    %v4777 = vpop.f32.mrb[0].mxu0
    %v4778 = vadd.f32 %v4735, %v4777
    %v4779 = vpop.f32.mrb[0].mxu0
    %v4780 = vadd.f32 %v4737, %v4779
    %v4781 = vpop.f32.mrb[0].mxu0
    %v4782 = vadd.f32 %v4739, %v4781
    %4783 = vdwg.mxu0
    %4784 = vmatprep.subr.bf16.mxu0 %v3173
    %4785 = vmatpush1.bf16.msra.mxu0 %v3172
    %4786 = vmatprep.subr.bf16.mxu0 %v3189
    %4787 = vmatpush1.bf16.msra.mxu0 %v3188
    %4788 = vmatprep.subr.bf16.mxu0 %v3205
    %4789 = vmatpush1.bf16.msra.mxu0 %v3204
    %4790 = vmatprep.subr.bf16.mxu0 %v3221
    %4791 = vmatpush1.bf16.msra.mxu0 %v3220
    %4792 = vmatprep.subr.bf16.mxu0 %v3237
    %4793 = vmatpush1.bf16.msra.mxu0 %v3236
    %4794 = vmatprep.subr.bf16.mxu0 %v3253
    %4795 = vmatpush1.bf16.msra.mxu0 %v3252
    %4796 = vmatprep.subr.bf16.mxu0 %v3269
    %4797 = vmatpush1.bf16.msra.mxu0 %v3268
    %4798 = vmatprep.subr.bf16.mxu0 %v3285
    %4799 = vmatpush1.bf16.msra.mxu0 %v3284
    %4800 = vmatprep.subr.bf16.mxu0 %v3301
    %4801 = vmatpush1.bf16.msra.mxu0 %v3300
    %4802 = vmatprep.subr.bf16.mxu0 %v3317
    %4803 = vmatpush1.bf16.msra.mxu0 %v3316
    %4804 = vmatprep.subr.bf16.mxu0 %v3333
    %4805 = vmatpush1.bf16.msra.mxu0 %v3332
    %4806 = vmatprep.subr.bf16.mxu0 %v3349
    %4807 = vmatpush1.bf16.msra.mxu0 %v3348
    %4808 = vmatprep.subr.bf16.mxu0 %v3365
    %4809 = vmatpush1.bf16.msra.mxu0 %v3364
    %4810 = vmatprep.subr.bf16.mxu0 %v3381
    %4811 = vmatpush1.bf16.msra.mxu0 %v3380
    %4812 = vmatprep.subr.bf16.mxu0 %v3397
    %4813 = vmatpush1.bf16.msra.mxu0 %v3396
    %4814 = vmatprep.subr.bf16.mxu0 %v3413
    %4815 = vmatpush1.bf16.msra.mxu0 %v3412
    %4816 = vmatprep.mubr.bf16.mxu0 %v1107
    %4817 = vmatmul.mubr.bf16.gmra.mrb[0].mxu0 %v1106
    %v4818 = vpop.f32.mrb[0].mxu0
    %v4819 = vadd.f32 0.0, %v4818
    %v4820 = vpop.f32.mrb[0].mxu0
    %v4821 = vadd.f32 0.0, %v4820
    %v4822 = vpop.f32.mrb[0].mxu0
    %v4823 = vadd.f32 0.0, %v4822
    %v4824 = vpop.f32.mrb[0].mxu0
    %v4825 = vadd.f32 0.0, %v4824
    %4826 = vdwg.mxu0
    %4827 = vmatprep.subr.bf16.mxu0 %v3429
    %4828 = vmatpush1.bf16.msra.mxu0 %v3428
    %4829 = vmatprep.subr.bf16.mxu0 %v3445
    %4830 = vmatpush1.bf16.msra.mxu0 %v3444
    %4831 = vmatprep.subr.bf16.mxu0 %v3461
    %4832 = vmatpush1.bf16.msra.mxu0 %v3460
    %4833 = vmatprep.subr.bf16.mxu0 %v3477
    %4834 = vmatpush1.bf16.msra.mxu0 %v3476
    %4835 = vmatprep.subr.bf16.mxu0 %v3493
    %4836 = vmatpush1.bf16.msra.mxu0 %v3492
    %4837 = vmatprep.subr.bf16.mxu0 %v3509
    %4838 = vmatpush1.bf16.msra.mxu0 %v3508
    %4839 = vmatprep.subr.bf16.mxu0 %v3525
    %4840 = vmatpush1.bf16.msra.mxu0 %v3524
    %4841 = vmatprep.subr.bf16.mxu0 %v3541
    %4842 = vmatpush1.bf16.msra.mxu0 %v3540
    %4843 = vmatprep.subr.bf16.mxu0 %v3557
    %4844 = vmatpush1.bf16.msra.mxu0 %v3556
    %4845 = vmatprep.subr.bf16.mxu0 %v3573
    %4846 = vmatpush1.bf16.msra.mxu0 %v3572
    %4847 = vmatprep.subr.bf16.mxu0 %v3589
    %4848 = vmatpush1.bf16.msra.mxu0 %v3588
    %4849 = vmatprep.subr.bf16.mxu0 %v3605
    %4850 = vmatpush1.bf16.msra.mxu0 %v3604
    %4851 = vmatprep.subr.bf16.mxu0 %v3621
    %4852 = vmatpush1.bf16.msra.mxu0 %v3620
    %4853 = vmatprep.subr.bf16.mxu0 %v3637
    %4854 = vmatpush1.bf16.msra.mxu0 %v3636
    %4855 = vmatprep.subr.bf16.mxu0 %v3653
    %4856 = vmatpush1.bf16.msra.mxu0 %v3652
    %4857 = vmatprep.subr.bf16.mxu0 %v3669
    %4858 = vmatpush1.bf16.msra.mxu0 %v3668
    %4859 = vmatprep.mubr.bf16.mxu0 %v1109
    %4860 = vmatmul.mubr.bf16.gmra.mrb[0].mxu0 %v1108
    %v4861 = vpop.f32.mrb[0].mxu0
    %v4862 = vadd.f32 %v4819, %v4861
    %v4863 = vpop.f32.mrb[0].mxu0
    %v4864 = vadd.f32 %v4821, %v4863
    %v4865 = vpop.f32.mrb[0].mxu0
    %v4866 = vadd.f32 %v4823, %v4865
    %v4867 = vpop.f32.mrb[0].mxu0
    %v4868 = vadd.f32 %v4825, %v4867
    %4869 = vdwg.mxu0
    %v4870 = vmax.f32 %v4260, 0.0
    %v4871 = vmax.f32 %v4262, 0.0
    %v4872 = vmax.f32 %v4346, 0.0
    %v4873 = vmax.f32 %v4348, 0.0
    %v4874 = vmax.f32 %v4432, 0.0
    %v4875 = vmax.f32 %v4434, 0.0
    %v4876 = vmax.f32 %v4518, 0.0
    %v4877 = vmax.f32 %v4520, 0.0
    %v4878 = vmax.f32 %v4604, 0.0
    %v4879 = vmax.f32 %v4606, 0.0
    %v4880 = vmax.f32 %v4690, 0.0
    %v4881 = vmax.f32 %v4692, 0.0
    %v4882 = vmax.f32 %v4776, 0.0
    %v4883 = vmax.f32 %v4778, 0.0
    %v4884 = vmax.f32 %v4862, 0.0
    %v4885 = vmax.f32 %v4864, 0.0
    %v4886 = vmax.f32 %v4264, 0.0
    %v4887 = vmax.f32 %v4266, 0.0
    %v4888 = vmax.f32 %v4350, 0.0
    %v4889 = vmax.f32 %v4352, 0.0
    %v4890 = vmax.f32 %v4436, 0.0
    %v4891 = vmax.f32 %v4438, 0.0
    %v4892 = vmax.f32 %v4522, 0.0
    %v4893 = vmax.f32 %v4524, 0.0
    %v4894 = vmax.f32 %v4608, 0.0
    %v4895 = vmax.f32 %v4610, 0.0
    %v4896 = vmax.f32 %v4694, 0.0
    %v4897 = vmax.f32 %v4696, 0.0
    %v4898 = vmax.f32 %v4780, 0.0
    %v4899 = vmax.f32 %v4782, 0.0
    %v4900 = vmax.f32 %v4866, 0.0
    %v4901 = vmax.f32 %v4868, 0.0
    %v4902 = vpack.c.bf16 %v4886, %v4870
    %v4903 = vpack.c.bf16 %v4887, %v4871
    %v4904 = vpack.c.bf16 %v4888, %v4872
    %v4905 = vpack.c.bf16 %v4889, %v4873
    %v4906 = vpack.c.bf16 %v4890, %v4874
    %v4907 = vpack.c.bf16 %v4891, %v4875
    %v4908 = vpack.c.bf16 %v4892, %v4876
    %v4909 = vpack.c.bf16 %v4893, %v4877
    %v4910 = vpack.c.bf16 %v4894, %v4878
    %v4911 = vpack.c.bf16 %v4895, %v4879
    %v4912 = vpack.c.bf16 %v4896, %v4880
    %v4913 = vpack.c.bf16 %v4897, %v4881
    %v4914 = vpack.c.bf16 %v4898, %v4882
    %v4915 = vpack.c.bf16 %v4899, %v4883
    %v4916 = vpack.c.bf16 %v4900, %v4884
    %v4917 = vpack.c.bf16 %v4901, %v4885
    %v4918 = vld [vmem:[%s6] sm:$0xff]
    %v4919 = vld [vmem:[%s6 + $0x8] sm:$0xff]
    %v4920 = vld [vmem:[%s6 + $0x10] sm:$0xff]
    %v4921 = vld [vmem:[%s6 + $0x18] sm:$0xff]
    %v4922 = vld [vmem:[%s6 + $0x20] sm:$0xff]
    %v4923 = vld [vmem:[%s6 + $0x28] sm:$0xff]
    %v4924 = vld [vmem:[%s6 + $0x30] sm:$0xff]
    %v4925 = vld [vmem:[%s6 + $0x38] sm:$0xff]
    %v4926 = vld [vmem:[%s6 + $0x40] sm:$0xff]
    %v4927 = vld [vmem:[%s6 + $0x48] sm:$0xff]
    %v4928 = vld [vmem:[%s6 + $0x50] sm:$0xff]
    %v4929 = vld [vmem:[%s6 + $0x58] sm:$0xff]
    %v4930 = vld [vmem:[%s6 + $0x60] sm:$0xff]
    %v4931 = vld [vmem:[%s6 + $0x68] sm:$0xff]
    %v4932 = vld [vmem:[%s6 + $0x70] sm:$0xff]
    %v4933 = vld [vmem:[%s6 + $0x78] sm:$0xff]
    %v4934 = vld [vmem:[%s6 + $0x80] sm:$0xff]
    %v4935 = vld [vmem:[%s6 + $0x88] sm:$0xff]
    %v4936 = vld [vmem:[%s6 + $0x90] sm:$0xff]
    %v4937 = vld [vmem:[%s6 + $0x98] sm:$0xff]
    %v4938 = vld [vmem:[%s6 + $0xa0] sm:$0xff]
    %v4939 = vld [vmem:[%s6 + $0xa8] sm:$0xff]
    %v4940 = vld [vmem:[%s6 + $0xb0] sm:$0xff]
    %v4941 = vld [vmem:[%s6 + $0xb8] sm:$0xff]
    %v4942 = vld [vmem:[%s6 + $0xc0] sm:$0xff]
    %v4943 = vld [vmem:[%s6 + $0xc8] sm:$0xff]
    %v4944 = vld [vmem:[%s6 + $0xd0] sm:$0xff]
    %v4945 = vld [vmem:[%s6 + $0xd8] sm:$0xff]
    %v4946 = vld [vmem:[%s6 + $0xe0] sm:$0xff]
    %v4947 = vld [vmem:[%s6 + $0xe8] sm:$0xff]
    %v4948 = vld [vmem:[%s6 + $0xf0] sm:$0xff]
    %v4949 = vld [vmem:[%s6 + $0xf8] sm:$0xff]
    %v4950 = vld [vmem:[%s6 + $0x100] sm:$0xff]
    %v4951 = vld [vmem:[%s6 + $0x108] sm:$0xff]
    %v4952 = vld [vmem:[%s6 + $0x110] sm:$0xff]
    %v4953 = vld [vmem:[%s6 + $0x118] sm:$0xff]
    %v4954 = vld [vmem:[%s6 + $0x120] sm:$0xff]
    %v4955 = vld [vmem:[%s6 + $0x128] sm:$0xff]
    %v4956 = vld [vmem:[%s6 + $0x130] sm:$0xff]
    %v4957 = vld [vmem:[%s6 + $0x138] sm:$0xff]
    %v4958 = vld [vmem:[%s6 + $0x140] sm:$0xff]
    %v4959 = vld [vmem:[%s6 + $0x148] sm:$0xff]
    %v4960 = vld [vmem:[%s6 + $0x150] sm:$0xff]
    %v4961 = vld [vmem:[%s6 + $0x158] sm:$0xff]
    %v4962 = vld [vmem:[%s6 + $0x160] sm:$0xff]
    %v4963 = vld [vmem:[%s6 + $0x168] sm:$0xff]
    %v4964 = vld [vmem:[%s6 + $0x170] sm:$0xff]
    %v4965 = vld [vmem:[%s6 + $0x178] sm:$0xff]
    %v4966 = vld [vmem:[%s6 + $0x180] sm:$0xff]
    %v4967 = vld [vmem:[%s6 + $0x188] sm:$0xff]
    %v4968 = vld [vmem:[%s6 + $0x190] sm:$0xff]
    %v4969 = vld [vmem:[%s6 + $0x198] sm:$0xff]
    %v4970 = vld [vmem:[%s6 + $0x1a0] sm:$0xff]
    %v4971 = vld [vmem:[%s6 + $0x1a8] sm:$0xff]
    %v4972 = vld [vmem:[%s6 + $0x1b0] sm:$0xff]
    %v4973 = vld [vmem:[%s6 + $0x1b8] sm:$0xff]
    %v4974 = vld [vmem:[%s6 + $0x1c0] sm:$0xff]
    %v4975 = vld [vmem:[%s6 + $0x1c8] sm:$0xff]
    %v4976 = vld [vmem:[%s6 + $0x1d0] sm:$0xff]
    %v4977 = vld [vmem:[%s6 + $0x1d8] sm:$0xff]
    %v4978 = vld [vmem:[%s6 + $0x1e0] sm:$0xff]
    %v4979 = vld [vmem:[%s6 + $0x1e8] sm:$0xff]
    %v4980 = vld [vmem:[%s6 + $0x1f0] sm:$0xff]
    %v4981 = vld [vmem:[%s6 + $0x1f8] sm:$0xff]
    %v4982 = vld [vmem:[%s6 + $0x200] sm:$0xff]
    %v4983 = vld [vmem:[%s6 + $0x208] sm:$0xff]
    %v4984 = vld [vmem:[%s6 + $0x210] sm:$0xff]
    %v4985 = vld [vmem:[%s6 + $0x218] sm:$0xff]
    %v4986 = vld [vmem:[%s6 + $0x220] sm:$0xff]
    %v4987 = vld [vmem:[%s6 + $0x228] sm:$0xff]
    %v4988 = vld [vmem:[%s6 + $0x230] sm:$0xff]
    %v4989 = vld [vmem:[%s6 + $0x238] sm:$0xff]
    %v4990 = vld [vmem:[%s6 + $0x240] sm:$0xff]
    %v4991 = vld [vmem:[%s6 + $0x248] sm:$0xff]
    %v4992 = vld [vmem:[%s6 + $0x250] sm:$0xff]
    %v4993 = vld [vmem:[%s6 + $0x258] sm:$0xff]
    %v4994 = vld [vmem:[%s6 + $0x260] sm:$0xff]
    %v4995 = vld [vmem:[%s6 + $0x268] sm:$0xff]
    %v4996 = vld [vmem:[%s6 + $0x270] sm:$0xff]
    %v4997 = vld [vmem:[%s6 + $0x278] sm:$0xff]
    %v4998 = vld [vmem:[%s6 + $0x280] sm:$0xff]
    %v4999 = vld [vmem:[%s6 + $0x288] sm:$0xff]
    %v5000 = vld [vmem:[%s6 + $0x290] sm:$0xff]
    %v5001 = vld [vmem:[%s6 + $0x298] sm:$0xff]
    %v5002 = vld [vmem:[%s6 + $0x2a0] sm:$0xff]
    %v5003 = vld [vmem:[%s6 + $0x2a8] sm:$0xff]
    %v5004 = vld [vmem:[%s6 + $0x2b0] sm:$0xff]
    %v5005 = vld [vmem:[%s6 + $0x2b8] sm:$0xff]
    %v5006 = vld [vmem:[%s6 + $0x2c0] sm:$0xff]
    %v5007 = vld [vmem:[%s6 + $0x2c8] sm:$0xff]
    %v5008 = vld [vmem:[%s6 + $0x2d0] sm:$0xff]
    %v5009 = vld [vmem:[%s6 + $0x2d8] sm:$0xff]
    %v5010 = vld [vmem:[%s6 + $0x2e0] sm:$0xff]
    %v5011 = vld [vmem:[%s6 + $0x2e8] sm:$0xff]
    %v5012 = vld [vmem:[%s6 + $0x2f0] sm:$0xff]
    %v5013 = vld [vmem:[%s6 + $0x2f8] sm:$0xff]
    %v5014 = vld [vmem:[%s6 + $0x300] sm:$0xff]
    %v5015 = vld [vmem:[%s6 + $0x308] sm:$0xff]
    %v5016 = vld [vmem:[%s6 + $0x310] sm:$0xff]
    %v5017 = vld [vmem:[%s6 + $0x318] sm:$0xff]
    %v5018 = vld [vmem:[%s6 + $0x320] sm:$0xff]
    %v5019 = vld [vmem:[%s6 + $0x328] sm:$0xff]
    %v5020 = vld [vmem:[%s6 + $0x330] sm:$0xff]
    %v5021 = vld [vmem:[%s6 + $0x338] sm:$0xff]
    %v5022 = vld [vmem:[%s6 + $0x340] sm:$0xff]
    %v5023 = vld [vmem:[%s6 + $0x348] sm:$0xff]
    %v5024 = vld [vmem:[%s6 + $0x350] sm:$0xff]
    %v5025 = vld [vmem:[%s6 + $0x358] sm:$0xff]
    %v5026 = vld [vmem:[%s6 + $0x360] sm:$0xff]
    %v5027 = vld [vmem:[%s6 + $0x368] sm:$0xff]
    %v5028 = vld [vmem:[%s6 + $0x370] sm:$0xff]
    %v5029 = vld [vmem:[%s6 + $0x378] sm:$0xff]
    %v5030 = vld [vmem:[%s6 + $0x380] sm:$0xff]
    %v5031 = vld [vmem:[%s6 + $0x388] sm:$0xff]
    %v5032 = vld [vmem:[%s6 + $0x390] sm:$0xff]
    %v5033 = vld [vmem:[%s6 + $0x398] sm:$0xff]
    %v5034 = vld [vmem:[%s6 + $0x3a0] sm:$0xff]
    %v5035 = vld [vmem:[%s6 + $0x3a8] sm:$0xff]
    %v5036 = vld [vmem:[%s6 + $0x3b0] sm:$0xff]
    %v5037 = vld [vmem:[%s6 + $0x3b8] sm:$0xff]
    %v5038 = vld [vmem:[%s6 + $0x3c0] sm:$0xff]
    %v5039 = vld [vmem:[%s6 + $0x3c8] sm:$0xff]
    %v5040 = vld [vmem:[%s6 + $0x3d0] sm:$0xff]
    %v5041 = vld [vmem:[%s6 + $0x3d8] sm:$0xff]
    %v5042 = vld [vmem:[%s6 + $0x3e0] sm:$0xff]
    %v5043 = vld [vmem:[%s6 + $0x3e8] sm:$0xff]
    %v5044 = vld [vmem:[%s6 + $0x3f0] sm:$0xff]
    %v5045 = vld [vmem:[%s6 + $0x3f8] sm:$0xff]
    %v5046 = vld [vmem:[%s6 + $0x400] sm:$0xff]
    %v5047 = vld [vmem:[%s6 + $0x408] sm:$0xff]
    %v5048 = vld [vmem:[%s6 + $0x410] sm:$0xff]
    %v5049 = vld [vmem:[%s6 + $0x418] sm:$0xff]
    %v5050 = vld [vmem:[%s6 + $0x420] sm:$0xff]
    %v5051 = vld [vmem:[%s6 + $0x428] sm:$0xff]
    %v5052 = vld [vmem:[%s6 + $0x430] sm:$0xff]
    %v5053 = vld [vmem:[%s6 + $0x438] sm:$0xff]
    %v5054 = vld [vmem:[%s6 + $0x440] sm:$0xff]
    %v5055 = vld [vmem:[%s6 + $0x448] sm:$0xff]
    %v5056 = vld [vmem:[%s6 + $0x450] sm:$0xff]
    %v5057 = vld [vmem:[%s6 + $0x458] sm:$0xff]
    %v5058 = vld [vmem:[%s6 + $0x460] sm:$0xff]
    %v5059 = vld [vmem:[%s6 + $0x468] sm:$0xff]
    %v5060 = vld [vmem:[%s6 + $0x470] sm:$0xff]
    %v5061 = vld [vmem:[%s6 + $0x478] sm:$0xff]
    %v5062 = vld [vmem:[%s6 + $0x480] sm:$0xff]
    %v5063 = vld [vmem:[%s6 + $0x488] sm:$0xff]
    %v5064 = vld [vmem:[%s6 + $0x490] sm:$0xff]
    %v5065 = vld [vmem:[%s6 + $0x498] sm:$0xff]
    %v5066 = vld [vmem:[%s6 + $0x4a0] sm:$0xff]
    %v5067 = vld [vmem:[%s6 + $0x4a8] sm:$0xff]
    %v5068 = vld [vmem:[%s6 + $0x4b0] sm:$0xff]
    %v5069 = vld [vmem:[%s6 + $0x4b8] sm:$0xff]
    %v5070 = vld [vmem:[%s6 + $0x4c0] sm:$0xff]
    %v5071 = vld [vmem:[%s6 + $0x4c8] sm:$0xff]
    %v5072 = vld [vmem:[%s6 + $0x4d0] sm:$0xff]
    %v5073 = vld [vmem:[%s6 + $0x4d8] sm:$0xff]
    %v5074 = vld [vmem:[%s6 + $0x4e0] sm:$0xff]
    %v5075 = vld [vmem:[%s6 + $0x4e8] sm:$0xff]
    %v5076 = vld [vmem:[%s6 + $0x4f0] sm:$0xff]
    %v5077 = vld [vmem:[%s6 + $0x4f8] sm:$0xff]
    %v5078 = vld [vmem:[%s6 + $0x500] sm:$0xff]
    %v5079 = vld [vmem:[%s6 + $0x508] sm:$0xff]
    %v5080 = vld [vmem:[%s6 + $0x510] sm:$0xff]
    %v5081 = vld [vmem:[%s6 + $0x518] sm:$0xff]
    %v5082 = vld [vmem:[%s6 + $0x520] sm:$0xff]
    %v5083 = vld [vmem:[%s6 + $0x528] sm:$0xff]
    %v5084 = vld [vmem:[%s6 + $0x530] sm:$0xff]
    %v5085 = vld [vmem:[%s6 + $0x538] sm:$0xff]
    %v5086 = vld [vmem:[%s6 + $0x540] sm:$0xff]
    %v5087 = vld [vmem:[%s6 + $0x548] sm:$0xff]
    %v5088 = vld [vmem:[%s6 + $0x550] sm:$0xff]
    %v5089 = vld [vmem:[%s6 + $0x558] sm:$0xff]
    %v5090 = vld [vmem:[%s6 + $0x560] sm:$0xff]
    %v5091 = vld [vmem:[%s6 + $0x568] sm:$0xff]
    %v5092 = vld [vmem:[%s6 + $0x570] sm:$0xff]
    %v5093 = vld [vmem:[%s6 + $0x578] sm:$0xff]
    %v5094 = vld [vmem:[%s6 + $0x580] sm:$0xff]
    %v5095 = vld [vmem:[%s6 + $0x588] sm:$0xff]
    %v5096 = vld [vmem:[%s6 + $0x590] sm:$0xff]
    %v5097 = vld [vmem:[%s6 + $0x598] sm:$0xff]
    %v5098 = vld [vmem:[%s6 + $0x5a0] sm:$0xff]
    %v5099 = vld [vmem:[%s6 + $0x5a8] sm:$0xff]
    %v5100 = vld [vmem:[%s6 + $0x5b0] sm:$0xff]
    %v5101 = vld [vmem:[%s6 + $0x5b8] sm:$0xff]
    %v5102 = vld [vmem:[%s6 + $0x5c0] sm:$0xff]
    %v5103 = vld [vmem:[%s6 + $0x5c8] sm:$0xff]
    %v5104 = vld [vmem:[%s6 + $0x5d0] sm:$0xff]
    %v5105 = vld [vmem:[%s6 + $0x5d8] sm:$0xff]
    %v5106 = vld [vmem:[%s6 + $0x5e0] sm:$0xff]
    %v5107 = vld [vmem:[%s6 + $0x5e8] sm:$0xff]
    %v5108 = vld [vmem:[%s6 + $0x5f0] sm:$0xff]
    %v5109 = vld [vmem:[%s6 + $0x5f8] sm:$0xff]
    %v5110 = vld [vmem:[%s6 + $0x600] sm:$0xff]
    %v5111 = vld [vmem:[%s6 + $0x608] sm:$0xff]
    %v5112 = vld [vmem:[%s6 + $0x610] sm:$0xff]
    %v5113 = vld [vmem:[%s6 + $0x618] sm:$0xff]
    %v5114 = vld [vmem:[%s6 + $0x620] sm:$0xff]
    %v5115 = vld [vmem:[%s6 + $0x628] sm:$0xff]
    %v5116 = vld [vmem:[%s6 + $0x630] sm:$0xff]
    %v5117 = vld [vmem:[%s6 + $0x638] sm:$0xff]
    %v5118 = vld [vmem:[%s6 + $0x640] sm:$0xff]
    %v5119 = vld [vmem:[%s6 + $0x648] sm:$0xff]
    %v5120 = vld [vmem:[%s6 + $0x650] sm:$0xff]
    %v5121 = vld [vmem:[%s6 + $0x658] sm:$0xff]
    %v5122 = vld [vmem:[%s6 + $0x660] sm:$0xff]
    %v5123 = vld [vmem:[%s6 + $0x668] sm:$0xff]
    %v5124 = vld [vmem:[%s6 + $0x670] sm:$0xff]
    %v5125 = vld [vmem:[%s6 + $0x678] sm:$0xff]
    %v5126 = vld [vmem:[%s6 + $0x680] sm:$0xff]
    %v5127 = vld [vmem:[%s6 + $0x688] sm:$0xff]
    %v5128 = vld [vmem:[%s6 + $0x690] sm:$0xff]
    %v5129 = vld [vmem:[%s6 + $0x698] sm:$0xff]
    %v5130 = vld [vmem:[%s6 + $0x6a0] sm:$0xff]
    %v5131 = vld [vmem:[%s6 + $0x6a8] sm:$0xff]
    %v5132 = vld [vmem:[%s6 + $0x6b0] sm:$0xff]
    %v5133 = vld [vmem:[%s6 + $0x6b8] sm:$0xff]
    %v5134 = vld [vmem:[%s6 + $0x6c0] sm:$0xff]
    %v5135 = vld [vmem:[%s6 + $0x6c8] sm:$0xff]
    %v5136 = vld [vmem:[%s6 + $0x6d0] sm:$0xff]
    %v5137 = vld [vmem:[%s6 + $0x6d8] sm:$0xff]
    %v5138 = vld [vmem:[%s6 + $0x6e0] sm:$0xff]
    %v5139 = vld [vmem:[%s6 + $0x6e8] sm:$0xff]
    %v5140 = vld [vmem:[%s6 + $0x6f0] sm:$0xff]
    %v5141 = vld [vmem:[%s6 + $0x6f8] sm:$0xff]
    %v5142 = vld [vmem:[%s6 + $0x700] sm:$0xff]
    %v5143 = vld [vmem:[%s6 + $0x708] sm:$0xff]
    %v5144 = vld [vmem:[%s6 + $0x710] sm:$0xff]
    %v5145 = vld [vmem:[%s6 + $0x718] sm:$0xff]
    %v5146 = vld [vmem:[%s6 + $0x720] sm:$0xff]
    %v5147 = vld [vmem:[%s6 + $0x728] sm:$0xff]
    %v5148 = vld [vmem:[%s6 + $0x730] sm:$0xff]
    %v5149 = vld [vmem:[%s6 + $0x738] sm:$0xff]
    %v5150 = vld [vmem:[%s6 + $0x740] sm:$0xff]
    %v5151 = vld [vmem:[%s6 + $0x748] sm:$0xff]
    %v5152 = vld [vmem:[%s6 + $0x750] sm:$0xff]
    %v5153 = vld [vmem:[%s6 + $0x758] sm:$0xff]
    %v5154 = vld [vmem:[%s6 + $0x760] sm:$0xff]
    %v5155 = vld [vmem:[%s6 + $0x768] sm:$0xff]
    %v5156 = vld [vmem:[%s6 + $0x770] sm:$0xff]
    %v5157 = vld [vmem:[%s6 + $0x778] sm:$0xff]
    %v5158 = vld [vmem:[%s6 + $0x780] sm:$0xff]
    %v5159 = vld [vmem:[%s6 + $0x788] sm:$0xff]
    %v5160 = vld [vmem:[%s6 + $0x790] sm:$0xff]
    %v5161 = vld [vmem:[%s6 + $0x798] sm:$0xff]
    %v5162 = vld [vmem:[%s6 + $0x7a0] sm:$0xff]
    %v5163 = vld [vmem:[%s6 + $0x7a8] sm:$0xff]
    %v5164 = vld [vmem:[%s6 + $0x7b0] sm:$0xff]
    %v5165 = vld [vmem:[%s6 + $0x7b8] sm:$0xff]
    %v5166 = vld [vmem:[%s6 + $0x7c0] sm:$0xff]
    %v5167 = vld [vmem:[%s6 + $0x7c8] sm:$0xff]
    %v5168 = vld [vmem:[%s6 + $0x7d0] sm:$0xff]
    %v5169 = vld [vmem:[%s6 + $0x7d8] sm:$0xff]
    %v5170 = vld [vmem:[%s6 + $0x7e0] sm:$0xff]
    %v5171 = vld [vmem:[%s6 + $0x7e8] sm:$0xff]
    %v5172 = vld [vmem:[%s6 + $0x7f0] sm:$0xff]
    %v5173 = vld [vmem:[%s6 + $0x7f8] sm:$0xff]
    %v5174 = vld [vmem:[%s6 + $0x800] sm:$0xff]
    %v5175 = vld [vmem:[%s6 + $0x808] sm:$0xff]
    %v5176 = vld [vmem:[%s6 + $0x810] sm:$0xff]
    %v5177 = vld [vmem:[%s6 + $0x818] sm:$0xff]
    %v5178 = vld [vmem:[%s6 + $0x820] sm:$0xff]
    %v5179 = vld [vmem:[%s6 + $0x828] sm:$0xff]
    %v5180 = vld [vmem:[%s6 + $0x830] sm:$0xff]
    %v5181 = vld [vmem:[%s6 + $0x838] sm:$0xff]
    %v5182 = vld [vmem:[%s6 + $0x840] sm:$0xff]
    %v5183 = vld [vmem:[%s6 + $0x848] sm:$0xff]
    %v5184 = vld [vmem:[%s6 + $0x850] sm:$0xff]
    %v5185 = vld [vmem:[%s6 + $0x858] sm:$0xff]
    %v5186 = vld [vmem:[%s6 + $0x860] sm:$0xff]
    %v5187 = vld [vmem:[%s6 + $0x868] sm:$0xff]
    %v5188 = vld [vmem:[%s6 + $0x870] sm:$0xff]
    %v5189 = vld [vmem:[%s6 + $0x878] sm:$0xff]
    %v5190 = vld [vmem:[%s6 + $0x880] sm:$0xff]
    %v5191 = vld [vmem:[%s6 + $0x888] sm:$0xff]
    %v5192 = vld [vmem:[%s6 + $0x890] sm:$0xff]
    %v5193 = vld [vmem:[%s6 + $0x898] sm:$0xff]
    %v5194 = vld [vmem:[%s6 + $0x8a0] sm:$0xff]
    %v5195 = vld [vmem:[%s6 + $0x8a8] sm:$0xff]
    %v5196 = vld [vmem:[%s6 + $0x8b0] sm:$0xff]
    %v5197 = vld [vmem:[%s6 + $0x8b8] sm:$0xff]
    %v5198 = vld [vmem:[%s6 + $0x8c0] sm:$0xff]
    %v5199 = vld [vmem:[%s6 + $0x8c8] sm:$0xff]
    %v5200 = vld [vmem:[%s6 + $0x8d0] sm:$0xff]
    %v5201 = vld [vmem:[%s6 + $0x8d8] sm:$0xff]
    %v5202 = vld [vmem:[%s6 + $0x8e0] sm:$0xff]
    %v5203 = vld [vmem:[%s6 + $0x8e8] sm:$0xff]
    %v5204 = vld [vmem:[%s6 + $0x8f0] sm:$0xff]
    %v5205 = vld [vmem:[%s6 + $0x8f8] sm:$0xff]
    %v5206 = vld [vmem:[%s6 + $0x900] sm:$0xff]
    %v5207 = vld [vmem:[%s6 + $0x908] sm:$0xff]
    %v5208 = vld [vmem:[%s6 + $0x910] sm:$0xff]
    %v5209 = vld [vmem:[%s6 + $0x918] sm:$0xff]
    %v5210 = vld [vmem:[%s6 + $0x920] sm:$0xff]
    %v5211 = vld [vmem:[%s6 + $0x928] sm:$0xff]
    %v5212 = vld [vmem:[%s6 + $0x930] sm:$0xff]
    %v5213 = vld [vmem:[%s6 + $0x938] sm:$0xff]
    %v5214 = vld [vmem:[%s6 + $0x940] sm:$0xff]
    %v5215 = vld [vmem:[%s6 + $0x948] sm:$0xff]
    %v5216 = vld [vmem:[%s6 + $0x950] sm:$0xff]
    %v5217 = vld [vmem:[%s6 + $0x958] sm:$0xff]
    %v5218 = vld [vmem:[%s6 + $0x960] sm:$0xff]
    %v5219 = vld [vmem:[%s6 + $0x968] sm:$0xff]
    %v5220 = vld [vmem:[%s6 + $0x970] sm:$0xff]
    %v5221 = vld [vmem:[%s6 + $0x978] sm:$0xff]
    %v5222 = vld [vmem:[%s6 + $0x980] sm:$0xff]
    %v5223 = vld [vmem:[%s6 + $0x988] sm:$0xff]
    %v5224 = vld [vmem:[%s6 + $0x990] sm:$0xff]
    %v5225 = vld [vmem:[%s6 + $0x998] sm:$0xff]
    %v5226 = vld [vmem:[%s6 + $0x9a0] sm:$0xff]
    %v5227 = vld [vmem:[%s6 + $0x9a8] sm:$0xff]
    %v5228 = vld [vmem:[%s6 + $0x9b0] sm:$0xff]
    %v5229 = vld [vmem:[%s6 + $0x9b8] sm:$0xff]
    %v5230 = vld [vmem:[%s6 + $0x9c0] sm:$0xff]
    %v5231 = vld [vmem:[%s6 + $0x9c8] sm:$0xff]
    %v5232 = vld [vmem:[%s6 + $0x9d0] sm:$0xff]
    %v5233 = vld [vmem:[%s6 + $0x9d8] sm:$0xff]
    %v5234 = vld [vmem:[%s6 + $0x9e0] sm:$0xff]
    %v5235 = vld [vmem:[%s6 + $0x9e8] sm:$0xff]
    %v5236 = vld [vmem:[%s6 + $0x9f0] sm:$0xff]
    %v5237 = vld [vmem:[%s6 + $0x9f8] sm:$0xff]
    %v5238 = vld [vmem:[%s6 + $0xa00] sm:$0xff]
    %v5239 = vld [vmem:[%s6 + $0xa08] sm:$0xff]
    %v5240 = vld [vmem:[%s6 + $0xa10] sm:$0xff]
    %v5241 = vld [vmem:[%s6 + $0xa18] sm:$0xff]
    %v5242 = vld [vmem:[%s6 + $0xa20] sm:$0xff]
    %v5243 = vld [vmem:[%s6 + $0xa28] sm:$0xff]
    %v5244 = vld [vmem:[%s6 + $0xa30] sm:$0xff]
    %v5245 = vld [vmem:[%s6 + $0xa38] sm:$0xff]
    %v5246 = vld [vmem:[%s6 + $0xa40] sm:$0xff]
    %v5247 = vld [vmem:[%s6 + $0xa48] sm:$0xff]
    %v5248 = vld [vmem:[%s6 + $0xa50] sm:$0xff]
    %v5249 = vld [vmem:[%s6 + $0xa58] sm:$0xff]
    %v5250 = vld [vmem:[%s6 + $0xa60] sm:$0xff]
    %v5251 = vld [vmem:[%s6 + $0xa68] sm:$0xff]
    %v5252 = vld [vmem:[%s6 + $0xa70] sm:$0xff]
    %v5253 = vld [vmem:[%s6 + $0xa78] sm:$0xff]
    %v5254 = vld [vmem:[%s6 + $0xa80] sm:$0xff]
    %v5255 = vld [vmem:[%s6 + $0xa88] sm:$0xff]
    %v5256 = vld [vmem:[%s6 + $0xa90] sm:$0xff]
    %v5257 = vld [vmem:[%s6 + $0xa98] sm:$0xff]
    %v5258 = vld [vmem:[%s6 + $0xaa0] sm:$0xff]
    %v5259 = vld [vmem:[%s6 + $0xaa8] sm:$0xff]
    %v5260 = vld [vmem:[%s6 + $0xab0] sm:$0xff]
    %v5261 = vld [vmem:[%s6 + $0xab8] sm:$0xff]
    %v5262 = vld [vmem:[%s6 + $0xac0] sm:$0xff]
    %v5263 = vld [vmem:[%s6 + $0xac8] sm:$0xff]
    %v5264 = vld [vmem:[%s6 + $0xad0] sm:$0xff]
    %v5265 = vld [vmem:[%s6 + $0xad8] sm:$0xff]
    %v5266 = vld [vmem:[%s6 + $0xae0] sm:$0xff]
    %v5267 = vld [vmem:[%s6 + $0xae8] sm:$0xff]
    %v5268 = vld [vmem:[%s6 + $0xaf0] sm:$0xff]
    %v5269 = vld [vmem:[%s6 + $0xaf8] sm:$0xff]
    %v5270 = vld [vmem:[%s6 + $0xb00] sm:$0xff]
    %v5271 = vld [vmem:[%s6 + $0xb08] sm:$0xff]
    %v5272 = vld [vmem:[%s6 + $0xb10] sm:$0xff]
    %v5273 = vld [vmem:[%s6 + $0xb18] sm:$0xff]
    %v5274 = vld [vmem:[%s6 + $0xb20] sm:$0xff]
    %v5275 = vld [vmem:[%s6 + $0xb28] sm:$0xff]
    %v5276 = vld [vmem:[%s6 + $0xb30] sm:$0xff]
    %v5277 = vld [vmem:[%s6 + $0xb38] sm:$0xff]
    %v5278 = vld [vmem:[%s6 + $0xb40] sm:$0xff]
    %v5279 = vld [vmem:[%s6 + $0xb48] sm:$0xff]
    %v5280 = vld [vmem:[%s6 + $0xb50] sm:$0xff]
    %v5281 = vld [vmem:[%s6 + $0xb58] sm:$0xff]
    %v5282 = vld [vmem:[%s6 + $0xb60] sm:$0xff]
    %v5283 = vld [vmem:[%s6 + $0xb68] sm:$0xff]
    %v5284 = vld [vmem:[%s6 + $0xb70] sm:$0xff]
    %v5285 = vld [vmem:[%s6 + $0xb78] sm:$0xff]
    %v5286 = vld [vmem:[%s6 + $0xb80] sm:$0xff]
    %v5287 = vld [vmem:[%s6 + $0xb88] sm:$0xff]
    %v5288 = vld [vmem:[%s6 + $0xb90] sm:$0xff]
    %v5289 = vld [vmem:[%s6 + $0xb98] sm:$0xff]
    %v5290 = vld [vmem:[%s6 + $0xba0] sm:$0xff]
    %v5291 = vld [vmem:[%s6 + $0xba8] sm:$0xff]
    %v5292 = vld [vmem:[%s6 + $0xbb0] sm:$0xff]
    %v5293 = vld [vmem:[%s6 + $0xbb8] sm:$0xff]
    %v5294 = vld [vmem:[%s6 + $0xbc0] sm:$0xff]
    %v5295 = vld [vmem:[%s6 + $0xbc8] sm:$0xff]
    %v5296 = vld [vmem:[%s6 + $0xbd0] sm:$0xff]
    %v5297 = vld [vmem:[%s6 + $0xbd8] sm:$0xff]
    %v5298 = vld [vmem:[%s6 + $0xbe0] sm:$0xff]
    %v5299 = vld [vmem:[%s6 + $0xbe8] sm:$0xff]
    %v5300 = vld [vmem:[%s6 + $0xbf0] sm:$0xff]
    %v5301 = vld [vmem:[%s6 + $0xbf8] sm:$0xff]
    %v5302 = vld [vmem:[%s6 + $0xc00] sm:$0xff]
    %v5303 = vld [vmem:[%s6 + $0xc08] sm:$0xff]
    %v5304 = vld [vmem:[%s6 + $0xc10] sm:$0xff]
    %v5305 = vld [vmem:[%s6 + $0xc18] sm:$0xff]
    %v5306 = vld [vmem:[%s6 + $0xc20] sm:$0xff]
    %v5307 = vld [vmem:[%s6 + $0xc28] sm:$0xff]
    %v5308 = vld [vmem:[%s6 + $0xc30] sm:$0xff]
    %v5309 = vld [vmem:[%s6 + $0xc38] sm:$0xff]
    %v5310 = vld [vmem:[%s6 + $0xc40] sm:$0xff]
    %v5311 = vld [vmem:[%s6 + $0xc48] sm:$0xff]
    %v5312 = vld [vmem:[%s6 + $0xc50] sm:$0xff]
    %v5313 = vld [vmem:[%s6 + $0xc58] sm:$0xff]
    %v5314 = vld [vmem:[%s6 + $0xc60] sm:$0xff]
    %v5315 = vld [vmem:[%s6 + $0xc68] sm:$0xff]
    %v5316 = vld [vmem:[%s6 + $0xc70] sm:$0xff]
    %v5317 = vld [vmem:[%s6 + $0xc78] sm:$0xff]
    %v5318 = vld [vmem:[%s6 + $0xc80] sm:$0xff]
    %v5319 = vld [vmem:[%s6 + $0xc88] sm:$0xff]
    %v5320 = vld [vmem:[%s6 + $0xc90] sm:$0xff]
    %v5321 = vld [vmem:[%s6 + $0xc98] sm:$0xff]
    %v5322 = vld [vmem:[%s6 + $0xca0] sm:$0xff]
    %v5323 = vld [vmem:[%s6 + $0xca8] sm:$0xff]
    %v5324 = vld [vmem:[%s6 + $0xcb0] sm:$0xff]
    %v5325 = vld [vmem:[%s6 + $0xcb8] sm:$0xff]
    %v5326 = vld [vmem:[%s6 + $0xcc0] sm:$0xff]
    %v5327 = vld [vmem:[%s6 + $0xcc8] sm:$0xff]
    %v5328 = vld [vmem:[%s6 + $0xcd0] sm:$0xff]
    %v5329 = vld [vmem:[%s6 + $0xcd8] sm:$0xff]
    %v5330 = vld [vmem:[%s6 + $0xce0] sm:$0xff]
    %v5331 = vld [vmem:[%s6 + $0xce8] sm:$0xff]
    %v5332 = vld [vmem:[%s6 + $0xcf0] sm:$0xff]
    %v5333 = vld [vmem:[%s6 + $0xcf8] sm:$0xff]
    %v5334 = vld [vmem:[%s6 + $0xd00] sm:$0xff]
    %v5335 = vld [vmem:[%s6 + $0xd08] sm:$0xff]
    %v5336 = vld [vmem:[%s6 + $0xd10] sm:$0xff]
    %v5337 = vld [vmem:[%s6 + $0xd18] sm:$0xff]
    %v5338 = vld [vmem:[%s6 + $0xd20] sm:$0xff]
    %v5339 = vld [vmem:[%s6 + $0xd28] sm:$0xff]
    %v5340 = vld [vmem:[%s6 + $0xd30] sm:$0xff]
    %v5341 = vld [vmem:[%s6 + $0xd38] sm:$0xff]
    %v5342 = vld [vmem:[%s6 + $0xd40] sm:$0xff]
    %v5343 = vld [vmem:[%s6 + $0xd48] sm:$0xff]
    %v5344 = vld [vmem:[%s6 + $0xd50] sm:$0xff]
    %v5345 = vld [vmem:[%s6 + $0xd58] sm:$0xff]
    %v5346 = vld [vmem:[%s6 + $0xd60] sm:$0xff]
    %v5347 = vld [vmem:[%s6 + $0xd68] sm:$0xff]
    %v5348 = vld [vmem:[%s6 + $0xd70] sm:$0xff]
    %v5349 = vld [vmem:[%s6 + $0xd78] sm:$0xff]
    %v5350 = vld [vmem:[%s6 + $0xd80] sm:$0xff]
    %v5351 = vld [vmem:[%s6 + $0xd88] sm:$0xff]
    %v5352 = vld [vmem:[%s6 + $0xd90] sm:$0xff]
    %v5353 = vld [vmem:[%s6 + $0xd98] sm:$0xff]
    %v5354 = vld [vmem:[%s6 + $0xda0] sm:$0xff]
    %v5355 = vld [vmem:[%s6 + $0xda8] sm:$0xff]
    %v5356 = vld [vmem:[%s6 + $0xdb0] sm:$0xff]
    %v5357 = vld [vmem:[%s6 + $0xdb8] sm:$0xff]
    %v5358 = vld [vmem:[%s6 + $0xdc0] sm:$0xff]
    %v5359 = vld [vmem:[%s6 + $0xdc8] sm:$0xff]
    %v5360 = vld [vmem:[%s6 + $0xdd0] sm:$0xff]
    %v5361 = vld [vmem:[%s6 + $0xdd8] sm:$0xff]
    %v5362 = vld [vmem:[%s6 + $0xde0] sm:$0xff]
    %v5363 = vld [vmem:[%s6 + $0xde8] sm:$0xff]
    %v5364 = vld [vmem:[%s6 + $0xdf0] sm:$0xff]
    %v5365 = vld [vmem:[%s6 + $0xdf8] sm:$0xff]
    %v5366 = vld [vmem:[%s6 + $0xe00] sm:$0xff]
    %v5367 = vld [vmem:[%s6 + $0xe08] sm:$0xff]
    %v5368 = vld [vmem:[%s6 + $0xe10] sm:$0xff]
    %v5369 = vld [vmem:[%s6 + $0xe18] sm:$0xff]
    %v5370 = vld [vmem:[%s6 + $0xe20] sm:$0xff]
    %v5371 = vld [vmem:[%s6 + $0xe28] sm:$0xff]
    %v5372 = vld [vmem:[%s6 + $0xe30] sm:$0xff]
    %v5373 = vld [vmem:[%s6 + $0xe38] sm:$0xff]
    %v5374 = vld [vmem:[%s6 + $0xe40] sm:$0xff]
    %v5375 = vld [vmem:[%s6 + $0xe48] sm:$0xff]
    %v5376 = vld [vmem:[%s6 + $0xe50] sm:$0xff]
    %v5377 = vld [vmem:[%s6 + $0xe58] sm:$0xff]
    %v5378 = vld [vmem:[%s6 + $0xe60] sm:$0xff]
    %v5379 = vld [vmem:[%s6 + $0xe68] sm:$0xff]
    %v5380 = vld [vmem:[%s6 + $0xe70] sm:$0xff]
    %v5381 = vld [vmem:[%s6 + $0xe78] sm:$0xff]
    %v5382 = vld [vmem:[%s6 + $0xe80] sm:$0xff]
    %v5383 = vld [vmem:[%s6 + $0xe88] sm:$0xff]
    %v5384 = vld [vmem:[%s6 + $0xe90] sm:$0xff]
    %v5385 = vld [vmem:[%s6 + $0xe98] sm:$0xff]
    %v5386 = vld [vmem:[%s6 + $0xea0] sm:$0xff]
    %v5387 = vld [vmem:[%s6 + $0xea8] sm:$0xff]
    %v5388 = vld [vmem:[%s6 + $0xeb0] sm:$0xff]
    %v5389 = vld [vmem:[%s6 + $0xeb8] sm:$0xff]
    %v5390 = vld [vmem:[%s6 + $0xec0] sm:$0xff]
    %v5391 = vld [vmem:[%s6 + $0xec8] sm:$0xff]
    %v5392 = vld [vmem:[%s6 + $0xed0] sm:$0xff]
    %v5393 = vld [vmem:[%s6 + $0xed8] sm:$0xff]
    %v5394 = vld [vmem:[%s6 + $0xee0] sm:$0xff]
    %v5395 = vld [vmem:[%s6 + $0xee8] sm:$0xff]
    %v5396 = vld [vmem:[%s6 + $0xef0] sm:$0xff]
    %v5397 = vld [vmem:[%s6 + $0xef8] sm:$0xff]
    %v5398 = vld [vmem:[%s6 + $0xf00] sm:$0xff]
    %v5399 = vld [vmem:[%s6 + $0xf08] sm:$0xff]
    %v5400 = vld [vmem:[%s6 + $0xf10] sm:$0xff]
    %v5401 = vld [vmem:[%s6 + $0xf18] sm:$0xff]
    %v5402 = vld [vmem:[%s6 + $0xf20] sm:$0xff]
    %v5403 = vld [vmem:[%s6 + $0xf28] sm:$0xff]
    %v5404 = vld [vmem:[%s6 + $0xf30] sm:$0xff]
    %v5405 = vld [vmem:[%s6 + $0xf38] sm:$0xff]
    %v5406 = vld [vmem:[%s6 + $0xf40] sm:$0xff]
    %v5407 = vld [vmem:[%s6 + $0xf48] sm:$0xff]
    %v5408 = vld [vmem:[%s6 + $0xf50] sm:$0xff]
    %v5409 = vld [vmem:[%s6 + $0xf58] sm:$0xff]
    %v5410 = vld [vmem:[%s6 + $0xf60] sm:$0xff]
    %v5411 = vld [vmem:[%s6 + $0xf68] sm:$0xff]
    %v5412 = vld [vmem:[%s6 + $0xf70] sm:$0xff]
    %v5413 = vld [vmem:[%s6 + $0xf78] sm:$0xff]
    %v5414 = vld [vmem:[%s6 + $0xf80] sm:$0xff]
    %v5415 = vld [vmem:[%s6 + $0xf88] sm:$0xff]
    %v5416 = vld [vmem:[%s6 + $0xf90] sm:$0xff]
    %v5417 = vld [vmem:[%s6 + $0xf98] sm:$0xff]
    %v5418 = vld [vmem:[%s6 + $0xfa0] sm:$0xff]
    %v5419 = vld [vmem:[%s6 + $0xfa8] sm:$0xff]
    %v5420 = vld [vmem:[%s6 + $0xfb0] sm:$0xff]
    %v5421 = vld [vmem:[%s6 + $0xfb8] sm:$0xff]
    %v5422 = vld [vmem:[%s6 + $0xfc0] sm:$0xff]
    %v5423 = vld [vmem:[%s6 + $0xfc8] sm:$0xff]
    %v5424 = vld [vmem:[%s6 + $0xfd0] sm:$0xff]
    %v5425 = vld [vmem:[%s6 + $0xfd8] sm:$0xff]
    %v5426 = vld [vmem:[%s6 + $0xfe0] sm:$0xff]
    %v5427 = vld [vmem:[%s6 + $0xfe8] sm:$0xff]
    %v5428 = vld [vmem:[%s6 + $0xff0] sm:$0xff]
    %v5429 = vld [vmem:[%s6 + $0xff8] sm:$0xff]
    %v5942 = vunpack.c.l.b16 %v4918
    %v5943 = vunpack.c.h.b16 %v4918
    %v5944 = vunpack.c.l.b16 %v4919
    %v5945 = vunpack.c.h.b16 %v4919
    %v5946 = vunpack.c.l.b16 %v4920
    %v5947 = vunpack.c.h.b16 %v4920
    %v5948 = vunpack.c.l.b16 %v4921
    %v5949 = vunpack.c.h.b16 %v4921
    %v5950 = vunpack.c.l.b16 %v4922
    %v5951 = vunpack.c.h.b16 %v4922
    %v5952 = vunpack.c.l.b16 %v4923
    %v5953 = vunpack.c.h.b16 %v4923
    %v5954 = vunpack.c.l.b16 %v4924
    %v5955 = vunpack.c.h.b16 %v4924
    %v5956 = vunpack.c.l.b16 %v4925
    %v5957 = vunpack.c.h.b16 %v4925
    %v5958 = vunpack.c.l.b16 %v4926
    %v5959 = vunpack.c.h.b16 %v4926
    %v5960 = vunpack.c.l.b16 %v4927
    %v5961 = vunpack.c.h.b16 %v4927
    %v5962 = vunpack.c.l.b16 %v4928
    %v5963 = vunpack.c.h.b16 %v4928
    %v5964 = vunpack.c.l.b16 %v4929
    %v5965 = vunpack.c.h.b16 %v4929
    %v5966 = vunpack.c.l.b16 %v4930
    %v5967 = vunpack.c.h.b16 %v4930
    %v5968 = vunpack.c.l.b16 %v4931
    %v5969 = vunpack.c.h.b16 %v4931
    %v5970 = vunpack.c.l.b16 %v4932
    %v5971 = vunpack.c.h.b16 %v4932
    %v5972 = vunpack.c.l.b16 %v4933
    %v5973 = vunpack.c.h.b16 %v4933
    %v5974 = vunpack.c.l.b16 %v4934
    %v5975 = vunpack.c.h.b16 %v4934
    %v5976 = vunpack.c.l.b16 %v4935
    %v5977 = vunpack.c.h.b16 %v4935
    %v5978 = vunpack.c.l.b16 %v4936
    %v5979 = vunpack.c.h.b16 %v4936
    %v5980 = vunpack.c.l.b16 %v4937
    %v5981 = vunpack.c.h.b16 %v4937
    %v5982 = vunpack.c.l.b16 %v4938
    %v5983 = vunpack.c.h.b16 %v4938
    %v5984 = vunpack.c.l.b16 %v4939
    %v5985 = vunpack.c.h.b16 %v4939
    %v5986 = vunpack.c.l.b16 %v4940
    %v5987 = vunpack.c.h.b16 %v4940
    %v5988 = vunpack.c.l.b16 %v4941
    %v5989 = vunpack.c.h.b16 %v4941
    %v5990 = vunpack.c.l.b16 %v4942
    %v5991 = vunpack.c.h.b16 %v4942
    %v5992 = vunpack.c.l.b16 %v4943
    %v5993 = vunpack.c.h.b16 %v4943
    %v5994 = vunpack.c.l.b16 %v4944
    %v5995 = vunpack.c.h.b16 %v4944
    %v5996 = vunpack.c.l.b16 %v4945
    %v5997 = vunpack.c.h.b16 %v4945
    %v5998 = vunpack.c.l.b16 %v4946
    %v5999 = vunpack.c.h.b16 %v4946
    %v6000 = vunpack.c.l.b16 %v4947
    %v6001 = vunpack.c.h.b16 %v4947
    %v6002 = vunpack.c.l.b16 %v4948
    %v6003 = vunpack.c.h.b16 %v4948
    %v6004 = vunpack.c.l.b16 %v4949
    %v6005 = vunpack.c.h.b16 %v4949
    %v6006 = vunpack.c.l.b16 %v4950
    %v6007 = vunpack.c.h.b16 %v4950
    %v6008 = vunpack.c.l.b16 %v4951
    %v6009 = vunpack.c.h.b16 %v4951
    %v6010 = vunpack.c.l.b16 %v4952
    %v6011 = vunpack.c.h.b16 %v4952
    %v6012 = vunpack.c.l.b16 %v4953
    %v6013 = vunpack.c.h.b16 %v4953
    %v6014 = vunpack.c.l.b16 %v4954
    %v6015 = vunpack.c.h.b16 %v4954
    %v6016 = vunpack.c.l.b16 %v4955
    %v6017 = vunpack.c.h.b16 %v4955
    %v6018 = vunpack.c.l.b16 %v4956
    %v6019 = vunpack.c.h.b16 %v4956
    %v6020 = vunpack.c.l.b16 %v4957
    %v6021 = vunpack.c.h.b16 %v4957
    %v6022 = vunpack.c.l.b16 %v4958
    %v6023 = vunpack.c.h.b16 %v4958
    %v6024 = vunpack.c.l.b16 %v4959
    %v6025 = vunpack.c.h.b16 %v4959
    %v6026 = vunpack.c.l.b16 %v4960
    %v6027 = vunpack.c.h.b16 %v4960
    %v6028 = vunpack.c.l.b16 %v4961
    %v6029 = vunpack.c.h.b16 %v4961
    %v6030 = vunpack.c.l.b16 %v4962
    %v6031 = vunpack.c.h.b16 %v4962
    %v6032 = vunpack.c.l.b16 %v4963
    %v6033 = vunpack.c.h.b16 %v4963
    %v6034 = vunpack.c.l.b16 %v4964
    %v6035 = vunpack.c.h.b16 %v4964
    %v6036 = vunpack.c.l.b16 %v4965
    %v6037 = vunpack.c.h.b16 %v4965
    %v6038 = vunpack.c.l.b16 %v4966
    %v6039 = vunpack.c.h.b16 %v4966
    %v6040 = vunpack.c.l.b16 %v4967
    %v6041 = vunpack.c.h.b16 %v4967
    %v6042 = vunpack.c.l.b16 %v4968
    %v6043 = vunpack.c.h.b16 %v4968
    %v6044 = vunpack.c.l.b16 %v4969
    %v6045 = vunpack.c.h.b16 %v4969
    %v6046 = vunpack.c.l.b16 %v4970
    %v6047 = vunpack.c.h.b16 %v4970
    %v6048 = vunpack.c.l.b16 %v4971
    %v6049 = vunpack.c.h.b16 %v4971
    %v6050 = vunpack.c.l.b16 %v4972
    %v6051 = vunpack.c.h.b16 %v4972
    %v6052 = vunpack.c.l.b16 %v4973
    %v6053 = vunpack.c.h.b16 %v4973
    %v6054 = vunpack.c.l.b16 %v4974
    %v6055 = vunpack.c.h.b16 %v4974
    %v6056 = vunpack.c.l.b16 %v4975
    %v6057 = vunpack.c.h.b16 %v4975
    %v6058 = vunpack.c.l.b16 %v4976
    %v6059 = vunpack.c.h.b16 %v4976
    %v6060 = vunpack.c.l.b16 %v4977
    %v6061 = vunpack.c.h.b16 %v4977
    %v6062 = vunpack.c.l.b16 %v4978
    %v6063 = vunpack.c.h.b16 %v4978
    %v6064 = vunpack.c.l.b16 %v4979
    %v6065 = vunpack.c.h.b16 %v4979
    %v6066 = vunpack.c.l.b16 %v4980
    %v6067 = vunpack.c.h.b16 %v4980
    %v6068 = vunpack.c.l.b16 %v4981
    %v6069 = vunpack.c.h.b16 %v4981
    %v6070 = vunpack.c.l.b16 %v4982
    %v6071 = vunpack.c.h.b16 %v4982
    %v6072 = vunpack.c.l.b16 %v4983
    %v6073 = vunpack.c.h.b16 %v4983
    %v6074 = vunpack.c.l.b16 %v4984
    %v6075 = vunpack.c.h.b16 %v4984
    %v6076 = vunpack.c.l.b16 %v4985
    %v6077 = vunpack.c.h.b16 %v4985
    %v6078 = vunpack.c.l.b16 %v4986
    %v6079 = vunpack.c.h.b16 %v4986
    %v6080 = vunpack.c.l.b16 %v4987
    %v6081 = vunpack.c.h.b16 %v4987
    %v6082 = vunpack.c.l.b16 %v4988
    %v6083 = vunpack.c.h.b16 %v4988
    %v6084 = vunpack.c.l.b16 %v4989
    %v6085 = vunpack.c.h.b16 %v4989
    %v6086 = vunpack.c.l.b16 %v4990
    %v6087 = vunpack.c.h.b16 %v4990
    %v6088 = vunpack.c.l.b16 %v4991
    %v6089 = vunpack.c.h.b16 %v4991
    %v6090 = vunpack.c.l.b16 %v4992
    %v6091 = vunpack.c.h.b16 %v4992
    %v6092 = vunpack.c.l.b16 %v4993
    %v6093 = vunpack.c.h.b16 %v4993
    %v6094 = vunpack.c.l.b16 %v4994
    %v6095 = vunpack.c.h.b16 %v4994
    %v6096 = vunpack.c.l.b16 %v4995
    %v6097 = vunpack.c.h.b16 %v4995
    %v6098 = vunpack.c.l.b16 %v4996
    %v6099 = vunpack.c.h.b16 %v4996
    %v6100 = vunpack.c.l.b16 %v4997
    %v6101 = vunpack.c.h.b16 %v4997
    %v6102 = vunpack.c.l.b16 %v4998
    %v6103 = vunpack.c.h.b16 %v4998
    %v6104 = vunpack.c.l.b16 %v4999
    %v6105 = vunpack.c.h.b16 %v4999
    %v6106 = vunpack.c.l.b16 %v5000
    %v6107 = vunpack.c.h.b16 %v5000
    %v6108 = vunpack.c.l.b16 %v5001
    %v6109 = vunpack.c.h.b16 %v5001
    %v6110 = vunpack.c.l.b16 %v5002
    %v6111 = vunpack.c.h.b16 %v5002
    %v6112 = vunpack.c.l.b16 %v5003
    %v6113 = vunpack.c.h.b16 %v5003
    %v6114 = vunpack.c.l.b16 %v5004
    %v6115 = vunpack.c.h.b16 %v5004
    %v6116 = vunpack.c.l.b16 %v5005
    %v6117 = vunpack.c.h.b16 %v5005
    %v6118 = vunpack.c.l.b16 %v5006
    %v6119 = vunpack.c.h.b16 %v5006
    %v6120 = vunpack.c.l.b16 %v5007
    %v6121 = vunpack.c.h.b16 %v5007
    %v6122 = vunpack.c.l.b16 %v5008
    %v6123 = vunpack.c.h.b16 %v5008
    %v6124 = vunpack.c.l.b16 %v5009
    %v6125 = vunpack.c.h.b16 %v5009
    %v6126 = vunpack.c.l.b16 %v5010
    %v6127 = vunpack.c.h.b16 %v5010
    %v6128 = vunpack.c.l.b16 %v5011
    %v6129 = vunpack.c.h.b16 %v5011
    %v6130 = vunpack.c.l.b16 %v5012
    %v6131 = vunpack.c.h.b16 %v5012
    %v6132 = vunpack.c.l.b16 %v5013
    %v6133 = vunpack.c.h.b16 %v5013
    %v6134 = vunpack.c.l.b16 %v5014
    %v6135 = vunpack.c.h.b16 %v5014
    %v6136 = vunpack.c.l.b16 %v5015
    %v6137 = vunpack.c.h.b16 %v5015
    %v6138 = vunpack.c.l.b16 %v5016
    %v6139 = vunpack.c.h.b16 %v5016
    %v6140 = vunpack.c.l.b16 %v5017
    %v6141 = vunpack.c.h.b16 %v5017
    %v6142 = vunpack.c.l.b16 %v5018
    %v6143 = vunpack.c.h.b16 %v5018
    %v6144 = vunpack.c.l.b16 %v5019
    %v6145 = vunpack.c.h.b16 %v5019
    %v6146 = vunpack.c.l.b16 %v5020
    %v6147 = vunpack.c.h.b16 %v5020
    %v6148 = vunpack.c.l.b16 %v5021
    %v6149 = vunpack.c.h.b16 %v5021
    %v6150 = vunpack.c.l.b16 %v5022
    %v6151 = vunpack.c.h.b16 %v5022
    %v6152 = vunpack.c.l.b16 %v5023
    %v6153 = vunpack.c.h.b16 %v5023
    %v6154 = vunpack.c.l.b16 %v5024
    %v6155 = vunpack.c.h.b16 %v5024
    %v6156 = vunpack.c.l.b16 %v5025
    %v6157 = vunpack.c.h.b16 %v5025
    %v6158 = vunpack.c.l.b16 %v5026
    %v6159 = vunpack.c.h.b16 %v5026
    %v6160 = vunpack.c.l.b16 %v5027
    %v6161 = vunpack.c.h.b16 %v5027
    %v6162 = vunpack.c.l.b16 %v5028
    %v6163 = vunpack.c.h.b16 %v5028
    %v6164 = vunpack.c.l.b16 %v5029
    %v6165 = vunpack.c.h.b16 %v5029
    %v6166 = vunpack.c.l.b16 %v5030
    %v6167 = vunpack.c.h.b16 %v5030
    %v6168 = vunpack.c.l.b16 %v5031
    %v6169 = vunpack.c.h.b16 %v5031
    %v6170 = vunpack.c.l.b16 %v5032
    %v6171 = vunpack.c.h.b16 %v5032
    %v6172 = vunpack.c.l.b16 %v5033
    %v6173 = vunpack.c.h.b16 %v5033
    %v6174 = vunpack.c.l.b16 %v5034
    %v6175 = vunpack.c.h.b16 %v5034
    %v6176 = vunpack.c.l.b16 %v5035
    %v6177 = vunpack.c.h.b16 %v5035
    %v6178 = vunpack.c.l.b16 %v5036
    %v6179 = vunpack.c.h.b16 %v5036
    %v6180 = vunpack.c.l.b16 %v5037
    %v6181 = vunpack.c.h.b16 %v5037
    %v6182 = vunpack.c.l.b16 %v5038
    %v6183 = vunpack.c.h.b16 %v5038
    %v6184 = vunpack.c.l.b16 %v5039
    %v6185 = vunpack.c.h.b16 %v5039
    %v6186 = vunpack.c.l.b16 %v5040
    %v6187 = vunpack.c.h.b16 %v5040
    %v6188 = vunpack.c.l.b16 %v5041
    %v6189 = vunpack.c.h.b16 %v5041
    %v6190 = vunpack.c.l.b16 %v5042
    %v6191 = vunpack.c.h.b16 %v5042
    %v6192 = vunpack.c.l.b16 %v5043
    %v6193 = vunpack.c.h.b16 %v5043
    %v6194 = vunpack.c.l.b16 %v5044
    %v6195 = vunpack.c.h.b16 %v5044
    %v6196 = vunpack.c.l.b16 %v5045
    %v6197 = vunpack.c.h.b16 %v5045
    %v6198 = vunpack.c.l.b16 %v5046
    %v6199 = vunpack.c.h.b16 %v5046
    %v6200 = vunpack.c.l.b16 %v5047
    %v6201 = vunpack.c.h.b16 %v5047
    %v6202 = vunpack.c.l.b16 %v5048
    %v6203 = vunpack.c.h.b16 %v5048
    %v6204 = vunpack.c.l.b16 %v5049
    %v6205 = vunpack.c.h.b16 %v5049
    %v6206 = vunpack.c.l.b16 %v5050
    %v6207 = vunpack.c.h.b16 %v5050
    %v6208 = vunpack.c.l.b16 %v5051
    %v6209 = vunpack.c.h.b16 %v5051
    %v6210 = vunpack.c.l.b16 %v5052
    %v6211 = vunpack.c.h.b16 %v5052
    %v6212 = vunpack.c.l.b16 %v5053
    %v6213 = vunpack.c.h.b16 %v5053
    %v6214 = vunpack.c.l.b16 %v5054
    %v6215 = vunpack.c.h.b16 %v5054
    %v6216 = vunpack.c.l.b16 %v5055
    %v6217 = vunpack.c.h.b16 %v5055
    %v6218 = vunpack.c.l.b16 %v5056
    %v6219 = vunpack.c.h.b16 %v5056
    %v6220 = vunpack.c.l.b16 %v5057
    %v6221 = vunpack.c.h.b16 %v5057
    %v6222 = vunpack.c.l.b16 %v5058
    %v6223 = vunpack.c.h.b16 %v5058
    %v6224 = vunpack.c.l.b16 %v5059
    %v6225 = vunpack.c.h.b16 %v5059
    %v6226 = vunpack.c.l.b16 %v5060
    %v6227 = vunpack.c.h.b16 %v5060
    %v6228 = vunpack.c.l.b16 %v5061
    %v6229 = vunpack.c.h.b16 %v5061
    %v6230 = vunpack.c.l.b16 %v5062
    %v6231 = vunpack.c.h.b16 %v5062
    %v6232 = vunpack.c.l.b16 %v5063
    %v6233 = vunpack.c.h.b16 %v5063
    %v6234 = vunpack.c.l.b16 %v5064
    %v6235 = vunpack.c.h.b16 %v5064
    %v6236 = vunpack.c.l.b16 %v5065
    %v6237 = vunpack.c.h.b16 %v5065
    %v6238 = vunpack.c.l.b16 %v5066
    %v6239 = vunpack.c.h.b16 %v5066
    %v6240 = vunpack.c.l.b16 %v5067
    %v6241 = vunpack.c.h.b16 %v5067
    %v6242 = vunpack.c.l.b16 %v5068
    %v6243 = vunpack.c.h.b16 %v5068
    %v6244 = vunpack.c.l.b16 %v5069
    %v6245 = vunpack.c.h.b16 %v5069
    %v6246 = vunpack.c.l.b16 %v5070
    %v6247 = vunpack.c.h.b16 %v5070
    %v6248 = vunpack.c.l.b16 %v5071
    %v6249 = vunpack.c.h.b16 %v5071
    %v6250 = vunpack.c.l.b16 %v5072
    %v6251 = vunpack.c.h.b16 %v5072
    %v6252 = vunpack.c.l.b16 %v5073
    %v6253 = vunpack.c.h.b16 %v5073
    %v6254 = vunpack.c.l.b16 %v5074
    %v6255 = vunpack.c.h.b16 %v5074
    %v6256 = vunpack.c.l.b16 %v5075
    %v6257 = vunpack.c.h.b16 %v5075
    %v6258 = vunpack.c.l.b16 %v5076
    %v6259 = vunpack.c.h.b16 %v5076
    %v6260 = vunpack.c.l.b16 %v5077
    %v6261 = vunpack.c.h.b16 %v5077
    %v6262 = vunpack.c.l.b16 %v5078
    %v6263 = vunpack.c.h.b16 %v5078
    %v6264 = vunpack.c.l.b16 %v5079
    %v6265 = vunpack.c.h.b16 %v5079
    %v6266 = vunpack.c.l.b16 %v5080
    %v6267 = vunpack.c.h.b16 %v5080
    %v6268 = vunpack.c.l.b16 %v5081
    %v6269 = vunpack.c.h.b16 %v5081
    %v6270 = vunpack.c.l.b16 %v5082
    %v6271 = vunpack.c.h.b16 %v5082
    %v6272 = vunpack.c.l.b16 %v5083
    %v6273 = vunpack.c.h.b16 %v5083
    %v6274 = vunpack.c.l.b16 %v5084
    %v6275 = vunpack.c.h.b16 %v5084
    %v6276 = vunpack.c.l.b16 %v5085
    %v6277 = vunpack.c.h.b16 %v5085
    %v6278 = vunpack.c.l.b16 %v5086
    %v6279 = vunpack.c.h.b16 %v5086
    %v6280 = vunpack.c.l.b16 %v5087
    %v6281 = vunpack.c.h.b16 %v5087
    %v6282 = vunpack.c.l.b16 %v5088
    %v6283 = vunpack.c.h.b16 %v5088
    %v6284 = vunpack.c.l.b16 %v5089
    %v6285 = vunpack.c.h.b16 %v5089
    %v6286 = vunpack.c.l.b16 %v5090
    %v6287 = vunpack.c.h.b16 %v5090
    %v6288 = vunpack.c.l.b16 %v5091
    %v6289 = vunpack.c.h.b16 %v5091
    %v6290 = vunpack.c.l.b16 %v5092
    %v6291 = vunpack.c.h.b16 %v5092
    %v6292 = vunpack.c.l.b16 %v5093
    %v6293 = vunpack.c.h.b16 %v5093
    %v6294 = vunpack.c.l.b16 %v5094
    %v6295 = vunpack.c.h.b16 %v5094
    %v6296 = vunpack.c.l.b16 %v5095
    %v6297 = vunpack.c.h.b16 %v5095
    %v6298 = vunpack.c.l.b16 %v5096
    %v6299 = vunpack.c.h.b16 %v5096
    %v6300 = vunpack.c.l.b16 %v5097
    %v6301 = vunpack.c.h.b16 %v5097
    %v6302 = vunpack.c.l.b16 %v5098
    %v6303 = vunpack.c.h.b16 %v5098
    %v6304 = vunpack.c.l.b16 %v5099
    %v6305 = vunpack.c.h.b16 %v5099
    %v6306 = vunpack.c.l.b16 %v5100
    %v6307 = vunpack.c.h.b16 %v5100
    %v6308 = vunpack.c.l.b16 %v5101
    %v6309 = vunpack.c.h.b16 %v5101
    %v6310 = vunpack.c.l.b16 %v5102
    %v6311 = vunpack.c.h.b16 %v5102
    %v6312 = vunpack.c.l.b16 %v5103
    %v6313 = vunpack.c.h.b16 %v5103
    %v6314 = vunpack.c.l.b16 %v5104
    %v6315 = vunpack.c.h.b16 %v5104
    %v6316 = vunpack.c.l.b16 %v5105
    %v6317 = vunpack.c.h.b16 %v5105
    %v6318 = vunpack.c.l.b16 %v5106
    %v6319 = vunpack.c.h.b16 %v5106
    %v6320 = vunpack.c.l.b16 %v5107
    %v6321 = vunpack.c.h.b16 %v5107
    %v6322 = vunpack.c.l.b16 %v5108
    %v6323 = vunpack.c.h.b16 %v5108
    %v6324 = vunpack.c.l.b16 %v5109
    %v6325 = vunpack.c.h.b16 %v5109
    %v6326 = vunpack.c.l.b16 %v5110
    %v6327 = vunpack.c.h.b16 %v5110
    %v6328 = vunpack.c.l.b16 %v5111
    %v6329 = vunpack.c.h.b16 %v5111
    %v6330 = vunpack.c.l.b16 %v5112
    %v6331 = vunpack.c.h.b16 %v5112
    %v6332 = vunpack.c.l.b16 %v5113
    %v6333 = vunpack.c.h.b16 %v5113
    %v6334 = vunpack.c.l.b16 %v5114
    %v6335 = vunpack.c.h.b16 %v5114
    %v6336 = vunpack.c.l.b16 %v5115
    %v6337 = vunpack.c.h.b16 %v5115
    %v6338 = vunpack.c.l.b16 %v5116
    %v6339 = vunpack.c.h.b16 %v5116
    %v6340 = vunpack.c.l.b16 %v5117
    %v6341 = vunpack.c.h.b16 %v5117
    %v6342 = vunpack.c.l.b16 %v5118
    %v6343 = vunpack.c.h.b16 %v5118
    %v6344 = vunpack.c.l.b16 %v5119
    %v6345 = vunpack.c.h.b16 %v5119
    %v6346 = vunpack.c.l.b16 %v5120
    %v6347 = vunpack.c.h.b16 %v5120
    %v6348 = vunpack.c.l.b16 %v5121
    %v6349 = vunpack.c.h.b16 %v5121
    %v6350 = vunpack.c.l.b16 %v5122
    %v6351 = vunpack.c.h.b16 %v5122
    %v6352 = vunpack.c.l.b16 %v5123
    %v6353 = vunpack.c.h.b16 %v5123
    %v6354 = vunpack.c.l.b16 %v5124
    %v6355 = vunpack.c.h.b16 %v5124
    %v6356 = vunpack.c.l.b16 %v5125
    %v6357 = vunpack.c.h.b16 %v5125
    %v6358 = vunpack.c.l.b16 %v5126
    %v6359 = vunpack.c.h.b16 %v5126
    %v6360 = vunpack.c.l.b16 %v5127
    %v6361 = vunpack.c.h.b16 %v5127
    %v6362 = vunpack.c.l.b16 %v5128
    %v6363 = vunpack.c.h.b16 %v5128
    %v6364 = vunpack.c.l.b16 %v5129
    %v6365 = vunpack.c.h.b16 %v5129
    %v6366 = vunpack.c.l.b16 %v5130
    %v6367 = vunpack.c.h.b16 %v5130
    %v6368 = vunpack.c.l.b16 %v5131
    %v6369 = vunpack.c.h.b16 %v5131
    %v6370 = vunpack.c.l.b16 %v5132
    %v6371 = vunpack.c.h.b16 %v5132
    %v6372 = vunpack.c.l.b16 %v5133
    %v6373 = vunpack.c.h.b16 %v5133
    %v6374 = vunpack.c.l.b16 %v5134
    %v6375 = vunpack.c.h.b16 %v5134
    %v6376 = vunpack.c.l.b16 %v5135
    %v6377 = vunpack.c.h.b16 %v5135
    %v6378 = vunpack.c.l.b16 %v5136
    %v6379 = vunpack.c.h.b16 %v5136
    %v6380 = vunpack.c.l.b16 %v5137
    %v6381 = vunpack.c.h.b16 %v5137
    %v6382 = vunpack.c.l.b16 %v5138
    %v6383 = vunpack.c.h.b16 %v5138
    %v6384 = vunpack.c.l.b16 %v5139
    %v6385 = vunpack.c.h.b16 %v5139
    %v6386 = vunpack.c.l.b16 %v5140
    %v6387 = vunpack.c.h.b16 %v5140
    %v6388 = vunpack.c.l.b16 %v5141
    %v6389 = vunpack.c.h.b16 %v5141
    %v6390 = vunpack.c.l.b16 %v5142
    %v6391 = vunpack.c.h.b16 %v5142
    %v6392 = vunpack.c.l.b16 %v5143
    %v6393 = vunpack.c.h.b16 %v5143
    %v6394 = vunpack.c.l.b16 %v5144
    %v6395 = vunpack.c.h.b16 %v5144
    %v6396 = vunpack.c.l.b16 %v5145
    %v6397 = vunpack.c.h.b16 %v5145
    %v6398 = vunpack.c.l.b16 %v5146
    %v6399 = vunpack.c.h.b16 %v5146
    %v6400 = vunpack.c.l.b16 %v5147
    %v6401 = vunpack.c.h.b16 %v5147
    %v6402 = vunpack.c.l.b16 %v5148
    %v6403 = vunpack.c.h.b16 %v5148
    %v6404 = vunpack.c.l.b16 %v5149
    %v6405 = vunpack.c.h.b16 %v5149
    %v6406 = vunpack.c.l.b16 %v5150
    %v6407 = vunpack.c.h.b16 %v5150
    %v6408 = vunpack.c.l.b16 %v5151
    %v6409 = vunpack.c.h.b16 %v5151
    %v6410 = vunpack.c.l.b16 %v5152
    %v6411 = vunpack.c.h.b16 %v5152
    %v6412 = vunpack.c.l.b16 %v5153
    %v6413 = vunpack.c.h.b16 %v5153
    %v6414 = vunpack.c.l.b16 %v5154
    %v6415 = vunpack.c.h.b16 %v5154
    %v6416 = vunpack.c.l.b16 %v5155
    %v6417 = vunpack.c.h.b16 %v5155
    %v6418 = vunpack.c.l.b16 %v5156
    %v6419 = vunpack.c.h.b16 %v5156
    %v6420 = vunpack.c.l.b16 %v5157
    %v6421 = vunpack.c.h.b16 %v5157
    %v6422 = vunpack.c.l.b16 %v5158
    %v6423 = vunpack.c.h.b16 %v5158
    %v6424 = vunpack.c.l.b16 %v5159
    %v6425 = vunpack.c.h.b16 %v5159
    %v6426 = vunpack.c.l.b16 %v5160
    %v6427 = vunpack.c.h.b16 %v5160
    %v6428 = vunpack.c.l.b16 %v5161
    %v6429 = vunpack.c.h.b16 %v5161
    %v6430 = vunpack.c.l.b16 %v5162
    %v6431 = vunpack.c.h.b16 %v5162
    %v6432 = vunpack.c.l.b16 %v5163
    %v6433 = vunpack.c.h.b16 %v5163
    %v6434 = vunpack.c.l.b16 %v5164
    %v6435 = vunpack.c.h.b16 %v5164
    %v6436 = vunpack.c.l.b16 %v5165
    %v6437 = vunpack.c.h.b16 %v5165
    %v6438 = vunpack.c.l.b16 %v5166
    %v6439 = vunpack.c.h.b16 %v5166
    %v6440 = vunpack.c.l.b16 %v5167
    %v6441 = vunpack.c.h.b16 %v5167
    %v6442 = vunpack.c.l.b16 %v5168
    %v6443 = vunpack.c.h.b16 %v5168
    %v6444 = vunpack.c.l.b16 %v5169
    %v6445 = vunpack.c.h.b16 %v5169
    %v6446 = vunpack.c.l.b16 %v5170
    %v6447 = vunpack.c.h.b16 %v5170
    %v6448 = vunpack.c.l.b16 %v5171
    %v6449 = vunpack.c.h.b16 %v5171
    %v6450 = vunpack.c.l.b16 %v5172
    %v6451 = vunpack.c.h.b16 %v5172
    %v6452 = vunpack.c.l.b16 %v5173
    %v6453 = vunpack.c.h.b16 %v5173
    %v6454 = vunpack.c.l.b16 %v5174
    %v6455 = vunpack.c.h.b16 %v5174
    %v6456 = vunpack.c.l.b16 %v5175
    %v6457 = vunpack.c.h.b16 %v5175
    %v6458 = vunpack.c.l.b16 %v5176
    %v6459 = vunpack.c.h.b16 %v5176
    %v6460 = vunpack.c.l.b16 %v5177
    %v6461 = vunpack.c.h.b16 %v5177
    %v6462 = vunpack.c.l.b16 %v5178
    %v6463 = vunpack.c.h.b16 %v5178
    %v6464 = vunpack.c.l.b16 %v5179
    %v6465 = vunpack.c.h.b16 %v5179
    %v6466 = vunpack.c.l.b16 %v5180
    %v6467 = vunpack.c.h.b16 %v5180
    %v6468 = vunpack.c.l.b16 %v5181
    %v6469 = vunpack.c.h.b16 %v5181
    %v6470 = vunpack.c.l.b16 %v5182
    %v6471 = vunpack.c.h.b16 %v5182
    %v6472 = vunpack.c.l.b16 %v5183
    %v6473 = vunpack.c.h.b16 %v5183
    %v6474 = vunpack.c.l.b16 %v5184
    %v6475 = vunpack.c.h.b16 %v5184
    %v6476 = vunpack.c.l.b16 %v5185
    %v6477 = vunpack.c.h.b16 %v5185
    %v6478 = vunpack.c.l.b16 %v5186
    %v6479 = vunpack.c.h.b16 %v5186
    %v6480 = vunpack.c.l.b16 %v5187
    %v6481 = vunpack.c.h.b16 %v5187
    %v6482 = vunpack.c.l.b16 %v5188
    %v6483 = vunpack.c.h.b16 %v5188
    %v6484 = vunpack.c.l.b16 %v5189
    %v6485 = vunpack.c.h.b16 %v5189
    %v6486 = vunpack.c.l.b16 %v5190
    %v6487 = vunpack.c.h.b16 %v5190
    %v6488 = vunpack.c.l.b16 %v5191
    %v6489 = vunpack.c.h.b16 %v5191
    %v6490 = vunpack.c.l.b16 %v5192
    %v6491 = vunpack.c.h.b16 %v5192
    %v6492 = vunpack.c.l.b16 %v5193
    %v6493 = vunpack.c.h.b16 %v5193
    %v6494 = vunpack.c.l.b16 %v5194
    %v6495 = vunpack.c.h.b16 %v5194
    %v6496 = vunpack.c.l.b16 %v5195
    %v6497 = vunpack.c.h.b16 %v5195
    %v6498 = vunpack.c.l.b16 %v5196
    %v6499 = vunpack.c.h.b16 %v5196
    %v6500 = vunpack.c.l.b16 %v5197
    %v6501 = vunpack.c.h.b16 %v5197
    %v6502 = vunpack.c.l.b16 %v5198
    %v6503 = vunpack.c.h.b16 %v5198
    %v6504 = vunpack.c.l.b16 %v5199
    %v6505 = vunpack.c.h.b16 %v5199
    %v6506 = vunpack.c.l.b16 %v5200
    %v6507 = vunpack.c.h.b16 %v5200
    %v6508 = vunpack.c.l.b16 %v5201
    %v6509 = vunpack.c.h.b16 %v5201
    %v6510 = vunpack.c.l.b16 %v5202
    %v6511 = vunpack.c.h.b16 %v5202
    %v6512 = vunpack.c.l.b16 %v5203
    %v6513 = vunpack.c.h.b16 %v5203
    %v6514 = vunpack.c.l.b16 %v5204
    %v6515 = vunpack.c.h.b16 %v5204
    %v6516 = vunpack.c.l.b16 %v5205
    %v6517 = vunpack.c.h.b16 %v5205
    %v6518 = vunpack.c.l.b16 %v5206
    %v6519 = vunpack.c.h.b16 %v5206
    %v6520 = vunpack.c.l.b16 %v5207
    %v6521 = vunpack.c.h.b16 %v5207
    %v6522 = vunpack.c.l.b16 %v5208
    %v6523 = vunpack.c.h.b16 %v5208
    %v6524 = vunpack.c.l.b16 %v5209
    %v6525 = vunpack.c.h.b16 %v5209
    %v6526 = vunpack.c.l.b16 %v5210
    %v6527 = vunpack.c.h.b16 %v5210
    %v6528 = vunpack.c.l.b16 %v5211
    %v6529 = vunpack.c.h.b16 %v5211
    %v6530 = vunpack.c.l.b16 %v5212
    %v6531 = vunpack.c.h.b16 %v5212
    %v6532 = vunpack.c.l.b16 %v5213
    %v6533 = vunpack.c.h.b16 %v5213
    %v6534 = vunpack.c.l.b16 %v5214
    %v6535 = vunpack.c.h.b16 %v5214
    %v6536 = vunpack.c.l.b16 %v5215
    %v6537 = vunpack.c.h.b16 %v5215
    %v6538 = vunpack.c.l.b16 %v5216
    %v6539 = vunpack.c.h.b16 %v5216
    %v6540 = vunpack.c.l.b16 %v5217
    %v6541 = vunpack.c.h.b16 %v5217
    %v6542 = vunpack.c.l.b16 %v5218
    %v6543 = vunpack.c.h.b16 %v5218
    %v6544 = vunpack.c.l.b16 %v5219
    %v6545 = vunpack.c.h.b16 %v5219
    %v6546 = vunpack.c.l.b16 %v5220
    %v6547 = vunpack.c.h.b16 %v5220
    %v6548 = vunpack.c.l.b16 %v5221
    %v6549 = vunpack.c.h.b16 %v5221
    %v6550 = vunpack.c.l.b16 %v5222
    %v6551 = vunpack.c.h.b16 %v5222
    %v6552 = vunpack.c.l.b16 %v5223
    %v6553 = vunpack.c.h.b16 %v5223
    %v6554 = vunpack.c.l.b16 %v5224
    %v6555 = vunpack.c.h.b16 %v5224
    %v6556 = vunpack.c.l.b16 %v5225
    %v6557 = vunpack.c.h.b16 %v5225
    %v6558 = vunpack.c.l.b16 %v5226
    %v6559 = vunpack.c.h.b16 %v5226
    %v6560 = vunpack.c.l.b16 %v5227
    %v6561 = vunpack.c.h.b16 %v5227
    %v6562 = vunpack.c.l.b16 %v5228
    %v6563 = vunpack.c.h.b16 %v5228
    %v6564 = vunpack.c.l.b16 %v5229
    %v6565 = vunpack.c.h.b16 %v5229
    %v6566 = vunpack.c.l.b16 %v5230
    %v6567 = vunpack.c.h.b16 %v5230
    %v6568 = vunpack.c.l.b16 %v5231
    %v6569 = vunpack.c.h.b16 %v5231
    %v6570 = vunpack.c.l.b16 %v5232
    %v6571 = vunpack.c.h.b16 %v5232
    %v6572 = vunpack.c.l.b16 %v5233
    %v6573 = vunpack.c.h.b16 %v5233
    %v6574 = vunpack.c.l.b16 %v5234
    %v6575 = vunpack.c.h.b16 %v5234
    %v6576 = vunpack.c.l.b16 %v5235
    %v6577 = vunpack.c.h.b16 %v5235
    %v6578 = vunpack.c.l.b16 %v5236
    %v6579 = vunpack.c.h.b16 %v5236
    %v6580 = vunpack.c.l.b16 %v5237
    %v6581 = vunpack.c.h.b16 %v5237
    %v6582 = vunpack.c.l.b16 %v5238
    %v6583 = vunpack.c.h.b16 %v5238
    %v6584 = vunpack.c.l.b16 %v5239
    %v6585 = vunpack.c.h.b16 %v5239
    %v6586 = vunpack.c.l.b16 %v5240
    %v6587 = vunpack.c.h.b16 %v5240
    %v6588 = vunpack.c.l.b16 %v5241
    %v6589 = vunpack.c.h.b16 %v5241
    %v6590 = vunpack.c.l.b16 %v5242
    %v6591 = vunpack.c.h.b16 %v5242
    %v6592 = vunpack.c.l.b16 %v5243
    %v6593 = vunpack.c.h.b16 %v5243
    %v6594 = vunpack.c.l.b16 %v5244
    %v6595 = vunpack.c.h.b16 %v5244
    %v6596 = vunpack.c.l.b16 %v5245
    %v6597 = vunpack.c.h.b16 %v5245
    %v6598 = vunpack.c.l.b16 %v5246
    %v6599 = vunpack.c.h.b16 %v5246
    %v6600 = vunpack.c.l.b16 %v5247
    %v6601 = vunpack.c.h.b16 %v5247
    %v6602 = vunpack.c.l.b16 %v5248
    %v6603 = vunpack.c.h.b16 %v5248
    %v6604 = vunpack.c.l.b16 %v5249
    %v6605 = vunpack.c.h.b16 %v5249
    %v6606 = vunpack.c.l.b16 %v5250
    %v6607 = vunpack.c.h.b16 %v5250
    %v6608 = vunpack.c.l.b16 %v5251
    %v6609 = vunpack.c.h.b16 %v5251
    %v6610 = vunpack.c.l.b16 %v5252
    %v6611 = vunpack.c.h.b16 %v5252
    %v6612 = vunpack.c.l.b16 %v5253
    %v6613 = vunpack.c.h.b16 %v5253
    %v6614 = vunpack.c.l.b16 %v5254
    %v6615 = vunpack.c.h.b16 %v5254
    %v6616 = vunpack.c.l.b16 %v5255
    %v6617 = vunpack.c.h.b16 %v5255
    %v6618 = vunpack.c.l.b16 %v5256
    %v6619 = vunpack.c.h.b16 %v5256
    %v6620 = vunpack.c.l.b16 %v5257
    %v6621 = vunpack.c.h.b16 %v5257
    %v6622 = vunpack.c.l.b16 %v5258
    %v6623 = vunpack.c.h.b16 %v5258
    %v6624 = vunpack.c.l.b16 %v5259
    %v6625 = vunpack.c.h.b16 %v5259
    %v6626 = vunpack.c.l.b16 %v5260
    %v6627 = vunpack.c.h.b16 %v5260
    %v6628 = vunpack.c.l.b16 %v5261
    %v6629 = vunpack.c.h.b16 %v5261
    %v6630 = vunpack.c.l.b16 %v5262
    %v6631 = vunpack.c.h.b16 %v5262
    %v6632 = vunpack.c.l.b16 %v5263
    %v6633 = vunpack.c.h.b16 %v5263
    %v6634 = vunpack.c.l.b16 %v5264
    %v6635 = vunpack.c.h.b16 %v5264
    %v6636 = vunpack.c.l.b16 %v5265
    %v6637 = vunpack.c.h.b16 %v5265
    %v6638 = vunpack.c.l.b16 %v5266
    %v6639 = vunpack.c.h.b16 %v5266
    %v6640 = vunpack.c.l.b16 %v5267
    %v6641 = vunpack.c.h.b16 %v5267
    %v6642 = vunpack.c.l.b16 %v5268
    %v6643 = vunpack.c.h.b16 %v5268
    %v6644 = vunpack.c.l.b16 %v5269
    %v6645 = vunpack.c.h.b16 %v5269
    %v6646 = vunpack.c.l.b16 %v5270
    %v6647 = vunpack.c.h.b16 %v5270
    %v6648 = vunpack.c.l.b16 %v5271
    %v6649 = vunpack.c.h.b16 %v5271
    %v6650 = vunpack.c.l.b16 %v5272
    %v6651 = vunpack.c.h.b16 %v5272
    %v6652 = vunpack.c.l.b16 %v5273
    %v6653 = vunpack.c.h.b16 %v5273
    %v6654 = vunpack.c.l.b16 %v5274
    %v6655 = vunpack.c.h.b16 %v5274
    %v6656 = vunpack.c.l.b16 %v5275
    %v6657 = vunpack.c.h.b16 %v5275
    %v6658 = vunpack.c.l.b16 %v5276
    %v6659 = vunpack.c.h.b16 %v5276
    %v6660 = vunpack.c.l.b16 %v5277
    %v6661 = vunpack.c.h.b16 %v5277
    %v6662 = vunpack.c.l.b16 %v5278
    %v6663 = vunpack.c.h.b16 %v5278
    %v6664 = vunpack.c.l.b16 %v5279
    %v6665 = vunpack.c.h.b16 %v5279
    %v6666 = vunpack.c.l.b16 %v5280
    %v6667 = vunpack.c.h.b16 %v5280
    %v6668 = vunpack.c.l.b16 %v5281
    %v6669 = vunpack.c.h.b16 %v5281
    %v6670 = vunpack.c.l.b16 %v5282
    %v6671 = vunpack.c.h.b16 %v5282
    %v6672 = vunpack.c.l.b16 %v5283
    %v6673 = vunpack.c.h.b16 %v5283
    %v6674 = vunpack.c.l.b16 %v5284
    %v6675 = vunpack.c.h.b16 %v5284
    %v6676 = vunpack.c.l.b16 %v5285
    %v6677 = vunpack.c.h.b16 %v5285
    %v6678 = vunpack.c.l.b16 %v5286
    %v6679 = vunpack.c.h.b16 %v5286
    %v6680 = vunpack.c.l.b16 %v5287
    %v6681 = vunpack.c.h.b16 %v5287
    %v6682 = vunpack.c.l.b16 %v5288
    %v6683 = vunpack.c.h.b16 %v5288
    %v6684 = vunpack.c.l.b16 %v5289
    %v6685 = vunpack.c.h.b16 %v5289
    %v6686 = vunpack.c.l.b16 %v5290
    %v6687 = vunpack.c.h.b16 %v5290
    %v6688 = vunpack.c.l.b16 %v5291
    %v6689 = vunpack.c.h.b16 %v5291
    %v6690 = vunpack.c.l.b16 %v5292
    %v6691 = vunpack.c.h.b16 %v5292
    %v6692 = vunpack.c.l.b16 %v5293
    %v6693 = vunpack.c.h.b16 %v5293
    %v6694 = vunpack.c.l.b16 %v5294
    %v6695 = vunpack.c.h.b16 %v5294
    %v6696 = vunpack.c.l.b16 %v5295
    %v6697 = vunpack.c.h.b16 %v5295
    %v6698 = vunpack.c.l.b16 %v5296
    %v6699 = vunpack.c.h.b16 %v5296
    %v6700 = vunpack.c.l.b16 %v5297
    %v6701 = vunpack.c.h.b16 %v5297
    %v6702 = vunpack.c.l.b16 %v5298
    %v6703 = vunpack.c.h.b16 %v5298
    %v6704 = vunpack.c.l.b16 %v5299
    %v6705 = vunpack.c.h.b16 %v5299
    %v6706 = vunpack.c.l.b16 %v5300
    %v6707 = vunpack.c.h.b16 %v5300
    %v6708 = vunpack.c.l.b16 %v5301
    %v6709 = vunpack.c.h.b16 %v5301
    %v6710 = vunpack.c.l.b16 %v5302
    %v6711 = vunpack.c.h.b16 %v5302
    %v6712 = vunpack.c.l.b16 %v5303
    %v6713 = vunpack.c.h.b16 %v5303
    %v6714 = vunpack.c.l.b16 %v5304
    %v6715 = vunpack.c.h.b16 %v5304
    %v6716 = vunpack.c.l.b16 %v5305
    %v6717 = vunpack.c.h.b16 %v5305
    %v6718 = vunpack.c.l.b16 %v5306
    %v6719 = vunpack.c.h.b16 %v5306
    %v6720 = vunpack.c.l.b16 %v5307
    %v6721 = vunpack.c.h.b16 %v5307
    %v6722 = vunpack.c.l.b16 %v5308
    %v6723 = vunpack.c.h.b16 %v5308
    %v6724 = vunpack.c.l.b16 %v5309
    %v6725 = vunpack.c.h.b16 %v5309
    %v6726 = vunpack.c.l.b16 %v5310
    %v6727 = vunpack.c.h.b16 %v5310
    %v6728 = vunpack.c.l.b16 %v5311
    %v6729 = vunpack.c.h.b16 %v5311
    %v6730 = vunpack.c.l.b16 %v5312
    %v6731 = vunpack.c.h.b16 %v5312
    %v6732 = vunpack.c.l.b16 %v5313
    %v6733 = vunpack.c.h.b16 %v5313
    %v6734 = vunpack.c.l.b16 %v5314
    %v6735 = vunpack.c.h.b16 %v5314
    %v6736 = vunpack.c.l.b16 %v5315
    %v6737 = vunpack.c.h.b16 %v5315
    %v6738 = vunpack.c.l.b16 %v5316
    %v6739 = vunpack.c.h.b16 %v5316
    %v6740 = vunpack.c.l.b16 %v5317
    %v6741 = vunpack.c.h.b16 %v5317
    %v6742 = vunpack.c.l.b16 %v5318
    %v6743 = vunpack.c.h.b16 %v5318
    %v6744 = vunpack.c.l.b16 %v5319
    %v6745 = vunpack.c.h.b16 %v5319
    %v6746 = vunpack.c.l.b16 %v5320
    %v6747 = vunpack.c.h.b16 %v5320
    %v6748 = vunpack.c.l.b16 %v5321
    %v6749 = vunpack.c.h.b16 %v5321
    %v6750 = vunpack.c.l.b16 %v5322
    %v6751 = vunpack.c.h.b16 %v5322
    %v6752 = vunpack.c.l.b16 %v5323
    %v6753 = vunpack.c.h.b16 %v5323
    %v6754 = vunpack.c.l.b16 %v5324
    %v6755 = vunpack.c.h.b16 %v5324
    %v6756 = vunpack.c.l.b16 %v5325
    %v6757 = vunpack.c.h.b16 %v5325
    %v6758 = vunpack.c.l.b16 %v5326
    %v6759 = vunpack.c.h.b16 %v5326
    %v6760 = vunpack.c.l.b16 %v5327
    %v6761 = vunpack.c.h.b16 %v5327
    %v6762 = vunpack.c.l.b16 %v5328
    %v6763 = vunpack.c.h.b16 %v5328
    %v6764 = vunpack.c.l.b16 %v5329
    %v6765 = vunpack.c.h.b16 %v5329
    %v6766 = vunpack.c.l.b16 %v5330
    %v6767 = vunpack.c.h.b16 %v5330
    %v6768 = vunpack.c.l.b16 %v5331
    %v6769 = vunpack.c.h.b16 %v5331
    %v6770 = vunpack.c.l.b16 %v5332
    %v6771 = vunpack.c.h.b16 %v5332
    %v6772 = vunpack.c.l.b16 %v5333
    %v6773 = vunpack.c.h.b16 %v5333
    %v6774 = vunpack.c.l.b16 %v5334
    %v6775 = vunpack.c.h.b16 %v5334
    %v6776 = vunpack.c.l.b16 %v5335
    %v6777 = vunpack.c.h.b16 %v5335
    %v6778 = vunpack.c.l.b16 %v5336
    %v6779 = vunpack.c.h.b16 %v5336
    %v6780 = vunpack.c.l.b16 %v5337
    %v6781 = vunpack.c.h.b16 %v5337
    %v6782 = vunpack.c.l.b16 %v5338
    %v6783 = vunpack.c.h.b16 %v5338
    %v6784 = vunpack.c.l.b16 %v5339
    %v6785 = vunpack.c.h.b16 %v5339
    %v6786 = vunpack.c.l.b16 %v5340
    %v6787 = vunpack.c.h.b16 %v5340
    %v6788 = vunpack.c.l.b16 %v5341
    %v6789 = vunpack.c.h.b16 %v5341
    %v6790 = vunpack.c.l.b16 %v5342
    %v6791 = vunpack.c.h.b16 %v5342
    %v6792 = vunpack.c.l.b16 %v5343
    %v6793 = vunpack.c.h.b16 %v5343
    %v6794 = vunpack.c.l.b16 %v5344
    %v6795 = vunpack.c.h.b16 %v5344
    %v6796 = vunpack.c.l.b16 %v5345
    %v6797 = vunpack.c.h.b16 %v5345
    %v6798 = vunpack.c.l.b16 %v5346
    %v6799 = vunpack.c.h.b16 %v5346
    %v6800 = vunpack.c.l.b16 %v5347
    %v6801 = vunpack.c.h.b16 %v5347
    %v6802 = vunpack.c.l.b16 %v5348
    %v6803 = vunpack.c.h.b16 %v5348
    %v6804 = vunpack.c.l.b16 %v5349
    %v6805 = vunpack.c.h.b16 %v5349
    %v6806 = vunpack.c.l.b16 %v5350
    %v6807 = vunpack.c.h.b16 %v5350
    %v6808 = vunpack.c.l.b16 %v5351
    %v6809 = vunpack.c.h.b16 %v5351
    %v6810 = vunpack.c.l.b16 %v5352
    %v6811 = vunpack.c.h.b16 %v5352
    %v6812 = vunpack.c.l.b16 %v5353
    %v6813 = vunpack.c.h.b16 %v5353
    %v6814 = vunpack.c.l.b16 %v5354
    %v6815 = vunpack.c.h.b16 %v5354
    %v6816 = vunpack.c.l.b16 %v5355
    %v6817 = vunpack.c.h.b16 %v5355
    %v6818 = vunpack.c.l.b16 %v5356
    %v6819 = vunpack.c.h.b16 %v5356
    %v6820 = vunpack.c.l.b16 %v5357
    %v6821 = vunpack.c.h.b16 %v5357
    %v6822 = vunpack.c.l.b16 %v5358
    %v6823 = vunpack.c.h.b16 %v5358
    %v6824 = vunpack.c.l.b16 %v5359
    %v6825 = vunpack.c.h.b16 %v5359
    %v6826 = vunpack.c.l.b16 %v5360
    %v6827 = vunpack.c.h.b16 %v5360
    %v6828 = vunpack.c.l.b16 %v5361
    %v6829 = vunpack.c.h.b16 %v5361
    %v6830 = vunpack.c.l.b16 %v5362
    %v6831 = vunpack.c.h.b16 %v5362
    %v6832 = vunpack.c.l.b16 %v5363
    %v6833 = vunpack.c.h.b16 %v5363
    %v6834 = vunpack.c.l.b16 %v5364
    %v6835 = vunpack.c.h.b16 %v5364
    %v6836 = vunpack.c.l.b16 %v5365
    %v6837 = vunpack.c.h.b16 %v5365
    %v6838 = vunpack.c.l.b16 %v5366
    %v6839 = vunpack.c.h.b16 %v5366
    %v6840 = vunpack.c.l.b16 %v5367
    %v6841 = vunpack.c.h.b16 %v5367
    %v6842 = vunpack.c.l.b16 %v5368
    %v6843 = vunpack.c.h.b16 %v5368
    %v6844 = vunpack.c.l.b16 %v5369
    %v6845 = vunpack.c.h.b16 %v5369
    %v6846 = vunpack.c.l.b16 %v5370
    %v6847 = vunpack.c.h.b16 %v5370
    %v6848 = vunpack.c.l.b16 %v5371
    %v6849 = vunpack.c.h.b16 %v5371
    %v6850 = vunpack.c.l.b16 %v5372
    %v6851 = vunpack.c.h.b16 %v5372
    %v6852 = vunpack.c.l.b16 %v5373
    %v6853 = vunpack.c.h.b16 %v5373
    %v6854 = vunpack.c.l.b16 %v5374
    %v6855 = vunpack.c.h.b16 %v5374
    %v6856 = vunpack.c.l.b16 %v5375
    %v6857 = vunpack.c.h.b16 %v5375
    %v6858 = vunpack.c.l.b16 %v5376
    %v6859 = vunpack.c.h.b16 %v5376
    %v6860 = vunpack.c.l.b16 %v5377
    %v6861 = vunpack.c.h.b16 %v5377
    %v6862 = vunpack.c.l.b16 %v5378
    %v6863 = vunpack.c.h.b16 %v5378
    %v6864 = vunpack.c.l.b16 %v5379
    %v6865 = vunpack.c.h.b16 %v5379
    %v6866 = vunpack.c.l.b16 %v5380
    %v6867 = vunpack.c.h.b16 %v5380
    %v6868 = vunpack.c.l.b16 %v5381
    %v6869 = vunpack.c.h.b16 %v5381
    %v6870 = vunpack.c.l.b16 %v5382
    %v6871 = vunpack.c.h.b16 %v5382
    %v6872 = vunpack.c.l.b16 %v5383
    %v6873 = vunpack.c.h.b16 %v5383
    %v6874 = vunpack.c.l.b16 %v5384
    %v6875 = vunpack.c.h.b16 %v5384
    %v6876 = vunpack.c.l.b16 %v5385
    %v6877 = vunpack.c.h.b16 %v5385
    %v6878 = vunpack.c.l.b16 %v5386
    %v6879 = vunpack.c.h.b16 %v5386
    %v6880 = vunpack.c.l.b16 %v5387
    %v6881 = vunpack.c.h.b16 %v5387
    %v6882 = vunpack.c.l.b16 %v5388
    %v6883 = vunpack.c.h.b16 %v5388
    %v6884 = vunpack.c.l.b16 %v5389
    %v6885 = vunpack.c.h.b16 %v5389
    %v6886 = vunpack.c.l.b16 %v5390
    %v6887 = vunpack.c.h.b16 %v5390
    %v6888 = vunpack.c.l.b16 %v5391
    %v6889 = vunpack.c.h.b16 %v5391
    %v6890 = vunpack.c.l.b16 %v5392
    %v6891 = vunpack.c.h.b16 %v5392
    %v6892 = vunpack.c.l.b16 %v5393
    %v6893 = vunpack.c.h.b16 %v5393
    %v6894 = vunpack.c.l.b16 %v5394
    %v6895 = vunpack.c.h.b16 %v5394
    %v6896 = vunpack.c.l.b16 %v5395
    %v6897 = vunpack.c.h.b16 %v5395
    %v6898 = vunpack.c.l.b16 %v5396
    %v6899 = vunpack.c.h.b16 %v5396
    %v6900 = vunpack.c.l.b16 %v5397
    %v6901 = vunpack.c.h.b16 %v5397
    %v6902 = vunpack.c.l.b16 %v5398
    %v6903 = vunpack.c.h.b16 %v5398
    %v6904 = vunpack.c.l.b16 %v5399
    %v6905 = vunpack.c.h.b16 %v5399
    %v6906 = vunpack.c.l.b16 %v5400
    %v6907 = vunpack.c.h.b16 %v5400
    %v6908 = vunpack.c.l.b16 %v5401
    %v6909 = vunpack.c.h.b16 %v5401
    %v6910 = vunpack.c.l.b16 %v5402
    %v6911 = vunpack.c.h.b16 %v5402
    %v6912 = vunpack.c.l.b16 %v5403
    %v6913 = vunpack.c.h.b16 %v5403
    %v6914 = vunpack.c.l.b16 %v5404
    %v6915 = vunpack.c.h.b16 %v5404
    %v6916 = vunpack.c.l.b16 %v5405
    %v6917 = vunpack.c.h.b16 %v5405
    %v6918 = vunpack.c.l.b16 %v5406
    %v6919 = vunpack.c.h.b16 %v5406
    %v6920 = vunpack.c.l.b16 %v5407
    %v6921 = vunpack.c.h.b16 %v5407
    %v6922 = vunpack.c.l.b16 %v5408
    %v6923 = vunpack.c.h.b16 %v5408
    %v6924 = vunpack.c.l.b16 %v5409
    %v6925 = vunpack.c.h.b16 %v5409
    %v6926 = vunpack.c.l.b16 %v5410
    %v6927 = vunpack.c.h.b16 %v5410
    %v6928 = vunpack.c.l.b16 %v5411
    %v6929 = vunpack.c.h.b16 %v5411
    %v6930 = vunpack.c.l.b16 %v5412
    %v6931 = vunpack.c.h.b16 %v5412
    %v6932 = vunpack.c.l.b16 %v5413
    %v6933 = vunpack.c.h.b16 %v5413
    %v6934 = vunpack.c.l.b16 %v5414
    %v6935 = vunpack.c.h.b16 %v5414
    %v6936 = vunpack.c.l.b16 %v5415
    %v6937 = vunpack.c.h.b16 %v5415
    %v6938 = vunpack.c.l.b16 %v5416
    %v6939 = vunpack.c.h.b16 %v5416
    %v6940 = vunpack.c.l.b16 %v5417
    %v6941 = vunpack.c.h.b16 %v5417
    %v6942 = vunpack.c.l.b16 %v5418
    %v6943 = vunpack.c.h.b16 %v5418
    %v6944 = vunpack.c.l.b16 %v5419
    %v6945 = vunpack.c.h.b16 %v5419
    %v6946 = vunpack.c.l.b16 %v5420
    %v6947 = vunpack.c.h.b16 %v5420
    %v6948 = vunpack.c.l.b16 %v5421
    %v6949 = vunpack.c.h.b16 %v5421
    %v6950 = vunpack.c.l.b16 %v5422
    %v6951 = vunpack.c.h.b16 %v5422
    %v6952 = vunpack.c.l.b16 %v5423
    %v6953 = vunpack.c.h.b16 %v5423
    %v6954 = vunpack.c.l.b16 %v5424
    %v6955 = vunpack.c.h.b16 %v5424
    %v6956 = vunpack.c.l.b16 %v5425
    %v6957 = vunpack.c.h.b16 %v5425
    %v6958 = vunpack.c.l.b16 %v5426
    %v6959 = vunpack.c.h.b16 %v5426
    %v6960 = vunpack.c.l.b16 %v5427
    %v6961 = vunpack.c.h.b16 %v5427
    %v6962 = vunpack.c.l.b16 %v5428
    %v6963 = vunpack.c.h.b16 %v5428
    %v6964 = vunpack.c.l.b16 %v5429
    %v6965 = vunpack.c.h.b16 %v5429
    %v6966 = vpack.c.b16 %v5946, %v5942
    %v6967 = vpack.c.b16 %v5947, %v5943
    %v6968 = vpack.c.b16 %v5948, %v5944
    %v6969 = vpack.c.b16 %v5949, %v5945
    %v6970 = vpack.c.b16 %v5954, %v5950
    %v6971 = vpack.c.b16 %v5955, %v5951
    %v6972 = vpack.c.b16 %v5956, %v5952
    %v6973 = vpack.c.b16 %v5957, %v5953
    %v6974 = vpack.c.b16 %v5962, %v5958
    %v6975 = vpack.c.b16 %v5963, %v5959
    %v6976 = vpack.c.b16 %v5964, %v5960
    %v6977 = vpack.c.b16 %v5965, %v5961
    %v6978 = vpack.c.b16 %v5970, %v5966
    %v6979 = vpack.c.b16 %v5971, %v5967
    %v6980 = vpack.c.b16 %v5972, %v5968
    %v6981 = vpack.c.b16 %v5973, %v5969
    %v6982 = vpack.c.b16 %v5978, %v5974
    %v6983 = vpack.c.b16 %v5979, %v5975
    %v6984 = vpack.c.b16 %v5980, %v5976
    %v6985 = vpack.c.b16 %v5981, %v5977
    %v6986 = vpack.c.b16 %v5986, %v5982
    %v6987 = vpack.c.b16 %v5987, %v5983
    %v6988 = vpack.c.b16 %v5988, %v5984
    %v6989 = vpack.c.b16 %v5989, %v5985
    %v6990 = vpack.c.b16 %v5994, %v5990
    %v6991 = vpack.c.b16 %v5995, %v5991
    %v6992 = vpack.c.b16 %v5996, %v5992
    %v6993 = vpack.c.b16 %v5997, %v5993
    %v6994 = vpack.c.b16 %v6002, %v5998
    %v6995 = vpack.c.b16 %v6003, %v5999
    %v6996 = vpack.c.b16 %v6004, %v6000
    %v6997 = vpack.c.b16 %v6005, %v6001
    %v6998 = vpack.c.b16 %v6010, %v6006
    %v6999 = vpack.c.b16 %v6011, %v6007
    %v7000 = vpack.c.b16 %v6012, %v6008
    %v7001 = vpack.c.b16 %v6013, %v6009
    %v7002 = vpack.c.b16 %v6018, %v6014
    %v7003 = vpack.c.b16 %v6019, %v6015
    %v7004 = vpack.c.b16 %v6020, %v6016
    %v7005 = vpack.c.b16 %v6021, %v6017
    %v7006 = vpack.c.b16 %v6026, %v6022
    %v7007 = vpack.c.b16 %v6027, %v6023
    %v7008 = vpack.c.b16 %v6028, %v6024
    %v7009 = vpack.c.b16 %v6029, %v6025
    %v7010 = vpack.c.b16 %v6034, %v6030
    %v7011 = vpack.c.b16 %v6035, %v6031
    %v7012 = vpack.c.b16 %v6036, %v6032
    %v7013 = vpack.c.b16 %v6037, %v6033
    %v7014 = vpack.c.b16 %v6042, %v6038
    %v7015 = vpack.c.b16 %v6043, %v6039
    %v7016 = vpack.c.b16 %v6044, %v6040
    %v7017 = vpack.c.b16 %v6045, %v6041
    %v7018 = vpack.c.b16 %v6050, %v6046
    %v7019 = vpack.c.b16 %v6051, %v6047
    %v7020 = vpack.c.b16 %v6052, %v6048
    %v7021 = vpack.c.b16 %v6053, %v6049
    %v7022 = vpack.c.b16 %v6058, %v6054
    %v7023 = vpack.c.b16 %v6059, %v6055
    %v7024 = vpack.c.b16 %v6060, %v6056
    %v7025 = vpack.c.b16 %v6061, %v6057
    %v7026 = vpack.c.b16 %v6066, %v6062
    %v7027 = vpack.c.b16 %v6067, %v6063
    %v7028 = vpack.c.b16 %v6068, %v6064
    %v7029 = vpack.c.b16 %v6069, %v6065
    %v7030 = vpack.c.b16 %v6074, %v6070
    %v7031 = vpack.c.b16 %v6075, %v6071
    %v7032 = vpack.c.b16 %v6076, %v6072
    %v7033 = vpack.c.b16 %v6077, %v6073
    %v7034 = vpack.c.b16 %v6082, %v6078
    %v7035 = vpack.c.b16 %v6083, %v6079
    %v7036 = vpack.c.b16 %v6084, %v6080
    %v7037 = vpack.c.b16 %v6085, %v6081
    %v7038 = vpack.c.b16 %v6090, %v6086
    %v7039 = vpack.c.b16 %v6091, %v6087
    %v7040 = vpack.c.b16 %v6092, %v6088
    %v7041 = vpack.c.b16 %v6093, %v6089
    %v7042 = vpack.c.b16 %v6098, %v6094
    %v7043 = vpack.c.b16 %v6099, %v6095
    %v7044 = vpack.c.b16 %v6100, %v6096
    %v7045 = vpack.c.b16 %v6101, %v6097
    %v7046 = vpack.c.b16 %v6106, %v6102
    %v7047 = vpack.c.b16 %v6107, %v6103
    %v7048 = vpack.c.b16 %v6108, %v6104
    %v7049 = vpack.c.b16 %v6109, %v6105
    %v7050 = vpack.c.b16 %v6114, %v6110
    %v7051 = vpack.c.b16 %v6115, %v6111
    %v7052 = vpack.c.b16 %v6116, %v6112
    %v7053 = vpack.c.b16 %v6117, %v6113
    %v7054 = vpack.c.b16 %v6122, %v6118
    %v7055 = vpack.c.b16 %v6123, %v6119
    %v7056 = vpack.c.b16 %v6124, %v6120
    %v7057 = vpack.c.b16 %v6125, %v6121
    %v7058 = vpack.c.b16 %v6130, %v6126
    %v7059 = vpack.c.b16 %v6131, %v6127
    %v7060 = vpack.c.b16 %v6132, %v6128
    %v7061 = vpack.c.b16 %v6133, %v6129
    %v7062 = vpack.c.b16 %v6138, %v6134
    %v7063 = vpack.c.b16 %v6139, %v6135
    %v7064 = vpack.c.b16 %v6140, %v6136
    %v7065 = vpack.c.b16 %v6141, %v6137
    %v7066 = vpack.c.b16 %v6146, %v6142
    %v7067 = vpack.c.b16 %v6147, %v6143
    %v7068 = vpack.c.b16 %v6148, %v6144
    %v7069 = vpack.c.b16 %v6149, %v6145
    %v7070 = vpack.c.b16 %v6154, %v6150
    %v7071 = vpack.c.b16 %v6155, %v6151
    %v7072 = vpack.c.b16 %v6156, %v6152
    %v7073 = vpack.c.b16 %v6157, %v6153
    %v7074 = vpack.c.b16 %v6162, %v6158
    %v7075 = vpack.c.b16 %v6163, %v6159
    %v7076 = vpack.c.b16 %v6164, %v6160
    %v7077 = vpack.c.b16 %v6165, %v6161
    %v7078 = vpack.c.b16 %v6170, %v6166
    %v7079 = vpack.c.b16 %v6171, %v6167
    %v7080 = vpack.c.b16 %v6172, %v6168
    %v7081 = vpack.c.b16 %v6173, %v6169
    %v7082 = vpack.c.b16 %v6178, %v6174
    %v7083 = vpack.c.b16 %v6179, %v6175
    %v7084 = vpack.c.b16 %v6180, %v6176
    %v7085 = vpack.c.b16 %v6181, %v6177
    %v7086 = vpack.c.b16 %v6186, %v6182
    %v7087 = vpack.c.b16 %v6187, %v6183
    %v7088 = vpack.c.b16 %v6188, %v6184
    %v7089 = vpack.c.b16 %v6189, %v6185
    %v7090 = vpack.c.b16 %v6194, %v6190
    %v7091 = vpack.c.b16 %v6195, %v6191
    %v7092 = vpack.c.b16 %v6196, %v6192
    %v7093 = vpack.c.b16 %v6197, %v6193
    %v7094 = vpack.c.b16 %v6202, %v6198
    %v7095 = vpack.c.b16 %v6203, %v6199
    %v7096 = vpack.c.b16 %v6204, %v6200
    %v7097 = vpack.c.b16 %v6205, %v6201
    %v7098 = vpack.c.b16 %v6210, %v6206
    %v7099 = vpack.c.b16 %v6211, %v6207
    %v7100 = vpack.c.b16 %v6212, %v6208
    %v7101 = vpack.c.b16 %v6213, %v6209
    %v7102 = vpack.c.b16 %v6218, %v6214
    %v7103 = vpack.c.b16 %v6219, %v6215
    %v7104 = vpack.c.b16 %v6220, %v6216
    %v7105 = vpack.c.b16 %v6221, %v6217
    %v7106 = vpack.c.b16 %v6226, %v6222
    %v7107 = vpack.c.b16 %v6227, %v6223
    %v7108 = vpack.c.b16 %v6228, %v6224
    %v7109 = vpack.c.b16 %v6229, %v6225
    %v7110 = vpack.c.b16 %v6234, %v6230
    %v7111 = vpack.c.b16 %v6235, %v6231
    %v7112 = vpack.c.b16 %v6236, %v6232
    %v7113 = vpack.c.b16 %v6237, %v6233
    %v7114 = vpack.c.b16 %v6242, %v6238
    %v7115 = vpack.c.b16 %v6243, %v6239
    %v7116 = vpack.c.b16 %v6244, %v6240
    %v7117 = vpack.c.b16 %v6245, %v6241
    %v7118 = vpack.c.b16 %v6250, %v6246
    %v7119 = vpack.c.b16 %v6251, %v6247
    %v7120 = vpack.c.b16 %v6252, %v6248
    %v7121 = vpack.c.b16 %v6253, %v6249
    %v7122 = vpack.c.b16 %v6258, %v6254
    %v7123 = vpack.c.b16 %v6259, %v6255
    %v7124 = vpack.c.b16 %v6260, %v6256
    %v7125 = vpack.c.b16 %v6261, %v6257
    %v7126 = vpack.c.b16 %v6266, %v6262
    %v7127 = vpack.c.b16 %v6267, %v6263
    %v7128 = vpack.c.b16 %v6268, %v6264
    %v7129 = vpack.c.b16 %v6269, %v6265
    %v7130 = vpack.c.b16 %v6274, %v6270
    %v7131 = vpack.c.b16 %v6275, %v6271
    %v7132 = vpack.c.b16 %v6276, %v6272
    %v7133 = vpack.c.b16 %v6277, %v6273
    %v7134 = vpack.c.b16 %v6282, %v6278
    %v7135 = vpack.c.b16 %v6283, %v6279
    %v7136 = vpack.c.b16 %v6284, %v6280
    %v7137 = vpack.c.b16 %v6285, %v6281
    %v7138 = vpack.c.b16 %v6290, %v6286
    %v7139 = vpack.c.b16 %v6291, %v6287
    %v7140 = vpack.c.b16 %v6292, %v6288
    %v7141 = vpack.c.b16 %v6293, %v6289
    %v7142 = vpack.c.b16 %v6298, %v6294
    %v7143 = vpack.c.b16 %v6299, %v6295
    %v7144 = vpack.c.b16 %v6300, %v6296
    %v7145 = vpack.c.b16 %v6301, %v6297
    %v7146 = vpack.c.b16 %v6306, %v6302
    %v7147 = vpack.c.b16 %v6307, %v6303
    %v7148 = vpack.c.b16 %v6308, %v6304
    %v7149 = vpack.c.b16 %v6309, %v6305
    %v7150 = vpack.c.b16 %v6314, %v6310
    %v7151 = vpack.c.b16 %v6315, %v6311
    %v7152 = vpack.c.b16 %v6316, %v6312
    %v7153 = vpack.c.b16 %v6317, %v6313
    %v7154 = vpack.c.b16 %v6322, %v6318
    %v7155 = vpack.c.b16 %v6323, %v6319
    %v7156 = vpack.c.b16 %v6324, %v6320
    %v7157 = vpack.c.b16 %v6325, %v6321
    %v7158 = vpack.c.b16 %v6330, %v6326
    %v7159 = vpack.c.b16 %v6331, %v6327
    %v7160 = vpack.c.b16 %v6332, %v6328
    %v7161 = vpack.c.b16 %v6333, %v6329
    %v7162 = vpack.c.b16 %v6338, %v6334
    %v7163 = vpack.c.b16 %v6339, %v6335
    %v7164 = vpack.c.b16 %v6340, %v6336
    %v7165 = vpack.c.b16 %v6341, %v6337
    %v7166 = vpack.c.b16 %v6346, %v6342
    %v7167 = vpack.c.b16 %v6347, %v6343
    %v7168 = vpack.c.b16 %v6348, %v6344
    %v7169 = vpack.c.b16 %v6349, %v6345
    %v7170 = vpack.c.b16 %v6354, %v6350
    %v7171 = vpack.c.b16 %v6355, %v6351
    %v7172 = vpack.c.b16 %v6356, %v6352
    %v7173 = vpack.c.b16 %v6357, %v6353
    %v7174 = vpack.c.b16 %v6362, %v6358
    %v7175 = vpack.c.b16 %v6363, %v6359
    %v7176 = vpack.c.b16 %v6364, %v6360
    %v7177 = vpack.c.b16 %v6365, %v6361
    %v7178 = vpack.c.b16 %v6370, %v6366
    %v7179 = vpack.c.b16 %v6371, %v6367
    %v7180 = vpack.c.b16 %v6372, %v6368
    %v7181 = vpack.c.b16 %v6373, %v6369
    %v7182 = vpack.c.b16 %v6378, %v6374
    %v7183 = vpack.c.b16 %v6379, %v6375
    %v7184 = vpack.c.b16 %v6380, %v6376
    %v7185 = vpack.c.b16 %v6381, %v6377
    %v7186 = vpack.c.b16 %v6386, %v6382
    %v7187 = vpack.c.b16 %v6387, %v6383
    %v7188 = vpack.c.b16 %v6388, %v6384
    %v7189 = vpack.c.b16 %v6389, %v6385
    %v7190 = vpack.c.b16 %v6394, %v6390
    %v7191 = vpack.c.b16 %v6395, %v6391
    %v7192 = vpack.c.b16 %v6396, %v6392
    %v7193 = vpack.c.b16 %v6397, %v6393
    %v7194 = vpack.c.b16 %v6402, %v6398
    %v7195 = vpack.c.b16 %v6403, %v6399
    %v7196 = vpack.c.b16 %v6404, %v6400
    %v7197 = vpack.c.b16 %v6405, %v6401
    %v7198 = vpack.c.b16 %v6410, %v6406
    %v7199 = vpack.c.b16 %v6411, %v6407
    %v7200 = vpack.c.b16 %v6412, %v6408
    %v7201 = vpack.c.b16 %v6413, %v6409
    %v7202 = vpack.c.b16 %v6418, %v6414
    %v7203 = vpack.c.b16 %v6419, %v6415
    %v7204 = vpack.c.b16 %v6420, %v6416
    %v7205 = vpack.c.b16 %v6421, %v6417
    %v7206 = vpack.c.b16 %v6426, %v6422
    %v7207 = vpack.c.b16 %v6427, %v6423
    %v7208 = vpack.c.b16 %v6428, %v6424
    %v7209 = vpack.c.b16 %v6429, %v6425
    %v7210 = vpack.c.b16 %v6434, %v6430
    %v7211 = vpack.c.b16 %v6435, %v6431
    %v7212 = vpack.c.b16 %v6436, %v6432
    %v7213 = vpack.c.b16 %v6437, %v6433
    %v7214 = vpack.c.b16 %v6442, %v6438
    %v7215 = vpack.c.b16 %v6443, %v6439
    %v7216 = vpack.c.b16 %v6444, %v6440
    %v7217 = vpack.c.b16 %v6445, %v6441
    %v7218 = vpack.c.b16 %v6450, %v6446
    %v7219 = vpack.c.b16 %v6451, %v6447
    %v7220 = vpack.c.b16 %v6452, %v6448
    %v7221 = vpack.c.b16 %v6453, %v6449
    %v7222 = vpack.c.b16 %v6458, %v6454
    %v7223 = vpack.c.b16 %v6459, %v6455
    %v7224 = vpack.c.b16 %v6460, %v6456
    %v7225 = vpack.c.b16 %v6461, %v6457
    %v7226 = vpack.c.b16 %v6466, %v6462
    %v7227 = vpack.c.b16 %v6467, %v6463
    %v7228 = vpack.c.b16 %v6468, %v6464
    %v7229 = vpack.c.b16 %v6469, %v6465
    %v7230 = vpack.c.b16 %v6474, %v6470
    %v7231 = vpack.c.b16 %v6475, %v6471
    %v7232 = vpack.c.b16 %v6476, %v6472
    %v7233 = vpack.c.b16 %v6477, %v6473
    %v7234 = vpack.c.b16 %v6482, %v6478
    %v7235 = vpack.c.b16 %v6483, %v6479
    %v7236 = vpack.c.b16 %v6484, %v6480
    %v7237 = vpack.c.b16 %v6485, %v6481
    %v7238 = vpack.c.b16 %v6490, %v6486
    %v7239 = vpack.c.b16 %v6491, %v6487
    %v7240 = vpack.c.b16 %v6492, %v6488
    %v7241 = vpack.c.b16 %v6493, %v6489
    %v7242 = vpack.c.b16 %v6498, %v6494
    %v7243 = vpack.c.b16 %v6499, %v6495
    %v7244 = vpack.c.b16 %v6500, %v6496
    %v7245 = vpack.c.b16 %v6501, %v6497
    %v7246 = vpack.c.b16 %v6506, %v6502
    %v7247 = vpack.c.b16 %v6507, %v6503
    %v7248 = vpack.c.b16 %v6508, %v6504
    %v7249 = vpack.c.b16 %v6509, %v6505
    %v7250 = vpack.c.b16 %v6514, %v6510
    %v7251 = vpack.c.b16 %v6515, %v6511
    %v7252 = vpack.c.b16 %v6516, %v6512
    %v7253 = vpack.c.b16 %v6517, %v6513
    %v7254 = vpack.c.b16 %v6522, %v6518
    %v7255 = vpack.c.b16 %v6523, %v6519
    %v7256 = vpack.c.b16 %v6524, %v6520
    %v7257 = vpack.c.b16 %v6525, %v6521
    %v7258 = vpack.c.b16 %v6530, %v6526
    %v7259 = vpack.c.b16 %v6531, %v6527
    %v7260 = vpack.c.b16 %v6532, %v6528
    %v7261 = vpack.c.b16 %v6533, %v6529
    %v7262 = vpack.c.b16 %v6538, %v6534
    %v7263 = vpack.c.b16 %v6539, %v6535
    %v7264 = vpack.c.b16 %v6540, %v6536
    %v7265 = vpack.c.b16 %v6541, %v6537
    %v7266 = vpack.c.b16 %v6546, %v6542
    %v7267 = vpack.c.b16 %v6547, %v6543
    %v7268 = vpack.c.b16 %v6548, %v6544
    %v7269 = vpack.c.b16 %v6549, %v6545
    %v7270 = vpack.c.b16 %v6554, %v6550
    %v7271 = vpack.c.b16 %v6555, %v6551
    %v7272 = vpack.c.b16 %v6556, %v6552
    %v7273 = vpack.c.b16 %v6557, %v6553
    %v7274 = vpack.c.b16 %v6562, %v6558
    %v7275 = vpack.c.b16 %v6563, %v6559
    %v7276 = vpack.c.b16 %v6564, %v6560
    %v7277 = vpack.c.b16 %v6565, %v6561
    %v7278 = vpack.c.b16 %v6570, %v6566
    %v7279 = vpack.c.b16 %v6571, %v6567
    %v7280 = vpack.c.b16 %v6572, %v6568
    %v7281 = vpack.c.b16 %v6573, %v6569
    %v7282 = vpack.c.b16 %v6578, %v6574
    %v7283 = vpack.c.b16 %v6579, %v6575
    %v7284 = vpack.c.b16 %v6580, %v6576
    %v7285 = vpack.c.b16 %v6581, %v6577
    %v7286 = vpack.c.b16 %v6586, %v6582
    %v7287 = vpack.c.b16 %v6587, %v6583
    %v7288 = vpack.c.b16 %v6588, %v6584
    %v7289 = vpack.c.b16 %v6589, %v6585
    %v7290 = vpack.c.b16 %v6594, %v6590
    %v7291 = vpack.c.b16 %v6595, %v6591
    %v7292 = vpack.c.b16 %v6596, %v6592
    %v7293 = vpack.c.b16 %v6597, %v6593
    %v7294 = vpack.c.b16 %v6602, %v6598
    %v7295 = vpack.c.b16 %v6603, %v6599
    %v7296 = vpack.c.b16 %v6604, %v6600
    %v7297 = vpack.c.b16 %v6605, %v6601
    %v7298 = vpack.c.b16 %v6610, %v6606
    %v7299 = vpack.c.b16 %v6611, %v6607
    %v7300 = vpack.c.b16 %v6612, %v6608
    %v7301 = vpack.c.b16 %v6613, %v6609
    %v7302 = vpack.c.b16 %v6618, %v6614
    %v7303 = vpack.c.b16 %v6619, %v6615
    %v7304 = vpack.c.b16 %v6620, %v6616
    %v7305 = vpack.c.b16 %v6621, %v6617
    %v7306 = vpack.c.b16 %v6626, %v6622
    %v7307 = vpack.c.b16 %v6627, %v6623
    %v7308 = vpack.c.b16 %v6628, %v6624
    %v7309 = vpack.c.b16 %v6629, %v6625
    %v7310 = vpack.c.b16 %v6634, %v6630
    %v7311 = vpack.c.b16 %v6635, %v6631
    %v7312 = vpack.c.b16 %v6636, %v6632
    %v7313 = vpack.c.b16 %v6637, %v6633
    %v7314 = vpack.c.b16 %v6642, %v6638
    %v7315 = vpack.c.b16 %v6643, %v6639
    %v7316 = vpack.c.b16 %v6644, %v6640
    %v7317 = vpack.c.b16 %v6645, %v6641
    %v7318 = vpack.c.b16 %v6650, %v6646
    %v7319 = vpack.c.b16 %v6651, %v6647
    %v7320 = vpack.c.b16 %v6652, %v6648
    %v7321 = vpack.c.b16 %v6653, %v6649
    %v7322 = vpack.c.b16 %v6658, %v6654
    %v7323 = vpack.c.b16 %v6659, %v6655
    %v7324 = vpack.c.b16 %v6660, %v6656
    %v7325 = vpack.c.b16 %v6661, %v6657
    %v7326 = vpack.c.b16 %v6666, %v6662
    %v7327 = vpack.c.b16 %v6667, %v6663
    %v7328 = vpack.c.b16 %v6668, %v6664
    %v7329 = vpack.c.b16 %v6669, %v6665
    %v7330 = vpack.c.b16 %v6674, %v6670
    %v7331 = vpack.c.b16 %v6675, %v6671
    %v7332 = vpack.c.b16 %v6676, %v6672
    %v7333 = vpack.c.b16 %v6677, %v6673
    %v7334 = vpack.c.b16 %v6682, %v6678
    %v7335 = vpack.c.b16 %v6683, %v6679
    %v7336 = vpack.c.b16 %v6684, %v6680
    %v7337 = vpack.c.b16 %v6685, %v6681
    %v7338 = vpack.c.b16 %v6690, %v6686
    %v7339 = vpack.c.b16 %v6691, %v6687
    %v7340 = vpack.c.b16 %v6692, %v6688
    %v7341 = vpack.c.b16 %v6693, %v6689
    %v7342 = vpack.c.b16 %v6698, %v6694
    %v7343 = vpack.c.b16 %v6699, %v6695
    %v7344 = vpack.c.b16 %v6700, %v6696
    %v7345 = vpack.c.b16 %v6701, %v6697
    %v7346 = vpack.c.b16 %v6706, %v6702
    %v7347 = vpack.c.b16 %v6707, %v6703
    %v7348 = vpack.c.b16 %v6708, %v6704
    %v7349 = vpack.c.b16 %v6709, %v6705
    %v7350 = vpack.c.b16 %v6714, %v6710
    %v7351 = vpack.c.b16 %v6715, %v6711
    %v7352 = vpack.c.b16 %v6716, %v6712
    %v7353 = vpack.c.b16 %v6717, %v6713
    %v7354 = vpack.c.b16 %v6722, %v6718
    %v7355 = vpack.c.b16 %v6723, %v6719
    %v7356 = vpack.c.b16 %v6724, %v6720
    %v7357 = vpack.c.b16 %v6725, %v6721
    %v7358 = vpack.c.b16 %v6730, %v6726
    %v7359 = vpack.c.b16 %v6731, %v6727
    %v7360 = vpack.c.b16 %v6732, %v6728
    %v7361 = vpack.c.b16 %v6733, %v6729
    %v7362 = vpack.c.b16 %v6738, %v6734
    %v7363 = vpack.c.b16 %v6739, %v6735
    %v7364 = vpack.c.b16 %v6740, %v6736
    %v7365 = vpack.c.b16 %v6741, %v6737
    %v7366 = vpack.c.b16 %v6746, %v6742
    %v7367 = vpack.c.b16 %v6747, %v6743
    %v7368 = vpack.c.b16 %v6748, %v6744
    %v7369 = vpack.c.b16 %v6749, %v6745
    %v7370 = vpack.c.b16 %v6754, %v6750
    %v7371 = vpack.c.b16 %v6755, %v6751
    %v7372 = vpack.c.b16 %v6756, %v6752
    %v7373 = vpack.c.b16 %v6757, %v6753
    %v7374 = vpack.c.b16 %v6762, %v6758
    %v7375 = vpack.c.b16 %v6763, %v6759
    %v7376 = vpack.c.b16 %v6764, %v6760
    %v7377 = vpack.c.b16 %v6765, %v6761
    %v7378 = vpack.c.b16 %v6770, %v6766
    %v7379 = vpack.c.b16 %v6771, %v6767
    %v7380 = vpack.c.b16 %v6772, %v6768
    %v7381 = vpack.c.b16 %v6773, %v6769
    %v7382 = vpack.c.b16 %v6778, %v6774
    %v7383 = vpack.c.b16 %v6779, %v6775
    %v7384 = vpack.c.b16 %v6780, %v6776
    %v7385 = vpack.c.b16 %v6781, %v6777
    %v7386 = vpack.c.b16 %v6786, %v6782
    %v7387 = vpack.c.b16 %v6787, %v6783
    %v7388 = vpack.c.b16 %v6788, %v6784
    %v7389 = vpack.c.b16 %v6789, %v6785
    %v7390 = vpack.c.b16 %v6794, %v6790
    %v7391 = vpack.c.b16 %v6795, %v6791
    %v7392 = vpack.c.b16 %v6796, %v6792
    %v7393 = vpack.c.b16 %v6797, %v6793
    %v7394 = vpack.c.b16 %v6802, %v6798
    %v7395 = vpack.c.b16 %v6803, %v6799
    %v7396 = vpack.c.b16 %v6804, %v6800
    %v7397 = vpack.c.b16 %v6805, %v6801
    %v7398 = vpack.c.b16 %v6810, %v6806
    %v7399 = vpack.c.b16 %v6811, %v6807
    %v7400 = vpack.c.b16 %v6812, %v6808
    %v7401 = vpack.c.b16 %v6813, %v6809
    %v7402 = vpack.c.b16 %v6818, %v6814
    %v7403 = vpack.c.b16 %v6819, %v6815
    %v7404 = vpack.c.b16 %v6820, %v6816
    %v7405 = vpack.c.b16 %v6821, %v6817
    %v7406 = vpack.c.b16 %v6826, %v6822
    %v7407 = vpack.c.b16 %v6827, %v6823
    %v7408 = vpack.c.b16 %v6828, %v6824
    %v7409 = vpack.c.b16 %v6829, %v6825
    %v7410 = vpack.c.b16 %v6834, %v6830
    %v7411 = vpack.c.b16 %v6835, %v6831
    %v7412 = vpack.c.b16 %v6836, %v6832
    %v7413 = vpack.c.b16 %v6837, %v6833
    %v7414 = vpack.c.b16 %v6842, %v6838
    %v7415 = vpack.c.b16 %v6843, %v6839
    %v7416 = vpack.c.b16 %v6844, %v6840
    %v7417 = vpack.c.b16 %v6845, %v6841
    %v7418 = vpack.c.b16 %v6850, %v6846
    %v7419 = vpack.c.b16 %v6851, %v6847
    %v7420 = vpack.c.b16 %v6852, %v6848
    %v7421 = vpack.c.b16 %v6853, %v6849
    %v7422 = vpack.c.b16 %v6858, %v6854
    %v7423 = vpack.c.b16 %v6859, %v6855
    %v7424 = vpack.c.b16 %v6860, %v6856
    %v7425 = vpack.c.b16 %v6861, %v6857
    %v7426 = vpack.c.b16 %v6866, %v6862
    %v7427 = vpack.c.b16 %v6867, %v6863
    %v7428 = vpack.c.b16 %v6868, %v6864
    %v7429 = vpack.c.b16 %v6869, %v6865
    %v7430 = vpack.c.b16 %v6874, %v6870
    %v7431 = vpack.c.b16 %v6875, %v6871
    %v7432 = vpack.c.b16 %v6876, %v6872
    %v7433 = vpack.c.b16 %v6877, %v6873
    %v7434 = vpack.c.b16 %v6882, %v6878
    %v7435 = vpack.c.b16 %v6883, %v6879
    %v7436 = vpack.c.b16 %v6884, %v6880
    %v7437 = vpack.c.b16 %v6885, %v6881
    %v7438 = vpack.c.b16 %v6890, %v6886
    %v7439 = vpack.c.b16 %v6891, %v6887
    %v7440 = vpack.c.b16 %v6892, %v6888
    %v7441 = vpack.c.b16 %v6893, %v6889
    %v7442 = vpack.c.b16 %v6898, %v6894
    %v7443 = vpack.c.b16 %v6899, %v6895
    %v7444 = vpack.c.b16 %v6900, %v6896
    %v7445 = vpack.c.b16 %v6901, %v6897
    %v7446 = vpack.c.b16 %v6906, %v6902
    %v7447 = vpack.c.b16 %v6907, %v6903
    %v7448 = vpack.c.b16 %v6908, %v6904
    %v7449 = vpack.c.b16 %v6909, %v6905
    %v7450 = vpack.c.b16 %v6914, %v6910
    %v7451 = vpack.c.b16 %v6915, %v6911
    %v7452 = vpack.c.b16 %v6916, %v6912
    %v7453 = vpack.c.b16 %v6917, %v6913
    %v7454 = vpack.c.b16 %v6922, %v6918
    %v7455 = vpack.c.b16 %v6923, %v6919
    %v7456 = vpack.c.b16 %v6924, %v6920
    %v7457 = vpack.c.b16 %v6925, %v6921
    %v7458 = vpack.c.b16 %v6930, %v6926
    %v7459 = vpack.c.b16 %v6931, %v6927
    %v7460 = vpack.c.b16 %v6932, %v6928
    %v7461 = vpack.c.b16 %v6933, %v6929
    %v7462 = vpack.c.b16 %v6938, %v6934
    %v7463 = vpack.c.b16 %v6939, %v6935
    %v7464 = vpack.c.b16 %v6940, %v6936
    %v7465 = vpack.c.b16 %v6941, %v6937
    %v7466 = vpack.c.b16 %v6946, %v6942
    %v7467 = vpack.c.b16 %v6947, %v6943
    %v7468 = vpack.c.b16 %v6948, %v6944
    %v7469 = vpack.c.b16 %v6949, %v6945
    %v7470 = vpack.c.b16 %v6954, %v6950
    %v7471 = vpack.c.b16 %v6955, %v6951
    %v7472 = vpack.c.b16 %v6956, %v6952
    %v7473 = vpack.c.b16 %v6957, %v6953
    %v7474 = vpack.c.b16 %v6962, %v6958
    %v7475 = vpack.c.b16 %v6963, %v6959
    %v7476 = vpack.c.b16 %v6964, %v6960
    %v7477 = vpack.c.b16 %v6965, %v6961
    %7990 = vmatprep.subr.bf16.mxu0 %v6967
    %7991 = vmatpush1.bf16.msra.mxu0 %v6966
    %7992 = vmatprep.subr.bf16.mxu0 %v6971
    %7993 = vmatpush1.bf16.msra.mxu0 %v6970
    %7994 = vmatprep.subr.bf16.mxu0 %v6975
    %7995 = vmatpush1.bf16.msra.mxu0 %v6974
    %7996 = vmatprep.subr.bf16.mxu0 %v6979
    %7997 = vmatpush1.bf16.msra.mxu0 %v6978
    %7998 = vmatprep.subr.bf16.mxu0 %v6983
    %7999 = vmatpush1.bf16.msra.mxu0 %v6982
    %8000 = vmatprep.subr.bf16.mxu0 %v6987
    %8001 = vmatpush1.bf16.msra.mxu0 %v6986
    %8002 = vmatprep.subr.bf16.mxu0 %v6991
    %8003 = vmatpush1.bf16.msra.mxu0 %v6990
    %8004 = vmatprep.subr.bf16.mxu0 %v6995
    %8005 = vmatpush1.bf16.msra.mxu0 %v6994
    %8006 = vmatprep.subr.bf16.mxu0 %v6999
    %8007 = vmatpush1.bf16.msra.mxu0 %v6998
    %8008 = vmatprep.subr.bf16.mxu0 %v7003
    %8009 = vmatpush1.bf16.msra.mxu0 %v7002
    %8010 = vmatprep.subr.bf16.mxu0 %v7007
    %8011 = vmatpush1.bf16.msra.mxu0 %v7006
    %8012 = vmatprep.subr.bf16.mxu0 %v7011
    %8013 = vmatpush1.bf16.msra.mxu0 %v7010
    %8014 = vmatprep.subr.bf16.mxu0 %v7015
    %8015 = vmatpush1.bf16.msra.mxu0 %v7014
    %8016 = vmatprep.subr.bf16.mxu0 %v7019
    %8017 = vmatpush1.bf16.msra.mxu0 %v7018
    %8018 = vmatprep.subr.bf16.mxu0 %v7023
    %8019 = vmatpush1.bf16.msra.mxu0 %v7022
    %8020 = vmatprep.subr.bf16.mxu0 %v7027
    %8021 = vmatpush1.bf16.msra.mxu0 %v7026
    %8022 = vmatprep.mubr.bf16.mxu0 %v4903
    %8023 = vmatmul.mubr.bf16.gmra.mrb[0].mxu0 %v4902
    %v8024 = vpop.f32.mrb[0].mxu0
    %v8025 = vadd.f32 %v1098, %v8024
    %v8026 = vpop.f32.mrb[0].mxu0
    %v8027 = vadd.f32 %v1099, %v8026
    %v8028 = vpop.f32.mrb[0].mxu0
    %v8029 = vadd.f32 %v1102, %v8028
    %v8030 = vpop.f32.mrb[0].mxu0
    %v8031 = vadd.f32 %v1103, %v8030
    %8032 = vdwg.mxu0
    %8033 = vmatprep.subr.bf16.mxu0 %v7031
    %8034 = vmatpush1.bf16.msra.mxu0 %v7030
    %8035 = vmatprep.subr.bf16.mxu0 %v7035
    %8036 = vmatpush1.bf16.msra.mxu0 %v7034
    %8037 = vmatprep.subr.bf16.mxu0 %v7039
    %8038 = vmatpush1.bf16.msra.mxu0 %v7038
    %8039 = vmatprep.subr.bf16.mxu0 %v7043
    %8040 = vmatpush1.bf16.msra.mxu0 %v7042
    %8041 = vmatprep.subr.bf16.mxu0 %v7047
    %8042 = vmatpush1.bf16.msra.mxu0 %v7046
    %8043 = vmatprep.subr.bf16.mxu0 %v7051
    %8044 = vmatpush1.bf16.msra.mxu0 %v7050
    %8045 = vmatprep.subr.bf16.mxu0 %v7055
    %8046 = vmatpush1.bf16.msra.mxu0 %v7054
    %8047 = vmatprep.subr.bf16.mxu0 %v7059
    %8048 = vmatpush1.bf16.msra.mxu0 %v7058
    %8049 = vmatprep.subr.bf16.mxu0 %v7063
    %8050 = vmatpush1.bf16.msra.mxu0 %v7062
    %8051 = vmatprep.subr.bf16.mxu0 %v7067
    %8052 = vmatpush1.bf16.msra.mxu0 %v7066
    %8053 = vmatprep.subr.bf16.mxu0 %v7071
    %8054 = vmatpush1.bf16.msra.mxu0 %v7070
    %8055 = vmatprep.subr.bf16.mxu0 %v7075
    %8056 = vmatpush1.bf16.msra.mxu0 %v7074
    %8057 = vmatprep.subr.bf16.mxu0 %v7079
    %8058 = vmatpush1.bf16.msra.mxu0 %v7078
    %8059 = vmatprep.subr.bf16.mxu0 %v7083
    %8060 = vmatpush1.bf16.msra.mxu0 %v7082
    %8061 = vmatprep.subr.bf16.mxu0 %v7087
    %8062 = vmatpush1.bf16.msra.mxu0 %v7086
    %8063 = vmatprep.subr.bf16.mxu0 %v7091
    %8064 = vmatpush1.bf16.msra.mxu0 %v7090
    %8065 = vmatprep.mubr.bf16.mxu0 %v4905
    %8066 = vmatmul.mubr.bf16.gmra.mrb[0].mxu0 %v4904
    %v8067 = vpop.f32.mrb[0].mxu0
    %v8068 = vadd.f32 %v8025, %v8067
    %v8069 = vpop.f32.mrb[0].mxu0
    %v8070 = vadd.f32 %v8027, %v8069
    %v8071 = vpop.f32.mrb[0].mxu0
    %v8072 = vadd.f32 %v8029, %v8071
    %v8073 = vpop.f32.mrb[0].mxu0
    %v8074 = vadd.f32 %v8031, %v8073
    %8075 = vdwg.mxu0
    %8076 = vmatprep.subr.bf16.mxu0 %v7095
    %8077 = vmatpush1.bf16.msra.mxu0 %v7094
    %8078 = vmatprep.subr.bf16.mxu0 %v7099
    %8079 = vmatpush1.bf16.msra.mxu0 %v7098
    %8080 = vmatprep.subr.bf16.mxu0 %v7103
    %8081 = vmatpush1.bf16.msra.mxu0 %v7102
    %8082 = vmatprep.subr.bf16.mxu0 %v7107
    %8083 = vmatpush1.bf16.msra.mxu0 %v7106
    %8084 = vmatprep.subr.bf16.mxu0 %v7111
    %8085 = vmatpush1.bf16.msra.mxu0 %v7110
    %8086 = vmatprep.subr.bf16.mxu0 %v7115
    %8087 = vmatpush1.bf16.msra.mxu0 %v7114
    %8088 = vmatprep.subr.bf16.mxu0 %v7119
    %8089 = vmatpush1.bf16.msra.mxu0 %v7118
    %8090 = vmatprep.subr.bf16.mxu0 %v7123
    %8091 = vmatpush1.bf16.msra.mxu0 %v7122
    %8092 = vmatprep.subr.bf16.mxu0 %v7127
    %8093 = vmatpush1.bf16.msra.mxu0 %v7126
    %8094 = vmatprep.subr.bf16.mxu0 %v7131
    %8095 = vmatpush1.bf16.msra.mxu0 %v7130
    %8096 = vmatprep.subr.bf16.mxu0 %v7135
    %8097 = vmatpush1.bf16.msra.mxu0 %v7134
    %8098 = vmatprep.subr.bf16.mxu0 %v7139
    %8099 = vmatpush1.bf16.msra.mxu0 %v7138
    %8100 = vmatprep.subr.bf16.mxu0 %v7143
    %8101 = vmatpush1.bf16.msra.mxu0 %v7142
    %8102 = vmatprep.subr.bf16.mxu0 %v7147
    %8103 = vmatpush1.bf16.msra.mxu0 %v7146
    %8104 = vmatprep.subr.bf16.mxu0 %v7151
    %8105 = vmatpush1.bf16.msra.mxu0 %v7150
    %8106 = vmatprep.subr.bf16.mxu0 %v7155
    %8107 = vmatpush1.bf16.msra.mxu0 %v7154
    %8108 = vmatprep.mubr.bf16.mxu0 %v4907
    %8109 = vmatmul.mubr.bf16.gmra.mrb[0].mxu0 %v4906
    %v8110 = vpop.f32.mrb[0].mxu0
    %v8111 = vadd.f32 %v8068, %v8110
    %v8112 = vpop.f32.mrb[0].mxu0
    %v8113 = vadd.f32 %v8070, %v8112
    %v8114 = vpop.f32.mrb[0].mxu0
    %v8115 = vadd.f32 %v8072, %v8114
    %v8116 = vpop.f32.mrb[0].mxu0
    %v8117 = vadd.f32 %v8074, %v8116
    %8118 = vdwg.mxu0
    %8119 = vmatprep.subr.bf16.mxu0 %v7159
    %8120 = vmatpush1.bf16.msra.mxu0 %v7158
    %8121 = vmatprep.subr.bf16.mxu0 %v7163
    %8122 = vmatpush1.bf16.msra.mxu0 %v7162
    %8123 = vmatprep.subr.bf16.mxu0 %v7167
    %8124 = vmatpush1.bf16.msra.mxu0 %v7166
    %8125 = vmatprep.subr.bf16.mxu0 %v7171
    %8126 = vmatpush1.bf16.msra.mxu0 %v7170
    %8127 = vmatprep.subr.bf16.mxu0 %v7175
    %8128 = vmatpush1.bf16.msra.mxu0 %v7174
    %8129 = vmatprep.subr.bf16.mxu0 %v7179
    %8130 = vmatpush1.bf16.msra.mxu0 %v7178
    %8131 = vmatprep.subr.bf16.mxu0 %v7183
    %8132 = vmatpush1.bf16.msra.mxu0 %v7182
    %8133 = vmatprep.subr.bf16.mxu0 %v7187
    %8134 = vmatpush1.bf16.msra.mxu0 %v7186
    %8135 = vmatprep.subr.bf16.mxu0 %v7191
    %8136 = vmatpush1.bf16.msra.mxu0 %v7190
    %8137 = vmatprep.subr.bf16.mxu0 %v7195
    %8138 = vmatpush1.bf16.msra.mxu0 %v7194
    %8139 = vmatprep.subr.bf16.mxu0 %v7199
    %8140 = vmatpush1.bf16.msra.mxu0 %v7198
    %8141 = vmatprep.subr.bf16.mxu0 %v7203
    %8142 = vmatpush1.bf16.msra.mxu0 %v7202
    %8143 = vmatprep.subr.bf16.mxu0 %v7207
    %8144 = vmatpush1.bf16.msra.mxu0 %v7206
    %8145 = vmatprep.subr.bf16.mxu0 %v7211
    %8146 = vmatpush1.bf16.msra.mxu0 %v7210
    %8147 = vmatprep.subr.bf16.mxu0 %v7215
    %8148 = vmatpush1.bf16.msra.mxu0 %v7214
    %8149 = vmatprep.subr.bf16.mxu0 %v7219
    %8150 = vmatpush1.bf16.msra.mxu0 %v7218
    %8151 = vmatprep.mubr.bf16.mxu0 %v4909
    %8152 = vmatmul.mubr.bf16.gmra.mrb[0].mxu0 %v4908
    %v8153 = vpop.f32.mrb[0].mxu0
    %v8154 = vadd.f32 %v8111, %v8153
    %v8155 = vpop.f32.mrb[0].mxu0
    %v8156 = vadd.f32 %v8113, %v8155
    %v8157 = vpop.f32.mrb[0].mxu0
    %v8158 = vadd.f32 %v8115, %v8157
    %v8159 = vpop.f32.mrb[0].mxu0
    %v8160 = vadd.f32 %v8117, %v8159
    %8161 = vdwg.mxu0
    %8162 = vmatprep.subr.bf16.mxu0 %v7223
    %8163 = vmatpush1.bf16.msra.mxu0 %v7222
    %8164 = vmatprep.subr.bf16.mxu0 %v7227
    %8165 = vmatpush1.bf16.msra.mxu0 %v7226
    %8166 = vmatprep.subr.bf16.mxu0 %v7231
    %8167 = vmatpush1.bf16.msra.mxu0 %v7230
    %8168 = vmatprep.subr.bf16.mxu0 %v7235
    %8169 = vmatpush1.bf16.msra.mxu0 %v7234
    %8170 = vmatprep.subr.bf16.mxu0 %v7239
    %8171 = vmatpush1.bf16.msra.mxu0 %v7238
    %8172 = vmatprep.subr.bf16.mxu0 %v7243
    %8173 = vmatpush1.bf16.msra.mxu0 %v7242
    %8174 = vmatprep.subr.bf16.mxu0 %v7247
    %8175 = vmatpush1.bf16.msra.mxu0 %v7246
    %8176 = vmatprep.subr.bf16.mxu0 %v7251
    %8177 = vmatpush1.bf16.msra.mxu0 %v7250
    %8178 = vmatprep.subr.bf16.mxu0 %v7255
    %8179 = vmatpush1.bf16.msra.mxu0 %v7254
    %8180 = vmatprep.subr.bf16.mxu0 %v7259
    %8181 = vmatpush1.bf16.msra.mxu0 %v7258
    %8182 = vmatprep.subr.bf16.mxu0 %v7263
    %8183 = vmatpush1.bf16.msra.mxu0 %v7262
    %8184 = vmatprep.subr.bf16.mxu0 %v7267
    %8185 = vmatpush1.bf16.msra.mxu0 %v7266
    %8186 = vmatprep.subr.bf16.mxu0 %v7271
    %8187 = vmatpush1.bf16.msra.mxu0 %v7270
    %8188 = vmatprep.subr.bf16.mxu0 %v7275
    %8189 = vmatpush1.bf16.msra.mxu0 %v7274
    %8190 = vmatprep.subr.bf16.mxu0 %v7279
    %8191 = vmatpush1.bf16.msra.mxu0 %v7278
    %8192 = vmatprep.subr.bf16.mxu0 %v7283
    %8193 = vmatpush1.bf16.msra.mxu0 %v7282
    %8194 = vmatprep.mubr.bf16.mxu0 %v4911
    %8195 = vmatmul.mubr.bf16.gmra.mrb[0].mxu0 %v4910
    %v8196 = vpop.f32.mrb[0].mxu0
    %v8197 = vadd.f32 %v8154, %v8196
    %v8198 = vpop.f32.mrb[0].mxu0
    %v8199 = vadd.f32 %v8156, %v8198
    %v8200 = vpop.f32.mrb[0].mxu0
    %v8201 = vadd.f32 %v8158, %v8200
    %v8202 = vpop.f32.mrb[0].mxu0
    %v8203 = vadd.f32 %v8160, %v8202
    %8204 = vdwg.mxu0
    %8205 = vmatprep.subr.bf16.mxu0 %v7287
    %8206 = vmatpush1.bf16.msra.mxu0 %v7286
    %8207 = vmatprep.subr.bf16.mxu0 %v7291
    %8208 = vmatpush1.bf16.msra.mxu0 %v7290
    %8209 = vmatprep.subr.bf16.mxu0 %v7295
    %8210 = vmatpush1.bf16.msra.mxu0 %v7294
    %8211 = vmatprep.subr.bf16.mxu0 %v7299
    %8212 = vmatpush1.bf16.msra.mxu0 %v7298
    %8213 = vmatprep.subr.bf16.mxu0 %v7303
    %8214 = vmatpush1.bf16.msra.mxu0 %v7302
    %8215 = vmatprep.subr.bf16.mxu0 %v7307
    %8216 = vmatpush1.bf16.msra.mxu0 %v7306
    %8217 = vmatprep.subr.bf16.mxu0 %v7311
    %8218 = vmatpush1.bf16.msra.mxu0 %v7310
    %8219 = vmatprep.subr.bf16.mxu0 %v7315
    %8220 = vmatpush1.bf16.msra.mxu0 %v7314
    %8221 = vmatprep.subr.bf16.mxu0 %v7319
    %8222 = vmatpush1.bf16.msra.mxu0 %v7318
    %8223 = vmatprep.subr.bf16.mxu0 %v7323
    %8224 = vmatpush1.bf16.msra.mxu0 %v7322
    %8225 = vmatprep.subr.bf16.mxu0 %v7327
    %8226 = vmatpush1.bf16.msra.mxu0 %v7326
    %8227 = vmatprep.subr.bf16.mxu0 %v7331
    %8228 = vmatpush1.bf16.msra.mxu0 %v7330
    %8229 = vmatprep.subr.bf16.mxu0 %v7335
    %8230 = vmatpush1.bf16.msra.mxu0 %v7334
    %8231 = vmatprep.subr.bf16.mxu0 %v7339
    %8232 = vmatpush1.bf16.msra.mxu0 %v7338
    %8233 = vmatprep.subr.bf16.mxu0 %v7343
    %8234 = vmatpush1.bf16.msra.mxu0 %v7342
    %8235 = vmatprep.subr.bf16.mxu0 %v7347
    %8236 = vmatpush1.bf16.msra.mxu0 %v7346
    %8237 = vmatprep.mubr.bf16.mxu0 %v4913
    %8238 = vmatmul.mubr.bf16.gmra.mrb[0].mxu0 %v4912
    %v8239 = vpop.f32.mrb[0].mxu0
    %v8240 = vadd.f32 %v8197, %v8239
    %v8241 = vpop.f32.mrb[0].mxu0
    %v8242 = vadd.f32 %v8199, %v8241
    %v8243 = vpop.f32.mrb[0].mxu0
    %v8244 = vadd.f32 %v8201, %v8243
    %v8245 = vpop.f32.mrb[0].mxu0
    %v8246 = vadd.f32 %v8203, %v8245
    %8247 = vdwg.mxu0
    %8248 = vmatprep.subr.bf16.mxu0 %v7351
    %8249 = vmatpush1.bf16.msra.mxu0 %v7350
    %8250 = vmatprep.subr.bf16.mxu0 %v7355
    %8251 = vmatpush1.bf16.msra.mxu0 %v7354
    %8252 = vmatprep.subr.bf16.mxu0 %v7359
    %8253 = vmatpush1.bf16.msra.mxu0 %v7358
    %8254 = vmatprep.subr.bf16.mxu0 %v7363
    %8255 = vmatpush1.bf16.msra.mxu0 %v7362
    %8256 = vmatprep.subr.bf16.mxu0 %v7367
    %8257 = vmatpush1.bf16.msra.mxu0 %v7366
    %8258 = vmatprep.subr.bf16.mxu0 %v7371
    %8259 = vmatpush1.bf16.msra.mxu0 %v7370
    %8260 = vmatprep.subr.bf16.mxu0 %v7375
    %8261 = vmatpush1.bf16.msra.mxu0 %v7374
    %8262 = vmatprep.subr.bf16.mxu0 %v7379
    %8263 = vmatpush1.bf16.msra.mxu0 %v7378
    %8264 = vmatprep.subr.bf16.mxu0 %v7383
    %8265 = vmatpush1.bf16.msra.mxu0 %v7382
    %8266 = vmatprep.subr.bf16.mxu0 %v7387
    %8267 = vmatpush1.bf16.msra.mxu0 %v7386
    %8268 = vmatprep.subr.bf16.mxu0 %v7391
    %8269 = vmatpush1.bf16.msra.mxu0 %v7390
    %8270 = vmatprep.subr.bf16.mxu0 %v7395
    %8271 = vmatpush1.bf16.msra.mxu0 %v7394
    %8272 = vmatprep.subr.bf16.mxu0 %v7399
    %8273 = vmatpush1.bf16.msra.mxu0 %v7398
    %8274 = vmatprep.subr.bf16.mxu0 %v7403
    %8275 = vmatpush1.bf16.msra.mxu0 %v7402
    %8276 = vmatprep.subr.bf16.mxu0 %v7407
    %8277 = vmatpush1.bf16.msra.mxu0 %v7406
    %8278 = vmatprep.subr.bf16.mxu0 %v7411
    %8279 = vmatpush1.bf16.msra.mxu0 %v7410
    %8280 = vmatprep.mubr.bf16.mxu0 %v4915
    %8281 = vmatmul.mubr.bf16.gmra.mrb[0].mxu0 %v4914
    %v8282 = vpop.f32.mrb[0].mxu0
    %v8283 = vadd.f32 %v8240, %v8282
    %v8284 = vpop.f32.mrb[0].mxu0
    %v8285 = vadd.f32 %v8242, %v8284
    %v8286 = vpop.f32.mrb[0].mxu0
    %v8287 = vadd.f32 %v8244, %v8286
    %v8288 = vpop.f32.mrb[0].mxu0
    %v8289 = vadd.f32 %v8246, %v8288
    %8290 = vdwg.mxu0
    %8291 = vmatprep.subr.bf16.mxu0 %v7415
    %8292 = vmatpush1.bf16.msra.mxu0 %v7414
    %8293 = vmatprep.subr.bf16.mxu0 %v7419
    %8294 = vmatpush1.bf16.msra.mxu0 %v7418
    %8295 = vmatprep.subr.bf16.mxu0 %v7423
    %8296 = vmatpush1.bf16.msra.mxu0 %v7422
    %8297 = vmatprep.subr.bf16.mxu0 %v7427
    %8298 = vmatpush1.bf16.msra.mxu0 %v7426
    %8299 = vmatprep.subr.bf16.mxu0 %v7431
    %8300 = vmatpush1.bf16.msra.mxu0 %v7430
    %8301 = vmatprep.subr.bf16.mxu0 %v7435
    %8302 = vmatpush1.bf16.msra.mxu0 %v7434
    %8303 = vmatprep.subr.bf16.mxu0 %v7439
    %8304 = vmatpush1.bf16.msra.mxu0 %v7438
    %8305 = vmatprep.subr.bf16.mxu0 %v7443
    %8306 = vmatpush1.bf16.msra.mxu0 %v7442
    %8307 = vmatprep.subr.bf16.mxu0 %v7447
    %8308 = vmatpush1.bf16.msra.mxu0 %v7446
    %8309 = vmatprep.subr.bf16.mxu0 %v7451
    %8310 = vmatpush1.bf16.msra.mxu0 %v7450
    %8311 = vmatprep.subr.bf16.mxu0 %v7455
    %8312 = vmatpush1.bf16.msra.mxu0 %v7454
    %8313 = vmatprep.subr.bf16.mxu0 %v7459
    %8314 = vmatpush1.bf16.msra.mxu0 %v7458
    %8315 = vmatprep.subr.bf16.mxu0 %v7463
    %8316 = vmatpush1.bf16.msra.mxu0 %v7462
    %8317 = vmatprep.subr.bf16.mxu0 %v7467
    %8318 = vmatpush1.bf16.msra.mxu0 %v7466
    %8319 = vmatprep.subr.bf16.mxu0 %v7471
    %8320 = vmatpush1.bf16.msra.mxu0 %v7470
    %8321 = vmatprep.subr.bf16.mxu0 %v7475
    %8322 = vmatpush1.bf16.msra.mxu0 %v7474
    %8323 = vmatprep.mubr.bf16.mxu0 %v4917
    %8324 = vmatmul.mubr.bf16.gmra.mrb[0].mxu0 %v4916
    %v8325 = vpop.f32.mrb[0].mxu0
    %v8326 = vadd.f32 %v8283, %v8325
    %v8327 = vpop.f32.mrb[0].mxu0
    %v8328 = vadd.f32 %v8285, %v8327
    %v8329 = vpop.f32.mrb[0].mxu0
    %v8330 = vadd.f32 %v8287, %v8329
    %v8331 = vpop.f32.mrb[0].mxu0
    %v8332 = vadd.f32 %v8289, %v8331
    %8333 = vdwg.mxu0
    %8334 = vmatprep.subr.bf16.mxu0 %v6969
    %8335 = vmatpush1.bf16.msra.mxu0 %v6968
    %8336 = vmatprep.subr.bf16.mxu0 %v6973
    %8337 = vmatpush1.bf16.msra.mxu0 %v6972
    %8338 = vmatprep.subr.bf16.mxu0 %v6977
    %8339 = vmatpush1.bf16.msra.mxu0 %v6976
    %8340 = vmatprep.subr.bf16.mxu0 %v6981
    %8341 = vmatpush1.bf16.msra.mxu0 %v6980
    %8342 = vmatprep.subr.bf16.mxu0 %v6985
    %8343 = vmatpush1.bf16.msra.mxu0 %v6984
    %8344 = vmatprep.subr.bf16.mxu0 %v6989
    %8345 = vmatpush1.bf16.msra.mxu0 %v6988
    %8346 = vmatprep.subr.bf16.mxu0 %v6993
    %8347 = vmatpush1.bf16.msra.mxu0 %v6992
    %8348 = vmatprep.subr.bf16.mxu0 %v6997
    %8349 = vmatpush1.bf16.msra.mxu0 %v6996
    %8350 = vmatprep.subr.bf16.mxu0 %v7001
    %8351 = vmatpush1.bf16.msra.mxu0 %v7000
    %8352 = vmatprep.subr.bf16.mxu0 %v7005
    %8353 = vmatpush1.bf16.msra.mxu0 %v7004
    %8354 = vmatprep.subr.bf16.mxu0 %v7009
    %8355 = vmatpush1.bf16.msra.mxu0 %v7008
    %8356 = vmatprep.subr.bf16.mxu0 %v7013
    %8357 = vmatpush1.bf16.msra.mxu0 %v7012
    %8358 = vmatprep.subr.bf16.mxu0 %v7017
    %8359 = vmatpush1.bf16.msra.mxu0 %v7016
    %8360 = vmatprep.subr.bf16.mxu0 %v7021
    %8361 = vmatpush1.bf16.msra.mxu0 %v7020
    %8362 = vmatprep.subr.bf16.mxu0 %v7025
    %8363 = vmatpush1.bf16.msra.mxu0 %v7024
    %8364 = vmatprep.subr.bf16.mxu0 %v7029
    %8365 = vmatpush1.bf16.msra.mxu0 %v7028
    %8366 = vmatprep.mubr.bf16.mxu0 %v4903
    %8367 = vmatmul.mubr.bf16.gmra.mrb[0].mxu0 %v4902
    %v8368 = vpop.f32.mrb[0].mxu0
    %v8369 = vadd.f32 %v1100, %v8368
    %v8370 = vpop.f32.mrb[0].mxu0
    %v8371 = vadd.f32 %v1101, %v8370
    %v8372 = vpop.f32.mrb[0].mxu0
    %v8373 = vadd.f32 %v1104, %v8372
    %v8374 = vpop.f32.mrb[0].mxu0
    %v8375 = vadd.f32 %v1105, %v8374
    %8376 = vdwg.mxu0
    %8377 = vmatprep.subr.bf16.mxu0 %v7033
    %8378 = vmatpush1.bf16.msra.mxu0 %v7032
    %8379 = vmatprep.subr.bf16.mxu0 %v7037
    %8380 = vmatpush1.bf16.msra.mxu0 %v7036
    %8381 = vmatprep.subr.bf16.mxu0 %v7041
    %8382 = vmatpush1.bf16.msra.mxu0 %v7040
    %8383 = vmatprep.subr.bf16.mxu0 %v7045
    %8384 = vmatpush1.bf16.msra.mxu0 %v7044
    %8385 = vmatprep.subr.bf16.mxu0 %v7049
    %8386 = vmatpush1.bf16.msra.mxu0 %v7048
    %8387 = vmatprep.subr.bf16.mxu0 %v7053
    %8388 = vmatpush1.bf16.msra.mxu0 %v7052
    %8389 = vmatprep.subr.bf16.mxu0 %v7057
    %8390 = vmatpush1.bf16.msra.mxu0 %v7056
    %8391 = vmatprep.subr.bf16.mxu0 %v7061
    %8392 = vmatpush1.bf16.msra.mxu0 %v7060
    %8393 = vmatprep.subr.bf16.mxu0 %v7065
    %8394 = vmatpush1.bf16.msra.mxu0 %v7064
    %8395 = vmatprep.subr.bf16.mxu0 %v7069
    %8396 = vmatpush1.bf16.msra.mxu0 %v7068
    %8397 = vmatprep.subr.bf16.mxu0 %v7073
    %8398 = vmatpush1.bf16.msra.mxu0 %v7072
    %8399 = vmatprep.subr.bf16.mxu0 %v7077
    %8400 = vmatpush1.bf16.msra.mxu0 %v7076
    %8401 = vmatprep.subr.bf16.mxu0 %v7081
    %8402 = vmatpush1.bf16.msra.mxu0 %v7080
    %8403 = vmatprep.subr.bf16.mxu0 %v7085
    %8404 = vmatpush1.bf16.msra.mxu0 %v7084
    %8405 = vmatprep.subr.bf16.mxu0 %v7089
    %8406 = vmatpush1.bf16.msra.mxu0 %v7088
    %8407 = vmatprep.subr.bf16.mxu0 %v7093
    %8408 = vmatpush1.bf16.msra.mxu0 %v7092
    %8409 = vmatprep.mubr.bf16.mxu0 %v4905
    %8410 = vmatmul.mubr.bf16.gmra.mrb[0].mxu0 %v4904
    %v8411 = vpop.f32.mrb[0].mxu0
    %v8412 = vadd.f32 %v8369, %v8411
    %v8413 = vpop.f32.mrb[0].mxu0
    %v8414 = vadd.f32 %v8371, %v8413
    %v8415 = vpop.f32.mrb[0].mxu0
    %v8416 = vadd.f32 %v8373, %v8415
    %v8417 = vpop.f32.mrb[0].mxu0
    %v8418 = vadd.f32 %v8375, %v8417
    %8419 = vdwg.mxu0
    %8420 = vmatprep.subr.bf16.mxu0 %v7097
    %8421 = vmatpush1.bf16.msra.mxu0 %v7096
    %8422 = vmatprep.subr.bf16.mxu0 %v7101
    %8423 = vmatpush1.bf16.msra.mxu0 %v7100
    %8424 = vmatprep.subr.bf16.mxu0 %v7105
    %8425 = vmatpush1.bf16.msra.mxu0 %v7104
    %8426 = vmatprep.subr.bf16.mxu0 %v7109
    %8427 = vmatpush1.bf16.msra.mxu0 %v7108
    %8428 = vmatprep.subr.bf16.mxu0 %v7113
    %8429 = vmatpush1.bf16.msra.mxu0 %v7112
    %8430 = vmatprep.subr.bf16.mxu0 %v7117
    %8431 = vmatpush1.bf16.msra.mxu0 %v7116
    %8432 = vmatprep.subr.bf16.mxu0 %v7121
    %8433 = vmatpush1.bf16.msra.mxu0 %v7120
    %8434 = vmatprep.subr.bf16.mxu0 %v7125
    %8435 = vmatpush1.bf16.msra.mxu0 %v7124
    %8436 = vmatprep.subr.bf16.mxu0 %v7129
    %8437 = vmatpush1.bf16.msra.mxu0 %v7128
    %8438 = vmatprep.subr.bf16.mxu0 %v7133
    %8439 = vmatpush1.bf16.msra.mxu0 %v7132
    %8440 = vmatprep.subr.bf16.mxu0 %v7137
    %8441 = vmatpush1.bf16.msra.mxu0 %v7136
    %8442 = vmatprep.subr.bf16.mxu0 %v7141
    %8443 = vmatpush1.bf16.msra.mxu0 %v7140
    %8444 = vmatprep.subr.bf16.mxu0 %v7145
    %8445 = vmatpush1.bf16.msra.mxu0 %v7144
    %8446 = vmatprep.subr.bf16.mxu0 %v7149
    %8447 = vmatpush1.bf16.msra.mxu0 %v7148
    %8448 = vmatprep.subr.bf16.mxu0 %v7153
    %8449 = vmatpush1.bf16.msra.mxu0 %v7152
    %8450 = vmatprep.subr.bf16.mxu0 %v7157
    %8451 = vmatpush1.bf16.msra.mxu0 %v7156
    %8452 = vmatprep.mubr.bf16.mxu0 %v4907
    %8453 = vmatmul.mubr.bf16.gmra.mrb[0].mxu0 %v4906
    %v8454 = vpop.f32.mrb[0].mxu0
    %v8455 = vadd.f32 %v8412, %v8454
    %v8456 = vpop.f32.mrb[0].mxu0
    %v8457 = vadd.f32 %v8414, %v8456
    %v8458 = vpop.f32.mrb[0].mxu0
    %v8459 = vadd.f32 %v8416, %v8458
    %v8460 = vpop.f32.mrb[0].mxu0
    %v8461 = vadd.f32 %v8418, %v8460
    %8462 = vdwg.mxu0
    %8463 = vmatprep.subr.bf16.mxu0 %v7161
    %8464 = vmatpush1.bf16.msra.mxu0 %v7160
    %8465 = vmatprep.subr.bf16.mxu0 %v7165
    %8466 = vmatpush1.bf16.msra.mxu0 %v7164
    %8467 = vmatprep.subr.bf16.mxu0 %v7169
    %8468 = vmatpush1.bf16.msra.mxu0 %v7168
    %8469 = vmatprep.subr.bf16.mxu0 %v7173
    %8470 = vmatpush1.bf16.msra.mxu0 %v7172
    %8471 = vmatprep.subr.bf16.mxu0 %v7177
    %8472 = vmatpush1.bf16.msra.mxu0 %v7176
    %8473 = vmatprep.subr.bf16.mxu0 %v7181
    %8474 = vmatpush1.bf16.msra.mxu0 %v7180
    %8475 = vmatprep.subr.bf16.mxu0 %v7185
    %8476 = vmatpush1.bf16.msra.mxu0 %v7184
    %8477 = vmatprep.subr.bf16.mxu0 %v7189
    %8478 = vmatpush1.bf16.msra.mxu0 %v7188
    %8479 = vmatprep.subr.bf16.mxu0 %v7193
    %8480 = vmatpush1.bf16.msra.mxu0 %v7192
    %8481 = vmatprep.subr.bf16.mxu0 %v7197
    %8482 = vmatpush1.bf16.msra.mxu0 %v7196
    %8483 = vmatprep.subr.bf16.mxu0 %v7201
    %8484 = vmatpush1.bf16.msra.mxu0 %v7200
    %8485 = vmatprep.subr.bf16.mxu0 %v7205
    %8486 = vmatpush1.bf16.msra.mxu0 %v7204
    %8487 = vmatprep.subr.bf16.mxu0 %v7209
    %8488 = vmatpush1.bf16.msra.mxu0 %v7208
    %8489 = vmatprep.subr.bf16.mxu0 %v7213
    %8490 = vmatpush1.bf16.msra.mxu0 %v7212
    %8491 = vmatprep.subr.bf16.mxu0 %v7217
    %8492 = vmatpush1.bf16.msra.mxu0 %v7216
    %8493 = vmatprep.subr.bf16.mxu0 %v7221
    %8494 = vmatpush1.bf16.msra.mxu0 %v7220
    %8495 = vmatprep.mubr.bf16.mxu0 %v4909
    %8496 = vmatmul.mubr.bf16.gmra.mrb[0].mxu0 %v4908
    %v8497 = vpop.f32.mrb[0].mxu0
    %v8498 = vadd.f32 %v8455, %v8497
    %v8499 = vpop.f32.mrb[0].mxu0
    %v8500 = vadd.f32 %v8457, %v8499
    %v8501 = vpop.f32.mrb[0].mxu0
    %v8502 = vadd.f32 %v8459, %v8501
    %v8503 = vpop.f32.mrb[0].mxu0
    %v8504 = vadd.f32 %v8461, %v8503
    %8505 = vdwg.mxu0
    %8506 = vmatprep.subr.bf16.mxu0 %v7225
    %8507 = vmatpush1.bf16.msra.mxu0 %v7224
    %8508 = vmatprep.subr.bf16.mxu0 %v7229
    %8509 = vmatpush1.bf16.msra.mxu0 %v7228
    %8510 = vmatprep.subr.bf16.mxu0 %v7233
    %8511 = vmatpush1.bf16.msra.mxu0 %v7232
    %8512 = vmatprep.subr.bf16.mxu0 %v7237
    %8513 = vmatpush1.bf16.msra.mxu0 %v7236
    %8514 = vmatprep.subr.bf16.mxu0 %v7241
    %8515 = vmatpush1.bf16.msra.mxu0 %v7240
    %8516 = vmatprep.subr.bf16.mxu0 %v7245
    %8517 = vmatpush1.bf16.msra.mxu0 %v7244
    %8518 = vmatprep.subr.bf16.mxu0 %v7249
    %8519 = vmatpush1.bf16.msra.mxu0 %v7248
    %8520 = vmatprep.subr.bf16.mxu0 %v7253
    %8521 = vmatpush1.bf16.msra.mxu0 %v7252
    %8522 = vmatprep.subr.bf16.mxu0 %v7257
    %8523 = vmatpush1.bf16.msra.mxu0 %v7256
    %8524 = vmatprep.subr.bf16.mxu0 %v7261
    %8525 = vmatpush1.bf16.msra.mxu0 %v7260
    %8526 = vmatprep.subr.bf16.mxu0 %v7265
    %8527 = vmatpush1.bf16.msra.mxu0 %v7264
    %8528 = vmatprep.subr.bf16.mxu0 %v7269
    %8529 = vmatpush1.bf16.msra.mxu0 %v7268
    %8530 = vmatprep.subr.bf16.mxu0 %v7273
    %8531 = vmatpush1.bf16.msra.mxu0 %v7272
    %8532 = vmatprep.subr.bf16.mxu0 %v7277
    %8533 = vmatpush1.bf16.msra.mxu0 %v7276
    %8534 = vmatprep.subr.bf16.mxu0 %v7281
    %8535 = vmatpush1.bf16.msra.mxu0 %v7280
    %8536 = vmatprep.subr.bf16.mxu0 %v7285
    %8537 = vmatpush1.bf16.msra.mxu0 %v7284
    %8538 = vmatprep.mubr.bf16.mxu0 %v4911
    %8539 = vmatmul.mubr.bf16.gmra.mrb[0].mxu0 %v4910
    %v8540 = vpop.f32.mrb[0].mxu0
    %v8541 = vadd.f32 %v8498, %v8540
    %v8542 = vpop.f32.mrb[0].mxu0
    %v8543 = vadd.f32 %v8500, %v8542
    %v8544 = vpop.f32.mrb[0].mxu0
    %v8545 = vadd.f32 %v8502, %v8544
    %v8546 = vpop.f32.mrb[0].mxu0
    %v8547 = vadd.f32 %v8504, %v8546
    %8548 = vdwg.mxu0
    %8549 = vmatprep.subr.bf16.mxu0 %v7289
    %8550 = vmatpush1.bf16.msra.mxu0 %v7288
    %8551 = vmatprep.subr.bf16.mxu0 %v7293
    %8552 = vmatpush1.bf16.msra.mxu0 %v7292
    %8553 = vmatprep.subr.bf16.mxu0 %v7297
    %8554 = vmatpush1.bf16.msra.mxu0 %v7296
    %8555 = vmatprep.subr.bf16.mxu0 %v7301
    %8556 = vmatpush1.bf16.msra.mxu0 %v7300
    %8557 = vmatprep.subr.bf16.mxu0 %v7305
    %8558 = vmatpush1.bf16.msra.mxu0 %v7304
    %8559 = vmatprep.subr.bf16.mxu0 %v7309
    %8560 = vmatpush1.bf16.msra.mxu0 %v7308
    %8561 = vmatprep.subr.bf16.mxu0 %v7313
    %8562 = vmatpush1.bf16.msra.mxu0 %v7312
    %8563 = vmatprep.subr.bf16.mxu0 %v7317
    %8564 = vmatpush1.bf16.msra.mxu0 %v7316
    %8565 = vmatprep.subr.bf16.mxu0 %v7321
    %8566 = vmatpush1.bf16.msra.mxu0 %v7320
    %8567 = vmatprep.subr.bf16.mxu0 %v7325
    %8568 = vmatpush1.bf16.msra.mxu0 %v7324
    %8569 = vmatprep.subr.bf16.mxu0 %v7329
    %8570 = vmatpush1.bf16.msra.mxu0 %v7328
    %8571 = vmatprep.subr.bf16.mxu0 %v7333
    %8572 = vmatpush1.bf16.msra.mxu0 %v7332
    %8573 = vmatprep.subr.bf16.mxu0 %v7337
    %8574 = vmatpush1.bf16.msra.mxu0 %v7336
    %8575 = vmatprep.subr.bf16.mxu0 %v7341
    %8576 = vmatpush1.bf16.msra.mxu0 %v7340
    %8577 = vmatprep.subr.bf16.mxu0 %v7345
    %8578 = vmatpush1.bf16.msra.mxu0 %v7344
    %8579 = vmatprep.subr.bf16.mxu0 %v7349
    %8580 = vmatpush1.bf16.msra.mxu0 %v7348
    %8581 = vmatprep.mubr.bf16.mxu0 %v4913
    %8582 = vmatmul.mubr.bf16.gmra.mrb[0].mxu0 %v4912
    %v8583 = vpop.f32.mrb[0].mxu0
    %v8584 = vadd.f32 %v8541, %v8583
    %v8585 = vpop.f32.mrb[0].mxu0
    %v8586 = vadd.f32 %v8543, %v8585
    %v8587 = vpop.f32.mrb[0].mxu0
    %v8588 = vadd.f32 %v8545, %v8587
    %v8589 = vpop.f32.mrb[0].mxu0
    %v8590 = vadd.f32 %v8547, %v8589
    %8591 = vdwg.mxu0
    %8592 = vmatprep.subr.bf16.mxu0 %v7353
    %8593 = vmatpush1.bf16.msra.mxu0 %v7352
    %8594 = vmatprep.subr.bf16.mxu0 %v7357
    %8595 = vmatpush1.bf16.msra.mxu0 %v7356
    %8596 = vmatprep.subr.bf16.mxu0 %v7361
    %8597 = vmatpush1.bf16.msra.mxu0 %v7360
    %8598 = vmatprep.subr.bf16.mxu0 %v7365
    %8599 = vmatpush1.bf16.msra.mxu0 %v7364
    %8600 = vmatprep.subr.bf16.mxu0 %v7369
    %8601 = vmatpush1.bf16.msra.mxu0 %v7368
    %8602 = vmatprep.subr.bf16.mxu0 %v7373
    %8603 = vmatpush1.bf16.msra.mxu0 %v7372
    %8604 = vmatprep.subr.bf16.mxu0 %v7377
    %8605 = vmatpush1.bf16.msra.mxu0 %v7376
    %8606 = vmatprep.subr.bf16.mxu0 %v7381
    %8607 = vmatpush1.bf16.msra.mxu0 %v7380
    %8608 = vmatprep.subr.bf16.mxu0 %v7385
    %8609 = vmatpush1.bf16.msra.mxu0 %v7384
    %8610 = vmatprep.subr.bf16.mxu0 %v7389
    %8611 = vmatpush1.bf16.msra.mxu0 %v7388
    %8612 = vmatprep.subr.bf16.mxu0 %v7393
    %8613 = vmatpush1.bf16.msra.mxu0 %v7392
    %8614 = vmatprep.subr.bf16.mxu0 %v7397
    %8615 = vmatpush1.bf16.msra.mxu0 %v7396
    %8616 = vmatprep.subr.bf16.mxu0 %v7401
    %8617 = vmatpush1.bf16.msra.mxu0 %v7400
    %8618 = vmatprep.subr.bf16.mxu0 %v7405
    %8619 = vmatpush1.bf16.msra.mxu0 %v7404
    %8620 = vmatprep.subr.bf16.mxu0 %v7409
    %8621 = vmatpush1.bf16.msra.mxu0 %v7408
    %8622 = vmatprep.subr.bf16.mxu0 %v7413
    %8623 = vmatpush1.bf16.msra.mxu0 %v7412
    %8624 = vmatprep.mubr.bf16.mxu0 %v4915
    %8625 = vmatmul.mubr.bf16.gmra.mrb[0].mxu0 %v4914
    %v8626 = vpop.f32.mrb[0].mxu0
    %v8627 = vadd.f32 %v8584, %v8626
    %v8628 = vpop.f32.mrb[0].mxu0
    %v8629 = vadd.f32 %v8586, %v8628
    %v8630 = vpop.f32.mrb[0].mxu0
    %v8631 = vadd.f32 %v8588, %v8630
    %v8632 = vpop.f32.mrb[0].mxu0
    %v8633 = vadd.f32 %v8590, %v8632
    %8634 = vdwg.mxu0
    %8635 = vmatprep.subr.bf16.mxu0 %v7417
    %8636 = vmatpush1.bf16.msra.mxu0 %v7416
    %8637 = vmatprep.subr.bf16.mxu0 %v7421
    %8638 = vmatpush1.bf16.msra.mxu0 %v7420
    %8639 = vmatprep.subr.bf16.mxu0 %v7425
    %8640 = vmatpush1.bf16.msra.mxu0 %v7424
    %8641 = vmatprep.subr.bf16.mxu0 %v7429
    %8642 = vmatpush1.bf16.msra.mxu0 %v7428
    %8643 = vmatprep.subr.bf16.mxu0 %v7433
    %8644 = vmatpush1.bf16.msra.mxu0 %v7432
    %8645 = vmatprep.subr.bf16.mxu0 %v7437
    %8646 = vmatpush1.bf16.msra.mxu0 %v7436
    %8647 = vmatprep.subr.bf16.mxu0 %v7441
    %8648 = vmatpush1.bf16.msra.mxu0 %v7440
    %8649 = vmatprep.subr.bf16.mxu0 %v7445
    %8650 = vmatpush1.bf16.msra.mxu0 %v7444
    %8651 = vmatprep.subr.bf16.mxu0 %v7449
    %8652 = vmatpush1.bf16.msra.mxu0 %v7448
    %8653 = vmatprep.subr.bf16.mxu0 %v7453
    %8654 = vmatpush1.bf16.msra.mxu0 %v7452
    %8655 = vmatprep.subr.bf16.mxu0 %v7457
    %8656 = vmatpush1.bf16.msra.mxu0 %v7456
    %8657 = vmatprep.subr.bf16.mxu0 %v7461
    %8658 = vmatpush1.bf16.msra.mxu0 %v7460
    %8659 = vmatprep.subr.bf16.mxu0 %v7465
    %8660 = vmatpush1.bf16.msra.mxu0 %v7464
    %8661 = vmatprep.subr.bf16.mxu0 %v7469
    %8662 = vmatpush1.bf16.msra.mxu0 %v7468
    %8663 = vmatprep.subr.bf16.mxu0 %v7473
    %8664 = vmatpush1.bf16.msra.mxu0 %v7472
    %8665 = vmatprep.subr.bf16.mxu0 %v7477
    %8666 = vmatpush1.bf16.msra.mxu0 %v7476
    %8667 = vmatprep.mubr.bf16.mxu0 %v4917
    %8668 = vmatmul.mubr.bf16.gmra.mrb[0].mxu0 %v4916
    %v8669 = vpop.f32.mrb[0].mxu0
    %v8670 = vadd.f32 %v8627, %v8669
    %v8671 = vpop.f32.mrb[0].mxu0
    %v8672 = vadd.f32 %v8629, %v8671
    %v8673 = vpop.f32.mrb[0].mxu0
    %v8674 = vadd.f32 %v8631, %v8673
    %v8675 = vpop.f32.mrb[0].mxu0
    %v8676 = vadd.f32 %v8633, %v8675
    %8677 = vdwg.mxu0
    %v8678 = vadd.f32 %v8326, %v8328
    %v8679 = vadd.f32 %v8678, %v8670
    %v8680 = vadd.f32 %v8679, %v8672
    %8681 = vadd.xlane.f32.xlu0 %v8680
    %v8682 = vpop.xlane.xlu0 %8681
    %v8683 = vadd.f32 %v8330, %v8332
    %v8684 = vadd.f32 %v8683, %v8674
    %v8685 = vadd.f32 %v8684, %v8676
    %8686 = vadd.xlane.f32.xlu0 %v8685
    %v8687 = vpop.xlane.xlu0 %8686
    %v8688 = vmul.f32 %v8682, %v1003
    %v8689 = vmul.f32 %v8687, %v1003
    %v8690 = vsub.f32 %v8326, %v8688
    %v8691 = vsub.f32 %v8328, %v8688
    %v8692 = vsub.f32 %v8670, %v8688
    %v8693 = vsub.f32 %v8672, %v8688
    %v8694 = vsub.f32 %v8330, %v8689
    %v8695 = vsub.f32 %v8332, %v8689
    %v8696 = vsub.f32 %v8674, %v8689
    %v8697 = vsub.f32 %v8676, %v8689
    %v8698 = vmul.f32 %v8690, %v8690
    %v8699 = vmul.f32 %v8691, %v8691
    %v8700 = vmul.f32 %v8692, %v8692
    %v8701 = vmul.f32 %v8693, %v8693
    %v8702 = vmul.f32 %v8694, %v8694
    %v8703 = vmul.f32 %v8695, %v8695
    %v8704 = vmul.f32 %v8696, %v8696
    %v8705 = vmul.f32 %v8697, %v8697
    %v8706 = vadd.f32 %v8698, %v8699
    %v8707 = vadd.f32 %v8706, %v8700
    %v8708 = vadd.f32 %v8707, %v8701
    %8709 = vadd.xlane.f32.xlu0 %v8708
    %v8710 = vpop.xlane.xlu0 %8709
    %v8711 = vadd.f32 %v8702, %v8703
    %v8712 = vadd.f32 %v8711, %v8704
    %v8713 = vadd.f32 %v8712, %v8705
    %8714 = vadd.xlane.f32.xlu0 %v8713
    %v8715 = vpop.xlane.xlu0 %8714
    %v8716 = vmul.f32 %v8710, %v1003
    %v8717 = vmul.f32 %v8715, %v1003
    %v8718 = vadd.f32 %v8716, 1e-05
    %v8719 = vadd.f32 %v8717, 1e-05
    %v8720 = vrsqrt.pop %v8718
    %v8721 = vrsqrt.pop %v8719
    %v8722 = vmul.f32 %v8690, %v8720
    %v8723 = vmul.f32 %v8691, %v8720
    %v8724 = vmul.f32 %v8692, %v8720
    %v8725 = vmul.f32 %v8693, %v8720
    %v8726 = vmul.f32 %v8694, %v8721
    %v8727 = vmul.f32 %v8695, %v8721
    %v8728 = vmul.f32 %v8696, %v8721
    %v8729 = vmul.f32 %v8697, %v8721
    %v8730 = vld [vmem:[%s7] sm:$0xf]
    %v8732 = vlaneseq
    %v8733 = vshrl.u32 %v8732, 7
    %v8734 = vsub.s32 0, %v8733
    %v8735 = vrot.slane %v8730, %v8734
    %v8736 = vlaneseq
    %v8737 = vshrl.u32 %v8736, 7
    %v8738 = vsub.s32 1, %v8737
    %v8739 = vrot.slane %v8730, %v8738
    %v8740 = vlaneseq
    %v8741 = vshrl.u32 %v8740, 7
    %v8742 = vsub.s32 2, %v8741
    %v8743 = vrot.slane %v8730, %v8742
    %v8744 = vlaneseq
    %v8745 = vshrl.u32 %v8744, 7
    %v8746 = vsub.s32 3, %v8745
    %v8747 = vrot.slane %v8730, %v8746
    %v8752 = vmul.f32 %v8722, %v8735
    %v8753 = vmul.f32 %v8723, %v8739
    %v8754 = vmul.f32 %v8724, %v8743
    %v8755 = vmul.f32 %v8725, %v8747
    %v8756 = vmul.f32 %v8726, %v8735
    %v8757 = vmul.f32 %v8727, %v8739
    %v8758 = vmul.f32 %v8728, %v8743
    %v8759 = vmul.f32 %v8729, %v8747
    %v8760 = vld [vmem:[%s8] sm:$0xf]
    %v8762 = vlaneseq
    %v8763 = vshrl.u32 %v8762, 7
    %v8764 = vsub.s32 0, %v8763
    %v8765 = vrot.slane %v8760, %v8764
    %v8766 = vlaneseq
    %v8767 = vshrl.u32 %v8766, 7
    %v8768 = vsub.s32 1, %v8767
    %v8769 = vrot.slane %v8760, %v8768
    %v8770 = vlaneseq
    %v8771 = vshrl.u32 %v8770, 7
    %v8772 = vsub.s32 2, %v8771
    %v8773 = vrot.slane %v8760, %v8772
    %v8774 = vlaneseq
    %v8775 = vshrl.u32 %v8774, 7
    %v8776 = vsub.s32 3, %v8775
    %v8777 = vrot.slane %v8760, %v8776
    %v8782 = vadd.f32 %v8752, %v8765
    %v8783 = vadd.f32 %v8753, %v8769
    %v8784 = vadd.f32 %v8754, %v8773
    %v8785 = vadd.f32 %v8755, %v8777
    %v8786 = vadd.f32 %v8756, %v8765
    %v8787 = vadd.f32 %v8757, %v8769
    %v8788 = vadd.f32 %v8758, %v8773
    %v8789 = vadd.f32 %v8759, %v8777
    %8790 = vst [vmem:[#allocation2] sm:$0xff] %v8782
    %8791 = vst [vmem:[#allocation2 + $0x8] sm:$0xff] %v8783
    %8792 = vst [vmem:[#allocation2 + $0x10] sm:$0xff] %v8784
    %8793 = vst [vmem:[#allocation2 + $0x18] sm:$0xff] %v8785
    %8794 = vst [vmem:[#allocation2 + $0x20] sm:$0xff] %v8786
    %8795 = vst [vmem:[#allocation2 + $0x28] sm:$0xff] %v8787
    %8796 = vst [vmem:[#allocation2 + $0x30] sm:$0xff] %v8788
    %8797 = vst [vmem:[#allocation2 + $0x38] sm:$0xff] %v8789
    // Predicated region
    $region38: #{encoder_layer.3} parent=1 // pred_check
      _
    $region39: #{encoder_layer.3} parent=1 // pred_check_branch
      %8799 = sbr.rel (0) target = $region41
    $region40: #{encoder_layer.3} parent=1 // pred_region
      %s8801 = ssub.s32 1024, 1024
      %8802 = vsyncadd [#allocation3], %s8801
      %s8803 = sshll.u32 [#allocation2], 4
      %s8804 = int_to_ptr.vmem [resolvable:$true] %s8803
      %8809 = dma.vmem_to_hbm [thread:$0]  %s8804, 1024, %s9, [#allocation3], 512, 512, 32
    $region41: #{encoder_layer.3} parent=1 // pred_fallthru
      _
    // Predicated region
    $region42: #{encoder_layer.3} parent=1 // pred_check
      _
    $region43: #{encoder_layer.3} parent=1 // pred_check_branch
      %8811 = sbr.rel (0) target = $region45
    $region44: #{encoder_layer.3} parent=1 // pred_region
      %8812 = dma.done [#allocation3], 1024
    $region45: #{encoder_layer.3} parent=1 // pred_fallthru
      _
    %8813 = vsyncpa [#allocation3], 1

</llo_original>
